<compile_context>
chip_gen: v7x
topology: tpu7x:2x2x1
jax: 0.10.0
libtpu: 0.0.40
codegen_flags: <defaults>
</compile_context>

<pallas_src>
import functools
import math

import jax
import jax.numpy as jnp
from jax import lax
from jax.experimental import pallas as pl
from jax.experimental.pallas import tpu as pltpu


def _round_up(n, m):
    return ((n + m - 1) // m) * m


def cnn_config(input_size):
    # (cin, cout, kernel, stride, padding, has_bn) - mirrors the nn.Sequential.
    return [
        (input_size, 50, 4, 4, 0, False),
        (50, 50, 4, 4, 0, False),
        (50, 50, 4, 2, 1, True),
        (50, 50, 4, 2, 1, True),
        (50, 100, 4, 2, 0, True),
        (100, 150, 4, 2, 0, True),
    ]


# ----------------------------------------------------------------------------
# Pallas kernel 1: conv-as-matmul   y = relu(X @ W + b) * scale + shift
# (scale/shift fold the eval-mode BatchNorm1d that follows the ReLU; scale=1,
#  shift=0 when the layer has no BN).  Row-tiled grid, lane-dense (k*128)
#  output columns; VMEM per step stays far below the scoped limits.
# ----------------------------------------------------------------------------
def _conv_mm_kernel(x_ref, w_ref, b_ref, scale_ref, shift_ref, o_ref):
    y = jnp.dot(x_ref[...], w_ref[...], preferred_element_type=jnp.float32)
    y = jnp.maximum(y + b_ref[...], 0.0)
    o_ref[...] = y * scale_ref[...] + shift_ref[...]


def conv_matmul(x, w, b, scale, shift, *, tm):
    n, kd = x.shape
    mp = w.shape[1]
    return pl.pallas_call(
        _conv_mm_kernel,
        out_shape=jax.ShapeDtypeStruct((n, mp), jnp.float32),
        grid=(n // tm,),
        in_specs=[
            pl.BlockSpec((tm, kd), lambda i: (i, 0)),
            pl.BlockSpec((kd, mp), lambda i: (0, 0)),
            pl.BlockSpec((1, mp), lambda i: (0, 0)),
            pl.BlockSpec((1, mp), lambda i: (0, 0)),
            pl.BlockSpec((1, mp), lambda i: (0, 0)),
        ],
        out_specs=pl.BlockSpec((tm, mp), lambda i: (i, 0)),
        compiler_params=pltpu.CompilerParams(
            dimension_semantics=("parallel",)),   # row tiles -> both v7x TCs
    )(x, w, b, scale, shift)


def conv_layer(x, w, b, scale, shift, *, k, stride, padding):
    """x: (B, L, Cpad) channels-last -> (B, Lout, Cout_pad)."""
    # TODO(synk): the im2col patch gather is still an XLA op; a fully fused
    # strided-window BlockSpec read would remove one HBM materialization/layer.
    bsz, _length, cpad = x.shape
    if padding:
        x = jnp.pad(x, ((0, 0), (padding, padding), (0, 0)))
    lp = x.shape[1]
    lout = (lp - k) // stride + 1
    idx = jnp.arange(lout)[:, None] * stride + jnp.arange(k)[None, :]
    patches = x[:, idx, :].reshape(bsz * lout, k * cpad)   # (N, K*Cpad)
    n = bsz * lout
    tm = _round_up(n, 8) if n <= 512 else 256
    n_pad = _round_up(n, tm)
    if n_pad != n:
        patches = jnp.pad(patches, ((0, n_pad - n), (0, 0)))
    y = conv_matmul(patches, w, b, scale, shift, tm=tm)
    return y[:n].reshape(bsz, lout, w.shape[1])


# ----------------------------------------------------------------------------
# Pallas kernel 2: both BiLSTM layers + the Linear head in ONE kernel.
#
# Per layer, forward and backward directions run together in one step.
#   state   h, c  : (B, 2H)  = [dir=fwd | dir=bwd]
#   gates         : (B, 8H)  = [i_f i_b | f_f f_b | o_f o_b | g_f g_b]
# Weights are pre-combined on the host.  Input projections are hoisted out of
# the recurrence (one big (T*B, D) @ (D, 8H) dot per direction into a VMEM
# scratch); each recurrence step is then a single (B, 2H) @ (2H, 8H) dot plus
# the cell update.  For layer 1 the operands are rows of layer-0's fused step
# sequence (seq[s] = [h0_fwd(s) | h0_bwd(T-1-s)]); M1/M2 restack the layer-1
# input weights so gates1(s) = seq[s] @ M1 + seq[T-1-s] @ M2 + h @ Whh1 + b1.
# Only layer-1's final (B, 2H) hidden is needed -> single (B, 2) HBM store.
# ----------------------------------------------------------------------------
def _bilstm_head_kernel(x_ref, w0f_ref, w0b_ref, whh0_ref, b0_ref,
                        m1_ref, m2_ref, whh1_ref, b1_ref,
                        whead_ref, bhead_ref, out_ref,
                        gxf_ref, gxb_ref, seq_ref, g1a_ref, g1b_ref,
                        *, t_steps, bsz, hidden):
    # TODO(synk): T is small here (4); for very long inputs the per-step Python
    # unroll should become a fori_loop / grid axis with the layer-0 sequence in
    # a larger VMEM scratch.
    h2 = 2 * hidden

    def cell(gates, h, c):
        # Gate groups are [i | f | o | g]: one contiguous sigmoid slab (3*2H)
        # and one tanh slab (2H) -> minimal EUP work, lane-aligned slices.
        sg = jax.nn.sigmoid(gates[:, :3 * h2])
        g_g = jnp.tanh(gates[:, 3 * h2:])
        i_g = sg[:, 0:h2]
        f_g = sg[:, h2:2 * h2]
        o_g = sg[:, 2 * h2:3 * h2]
        c = f_g * c + i_g * g_g
        h = o_g * jnp.tanh(c)
        return h, c

    zeros = jnp.zeros((bsz, h2), jnp.float32)

    # ---- layer 0: input projections hoisted out of the recurrence ----
    x_all = x_ref[...]                                   # (T*B, D)
    gxf_ref[...] = jnp.dot(x_all, w0f_ref[...], preferred_element_type=jnp.float32)
    gxb_ref[...] = jnp.dot(x_all, w0b_ref[...], preferred_element_type=jnp.float32)

    h, c = zeros, zeros
    for s in range(t_steps):
        r = t_steps - 1 - s
        gates = (gxf_ref[pl.ds(s * bsz, bsz), :]
                 + gxb_ref[pl.ds(r * bsz, bsz), :]
                 + jnp.dot(h, whh0_ref[...], preferred_element_type=jnp.float32)
                 + b0_ref[...])
        h, c = cell(gates, h, c)
        seq_ref[pl.ds(s * bsz, bsz), :] = h              # fused-step sequence

    # ---- layer 1: hoist its input projections the same way ----
    seq_all = seq_ref[...]                               # (T*B, 2H)
    g1a_ref[...] = jnp.dot(seq_all, m1_ref[...], preferred_element_type=jnp.float32)
    g1b_ref[...] = jnp.dot(seq_all, m2_ref[...], preferred_element_type=jnp.float32)

    h, c = zeros, zeros
    for s in range(t_steps):
        r = t_steps - 1 - s
        gates = (g1a_ref[pl.ds(s * bsz, bsz), :]
                 + g1b_ref[pl.ds(r * bsz, bsz), :]
                 + jnp.dot(h, whh1_ref[...], preferred_element_type=jnp.float32)
                 + b1_ref[...])
        h, c = cell(gates, h, c)

    # ---- head: h = [h1_fwd_final | h1_bwd_final]; W_head is pre-permuted so
    # this equals Linear(h_n interleaved fwd/bwd per hidden unit). ----
    y = jnp.dot(h, whead_ref[...], preferred_element_type=jnp.float32)
    out_ref[...] = y + bhead_ref[...]


def bilstm_head(feats_flat, lp, *, t_steps, bsz, hidden):
    vmem = pl.BlockSpec(memory_space=pltpu.MemorySpace.VMEM)
    g8 = 8 * hidden
    kernel = functools.partial(_bilstm_head_kernel,
                               t_steps=t_steps, bsz=bsz, hidden=hidden)
    return pl.pallas_call(
        kernel,
        out_shape=jax.ShapeDtypeStruct((bsz, 2), jnp.float32),
        in_specs=[vmem] * 11,
        out_specs=vmem,
        scratch_shapes=[
            pltpu.VMEM((t_steps * bsz, g8), jnp.float32),          # gxf
            pltpu.VMEM((t_steps * bsz, g8), jnp.float32),          # gxb
            pltpu.VMEM((t_steps * bsz, 2 * hidden), jnp.float32),  # seq
            pltpu.VMEM((t_steps * bsz, g8), jnp.float32),          # g1a
            pltpu.VMEM((t_steps * bsz, g8), jnp.float32),          # g1b
        ],
    )(feats_flat, lp["w0f"], lp["w0b"], lp["whh0"], lp["b0"],
      lp["m1"], lp["m2"], lp["whh1"], lp["b1"], lp["w_head"], lp["b_head"])


# ----------------------------------------------------------------------------
# Host-side weight re-layout (PyTorch form -> fused kernel form)
# ----------------------------------------------------------------------------
# PyTorch gate row order is (i, f, g, o); the fused kernel uses groups
# (i, f, o, g) so sigmoid / tanh each act on one contiguous slab.
_GATE_TO_GROUP = (0, 1, 3, 2)


def _combine_dir_ih(w_f, w_b, hidden):
    """weight_ih (4H, D) per direction -> (D, 8H) each, columns placed in the
    gate-grouped direction-interleaved layout (zeros elsewhere)."""
    H = hidden
    D = w_f.shape[1]
    wf = jnp.zeros((D, 8 * H), jnp.float32)
    wb = jnp.zeros((D, 8 * H), jnp.float32)
    for pg, ng in enumerate(_GATE_TO_GROUP):
        wf = wf.at[:, ng * 2 * H:ng * 2 * H + H].set(
            w_f[pg * H:(pg + 1) * H, :].T)
        wb = wb.at[:, ng * 2 * H + H:(ng + 1) * 2 * H].set(
            w_b[pg * H:(pg + 1) * H, :].T)
    return wf, wb


def _combine_dir_hh(w_f, w_b, hidden):
    """weight_hh (4H, H) per direction -> one (2H, 8H) block matrix:
    rows 0:H act on h_fwd, rows H:2H on h_bwd."""
    H = hidden
    whh = jnp.zeros((2 * H, 8 * H), jnp.float32)
    for pg, ng in enumerate(_GATE_TO_GROUP):
        whh = whh.at[0:H, ng * 2 * H:ng * 2 * H + H].set(
            w_f[pg * H:(pg + 1) * H, :].T)
        whh = whh.at[H:2 * H, ng * 2 * H + H:(ng + 1) * 2 * H].set(
            w_b[pg * H:(pg + 1) * H, :].T)
    return whh


def _combine_dir_bias(bih_f, bhh_f, bih_b, bhh_b, hidden):
    H = hidden
    bf = bih_f + bhh_f
    bb = bih_b + bhh_b
    out = jnp.zeros((1, 8 * H), jnp.float32)
    for pg, ng in enumerate(_GATE_TO_GROUP):
        out = out.at[0, ng * 2 * H:ng * 2 * H + H].set(bf[pg * H:(pg + 1) * H])
        out = out.at[0, ng * 2 * H + H:(ng + 1) * 2 * H].set(bb[pg * H:(pg + 1) * H])
    return out


def prepare_kernel_params(params, hidden, input_size):
    cfg = cnn_config(input_size)
    cnn_k = []
    for li, (cin, cout, k, _s, _p, _bn) in enumerate(cfg):
        layer = params["cnn"][li]
        cin_p = cin if li == 0 else _round_up(cin, 128)
        cout_p = _round_up(cout, 128)
        w = jnp.transpose(layer["w"], (2, 1, 0))                  # (K, Cin, Cout)
        w_p = jnp.zeros((k, cin_p, cout_p), jnp.float32).at[:, :cin, :cout].set(w)
        cnn_k.append(dict(
            w=w_p.reshape(k * cin_p, cout_p),
            b=jnp.zeros((1, cout_p), jnp.float32).at[0, :cout].set(layer["b"]),
            scale=jnp.ones((1, cout_p), jnp.float32).at[0, :cout].set(layer["scale"]),
            shift=jnp.zeros((1, cout_p), jnp.float32).at[0, :cout].set(layer["shift"]),
        ))

    H = hidden
    d0 = cfg[-1][1]                      # 150
    d0_p = _round_up(d0, 128)            # 256 - matches the padded conv output

    wih_f, whh_f, bih_f, bhh_f = params["lstm"][0]["fwd"]
    wih_b, whh_b, bih_b, bhh_b = params["lstm"][0]["bwd"]
    wih_f = jnp.zeros((4 * H, d0_p), jnp.float32).at[:, :d0].set(wih_f)
    wih_b = jnp.zeros((4 * H, d0_p), jnp.float32).at[:, :d0].set(wih_b)
    w0f, w0b = _combine_dir_ih(wih_f, wih_b, H)
    whh0 = _combine_dir_hh(whh_f, whh_b, H)
    b0 = _combine_dir_bias(bih_f, bhh_f, bih_b, bhh_b, H)

    wih_f, whh_f, bih_f, bhh_f = params["lstm"][1]["fwd"]
    wih_b, whh_b, bih_b, bhh_b = params["lstm"][1]["bwd"]
    w1f, w1b = _combine_dir_ih(wih_f, wih_b, H)                   # (2H, 8H) each
    # Layer-0's fused step state is [h0_fwd(s) | h0_bwd(T-1-s)]; M1/M2 restack
    # the layer-1 input weights so gates1 = seq[s] @ M1 + seq[T-1-s] @ M2 + ...
    m1 = jnp.concatenate([w1f[0:H], w1b[H:2 * H]], axis=0)
    m2 = jnp.concatenate([w1b[0:H], w1f[H:2 * H]], axis=0)
    whh1 = _combine_dir_hh(whh_f, whh_b, H)
    b1 = _combine_dir_bias(bih_f, bhh_f, bih_b, bhh_b, H)

    w_out, b_out = params["out"]
    # h_n.permute(1,2,0)[:, :, -2:].reshape(B, 2H) interleaves fwd/bwd per
    # hidden unit; fold that permutation into the head weight instead.
    w_head = jnp.concatenate([w_out[:, 0::2].T, w_out[:, 1::2].T], axis=0)
    b_head = b_out.reshape(1, 2)

    lstm_k = dict(w0f=w0f, w0b=w0b, whh0=whh0, b0=b0, m1=m1, m2=m2,
                  whh1=whh1, b1=b1, w_head=w_head, b_head=b_head)
    return dict(cnn=cnn_k, lstm=lstm_k)


def build_forward(hidden, cfg):
    @jax.jit
    def forward(x, kp):
        h = x                                             # (B, L, Cin) channels-last
        for li, (_cin, _cout, k, stride, padding, _bn) in enumerate(cfg):
            layer = kp["cnn"][li]
            h = conv_layer(h, layer["w"], layer["b"], layer["scale"],
                           layer["shift"], k=k, stride=stride, padding=padding)
        bsz, t_steps, d = h.shape
        # Time-major, flattened (T*B, D) so the kernel can do one big input
        # projection per direction without an in-kernel reshape (tiny tensor).
        feats_flat = jnp.transpose(h, (1, 0, 2)).reshape(t_steps * bsz, d)
        return bilstm_head(feats_flat, kp["lstm"],
                           t_steps=t_steps, bsz=bsz, hidden=hidden)
    return forward


# ----------------------------------------------------------------------------
# Pure-JAX reference (PyTorch semantics, eval mode) and parameter init
# ----------------------------------------------------------------------------
def reference_forward(x, params, hidden):
    h = jnp.transpose(x, (0, 2, 1))                       # (B, C, L)
    for layer in params["cnn"]:
        h = lax.conv_general_dilated(
            h, layer["w"], window_strides=(layer["stride"],),
            padding=[(layer["padding"], layer["padding"])],
            dimension_numbers=("NCH", "OIH", "NCH"))
        h = jnp.maximum(h + layer["b"][None, :, None], 0.0)
        h = h * layer["scale"][None, :, None] + layer["shift"][None, :, None]
    feats = jnp.transpose(h, (0, 2, 1))                   # (B, T, 150)

    def run_dir(seq, wih, whh, bih, bhh):
        bsz = seq.shape[0]
        hh = hidden

        def step(carry, x_t):
            h_t, c_t = carry
            gates = x_t @ wih.T + h_t @ whh.T + bih + bhh
            i = jax.nn.sigmoid(gates[:, 0:hh])
            f = jax.nn.sigmoid(gates[:, hh:2 * hh])
            g = jnp.tanh(gates[:, 2 * hh:3 * hh])
            o = jax.nn.sigmoid(gates[:, 3 * hh:4 * hh])
            c_t = f * c_t + i * g
            h_t = o * jnp.tanh(c_t)
            return (h_t, c_t), h_t

        init = (jnp.zeros((bsz, hh), jnp.float32), jnp.zeros((bsz, hh), jnp.float32))
        (h_last, _), hs = lax.scan(step, init, jnp.transpose(seq, (1, 0, 2)))
        return jnp.transpose(hs, (1, 0, 2)), h_last

    inp = feats
    h_fwd = h_bwd = None
    for layer in params["lstm"]:
        out_f, h_fwd = run_dir(inp, *layer["fwd"])
        out_b_rev, h_bwd = run_dir(inp[:, ::-1], *layer["bwd"])
        inp = jnp.concatenate([out_f, out_b_rev[:, ::-1]], axis=-1)
    y = jnp.stack([h_fwd, h_bwd], axis=-1).reshape(x.shape[0], 2 * hidden)
    w_out, b_out = params["out"]
    return y @ w_out.T + b_out[None, :]


def init_params(key, input_size, hidden):
    cnn = []
    for (cin, cout, k, s, p, has_bn) in cnn_config(input_size):
        key, k1, k2, k3, k4, k5, k6 = jax.random.split(key, 7)
        bound = 1.0 / math.sqrt(cin * k)
        w = jax.random.uniform(k1, (cout, cin, k), jnp.float32, -bound, bound)
        b = jax.random.uniform(k2, (cout,), jnp.float32, -bound, bound)
        if has_bn:
            gamma = jax.random.uniform(k3, (cout,), jnp.float32, 0.5, 1.5)
            beta = jax.random.uniform(k4, (cout,), jnp.float32, -0.1, 0.1)
            mean = jax.random.uniform(k5, (cout,), jnp.float32, -0.1, 0.1)
            var = jax.random.uniform(k6, (cout,), jnp.float32, 0.5, 1.5)
            scale = gamma / jnp.sqrt(var + 1e-5)
            shift = beta - mean * scale
        else:
            scale = jnp.ones((cout,), jnp.float32)
            shift = jnp.zeros((cout,), jnp.float32)
        cnn.append(dict(w=w, b=b, scale=scale, shift=shift, stride=s, padding=p))

    lstm = []
    bound = 1.0 / math.sqrt(hidden)
    for d_in in (150, 2 * hidden):
        layer = {}
        for direction in ("fwd", "bwd"):
            key, k1, k2, k3, k4 = jax.random.split(key, 5)
            wih = jax.random.uniform(k1, (4 * hidden, d_in), jnp.float32, -bound, bound)
            whh = jax.random.uniform(k2, (4 * hidden, hidden), jnp.float32, -bound, bound)
            bih = jax.random.uniform(k3, (4 * hidden,), jnp.float32, -bound, bound)
            bhh = jax.random.uniform(k4, (4 * hidden,), jnp.float32, -bound, bound)
            layer[direction] = (wih, whh, bih, bhh)
        lstm.append(layer)

    key, k1, k2 = jax.random.split(key, 3)
    bound = 1.0 / math.sqrt(2 * hidden)
    w_out = jax.random.uniform(k1, (2, 2 * hidden), jnp.float32, -bound, bound)
    b_out = jax.random.uniform(k2, (2,), jnp.float32, -bound, bound)
    return dict(cnn=cnn, lstm=lstm, out=(w_out, b_out))


# TODO(synk): Dropout layers are identity here (eval-mode forward); training-mode
# stochastic dropout is not implemented.

if __name__ == "__main__":
    input_size = 8
    hidden = 64          # 2H = 128 -> lane-dense recurrent state
    B, L = 2, 1408       # CNN reduces 1408 -> T = 4 LSTM time steps

    key = jax.random.PRNGKey(0)
    k_params, k_x = jax.random.split(key)
    params = init_params(k_params, input_size, hidden)
    x = jax.random.normal(k_x, (B, L, input_size), jnp.float32)

    kparams = prepare_kernel_params(params, hidden, input_size)
    forward = build_forward(hidden, cnn_config(input_size))
    y = jax.block_until_ready(forward(x, kparams))

    assert y.shape == (B, 2), y.shape
    assert bool(jnp.all(jnp.isfinite(y)))

    # Cross-check against a pure-JAX/XLA reference with PyTorch semantics.
    y_ref = jax.block_until_ready(reference_forward(x, params, hidden))
    assert bool(jnp.allclose(y, y_ref, atol=2e-2, rtol=2e-2)), (y, y_ref)
    print("KERNEL_OK")
</pallas_src>

<mosaic_0001>
module attributes {stable_mosaic.version = 11 : i64} {
  func.func private @main(%arg0: i32) attributes {dimension_semantics = [#tpu.dimension_semantics<core_parallel>], iteration_bounds = array<i64: 2>, tpu.core_type = #tpu.core_type<sc_scalar_subcore>, window_params = []} {
    return
  }
}

module attributes {stable_mosaic.version = 11 : i64} {
  func.func private @main(%arg0: i32) attributes {dimension_semantics = [#tpu.dimension_semantics<core_parallel>], iteration_bounds = array<i64: 2>, tpu.core_type = #tpu.core_type<sc_scalar_subcore>, window_params = []} {
    return
  }
}

module attributes {stable_mosaic.version = 11 : i64} {
  func.func @_conv_mm_kernel(%arg0: i32, %arg1: memref<256x32xf32, #tpu.memory_space<vmem>>, %arg2: memref<32x128xf32, #tpu.memory_space<vmem>>, %arg3: memref<1x128xf32, #tpu.memory_space<vmem>>, %arg4: memref<1x128xf32, #tpu.memory_space<vmem>>, %arg5: memref<1x128xf32, #tpu.memory_space<vmem>>, %arg6: memref<256x128xf32, #tpu.memory_space<vmem>>) attributes {dimension_semantics = [#tpu.dimension_semantics<parallel>], iteration_bounds = array<i64: 3>, scalar_prefetch = 0 : i64, scratch_operands = 0 : i64, tpu.core_type = #tpu.core_type<tc>, window_params = [{transform_indices = @transform_0, window_bounds = array<i64: 256, 32>}, {pipeline_mode = #tpu.pipeline_mode<synchronous>, transform_indices = @transform_1, window_bounds = array<i64: 32, 128>}, {pipeline_mode = #tpu.pipeline_mode<synchronous>, transform_indices = @transform_2, window_bounds = array<i64: 1, 128>}, {pipeline_mode = #tpu.pipeline_mode<synchronous>, transform_indices = @transform_3, window_bounds = array<i64: 1, 128>}, {pipeline_mode = #tpu.pipeline_mode<synchronous>, transform_indices = @transform_4, window_bounds = array<i64: 1, 128>}, {transform_indices = @transform_5, window_bounds = array<i64: 256, 128>}]} {
    %c0 = arith.constant 0 : index
    %c0_0 = arith.constant 0 : index
    %0 = vector.load %arg1[%c0, %c0_0] : memref<256x32xf32, #tpu.memory_space<vmem>>, vector<256x32xf32>
    %c0_1 = arith.constant 0 : index
    %c0_2 = arith.constant 0 : index
    %1 = vector.load %arg2[%c0_1, %c0_2] : memref<32x128xf32, #tpu.memory_space<vmem>>, vector<32x128xf32>
    %cst = arith.constant dense<0.000000e+00> : vector<256x128xf32>
    %2 = tpu.matmul %0, %1, %cst {dimension_numbers = #tpu.dot_dimension_numbers<[1], [0], [0], [1], [0, 0, 1, 1], [], []>} : vector<256x32xf32>, vector<32x128xf32>, vector<256x128xf32> -> vector<256x128xf32>
    %c0_3 = arith.constant 0 : index
    %c0_4 = arith.constant 0 : index
    %3 = vector.load %arg3[%c0_3, %c0_4] : memref<1x128xf32, #tpu.memory_space<vmem>>, vector<1x128xf32>
    %4 = vector.broadcast %3 : vector<1x128xf32> to vector<256x128xf32>
    %5 = arith.addf %2, %4 : vector<256x128xf32>
    %cst_5 = arith.constant 0.000000e+00 : f32
    %6 = vector.broadcast %cst_5 : f32 to vector<256x128xf32>
    %7 = arith.maximumf %5, %6 : vector<256x128xf32>
    %c0_6 = arith.constant 0 : index
    %c0_7 = arith.constant 0 : index
    %8 = vector.load %arg4[%c0_6, %c0_7] : memref<1x128xf32, #tpu.memory_space<vmem>>, vector<1x128xf32>
    %9 = vector.broadcast %8 : vector<1x128xf32> to vector<256x128xf32>
    %10 = arith.mulf %7, %9 : vector<256x128xf32>
    %c0_8 = arith.constant 0 : index
    %c0_9 = arith.constant 0 : index
    %11 = vector.load %arg5[%c0_8, %c0_9] : memref<1x128xf32, #tpu.memory_space<vmem>>, vector<1x128xf32>
    %12 = vector.broadcast %11 : vector<1x128xf32> to vector<256x128xf32>
    %13 = arith.addf %10, %12 : vector<256x128xf32>
    %c0_10 = arith.constant 0 : index
    %c0_11 = arith.constant 0 : index
    %14 = vector.load %arg6[%c0_10, %c0_11] : memref<256x128xf32, #tpu.memory_space<vmem>>, vector<256x128xf32>
    tpu.vector_store %arg6[%c0_10, %c0_11], %13 {strides = array<i32>} : memref<256x128xf32, #tpu.memory_space<vmem>>, vector<256x128xf32>,
    return
  }
  func.func @transform_0(%arg0: i32) -> (i32, i32) {
    %c0_i32 = arith.constant 0 : i32
    %c0_i32_0 = arith.constant 0 : i32
    return %arg0, %c0_i32 : i32, i32
  }
  func.func @transform_1(%arg0: i32) -> (i32, i32) {
    %c0_i32 = arith.constant 0 : i32
    %c0_i32_0 = arith.constant 0 : i32
    %c0_i32_1 = arith.constant 0 : i32
    return %c0_i32, %c0_i32_0 : i32, i32
  }
  func.func @transform_2(%arg0: i32) -> (i32, i32) {
    %c0_i32 = arith.constant 0 : i32
    %c0_i32_0 = arith.constant 0 : i32
    %c0_i32_1 = arith.constant 0 : i32
    return %c0_i32, %c0_i32_0 : i32, i32
  }
  func.func @transform_3(%arg0: i32) -> (i32, i32) {
    %c0_i32 = arith.constant 0 : i32
    %c0_i32_0 = arith.constant 0 : i32
    %c0_i32_1 = arith.constant 0 : i32
    return %c0_i32, %c0_i32_0 : i32, i32
  }
  func.func @transform_4(%arg0: i32) -> (i32, i32) {
    %c0_i32 = arith.constant 0 : i32
    %c0_i32_0 = arith.constant 0 : i32
    %c0_i32_1 = arith.constant 0 : i32
    return %c0_i32, %c0_i32_0 : i32, i32
  }
  func.func @transform_5(%arg0: i32) -> (i32, i32) {
    %c0_i32 = arith.constant 0 : i32
    %c0_i32_0 = arith.constant 0 : i32
    return %arg0, %c0_i32 : i32, i32
  }
}

module attributes {stable_mosaic.version = 11 : i64} {
  func.func @_conv_mm_kernel(%arg0: i32, %arg1: memref<176x512xf32, #tpu.memory_space<vmem>>, %arg2: memref<512x128xf32, #tpu.memory_space<vmem>>, %arg3: memref<1x128xf32, #tpu.memory_space<vmem>>, %arg4: memref<1x128xf32, #tpu.memory_space<vmem>>, %arg5: memref<1x128xf32, #tpu.memory_space<vmem>>, %arg6: memref<176x128xf32, #tpu.memory_space<vmem>>) attributes {dimension_semantics = [#tpu.dimension_semantics<parallel>], iteration_bounds = array<i64: 1>, scalar_prefetch = 0 : i64, scratch_operands = 0 : i64, tpu.core_type = #tpu.core_type<tc>, window_params = [{transform_indices = @transform_0, window_bounds = array<i64: 176, 512>}, {pipeline_mode = #tpu.pipeline_mode<synchronous>, transform_indices = @transform_1, window_bounds = array<i64: 512, 128>}, {pipeline_mode = #tpu.pipeline_mode<synchronous>, transform_indices = @transform_2, window_bounds = array<i64: 1, 128>}, {pipeline_mode = #tpu.pipeline_mode<synchronous>, transform_indices = @transform_3, window_bounds = array<i64: 1, 128>}, {pipeline_mode = #tpu.pipeline_mode<synchronous>, transform_indices = @transform_4, window_bounds = array<i64: 1, 128>}, {transform_indices = @transform_5, window_bounds = array<i64: 176, 128>}]} {
    %c0 = arith.constant 0 : index
    %c0_0 = arith.constant 0 : index
    %0 = vector.load %arg1[%c0, %c0_0] : memref<176x512xf32, #tpu.memory_space<vmem>>, vector<176x512xf32>
    %c0_1 = arith.constant 0 : index
    %c0_2 = arith.constant 0 : index
    %1 = vector.load %arg2[%c0_1, %c0_2] : memref<512x128xf32, #tpu.memory_space<vmem>>, vector<512x128xf32>
    %cst = arith.constant dense<0.000000e+00> : vector<176x128xf32>
    %2 = tpu.matmul %0, %1, %cst {dimension_numbers = #tpu.dot_dimension_numbers<[1], [0], [0], [1], [0, 0, 1, 1], [], []>} : vector<176x512xf32>, vector<512x128xf32>, vector<176x128xf32> -> vector<176x128xf32>
    %c0_3 = arith.constant 0 : index
    %c0_4 = arith.constant 0 : index
    %3 = vector.load %arg3[%c0_3, %c0_4] : memref<1x128xf32, #tpu.memory_space<vmem>>, vector<1x128xf32>
    %4 = vector.broadcast %3 : vector<1x128xf32> to vector<176x128xf32>
    %5 = arith.addf %2, %4 : vector<176x128xf32>
    %cst_5 = arith.constant 0.000000e+00 : f32
    %6 = vector.broadcast %cst_5 : f32 to vector<176x128xf32>
    %7 = arith.maximumf %5, %6 : vector<176x128xf32>
    %c0_6 = arith.constant 0 : index
    %c0_7 = arith.constant 0 : index
    %8 = vector.load %arg4[%c0_6, %c0_7] : memref<1x128xf32, #tpu.memory_space<vmem>>, vector<1x128xf32>
    %9 = vector.broadcast %8 : vector<1x128xf32> to vector<176x128xf32>
    %10 = arith.mulf %7, %9 : vector<176x128xf32>
    %c0_8 = arith.constant 0 : index
    %c0_9 = arith.constant 0 : index
    %11 = vector.load %arg5[%c0_8, %c0_9] : memref<1x128xf32, #tpu.memory_space<vmem>>, vector<1x128xf32>
    %12 = vector.broadcast %11 : vector<1x128xf32> to vector<176x128xf32>
    %13 = arith.addf %10, %12 : vector<176x128xf32>
    %c0_10 = arith.constant 0 : index
    %c0_11 = arith.constant 0 : index
    %14 = vector.load %arg6[%c0_10, %c0_11] : memref<176x128xf32, #tpu.memory_space<vmem>>, vector<176x128xf32>
    tpu.vector_store %arg6[%c0_10, %c0_11], %13 {strides = array<i32>} : memref<176x128xf32, #tpu.memory_space<vmem>>, vector<176x128xf32>,
    return
  }
  func.func @transform_0(%arg0: i32) -> (i32, i32) {
    %c0_i32 = arith.constant 0 : i32
    %c0_i32_0 = arith.constant 0 : i32
    return %arg0, %c0_i32 : i32, i32
  }
  func.func @transform_1(%arg0: i32) -> (i32, i32) {
    %c0_i32 = arith.constant 0 : i32
    %c0_i32_0 = arith.constant 0 : i32
    %c0_i32_1 = arith.constant 0 : i32
    return %c0_i32, %c0_i32_0 : i32, i32
  }
  func.func @transform_2(%arg0: i32) -> (i32, i32) {
    %c0_i32 = arith.constant 0 : i32
    %c0_i32_0 = arith.constant 0 : i32
    %c0_i32_1 = arith.constant 0 : i32
    return %c0_i32, %c0_i32_0 : i32, i32
  }
  func.func @transform_3(%arg0: i32) -> (i32, i32) {
    %c0_i32 = arith.constant 0 : i32
    %c0_i32_0 = arith.constant 0 : i32
    %c0_i32_1 = arith.constant 0 : i32
    return %c0_i32, %c0_i32_0 : i32, i32
  }
  func.func @transform_4(%arg0: i32) -> (i32, i32) {
    %c0_i32 = arith.constant 0 : i32
    %c0_i32_0 = arith.constant 0 : i32
    %c0_i32_1 = arith.constant 0 : i32
    return %c0_i32, %c0_i32_0 : i32, i32
  }
  func.func @transform_5(%arg0: i32) -> (i32, i32) {
    %c0_i32 = arith.constant 0 : i32
    %c0_i32_0 = arith.constant 0 : i32
    return %arg0, %c0_i32 : i32, i32
  }
}

module attributes {stable_mosaic.version = 11 : i64} {
  func.func @_conv_mm_kernel(%arg0: i32, %arg1: memref<88x512xf32, #tpu.memory_space<vmem>>, %arg2: memref<512x128xf32, #tpu.memory_space<vmem>>, %arg3: memref<1x128xf32, #tpu.memory_space<vmem>>, %arg4: memref<1x128xf32, #tpu.memory_space<vmem>>, %arg5: memref<1x128xf32, #tpu.memory_space<vmem>>, %arg6: memref<88x128xf32, #tpu.memory_space<vmem>>) attributes {dimension_semantics = [#tpu.dimension_semantics<parallel>], iteration_bounds = array<i64: 1>, scalar_prefetch = 0 : i64, scratch_operands = 0 : i64, tpu.core_type = #tpu.core_type<tc>, window_params = [{transform_indices = @transform_0, window_bounds = array<i64: 88, 512>}, {pipeline_mode = #tpu.pipeline_mode<synchronous>, transform_indices = @transform_1, window_bounds = array<i64: 512, 128>}, {pipeline_mode = #tpu.pipeline_mode<synchronous>, transform_indices = @transform_2, window_bounds = array<i64: 1, 128>}, {pipeline_mode = #tpu.pipeline_mode<synchronous>, transform_indices = @transform_3, window_bounds = array<i64: 1, 128>}, {pipeline_mode = #tpu.pipeline_mode<synchronous>, transform_indices = @transform_4, window_bounds = array<i64: 1, 128>}, {transform_indices = @transform_5, window_bounds = array<i64: 88, 128>}]} {
    %c0 = arith.constant 0 : index
    %c0_0 = arith.constant 0 : index
    %0 = vector.load %arg1[%c0, %c0_0] : memref<88x512xf32, #tpu.memory_space<vmem>>, vector<88x512xf32>
    %c0_1 = arith.constant 0 : index
    %c0_2 = arith.constant 0 : index
    %1 = vector.load %arg2[%c0_1, %c0_2] : memref<512x128xf32, #tpu.memory_space<vmem>>, vector<512x128xf32>
    %cst = arith.constant dense<0.000000e+00> : vector<88x128xf32>
    %2 = tpu.matmul %0, %1, %cst {dimension_numbers = #tpu.dot_dimension_numbers<[1], [0], [0], [1], [0, 0, 1, 1], [], []>} : vector<88x512xf32>, vector<512x128xf32>, vector<88x128xf32> -> vector<88x128xf32>
    %c0_3 = arith.constant 0 : index
    %c0_4 = arith.constant 0 : index
    %3 = vector.load %arg3[%c0_3, %c0_4] : memref<1x128xf32, #tpu.memory_space<vmem>>, vector<1x128xf32>
    %4 = vector.broadcast %3 : vector<1x128xf32> to vector<88x128xf32>
    %5 = arith.addf %2, %4 : vector<88x128xf32>
    %cst_5 = arith.constant 0.000000e+00 : f32
    %6 = vector.broadcast %cst_5 : f32 to vector<88x128xf32>
    %7 = arith.maximumf %5, %6 : vector<88x128xf32>
    %c0_6 = arith.constant 0 : index
    %c0_7 = arith.constant 0 : index
    %8 = vector.load %arg4[%c0_6, %c0_7] : memref<1x128xf32, #tpu.memory_space<vmem>>, vector<1x128xf32>
    %9 = vector.broadcast %8 : vector<1x128xf32> to vector<88x128xf32>
    %10 = arith.mulf %7, %9 : vector<88x128xf32>
    %c0_8 = arith.constant 0 : index
    %c0_9 = arith.constant 0 : index
    %11 = vector.load %arg5[%c0_8, %c0_9] : memref<1x128xf32, #tpu.memory_space<vmem>>, vector<1x128xf32>
    %12 = vector.broadcast %11 : vector<1x128xf32> to vector<88x128xf32>
    %13 = arith.addf %10, %12 : vector<88x128xf32>
    %c0_10 = arith.constant 0 : index
    %c0_11 = arith.constant 0 : index
    %14 = vector.load %arg6[%c0_10, %c0_11] : memref<88x128xf32, #tpu.memory_space<vmem>>, vector<88x128xf32>
    tpu.vector_store %arg6[%c0_10, %c0_11], %13 {strides = array<i32>} : memref<88x128xf32, #tpu.memory_space<vmem>>, vector<88x128xf32>,
    return
  }
  func.func @transform_0(%arg0: i32) -> (i32, i32) {
    %c0_i32 = arith.constant 0 : i32
    %c0_i32_0 = arith.constant 0 : i32
    return %arg0, %c0_i32 : i32, i32
  }
  func.func @transform_1(%arg0: i32) -> (i32, i32) {
    %c0_i32 = arith.constant 0 : i32
    %c0_i32_0 = arith.constant 0 : i32
    %c0_i32_1 = arith.constant 0 : i32
    return %c0_i32, %c0_i32_0 : i32, i32
  }
  func.func @transform_2(%arg0: i32) -> (i32, i32) {
    %c0_i32 = arith.constant 0 : i32
    %c0_i32_0 = arith.constant 0 : i32
    %c0_i32_1 = arith.constant 0 : i32
    return %c0_i32, %c0_i32_0 : i32, i32
  }
  func.func @transform_3(%arg0: i32) -> (i32, i32) {
    %c0_i32 = arith.constant 0 : i32
    %c0_i32_0 = arith.constant 0 : i32
    %c0_i32_1 = arith.constant 0 : i32
    return %c0_i32, %c0_i32_0 : i32, i32
  }
  func.func @transform_4(%arg0: i32) -> (i32, i32) {
    %c0_i32 = arith.constant 0 : i32
    %c0_i32_0 = arith.constant 0 : i32
    %c0_i32_1 = arith.constant 0 : i32
    return %c0_i32, %c0_i32_0 : i32, i32
  }
  func.func @transform_5(%arg0: i32) -> (i32, i32) {
    %c0_i32 = arith.constant 0 : i32
    %c0_i32_0 = arith.constant 0 : i32
    return %arg0, %c0_i32 : i32, i32
  }
}

module attributes {stable_mosaic.version = 11 : i64} {
  func.func @_conv_mm_kernel(%arg0: i32, %arg1: memref<48x512xf32, #tpu.memory_space<vmem>>, %arg2: memref<512x128xf32, #tpu.memory_space<vmem>>, %arg3: memref<1x128xf32, #tpu.memory_space<vmem>>, %arg4: memref<1x128xf32, #tpu.memory_space<vmem>>, %arg5: memref<1x128xf32, #tpu.memory_space<vmem>>, %arg6: memref<48x128xf32, #tpu.memory_space<vmem>>) attributes {dimension_semantics = [#tpu.dimension_semantics<parallel>], iteration_bounds = array<i64: 1>, scalar_prefetch = 0 : i64, scratch_operands = 0 : i64, tpu.core_type = #tpu.core_type<tc>, window_params = [{transform_indices = @transform_0, window_bounds = array<i64: 48, 512>}, {pipeline_mode = #tpu.pipeline_mode<synchronous>, transform_indices = @transform_1, window_bounds = array<i64: 512, 128>}, {pipeline_mode = #tpu.pipeline_mode<synchronous>, transform_indices = @transform_2, window_bounds = array<i64: 1, 128>}, {pipeline_mode = #tpu.pipeline_mode<synchronous>, transform_indices = @transform_3, window_bounds = array<i64: 1, 128>}, {pipeline_mode = #tpu.pipeline_mode<synchronous>, transform_indices = @transform_4, window_bounds = array<i64: 1, 128>}, {transform_indices = @transform_5, window_bounds = array<i64: 48, 128>}]} {
    %c0 = arith.constant 0 : index
    %c0_0 = arith.constant 0 : index
    %0 = vector.load %arg1[%c0, %c0_0] : memref<48x512xf32, #tpu.memory_space<vmem>>, vector<48x512xf32>
    %c0_1 = arith.constant 0 : index
    %c0_2 = arith.constant 0 : index
    %1 = vector.load %arg2[%c0_1, %c0_2] : memref<512x128xf32, #tpu.memory_space<vmem>>, vector<512x128xf32>
    %cst = arith.constant dense<0.000000e+00> : vector<48x128xf32>
    %2 = tpu.matmul %0, %1, %cst {dimension_numbers = #tpu.dot_dimension_numbers<[1], [0], [0], [1], [0, 0, 1, 1], [], []>} : vector<48x512xf32>, vector<512x128xf32>, vector<48x128xf32> -> vector<48x128xf32>
    %c0_3 = arith.constant 0 : index
    %c0_4 = arith.constant 0 : index
    %3 = vector.load %arg3[%c0_3, %c0_4] : memref<1x128xf32, #tpu.memory_space<vmem>>, vector<1x128xf32>
    %4 = vector.broadcast %3 : vector<1x128xf32> to vector<48x128xf32>
    %5 = arith.addf %2, %4 : vector<48x128xf32>
    %cst_5 = arith.constant 0.000000e+00 : f32
    %6 = vector.broadcast %cst_5 : f32 to vector<48x128xf32>
    %7 = arith.maximumf %5, %6 : vector<48x128xf32>
    %c0_6 = arith.constant 0 : index
    %c0_7 = arith.constant 0 : index
    %8 = vector.load %arg4[%c0_6, %c0_7] : memref<1x128xf32, #tpu.memory_space<vmem>>, vector<1x128xf32>
    %9 = vector.broadcast %8 : vector<1x128xf32> to vector<48x128xf32>
    %10 = arith.mulf %7, %9 : vector<48x128xf32>
    %c0_8 = arith.constant 0 : index
    %c0_9 = arith.constant 0 : index
    %11 = vector.load %arg5[%c0_8, %c0_9] : memref<1x128xf32, #tpu.memory_space<vmem>>, vector<1x128xf32>
    %12 = vector.broadcast %11 : vector<1x128xf32> to vector<48x128xf32>
    %13 = arith.addf %10, %12 : vector<48x128xf32>
    %c0_10 = arith.constant 0 : index
    %c0_11 = arith.constant 0 : index
    %14 = vector.load %arg6[%c0_10, %c0_11] : memref<48x128xf32, #tpu.memory_space<vmem>>, vector<48x128xf32>
    tpu.vector_store %arg6[%c0_10, %c0_11], %13 {strides = array<i32>} : memref<48x128xf32, #tpu.memory_space<vmem>>, vector<48x128xf32>,
    return
  }
  func.func @transform_0(%arg0: i32) -> (i32, i32) {
    %c0_i32 = arith.constant 0 : i32
    %c0_i32_0 = arith.constant 0 : i32
    return %arg0, %c0_i32 : i32, i32
  }
  func.func @transform_1(%arg0: i32) -> (i32, i32) {
    %c0_i32 = arith.constant 0 : i32
    %c0_i32_0 = arith.constant 0 : i32
    %c0_i32_1 = arith.constant 0 : i32
    return %c0_i32, %c0_i32_0 : i32, i32
  }
  func.func @transform_2(%arg0: i32) -> (i32, i32) {
    %c0_i32 = arith.constant 0 : i32
    %c0_i32_0 = arith.constant 0 : i32
    %c0_i32_1 = arith.constant 0 : i32
    return %c0_i32, %c0_i32_0 : i32, i32
  }
  func.func @transform_3(%arg0: i32) -> (i32, i32) {
    %c0_i32 = arith.constant 0 : i32
    %c0_i32_0 = arith.constant 0 : i32
    %c0_i32_1 = arith.constant 0 : i32
    return %c0_i32, %c0_i32_0 : i32, i32
  }
  func.func @transform_4(%arg0: i32) -> (i32, i32) {
    %c0_i32 = arith.constant 0 : i32
    %c0_i32_0 = arith.constant 0 : i32
    %c0_i32_1 = arith.constant 0 : i32
    return %c0_i32, %c0_i32_0 : i32, i32
  }
  func.func @transform_5(%arg0: i32) -> (i32, i32) {
    %c0_i32 = arith.constant 0 : i32
    %c0_i32_0 = arith.constant 0 : i32
    return %arg0, %c0_i32 : i32, i32
  }
}

module attributes {stable_mosaic.version = 11 : i64} {
  func.func @_conv_mm_kernel(%arg0: i32, %arg1: memref<24x512xf32, #tpu.memory_space<vmem>>, %arg2: memref<512x128xf32, #tpu.memory_space<vmem>>, %arg3: memref<1x128xf32, #tpu.memory_space<vmem>>, %arg4: memref<1x128xf32, #tpu.memory_space<vmem>>, %arg5: memref<1x128xf32, #tpu.memory_space<vmem>>, %arg6: memref<24x128xf32, #tpu.memory_space<vmem>>) attributes {dimension_semantics = [#tpu.dimension_semantics<parallel>], iteration_bounds = array<i64: 1>, scalar_prefetch = 0 : i64, scratch_operands = 0 : i64, tpu.core_type = #tpu.core_type<tc>, window_params = [{transform_indices = @transform_0, window_bounds = array<i64: 24, 512>}, {pipeline_mode = #tpu.pipeline_mode<synchronous>, transform_indices = @transform_1, window_bounds = array<i64: 512, 128>}, {pipeline_mode = #tpu.pipeline_mode<synchronous>, transform_indices = @transform_2, window_bounds = array<i64: 1, 128>}, {pipeline_mode = #tpu.pipeline_mode<synchronous>, transform_indices = @transform_3, window_bounds = array<i64: 1, 128>}, {pipeline_mode = #tpu.pipeline_mode<synchronous>, transform_indices = @transform_4, window_bounds = array<i64: 1, 128>}, {transform_indices = @transform_5, window_bounds = array<i64: 24, 128>}]} {
    %c0 = arith.constant 0 : index
    %c0_0 = arith.constant 0 : index
    %0 = vector.load %arg1[%c0, %c0_0] : memref<24x512xf32, #tpu.memory_space<vmem>>, vector<24x512xf32>
    %c0_1 = arith.constant 0 : index
    %c0_2 = arith.constant 0 : index
    %1 = vector.load %arg2[%c0_1, %c0_2] : memref<512x128xf32, #tpu.memory_space<vmem>>, vector<512x128xf32>
    %cst = arith.constant dense<0.000000e+00> : vector<24x128xf32>
    %2 = tpu.matmul %0, %1, %cst {dimension_numbers = #tpu.dot_dimension_numbers<[1], [0], [0], [1], [0, 0, 1, 1], [], []>} : vector<24x512xf32>, vector<512x128xf32>, vector<24x128xf32> -> vector<24x128xf32>
    %c0_3 = arith.constant 0 : index
    %c0_4 = arith.constant 0 : index
    %3 = vector.load %arg3[%c0_3, %c0_4] : memref<1x128xf32, #tpu.memory_space<vmem>>, vector<1x128xf32>
    %4 = vector.broadcast %3 : vector<1x128xf32> to vector<24x128xf32>
    %5 = arith.addf %2, %4 : vector<24x128xf32>
    %cst_5 = arith.constant 0.000000e+00 : f32
    %6 = vector.broadcast %cst_5 : f32 to vector<24x128xf32>
    %7 = arith.maximumf %5, %6 : vector<24x128xf32>
    %c0_6 = arith.constant 0 : index
    %c0_7 = arith.constant 0 : index
    %8 = vector.load %arg4[%c0_6, %c0_7] : memref<1x128xf32, #tpu.memory_space<vmem>>, vector<1x128xf32>
    %9 = vector.broadcast %8 : vector<1x128xf32> to vector<24x128xf32>
    %10 = arith.mulf %7, %9 : vector<24x128xf32>
    %c0_8 = arith.constant 0 : index
    %c0_9 = arith.constant 0 : index
    %11 = vector.load %arg5[%c0_8, %c0_9] : memref<1x128xf32, #tpu.memory_space<vmem>>, vector<1x128xf32>
    %12 = vector.broadcast %11 : vector<1x128xf32> to vector<24x128xf32>
    %13 = arith.addf %10, %12 : vector<24x128xf32>
    %c0_10 = arith.constant 0 : index
    %c0_11 = arith.constant 0 : index
    %14 = vector.load %arg6[%c0_10, %c0_11] : memref<24x128xf32, #tpu.memory_space<vmem>>, vector<24x128xf32>
    tpu.vector_store %arg6[%c0_10, %c0_11], %13 {strides = array<i32>} : memref<24x128xf32, #tpu.memory_space<vmem>>, vector<24x128xf32>,
    return
  }
  func.func @transform_0(%arg0: i32) -> (i32, i32) {
    %c0_i32 = arith.constant 0 : i32
    %c0_i32_0 = arith.constant 0 : i32
    return %arg0, %c0_i32 : i32, i32
  }
  func.func @transform_1(%arg0: i32) -> (i32, i32) {
    %c0_i32 = arith.constant 0 : i32
    %c0_i32_0 = arith.constant 0 : i32
    %c0_i32_1 = arith.constant 0 : i32
    return %c0_i32, %c0_i32_0 : i32, i32
  }
  func.func @transform_2(%arg0: i32) -> (i32, i32) {
    %c0_i32 = arith.constant 0 : i32
    %c0_i32_0 = arith.constant 0 : i32
    %c0_i32_1 = arith.constant 0 : i32
    return %c0_i32, %c0_i32_0 : i32, i32
  }
  func.func @transform_3(%arg0: i32) -> (i32, i32) {
    %c0_i32 = arith.constant 0 : i32
    %c0_i32_0 = arith.constant 0 : i32
    %c0_i32_1 = arith.constant 0 : i32
    return %c0_i32, %c0_i32_0 : i32, i32
  }
  func.func @transform_4(%arg0: i32) -> (i32, i32) {
    %c0_i32 = arith.constant 0 : i32
    %c0_i32_0 = arith.constant 0 : i32
    %c0_i32_1 = arith.constant 0 : i32
    return %c0_i32, %c0_i32_0 : i32, i32
  }
  func.func @transform_5(%arg0: i32) -> (i32, i32) {
    %c0_i32 = arith.constant 0 : i32
    %c0_i32_0 = arith.constant 0 : i32
    return %arg0, %c0_i32 : i32, i32
  }
}

module attributes {stable_mosaic.version = 11 : i64} {
  func.func @_conv_mm_kernel(%arg0: i32, %arg1: memref<8x512xf32, #tpu.memory_space<vmem>>, %arg2: memref<512x256xf32, #tpu.memory_space<vmem>>, %arg3: memref<1x256xf32, #tpu.memory_space<vmem>>, %arg4: memref<1x256xf32, #tpu.memory_space<vmem>>, %arg5: memref<1x256xf32, #tpu.memory_space<vmem>>, %arg6: memref<8x256xf32, #tpu.memory_space<vmem>>) attributes {dimension_semantics = [#tpu.dimension_semantics<parallel>], iteration_bounds = array<i64: 1>, scalar_prefetch = 0 : i64, scratch_operands = 0 : i64, tpu.core_type = #tpu.core_type<tc>, window_params = [{transform_indices = @transform_0, window_bounds = array<i64: 8, 512>}, {pipeline_mode = #tpu.pipeline_mode<synchronous>, transform_indices = @transform_1, window_bounds = array<i64: 512, 256>}, {pipeline_mode = #tpu.pipeline_mode<synchronous>, transform_indices = @transform_2, window_bounds = array<i64: 1, 256>}, {pipeline_mode = #tpu.pipeline_mode<synchronous>, transform_indices = @transform_3, window_bounds = array<i64: 1, 256>}, {pipeline_mode = #tpu.pipeline_mode<synchronous>, transform_indices = @transform_4, window_bounds = array<i64: 1, 256>}, {transform_indices = @transform_5, window_bounds = array<i64: 8, 256>}]} {
    %c0 = arith.constant 0 : index
    %c0_0 = arith.constant 0 : index
    %0 = vector.load %arg1[%c0, %c0_0] : memref<8x512xf32, #tpu.memory_space<vmem>>, vector<8x512xf32>
    %c0_1 = arith.constant 0 : index
    %c0_2 = arith.constant 0 : index
    %1 = vector.load %arg2[%c0_1, %c0_2] : memref<512x256xf32, #tpu.memory_space<vmem>>, vector<512x256xf32>
    %cst = arith.constant dense<0.000000e+00> : vector<8x256xf32>
    %2 = tpu.matmul %0, %1, %cst {dimension_numbers = #tpu.dot_dimension_numbers<[1], [0], [0], [1], [0, 0, 1, 1], [], []>} : vector<8x512xf32>, vector<512x256xf32>, vector<8x256xf32> -> vector<8x256xf32>
    %c0_3 = arith.constant 0 : index
    %c0_4 = arith.constant 0 : index
    %3 = vector.load %arg3[%c0_3, %c0_4] : memref<1x256xf32, #tpu.memory_space<vmem>>, vector<1x256xf32>
    %4 = vector.broadcast %3 : vector<1x256xf32> to vector<8x256xf32>
    %5 = arith.addf %2, %4 : vector<8x256xf32>
    %cst_5 = arith.constant 0.000000e+00 : f32
    %6 = vector.broadcast %cst_5 : f32 to vector<8x256xf32>
    %7 = arith.maximumf %5, %6 : vector<8x256xf32>
    %c0_6 = arith.constant 0 : index
    %c0_7 = arith.constant 0 : index
    %8 = vector.load %arg4[%c0_6, %c0_7] : memref<1x256xf32, #tpu.memory_space<vmem>>, vector<1x256xf32>
    %9 = vector.broadcast %8 : vector<1x256xf32> to vector<8x256xf32>
    %10 = arith.mulf %7, %9 : vector<8x256xf32>
    %c0_8 = arith.constant 0 : index
    %c0_9 = arith.constant 0 : index
    %11 = vector.load %arg5[%c0_8, %c0_9] : memref<1x256xf32, #tpu.memory_space<vmem>>, vector<1x256xf32>
    %12 = vector.broadcast %11 : vector<1x256xf32> to vector<8x256xf32>
    %13 = arith.addf %10, %12 : vector<8x256xf32>
    %c0_10 = arith.constant 0 : index
    %c0_11 = arith.constant 0 : index
    %14 = vector.load %arg6[%c0_10, %c0_11] : memref<8x256xf32, #tpu.memory_space<vmem>>, vector<8x256xf32>
    tpu.vector_store %arg6[%c0_10, %c0_11], %13 {strides = array<i32>} : memref<8x256xf32, #tpu.memory_space<vmem>>, vector<8x256xf32>,
    return
  }
  func.func @transform_0(%arg0: i32) -> (i32, i32) {
    %c0_i32 = arith.constant 0 : i32
    %c0_i32_0 = arith.constant 0 : i32
    return %arg0, %c0_i32 : i32, i32
  }
  func.func @transform_1(%arg0: i32) -> (i32, i32) {
    %c0_i32 = arith.constant 0 : i32
    %c0_i32_0 = arith.constant 0 : i32
    %c0_i32_1 = arith.constant 0 : i32
    return %c0_i32, %c0_i32_0 : i32, i32
  }
  func.func @transform_2(%arg0: i32) -> (i32, i32) {
    %c0_i32 = arith.constant 0 : i32
    %c0_i32_0 = arith.constant 0 : i32
    %c0_i32_1 = arith.constant 0 : i32
    return %c0_i32, %c0_i32_0 : i32, i32
  }
  func.func @transform_3(%arg0: i32) -> (i32, i32) {
    %c0_i32 = arith.constant 0 : i32
    %c0_i32_0 = arith.constant 0 : i32
    %c0_i32_1 = arith.constant 0 : i32
    return %c0_i32, %c0_i32_0 : i32, i32
  }
  func.func @transform_4(%arg0: i32) -> (i32, i32) {
    %c0_i32 = arith.constant 0 : i32
    %c0_i32_0 = arith.constant 0 : i32
    %c0_i32_1 = arith.constant 0 : i32
    return %c0_i32, %c0_i32_0 : i32, i32
  }
  func.func @transform_5(%arg0: i32) -> (i32, i32) {
    %c0_i32 = arith.constant 0 : i32
    %c0_i32_0 = arith.constant 0 : i32
    return %arg0, %c0_i32 : i32, i32
  }
}

module attributes {stable_mosaic.version = 11 : i64} {
  func.func @_bilstm_head_kernel(%arg0: memref<8x256xf32, #tpu.memory_space<vmem>>, %arg1: memref<256x512xf32, #tpu.memory_space<vmem>>, %arg2: memref<256x512xf32, #tpu.memory_space<vmem>>, %arg3: memref<128x512xf32, #tpu.memory_space<vmem>>, %arg4: memref<1x512xf32, #tpu.memory_space<vmem>>, %arg5: memref<128x512xf32, #tpu.memory_space<vmem>>, %arg6: memref<128x512xf32, #tpu.memory_space<vmem>>, %arg7: memref<128x512xf32, #tpu.memory_space<vmem>>, %arg8: memref<1x512xf32, #tpu.memory_space<vmem>>, %arg9: memref<128x2xf32, #tpu.memory_space<vmem>>, %arg10: memref<1x2xf32, #tpu.memory_space<vmem>>, %arg11: memref<2x2xf32, #tpu.memory_space<vmem>>, %arg12: memref<8x512xf32, #tpu.memory_space<vmem>>, %arg13: memref<8x512xf32, #tpu.memory_space<vmem>>, %arg14: memref<8x128xf32, #tpu.memory_space<vmem>>, %arg15: memref<8x512xf32, #tpu.memory_space<vmem>>, %arg16: memref<8x512xf32, #tpu.memory_space<vmem>>) attributes {dimension_semantics = [], scalar_prefetch = 0 : i64, scratch_operands = 5 : i64, tpu.core_type = #tpu.core_type<tc>} {
    %cst = arith.constant 0.000000e+00 : f32
    %0 = vector.broadcast %cst : f32 to vector<2x128xf32>
    %c0 = arith.constant 0 : index
    %c0_0 = arith.constant 0 : index
    %1 = vector.load %arg0[%c0, %c0_0] : memref<8x256xf32, #tpu.memory_space<vmem>>, vector<8x256xf32>
    %c0_1 = arith.constant 0 : index
    %c0_2 = arith.constant 0 : index
    %2 = vector.load %arg1[%c0_1, %c0_2] : memref<256x512xf32, #tpu.memory_space<vmem>>, vector<256x512xf32>
    %cst_3 = arith.constant dense<0.000000e+00> : vector<8x512xf32>
    %3 = tpu.matmul %1, %2, %cst_3 {dimension_numbers = #tpu.dot_dimension_numbers<[1], [0], [0], [1], [0, 0, 1, 1], [], []>} : vector<8x256xf32>, vector<256x512xf32>, vector<8x512xf32> -> vector<8x512xf32>
    %c0_4 = arith.constant 0 : index
    %c0_5 = arith.constant 0 : index
    %4 = vector.load %arg12[%c0_4, %c0_5] : memref<8x512xf32, #tpu.memory_space<vmem>>, vector<8x512xf32>
    tpu.vector_store %arg12[%c0_4, %c0_5], %3 {strides = array<i32>} : memref<8x512xf32, #tpu.memory_space<vmem>>, vector<8x512xf32>,
    %c0_6 = arith.constant 0 : index
    %c0_7 = arith.constant 0 : index
    %5 = vector.load %arg2[%c0_6, %c0_7] : memref<256x512xf32, #tpu.memory_space<vmem>>, vector<256x512xf32>
    %cst_8 = arith.constant dense<0.000000e+00> : vector<8x512xf32>
    %6 = tpu.matmul %1, %5, %cst_8 {dimension_numbers = #tpu.dot_dimension_numbers<[1], [0], [0], [1], [0, 0, 1, 1], [], []>} : vector<8x256xf32>, vector<256x512xf32>, vector<8x512xf32> -> vector<8x512xf32>
    %c0_9 = arith.constant 0 : index
    %c0_10 = arith.constant 0 : index
    %7 = vector.load %arg13[%c0_9, %c0_10] : memref<8x512xf32, #tpu.memory_space<vmem>>, vector<8x512xf32>
    tpu.vector_store %arg13[%c0_9, %c0_10], %6 {strides = array<i32>} : memref<8x512xf32, #tpu.memory_space<vmem>>, vector<8x512xf32>,
    %c0_11 = arith.constant 0 : index
    %c0_12 = arith.constant 0 : index
    %8 = vector.load %arg12[%c0_11, %c0_12] : memref<8x512xf32, #tpu.memory_space<vmem>>, vector<2x512xf32>
    %c6 = arith.constant 6 : index
    %c0_13 = arith.constant 0 : index
    %9 = vector.load %arg13[%c6, %c0_13] : memref<8x512xf32, #tpu.memory_space<vmem>>, vector<2x512xf32>
    %10 = arith.addf %8, %9 : vector<2x512xf32>
    %c0_14 = arith.constant 0 : index
    %c0_15 = arith.constant 0 : index
    %11 = vector.load %arg3[%c0_14, %c0_15] : memref<128x512xf32, #tpu.memory_space<vmem>>, vector<128x512xf32>
    %cst_16 = arith.constant dense<0.000000e+00> : vector<2x512xf32>
    %12 = tpu.matmul %0, %11, %cst_16 {dimension_numbers = #tpu.dot_dimension_numbers<[1], [0], [0], [1], [0, 0, 1, 1], [], []>} : vector<2x128xf32>, vector<128x512xf32>, vector<2x512xf32> -> vector<2x512xf32>
    %13 = arith.addf %10, %12 : vector<2x512xf32>
    %c0_17 = arith.constant 0 : index
    %c0_18 = arith.constant 0 : index
    %14 = vector.load %arg4[%c0_17, %c0_18] : memref<1x512xf32, #tpu.memory_space<vmem>>, vector<1x512xf32>
    %15 = vector.broadcast %14 : vector<1x512xf32> to vector<2x512xf32>
    %16 = arith.addf %13, %15 : vector<2x512xf32>
    %17 = vector.extract_strided_slice %16 {offsets = [0, 0], sizes = [2, 384], strides = [1, 1]} : vector<2x512xf32> to vector<2x384xf32>
    %18 = arith.negf %17 : vector<2x384xf32>
    %19 = math.exp %18 : vector<2x384xf32>
    %cst_19 = arith.constant 1.000000e+00 : f32
    %20 = vector.broadcast %cst_19 : f32 to vector<2x384xf32>
    %21 = arith.addf %20, %19 : vector<2x384xf32>
    %22 = arith.divf %20, %21 : vector<2x384xf32>
    %23 = vector.extract_strided_slice %16 {offsets = [0, 384], sizes = [2, 128], strides = [1, 1]} : vector<2x512xf32> to vector<2x128xf32>
    %24 = math.tanh %23 : vector<2x128xf32>
    %25 = vector.extract_strided_slice %22 {offsets = [0, 0], sizes = [2, 128], strides = [1, 1]} : vector<2x384xf32> to vector<2x128xf32>
    %26 = vector.extract_strided_slice %22 {offsets = [0, 128], sizes = [2, 128], strides = [1, 1]} : vector<2x384xf32> to vector<2x128xf32>
    %27 = vector.extract_strided_slice %22 {offsets = [0, 256], sizes = [2, 128], strides = [1, 1]} : vector<2x384xf32> to vector<2x128xf32>
    %28 = arith.mulf %26, %0 : vector<2x128xf32>
    %29 = arith.mulf %25, %24 : vector<2x128xf32>
    %30 = arith.addf %28, %29 : vector<2x128xf32>
    %31 = math.tanh %30 : vector<2x128xf32>
    %32 = arith.mulf %27, %31 : vector<2x128xf32>
    %c0_20 = arith.constant 0 : index
    %c0_21 = arith.constant 0 : index
    %33 = vector.load %arg14[%c0_20, %c0_21] : memref<8x128xf32, #tpu.memory_space<vmem>>, vector<2x128xf32>
    tpu.vector_store %arg14[%c0_20, %c0_21], %32 {strides = array<i32>} : memref<8x128xf32, #tpu.memory_space<vmem>>, vector<2x128xf32>,
    %c2 = arith.constant 2 : index
    %c0_22 = arith.constant 0 : index
    %34 = vector.load %arg12[%c2, %c0_22] : memref<8x512xf32, #tpu.memory_space<vmem>>, vector<2x512xf32>
    %c4 = arith.constant 4 : index
    %c0_23 = arith.constant 0 : index
    %35 = vector.load %arg13[%c4, %c0_23] : memref<8x512xf32, #tpu.memory_space<vmem>>, vector<2x512xf32>
    %36 = arith.addf %34, %35 : vector<2x512xf32>
    %c0_24 = arith.constant 0 : index
    %c0_25 = arith.constant 0 : index
    %37 = vector.load %arg3[%c0_24, %c0_25] : memref<128x512xf32, #tpu.memory_space<vmem>>, vector<128x512xf32>
    %cst_26 = arith.constant dense<0.000000e+00> : vector<2x512xf32>
    %38 = tpu.matmul %32, %37, %cst_26 {dimension_numbers = #tpu.dot_dimension_numbers<[1], [0], [0], [1], [0, 0, 1, 1], [], []>} : vector<2x128xf32>, vector<128x512xf32>, vector<2x512xf32> -> vector<2x512xf32>
    %39 = arith.addf %36, %38 : vector<2x512xf32>
    %c0_27 = arith.constant 0 : index
    %c0_28 = arith.constant 0 : index
    %40 = vector.load %arg4[%c0_27, %c0_28] : memref<1x512xf32, #tpu.memory_space<vmem>>, vector<1x512xf32>
    %41 = vector.broadcast %40 : vector<1x512xf32> to vector<2x512xf32>
    %42 = arith.addf %39, %41 : vector<2x512xf32>
    %43 = vector.extract_strided_slice %42 {offsets = [0, 0], sizes = [2, 384], strides = [1, 1]} : vector<2x512xf32> to vector<2x384xf32>
    %44 = arith.negf %43 : vector<2x384xf32>
    %45 = math.exp %44 : vector<2x384xf32>
    %cst_29 = arith.constant 1.000000e+00 : f32
    %46 = vector.broadcast %cst_29 : f32 to vector<2x384xf32>
    %47 = arith.addf %46, %45 : vector<2x384xf32>
    %48 = arith.divf %46, %47 : vector<2x384xf32>
    %49 = vector.extract_strided_slice %42 {offsets = [0, 384], sizes = [2, 128], strides = [1, 1]} : vector<2x512xf32> to vector<2x128xf32>
    %50 = math.tanh %49 : vector<2x128xf32>
    %51 = vector.extract_strided_slice %48 {offsets = [0, 0], sizes = [2, 128], strides = [1, 1]} : vector<2x384xf32> to vector<2x128xf32>
    %52 = vector.extract_strided_slice %48 {offsets = [0, 128], sizes = [2, 128], strides = [1, 1]} : vector<2x384xf32> to vector<2x128xf32>
    %53 = vector.extract_strided_slice %48 {offsets = [0, 256], sizes = [2, 128], strides = [1, 1]} : vector<2x384xf32> to vector<2x128xf32>
    %54 = arith.mulf %52, %30 : vector<2x128xf32>
    %55 = arith.mulf %51, %50 : vector<2x128xf32>
    %56 = arith.addf %54, %55 : vector<2x128xf32>
    %57 = math.tanh %56 : vector<2x128xf32>
    %58 = arith.mulf %53, %57 : vector<2x128xf32>
    %c2_30 = arith.constant 2 : index
    %c0_31 = arith.constant 0 : index
    %59 = vector.load %arg14[%c2_30, %c0_31] : memref<8x128xf32, #tpu.memory_space<vmem>>, vector<2x128xf32>
    tpu.vector_store %arg14[%c2_30, %c0_31], %58 {strides = array<i32>} : memref<8x128xf32, #tpu.memory_space<vmem>>, vector<2x128xf32>,
    %c4_32 = arith.constant 4 : index
    %c0_33 = arith.constant 0 : index
    %60 = vector.load %arg12[%c4_32, %c0_33] : memref<8x512xf32, #tpu.memory_space<vmem>>, vector<2x512xf32>
    %c2_34 = arith.constant 2 : index
    %c0_35 = arith.constant 0 : index
    %61 = vector.load %arg13[%c2_34, %c0_35] : memref<8x512xf32, #tpu.memory_space<vmem>>, vector<2x512xf32>
    %62 = arith.addf %60, %61 : vector<2x512xf32>
    %c0_36 = arith.constant 0 : index
    %c0_37 = arith.constant 0 : index
    %63 = vector.load %arg3[%c0_36, %c0_37] : memref<128x512xf32, #tpu.memory_space<vmem>>, vector<128x512xf32>
    %cst_38 = arith.constant dense<0.000000e+00> : vector<2x512xf32>
    %64 = tpu.matmul %58, %63, %cst_38 {dimension_numbers = #tpu.dot_dimension_numbers<[1], [0], [0], [1], [0, 0, 1, 1], [], []>} : vector<2x128xf32>, vector<128x512xf32>, vector<2x512xf32> -> vector<2x512xf32>
    %65 = arith.addf %62, %64 : vector<2x512xf32>
    %c0_39 = arith.constant 0 : index
    %c0_40 = arith.constant 0 : index
    %66 = vector.load %arg4[%c0_39, %c0_40] : memref<1x512xf32, #tpu.memory_space<vmem>>, vector<1x512xf32>
    %67 = vector.broadcast %66 : vector<1x512xf32> to vector<2x512xf32>
    %68 = arith.addf %65, %67 : vector<2x512xf32>
    %69 = vector.extract_strided_slice %68 {offsets = [0, 0], sizes = [2, 384], strides = [1, 1]} : vector<2x512xf32> to vector<2x384xf32>
    %70 = arith.negf %69 : vector<2x384xf32>
    %71 = math.exp %70 : vector<2x384xf32>
    %cst_41 = arith.constant 1.000000e+00 : f32
    %72 = vector.broadcast %cst_41 : f32 to vector<2x384xf32>
    %73 = arith.addf %72, %71 : vector<2x384xf32>
    %74 = arith.divf %72, %73 : vector<2x384xf32>
    %75 = vector.extract_strided_slice %68 {offsets = [0, 384], sizes = [2, 128], strides = [1, 1]} : vector<2x512xf32> to vector<2x128xf32>
    %76 = math.tanh %75 : vector<2x128xf32>
    %77 = vector.extract_strided_slice %74 {offsets = [0, 0], sizes = [2, 128], strides = [1, 1]} : vector<2x384xf32> to vector<2x128xf32>
    %78 = vector.extract_strided_slice %74 {offsets = [0, 128], sizes = [2, 128], strides = [1, 1]} : vector<2x384xf32> to vector<2x128xf32>
    %79 = vector.extract_strided_slice %74 {offsets = [0, 256], sizes = [2, 128], strides = [1, 1]} : vector<2x384xf32> to vector<2x128xf32>
    %80 = arith.mulf %78, %56 : vector<2x128xf32>
    %81 = arith.mulf %77, %76 : vector<2x128xf32>
    %82 = arith.addf %80, %81 : vector<2x128xf32>
    %83 = math.tanh %82 : vector<2x128xf32>
    %84 = arith.mulf %79, %83 : vector<2x128xf32>
    %c4_42 = arith.constant 4 : index
    %c0_43 = arith.constant 0 : index
    %85 = vector.load %arg14[%c4_42, %c0_43] : memref<8x128xf32, #tpu.memory_space<vmem>>, vector<2x128xf32>
    tpu.vector_store %arg14[%c4_42, %c0_43], %84 {strides = array<i32>} : memref<8x128xf32, #tpu.memory_space<vmem>>, vector<2x128xf32>,
    %c6_44 = arith.constant 6 : index
    %c0_45 = arith.constant 0 : index
    %86 = vector.load %arg12[%c6_44, %c0_45] : memref<8x512xf32, #tpu.memory_space<vmem>>, vector<2x512xf32>
    %c0_46 = arith.constant 0 : index
    %c0_47 = arith.constant 0 : index
    %87 = vector.load %arg13[%c0_46, %c0_47] : memref<8x512xf32, #tpu.memory_space<vmem>>, vector<2x512xf32>
    %88 = arith.addf %86, %87 : vector<2x512xf32>
    %c0_48 = arith.constant 0 : index
    %c0_49 = arith.constant 0 : index
    %89 = vector.load %arg3[%c0_48, %c0_49] : memref<128x512xf32, #tpu.memory_space<vmem>>, vector<128x512xf32>
    %cst_50 = arith.constant dense<0.000000e+00> : vector<2x512xf32>
    %90 = tpu.matmul %84, %89, %cst_50 {dimension_numbers = #tpu.dot_dimension_numbers<[1], [0], [0], [1], [0, 0, 1, 1], [], []>} : vector<2x128xf32>, vector<128x512xf32>, vector<2x512xf32> -> vector<2x512xf32>
    %91 = arith.addf %88, %90 : vector<2x512xf32>
    %c0_51 = arith.constant 0 : index
    %c0_52 = arith.constant 0 : index
    %92 = vector.load %arg4[%c0_51, %c0_52] : memref<1x512xf32, #tpu.memory_space<vmem>>, vector<1x512xf32>
    %93 = vector.broadcast %92 : vector<1x512xf32> to vector<2x512xf32>
    %94 = arith.addf %91, %93 : vector<2x512xf32>
    %95 = vector.extract_strided_slice %94 {offsets = [0, 0], sizes = [2, 384], strides = [1, 1]} : vector<2x512xf32> to vector<2x384xf32>
    %96 = arith.negf %95 : vector<2x384xf32>
    %97 = math.exp %96 : vector<2x384xf32>
    %cst_53 = arith.constant 1.000000e+00 : f32
    %98 = vector.broadcast %cst_53 : f32 to vector<2x384xf32>
    %99 = arith.addf %98, %97 : vector<2x384xf32>
    %100 = arith.divf %98, %99 : vector<2x384xf32>
    %101 = vector.extract_strided_slice %94 {offsets = [0, 384], sizes = [2, 128], strides = [1, 1]} : vector<2x512xf32> to vector<2x128xf32>
    %102 = math.tanh %101 : vector<2x128xf32>
    %103 = vector.extract_strided_slice %100 {offsets = [0, 0], sizes = [2, 128], strides = [1, 1]} : vector<2x384xf32> to vector<2x128xf32>
    %104 = vector.extract_strided_slice %100 {offsets = [0, 128], sizes = [2, 128], strides = [1, 1]} : vector<2x384xf32> to vector<2x128xf32>
    %105 = vector.extract_strided_slice %100 {offsets = [0, 256], sizes = [2, 128], strides = [1, 1]} : vector<2x384xf32> to vector<2x128xf32>
    %106 = arith.mulf %104, %82 : vector<2x128xf32>
    %107 = arith.mulf %103, %102 : vector<2x128xf32>
    %108 = arith.addf %106, %107 : vector<2x128xf32>
    %109 = math.tanh %108 : vector<2x128xf32>
    %110 = arith.mulf %105, %109 : vector<2x128xf32>
    %c6_54 = arith.constant 6 : index
    %c0_55 = arith.constant 0 : index
    %111 = vector.load %arg14[%c6_54, %c0_55] : memref<8x128xf32, #tpu.memory_space<vmem>>, vector<2x128xf32>
    tpu.vector_store %arg14[%c6_54, %c0_55], %110 {strides = array<i32>} : memref<8x128xf32, #tpu.memory_space<vmem>>, vector<2x128xf32>,
    %c0_56 = arith.constant 0 : index
    %c0_57 = arith.constant 0 : index
    %112 = vector.load %arg14[%c0_56, %c0_57] : memref<8x128xf32, #tpu.memory_space<vmem>>, vector<8x128xf32>
    %c0_58 = arith.constant 0 : index
    %c0_59 = arith.constant 0 : index
    %113 = vector.load %arg5[%c0_58, %c0_59] : memref<128x512xf32, #tpu.memory_space<vmem>>, vector<128x512xf32>
    %cst_60 = arith.constant dense<0.000000e+00> : vector<8x512xf32>
    %114 = tpu.matmul %112, %113, %cst_60 {dimension_numbers = #tpu.dot_dimension_numbers<[1], [0], [0], [1], [0, 0, 1, 1], [], []>} : vector<8x128xf32>, vector<128x512xf32>, vector<8x512xf32> -> vector<8x512xf32>
    %c0_61 = arith.constant 0 : index
    %c0_62 = arith.constant 0 : index
    %115 = vector.load %arg15[%c0_61, %c0_62] : memref<8x512xf32, #tpu.memory_space<vmem>>, vector<8x512xf32>
    tpu.vector_store %arg15[%c0_61, %c0_62], %114 {strides = array<i32>} : memref<8x512xf32, #tpu.memory_space<vmem>>, vector<8x512xf32>,
    %c0_63 = arith.constant 0 : index
    %c0_64 = arith.constant 0 : index
    %116 = vector.load %arg6[%c0_63, %c0_64] : memref<128x512xf32, #tpu.memory_space<vmem>>, vector<128x512xf32>
    %cst_65 = arith.constant dense<0.000000e+00> : vector<8x512xf32>
    %117 = tpu.matmul %112, %116, %cst_65 {dimension_numbers = #tpu.dot_dimension_numbers<[1], [0], [0], [1], [0, 0, 1, 1], [], []>} : vector<8x128xf32>, vector<128x512xf32>, vector<8x512xf32> -> vector<8x512xf32>
    %c0_66 = arith.constant 0 : index
    %c0_67 = arith.constant 0 : index
    %118 = vector.load %arg16[%c0_66, %c0_67] : memref<8x512xf32, #tpu.memory_space<vmem>>, vector<8x512xf32>
    tpu.vector_store %arg16[%c0_66, %c0_67], %117 {strides = array<i32>} : memref<8x512xf32, #tpu.memory_space<vmem>>, vector<8x512xf32>,
    %c0_68 = arith.constant 0 : index
    %c0_69 = arith.constant 0 : index
    %119 = vector.load %arg15[%c0_68, %c0_69] : memref<8x512xf32, #tpu.memory_space<vmem>>, vector<2x512xf32>
    %c6_70 = arith.constant 6 : index
    %c0_71 = arith.constant 0 : index
    %120 = vector.load %arg16[%c6_70, %c0_71] : memref<8x512xf32, #tpu.memory_space<vmem>>, vector<2x512xf32>
    %121 = arith.addf %119, %120 : vector<2x512xf32>
    %c0_72 = arith.constant 0 : index
    %c0_73 = arith.constant 0 : index
    %122 = vector.load %arg7[%c0_72, %c0_73] : memref<128x512xf32, #tpu.memory_space<vmem>>, vector<128x512xf32>
    %cst_74 = arith.constant dense<0.000000e+00> : vector<2x512xf32>
    %123 = tpu.matmul %0, %122, %cst_74 {dimension_numbers = #tpu.dot_dimension_numbers<[1], [0], [0], [1], [0, 0, 1, 1], [], []>} : vector<2x128xf32>, vector<128x512xf32>, vector<2x512xf32> -> vector<2x512xf32>
    %124 = arith.addf %121, %123 : vector<2x512xf32>
    %c0_75 = arith.constant 0 : index
    %c0_76 = arith.constant 0 : index
    %125 = vector.load %arg8[%c0_75, %c0_76] : memref<1x512xf32, #tpu.memory_space<vmem>>, vector<1x512xf32>
    %126 = vector.broadcast %125 : vector<1x512xf32> to vector<2x512xf32>
    %127 = arith.addf %124, %126 : vector<2x512xf32>
    %128 = vector.extract_strided_slice %127 {offsets = [0, 0], sizes = [2, 384], strides = [1, 1]} : vector<2x512xf32> to vector<2x384xf32>
    %129 = arith.negf %128 : vector<2x384xf32>
    %130 = math.exp %129 : vector<2x384xf32>
    %cst_77 = arith.constant 1.000000e+00 : f32
    %131 = vector.broadcast %cst_77 : f32 to vector<2x384xf32>
    %132 = arith.addf %131, %130 : vector<2x384xf32>
    %133 = arith.divf %131, %132 : vector<2x384xf32>
    %134 = vector.extract_strided_slice %127 {offsets = [0, 384], sizes = [2, 128], strides = [1, 1]} : vector<2x512xf32> to vector<2x128xf32>
    %135 = math.tanh %134 : vector<2x128xf32>
    %136 = vector.extract_strided_slice %133 {offsets = [0, 0], sizes = [2, 128], strides = [1, 1]} : vector<2x384xf32> to vector<2x128xf32>
    %137 = vector.extract_strided_slice %133 {offsets = [0, 128], sizes = [2, 128], strides = [1, 1]} : vector<2x384xf32> to vector<2x128xf32>
    %138 = vector.extract_strided_slice %133 {offsets = [0, 256], sizes = [2, 128], strides = [1, 1]} : vector<2x384xf32> to vector<2x128xf32>
    %139 = arith.mulf %137, %0 : vector<2x128xf32>
    %140 = arith.mulf %136, %135 : vector<2x128xf32>
    %141 = arith.addf %139, %140 : vector<2x128xf32>
    %142 = math.tanh %141 : vector<2x128xf32>
    %143 = arith.mulf %138, %142 : vector<2x128xf32>
    %c2_78 = arith.constant 2 : index
    %c0_79 = arith.constant 0 : index
    %144 = vector.load %arg15[%c2_78, %c0_79] : memref<8x512xf32, #tpu.memory_space<vmem>>, vector<2x512xf32>
    %c4_80 = arith.constant 4 : index
    %c0_81 = arith.constant 0 : index
    %145 = vector.load %arg16[%c4_80, %c0_81] : memref<8x512xf32, #tpu.memory_space<vmem>>, vector<2x512xf32>
    %146 = arith.addf %144, %145 : vector<2x512xf32>
    %c0_82 = arith.constant 0 : index
    %c0_83 = arith.constant 0 : index
    %147 = vector.load %arg7[%c0_82, %c0_83] : memref<128x512xf32, #tpu.memory_space<vmem>>, vector<128x512xf32>
    %cst_84 = arith.constant dense<0.000000e+00> : vector<2x512xf32>
    %148 = tpu.matmul %143, %147, %cst_84 {dimension_numbers = #tpu.dot_dimension_numbers<[1], [0], [0], [1], [0, 0, 1, 1], [], []>} : vector<2x128xf32>, vector<128x512xf32>, vector<2x512xf32> -> vector<2x512xf32>
    %149 = arith.addf %146, %148 : vector<2x512xf32>
    %c0_85 = arith.constant 0 : index
    %c0_86 = arith.constant 0 : index
    %150 = vector.load %arg8[%c0_85, %c0_86] : memref<1x512xf32, #tpu.memory_space<vmem>>, vector<1x512xf32>
    %151 = vector.broadcast %150 : vector<1x512xf32> to vector<2x512xf32>
    %152 = arith.addf %149, %151 : vector<2x512xf32>
    %153 = vector.extract_strided_slice %152 {offsets = [0, 0], sizes = [2, 384], strides = [1, 1]} : vector<2x512xf32> to vector<2x384xf32>
    %154 = arith.negf %153 : vector<2x384xf32>
    %155 = math.exp %154 : vector<2x384xf32>
    %cst_87 = arith.constant 1.000000e+00 : f32
    %156 = vector.broadcast %cst_87 : f32 to vector<2x384xf32>
    %157 = arith.addf %156, %155 : vector<2x384xf32>
    %158 = arith.divf %156, %157 : vector<2x384xf32>
    %159 = vector.extract_strided_slice %152 {offsets = [0, 384], sizes = [2, 128], strides = [1, 1]} : vector<2x512xf32> to vector<2x128xf32>
    %160 = math.tanh %159 : vector<2x128xf32>
    %161 = vector.extract_strided_slice %158 {offsets = [0, 0], sizes = [2, 128], strides = [1, 1]} : vector<2x384xf32> to vector<2x128xf32>
    %162 = vector.extract_strided_slice %158 {offsets = [0, 128], sizes = [2, 128], strides = [1, 1]} : vector<2x384xf32> to vector<2x128xf32>
    %163 = vector.extract_strided_slice %158 {offsets = [0, 256], sizes = [2, 128], strides = [1, 1]} : vector<2x384xf32> to vector<2x128xf32>
    %164 = arith.mulf %162, %141 : vector<2x128xf32>
    %165 = arith.mulf %161, %160 : vector<2x128xf32>
    %166 = arith.addf %164, %165 : vector<2x128xf32>
    %167 = math.tanh %166 : vector<2x128xf32>
    %168 = arith.mulf %163, %167 : vector<2x128xf32>
    %c4_88 = arith.constant 4 : index
    %c0_89 = arith.constant 0 : index
    %169 = vector.load %arg15[%c4_88, %c0_89] : memref<8x512xf32, #tpu.memory_space<vmem>>, vector<2x512xf32>
    %c2_90 = arith.constant 2 : index
    %c0_91 = arith.constant 0 : index
    %170 = vector.load %arg16[%c2_90, %c0_91] : memref<8x512xf32, #tpu.memory_space<vmem>>, vector<2x512xf32>
    %171 = arith.addf %169, %170 : vector<2x512xf32>
    %c0_92 = arith.constant 0 : index
    %c0_93 = arith.constant 0 : index
    %172 = vector.load %arg7[%c0_92, %c0_93] : memref<128x512xf32, #tpu.memory_space<vmem>>, vector<128x512xf32>
    %cst_94 = arith.constant dense<0.000000e+00> : vector<2x512xf32>
    %173 = tpu.matmul %168, %172, %cst_94 {dimension_numbers = #tpu.dot_dimension_numbers<[1], [0], [0], [1], [0, 0, 1, 1], [], []>} : vector<2x128xf32>, vector<128x512xf32>, vector<2x512xf32> -> vector<2x512xf32>
    %174 = arith.addf %171, %173 : vector<2x512xf32>
    %c0_95 = arith.constant 0 : index
    %c0_96 = arith.constant 0 : index
    %175 = vector.load %arg8[%c0_95, %c0_96] : memref<1x512xf32, #tpu.memory_space<vmem>>, vector<1x512xf32>
    %176 = vector.broadcast %175 : vector<1x512xf32> to vector<2x512xf32>
    %177 = arith.addf %174, %176 : vector<2x512xf32>
    %178 = vector.extract_strided_slice %177 {offsets = [0, 0], sizes = [2, 384], strides = [1, 1]} : vector<2x512xf32> to vector<2x384xf32>
    %179 = arith.negf %178 : vector<2x384xf32>
    %180 = math.exp %179 : vector<2x384xf32>
    %cst_97 = arith.constant 1.000000e+00 : f32
    %181 = vector.broadcast %cst_97 : f32 to vector<2x384xf32>
    %182 = arith.addf %181, %180 : vector<2x384xf32>
    %183 = arith.divf %181, %182 : vector<2x384xf32>
    %184 = vector.extract_strided_slice %177 {offsets = [0, 384], sizes = [2, 128], strides = [1, 1]} : vector<2x512xf32> to vector<2x128xf32>
    %185 = math.tanh %184 : vector<2x128xf32>
    %186 = vector.extract_strided_slice %183 {offsets = [0, 0], sizes = [2, 128], strides = [1, 1]} : vector<2x384xf32> to vector<2x128xf32>
    %187 = vector.extract_strided_slice %183 {offsets = [0, 128], sizes = [2, 128], strides = [1, 1]} : vector<2x384xf32> to vector<2x128xf32>
    %188 = vector.extract_strided_slice %183 {offsets = [0, 256], sizes = [2, 128], strides = [1, 1]} : vector<2x384xf32> to vector<2x128xf32>
    %189 = arith.mulf %187, %166 : vector<2x128xf32>
    %190 = arith.mulf %186, %185 : vector<2x128xf32>
    %191 = arith.addf %189, %190 : vector<2x128xf32>
    %192 = math.tanh %191 : vector<2x128xf32>
    %193 = arith.mulf %188, %192 : vector<2x128xf32>
    %c6_98 = arith.constant 6 : index
    %c0_99 = arith.constant 0 : index
    %194 = vector.load %arg15[%c6_98, %c0_99] : memref<8x512xf32, #tpu.memory_space<vmem>>, vector<2x512xf32>
    %c0_100 = arith.constant 0 : index
    %c0_101 = arith.constant 0 : index
    %195 = vector.load %arg16[%c0_100, %c0_101] : memref<8x512xf32, #tpu.memory_space<vmem>>, vector<2x512xf32>
    %196 = arith.addf %194, %195 : vector<2x512xf32>
    %c0_102 = arith.constant 0 : index
    %c0_103 = arith.constant 0 : index
    %197 = vector.load %arg7[%c0_102, %c0_103] : memref<128x512xf32, #tpu.memory_space<vmem>>, vector<128x512xf32>
    %cst_104 = arith.constant dense<0.000000e+00> : vector<2x512xf32>
    %198 = tpu.matmul %193, %197, %cst_104 {dimension_numbers = #tpu.dot_dimension_numbers<[1], [0], [0], [1], [0, 0, 1, 1], [], []>} : vector<2x128xf32>, vector<128x512xf32>, vector<2x512xf32> -> vector<2x512xf32>
    %199 = arith.addf %196, %198 : vector<2x512xf32>
    %c0_105 = arith.constant 0 : index
    %c0_106 = arith.constant 0 : index
    %200 = vector.load %arg8[%c0_105, %c0_106] : memref<1x512xf32, #tpu.memory_space<vmem>>, vector<1x512xf32>
    %201 = vector.broadcast %200 : vector<1x512xf32> to vector<2x512xf32>
    %202 = arith.addf %199, %201 : vector<2x512xf32>
    %203 = vector.extract_strided_slice %202 {offsets = [0, 0], sizes = [2, 384], strides = [1, 1]} : vector<2x512xf32> to vector<2x384xf32>
    %204 = arith.negf %203 : vector<2x384xf32>
    %205 = math.exp %204 : vector<2x384xf32>
    %cst_107 = arith.constant 1.000000e+00 : f32
    %206 = vector.broadcast %cst_107 : f32 to vector<2x384xf32>
    %207 = arith.addf %206, %205 : vector<2x384xf32>
    %208 = arith.divf %206, %207 : vector<2x384xf32>
    %209 = vector.extract_strided_slice %202 {offsets = [0, 384], sizes = [2, 128], strides = [1, 1]} : vector<2x512xf32> to vector<2x128xf32>
    %210 = math.tanh %209 : vector<2x128xf32>
    %211 = vector.extract_strided_slice %208 {offsets = [0, 0], sizes = [2, 128], strides = [1, 1]} : vector<2x384xf32> to vector<2x128xf32>
    %212 = vector.extract_strided_slice %208 {offsets = [0, 128], sizes = [2, 128], strides = [1, 1]} : vector<2x384xf32> to vector<2x128xf32>
    %213 = vector.extract_strided_slice %208 {offsets = [0, 256], sizes = [2, 128], strides = [1, 1]} : vector<2x384xf32> to vector<2x128xf32>
    %214 = arith.mulf %212, %191 : vector<2x128xf32>
    %215 = arith.mulf %211, %210 : vector<2x128xf32>
    %216 = arith.addf %214, %215 : vector<2x128xf32>
    %217 = math.tanh %216 : vector<2x128xf32>
    %218 = arith.mulf %213, %217 : vector<2x128xf32>
    %c0_108 = arith.constant 0 : index
    %c0_109 = arith.constant 0 : index
    %219 = vector.load %arg9[%c0_108, %c0_109] : memref<128x2xf32, #tpu.memory_space<vmem>>, vector<128x2xf32>
    %cst_110 = arith.constant dense<0.000000e+00> : vector<2x2xf32>
    %220 = tpu.matmul %218, %219, %cst_110 {dimension_numbers = #tpu.dot_dimension_numbers<[1], [0], [0], [1], [0, 0, 1, 1], [], []>} : vector<2x128xf32>, vector<128x2xf32>, vector<2x2xf32> -> vector<2x2xf32>
    %c0_111 = arith.constant 0 : index
    %c0_112 = arith.constant 0 : index
    %221 = vector.load %arg10[%c0_111, %c0_112] : memref<1x2xf32, #tpu.memory_space<vmem>>, vector<1x2xf32>
    %222 = vector.broadcast %221 : vector<1x2xf32> to vector<2x2xf32>
    %223 = arith.addf %220, %222 : vector<2x2xf32>
    %c0_113 = arith.constant 0 : index
    %c0_114 = arith.constant 0 : index
    %224 = vector.load %arg11[%c0_113, %c0_114] : memref<2x2xf32, #tpu.memory_space<vmem>>, vector<2x2xf32>
    tpu.vector_store %arg11[%c0_113, %c0_114], %223 {strides = array<i32>} : memref<2x2xf32, #tpu.memory_space<vmem>>, vector<2x2xf32>,
    return
  }
}

</mosaic_0001>

<llo_original>
// kernel: forward.7
$region0: #{forward.7}
  #allocation0 [shape = 'u32[]', space=smem, size = 0x4, offset = 0x4, fixed_abs, tag = 'smem constant byte address 0x4 - core index']
  #allocation1 [shape = 'u32[144,128]{1,0:T(1,128)}', space=vmem, size = 0x12000, scoped, tag = 'internal scratch']
  %s0 = inlined_call_operand.vmem [shape: f32[768,32], index: 0, kind: input, shape index: {}]
  %s1 = inlined_call_operand.vmem [shape: f32[32,128], index: 1, kind: input, shape index: {}]
  %s2 = inlined_call_operand.vmem [shape: f32[1,128], index: 2, kind: input, shape index: {}]
  %s3 = inlined_call_operand.vmem [shape: f32[1,128], index: 3, kind: input, shape index: {}]
  %s4 = inlined_call_operand.vmem [shape: f32[1,128], index: 4, kind: input, shape index: {}]
  %s5 = inlined_call_operand.vmem [shape: f32[768,128], index: 5, kind: output, shape index: {}]
  %s6 = sld [smem:[#allocation0]]
  $region53: #{forward.7} parent=0
    _
  %s8 = ssub.s32 1, %s6
  %s9 = scalar_select 0, %s8, %s6
  loop: start=0, step=1, limit=5
  $region2: #{forward.7} parent=0 // loop_pre_header
    _
  $region3: #{forward.7} parent=0 // loop_header
    %s11 = sphi 0, %s15
    %p12 = scmp.ge.s32.totalorder %s11, 5
    %s21 = sphi 0, %s23
    %s24 = sphi 0, %s21
    %s25 = sphi 0, %s24
    %s41 = sphi 0, %s25
    %s45 = sphi 0, %s45
    %s47 = sphi 0, %s45
    %s48 = sphi 0, %s47
    %s62 = sphi 0, %s48
    %s66 = sphi 0, %s66
    %s68 = sphi 0, %s66
    %s69 = sphi 0, %s68
    %s83 = sphi 0, %s69
    %s87 = sphi 0, %s87
    %s89 = sphi 0, %s87
    %s90 = sphi 0, %s89
    %s104 = sphi 0, %s90
    %s108 = sphi 0, %s108
    %s110 = sphi 0, %s108
    %s111 = sphi 0, %s110
    %s125 = sphi 0, %s111
    %s131 = sphi 0, %s133
    %s134 = sphi 0, %s131
    %s135 = sphi 0, %s134
    %s151 = sphi 0, %s135
  $region4: #{forward.7} parent=0 // loop_header_branch
    %14 = sbr.rel (%p12) target = $region8
  $region5: #{forward.7} parent=0 // loop_body
    %s16 = ssub.s32 %s11, 1
    %s17 = ssub.s32 %s11, 2
    %s18 = sadd.s32 %s11, 1
    %s19 = ssub.s32 %s11, %s18
    %p20 = scmp.eq.s32.totalorder %s19, 0
    %s22 = sadd.s32 %s21, 1
    %s23 = scalar_select %p20, %s21, %s22
    %p26 = pneg %p20
    %p27 = scmp.eq.s32.totalorder %s11, 2
    %p28 = por %p26, %p27
    %p29 = scmp.ne.s32.totalorder %s21, %s24
    %p30 = scmp.eq.s32.totalorder %s11, 0
    %p31 = por %p29, %p30
    %p32 = scmp.ne.s32.totalorder %s21, %s24
    %p33 = scmp.eq.s32.totalorder %s16, 2
    %p34 = por %p32, %p33
    %p35 = scmp.ne.s32.totalorder %s24, %s25
    %p36 = scmp.eq.s32.totalorder %s16, 0
    %p37 = por %p35, %p36
    %p38 = scmp.ne.s32.totalorder %s24, %s25
    %p39 = scmp.eq.s32.totalorder %s17, 2
    %p40 = por %p38, %p39
    %p42 = scmp.ne.s32.totalorder %s25, %s41
    %p43 = scmp.eq.s32.totalorder %s17, 0
    %p44 = por %p42, %p43
    %s46 = sadd.s32 %s45, 1
    %p49 = scmp.eq.s32.totalorder %s11, 2
    %p50 = scmp.ne.s32.totalorder %s45, %s47
    %p51 = scmp.eq.s32.totalorder %s11, 0
    %p52 = por %p50, %p51
    %p53 = scmp.ne.s32.totalorder %s45, %s47
    %p54 = scmp.eq.s32.totalorder %s16, 2
    %p55 = por %p53, %p54
    %p56 = scmp.ne.s32.totalorder %s47, %s48
    %p57 = scmp.eq.s32.totalorder %s16, 0
    %p58 = por %p56, %p57
    %p59 = scmp.ne.s32.totalorder %s47, %s48
    %p60 = scmp.eq.s32.totalorder %s17, 2
    %p61 = por %p59, %p60
    %p63 = scmp.ne.s32.totalorder %s48, %s62
    %p64 = scmp.eq.s32.totalorder %s17, 0
    %p65 = por %p63, %p64
    %s67 = sadd.s32 %s66, 1
    %p70 = scmp.eq.s32.totalorder %s11, 2
    %p71 = scmp.ne.s32.totalorder %s66, %s68
    %p72 = scmp.eq.s32.totalorder %s11, 0
    %p73 = por %p71, %p72
    %p74 = scmp.ne.s32.totalorder %s66, %s68
    %p75 = scmp.eq.s32.totalorder %s16, 2
    %p76 = por %p74, %p75
    %p77 = scmp.ne.s32.totalorder %s68, %s69
    %p78 = scmp.eq.s32.totalorder %s16, 0
    %p79 = por %p77, %p78
    %p80 = scmp.ne.s32.totalorder %s68, %s69
    %p81 = scmp.eq.s32.totalorder %s17, 2
    %p82 = por %p80, %p81
    %p84 = scmp.ne.s32.totalorder %s69, %s83
    %p85 = scmp.eq.s32.totalorder %s17, 0
    %p86 = por %p84, %p85
    %s88 = sadd.s32 %s87, 1
    %p91 = scmp.eq.s32.totalorder %s11, 2
    %p92 = scmp.ne.s32.totalorder %s87, %s89
    %p93 = scmp.eq.s32.totalorder %s11, 0
    %p94 = por %p92, %p93
    %p95 = scmp.ne.s32.totalorder %s87, %s89
    %p96 = scmp.eq.s32.totalorder %s16, 2
    %p97 = por %p95, %p96
    %p98 = scmp.ne.s32.totalorder %s89, %s90
    %p99 = scmp.eq.s32.totalorder %s16, 0
    %p100 = por %p98, %p99
    %p101 = scmp.ne.s32.totalorder %s89, %s90
    %p102 = scmp.eq.s32.totalorder %s17, 2
    %p103 = por %p101, %p102
    %p105 = scmp.ne.s32.totalorder %s90, %s104
    %p106 = scmp.eq.s32.totalorder %s17, 0
    %p107 = por %p105, %p106
    %s109 = sadd.s32 %s108, 1
    %p112 = scmp.eq.s32.totalorder %s11, 2
    %p113 = scmp.ne.s32.totalorder %s108, %s110
    %p114 = scmp.eq.s32.totalorder %s11, 0
    %p115 = por %p113, %p114
    %p116 = scmp.ne.s32.totalorder %s108, %s110
    %p117 = scmp.eq.s32.totalorder %s16, 2
    %p118 = por %p116, %p117
    %p119 = scmp.ne.s32.totalorder %s110, %s111
    %p120 = scmp.eq.s32.totalorder %s16, 0
    %p121 = por %p119, %p120
    %p122 = scmp.ne.s32.totalorder %s110, %s111
    %p123 = scmp.eq.s32.totalorder %s17, 2
    %p124 = por %p122, %p123
    %p126 = scmp.ne.s32.totalorder %s111, %s125
    %p127 = scmp.eq.s32.totalorder %s17, 0
    %p128 = por %p126, %p127
    %s129 = ssub.s32 %s11, %s18
    %p130 = scmp.eq.s32.totalorder %s129, 0
    %s132 = sadd.s32 %s131, 1
    %s133 = scalar_select %p130, %s131, %s132
    %p136 = pneg %p130
    %p137 = scmp.eq.s32.totalorder %s11, 2
    %p138 = por %p136, %p137
    %p139 = scmp.ne.s32.totalorder %s131, %s134
    %p140 = scmp.eq.s32.totalorder %s11, 0
    %p141 = por %p139, %p140
    %p142 = scmp.ne.s32.totalorder %s131, %s134
    %p143 = scmp.eq.s32.totalorder %s16, 2
    %p144 = por %p142, %p143
    %p145 = scmp.ne.s32.totalorder %s134, %s135
    %p146 = scmp.eq.s32.totalorder %s16, 0
    %p147 = por %p145, %p146
    %p148 = scmp.ne.s32.totalorder %s134, %s135
    %p149 = scmp.eq.s32.totalorder %s17, 2
    %p150 = por %p148, %p149
    %p152 = scmp.ne.s32.totalorder %s135, %s151
    %p153 = scmp.eq.s32.totalorder %s17, 0
    %p154 = por %p152, %p153
    %p155 = scmp.le.s32.totalorder 1, %s11
    %p156 = scmp.lt.s32.totalorder %s11, 4
    %p157 = pnand %p155, %p156
    %p158 = pneg %p157
    // Predicated region
    $region9: #{forward.7} parent=5 // pred_check
      _
    $region10: #{forward.7} parent=5 // pred_check_branch
      %160 = sbr.rel (%p157) target = $region12
    $region11: #{forward.7} parent=5 // pred_region
      %s161 = ssub.s32 %s11, 1
      // Predicated region
      $region13: #{forward.7} parent=11 // pred_check
        %p162 = pneg %p58
      $region14: #{forward.7} parent=11 // pred_check_branch
        %164 = sbr.rel (%p162) target = $region16
      $region15: #{forward.7} parent=11 // pred_region
        _
      $region16: #{forward.7} parent=11 // pred_fallthru
        _
      // Predicated region
      $region17: #{forward.7} parent=11 // pred_check
        %p165 = pneg %p79
      $region18: #{forward.7} parent=11 // pred_check_branch
        %167 = sbr.rel (%p165) target = $region20
      $region19: #{forward.7} parent=11 // pred_region
        _
      $region20: #{forward.7} parent=11 // pred_fallthru
        _
      // Predicated region
      $region21: #{forward.7} parent=11 // pred_check
        %p168 = pneg %p100
      $region22: #{forward.7} parent=11 // pred_check_branch
        %170 = sbr.rel (%p168) target = $region24
      $region23: #{forward.7} parent=11 // pred_region
        _
      $region24: #{forward.7} parent=11 // pred_fallthru
        _
      // Predicated region
      $region25: #{forward.7} parent=11 // pred_check
        %p171 = pneg %p121
      $region26: #{forward.7} parent=11 // pred_check_branch
        %173 = sbr.rel (%p171) target = $region28
      $region27: #{forward.7} parent=11 // pred_region
        _
      $region28: #{forward.7} parent=11 // pred_fallthru
        _
    $region12: #{forward.7} parent=5 // pred_fallthru
      _
    %p174 = scmp.lt.s32.totalorder %s11, 3
    // Predicated region
    $region29: #{forward.7} parent=5 // pred_check
      %p175 = pneg %p174
    $region30: #{forward.7} parent=5 // pred_check_branch
      %177 = sbr.rel (%p175) target = $region32
    $region31: #{forward.7} parent=5 // pred_region
      // Predicated region
      $region33: #{forward.7} parent=31 // pred_check
        %p178 = pneg %p31
      $region34: #{forward.7} parent=31 // pred_check_branch
        %180 = sbr.rel (%p178) target = $region36
      $region35: #{forward.7} parent=31 // pred_region
        %s181 = smul.u32 32, %s11
        %p182 = scmp.lt.s32.totalorder %s181, 95
        %s183 = scalar_select %p182, %s181, 95
        %s184 = smul.addr %s183, 8
        %s185 = scalar_lea.vmem %s0, %s184
        %s186 = smul.u32 32, %s11
      $region36: #{forward.7} parent=31 // pred_fallthru
        _
    $region32: #{forward.7} parent=5 // pred_fallthru
      _
    %p187 = scmp.le.s32.totalorder 1, %s11
    %p188 = scmp.lt.s32.totalorder %s11, 4
    %p189 = pnand %p187, %p188
    %p190 = pneg %p189
    // Predicated region
    $region37: #{forward.7} parent=5 // pred_check
      _
    $region38: #{forward.7} parent=5 // pred_check_branch
      %192 = sbr.rel (%p189) target = $region40
    $region39: #{forward.7} parent=5 // pred_region
      %s193 = ssub.s32 %s11, 1
      %s194 = smul.u32 32, %s16
      %p195 = scmp.lt.s32.totalorder %s194, 95
      %s196 = scalar_select %p195, %s194, 95
      %s197 = smul.addr %s196, 8
      %s198 = scalar_lea.vmem %s0, %s197
      %p199 = pneg %p37
      %p200 = pneg %p34
      %p201 = pneg %p58
      %p202 = pneg %p55
      %p203 = pneg %p79
      %p204 = pneg %p76
      %p205 = pneg %p100
      %p206 = pneg %p97
      %p207 = pneg %p121
      %p208 = pneg %p118
      %p209 = pneg %p147
      %p210 = pneg %p144
      %s211 = smul.u32 32, %s16
      %p212 = scmp.lt.s32.totalorder %s211, 95
      %s213 = scalar_select %p212, %s211, 95
      %s214 = smul.addr %s213, 8
      %s215 = scalar_lea.vmem %s5, %s214
      %s216 = smul.u32 32, %s16
      %p217 = scmp.lt.s32.totalorder %s216, 95
      %s218 = scalar_select %p217, %s216, 95
      %s219 = smul.addr %s218, 8
      %s220 = scalar_lea.vmem %s0, %s219
      %s221 = smul.u32 32, %s16
      %s222 = smul.u32 32, %s16
      %p223 = scmp.lt.s32.totalorder %s222, 95
      %s224 = scalar_select %p223, %s222, 95
      %s225 = smul.addr %s224, 8
      %s226 = scalar_lea.vmem %s5, %s225
      %s227 = smul.u32 32, %s16
      %v228 = vld [vmem:[%s220] sm:$0xff]
      %v229 = vld [vmem:[%s220 + $0x8] sm:$0xff]
      %v230 = vld [vmem:[%s220 + $0x10] sm:$0xff]
      %v231 = vld [vmem:[%s220 + $0x18] sm:$0xff]
      %v232 = vld [vmem:[%s220 + $0x20] sm:$0xff]
      %v233 = vld [vmem:[%s220 + $0x28] sm:$0xff]
      %v234 = vld [vmem:[%s220 + $0x30] sm:$0xff]
      %v235 = vld [vmem:[%s220 + $0x38] sm:$0xff]
      %v236 = vld [vmem:[%s220 + $0x40] sm:$0xff]
      %v237 = vld [vmem:[%s220 + $0x48] sm:$0xff]
      %v238 = vld [vmem:[%s220 + $0x50] sm:$0xff]
      %v239 = vld [vmem:[%s220 + $0x58] sm:$0xff]
      %v240 = vld [vmem:[%s220 + $0x60] sm:$0xff]
      %v241 = vld [vmem:[%s220 + $0x68] sm:$0xff]
      %v242 = vld [vmem:[%s220 + $0x70] sm:$0xff]
      %v243 = vld [vmem:[%s220 + $0x78] sm:$0xff]
      %v244 = vld [vmem:[%s220 + $0x80] sm:$0xff]
      %v245 = vld [vmem:[%s220 + $0x88] sm:$0xff]
      %v246 = vld [vmem:[%s220 + $0x90] sm:$0xff]
      %v247 = vld [vmem:[%s220 + $0x98] sm:$0xff]
      %v248 = vld [vmem:[%s220 + $0xa0] sm:$0xff]
      %v249 = vld [vmem:[%s220 + $0xa8] sm:$0xff]
      %v250 = vld [vmem:[%s220 + $0xb0] sm:$0xff]
      %v251 = vld [vmem:[%s220 + $0xb8] sm:$0xff]
      %v252 = vld [vmem:[%s220 + $0xc0] sm:$0xff]
      %v253 = vld [vmem:[%s220 + $0xc8] sm:$0xff]
      %v254 = vld [vmem:[%s220 + $0xd0] sm:$0xff]
      %v255 = vld [vmem:[%s220 + $0xd8] sm:$0xff]
      %v256 = vld [vmem:[%s220 + $0xe0] sm:$0xff]
      %v257 = vld [vmem:[%s220 + $0xe8] sm:$0xff]
      %v258 = vld [vmem:[%s220 + $0xf0] sm:$0xff]
      %v259 = vld [vmem:[%s220 + $0xf8] sm:$0xff]
      %v260 = vld [vmem:[%s1] sm:$0xff]
      %v261 = vld [vmem:[%s1 + $0x8] sm:$0xff]
      %v262 = vld [vmem:[%s1 + $0x10] sm:$0xff]
      %v263 = vld [vmem:[%s1 + $0x18] sm:$0xff]
      %v264 = vld [vmem:[%s2] sm:$0x1]
      %v266 = vlaneseq
      %v267 = vshrl.u32 %v266, 7
      %v268 = vsub.s32 0, %v267
      %v269 = vrot.slane %v264, %v268
      %vm271 = vcmask 261120
      %v273 = vsel %vm271, %v228, 0
      %v276 = vsel %vm271, %v229, 0
      %v279 = vsel %vm271, %v230, 0
      %v282 = vsel %vm271, %v231, 0
      %v285 = vsel %vm271, %v232, 0
      %v288 = vsel %vm271, %v233, 0
      %v291 = vsel %vm271, %v234, 0
      %v294 = vsel %vm271, %v235, 0
      %v297 = vsel %vm271, %v236, 0
      %v300 = vsel %vm271, %v237, 0
      %v303 = vsel %vm271, %v238, 0
      %v306 = vsel %vm271, %v239, 0
      %v309 = vsel %vm271, %v240, 0
      %v312 = vsel %vm271, %v241, 0
      %v315 = vsel %vm271, %v242, 0
      %v318 = vsel %vm271, %v243, 0
      %v321 = vsel %vm271, %v244, 0
      %v324 = vsel %vm271, %v245, 0
      %v327 = vsel %vm271, %v246, 0
      %v330 = vsel %vm271, %v247, 0
      %v333 = vsel %vm271, %v248, 0
      %v336 = vsel %vm271, %v249, 0
      %v339 = vsel %vm271, %v250, 0
      %v342 = vsel %vm271, %v251, 0
      %v345 = vsel %vm271, %v252, 0
      %v348 = vsel %vm271, %v253, 0
      %v351 = vsel %vm271, %v254, 0
      %v354 = vsel %vm271, %v255, 0
      %v357 = vsel %vm271, %v256, 0
      %v360 = vsel %vm271, %v257, 0
      %v363 = vsel %vm271, %v258, 0
      %v366 = vsel %vm271, %v259, 0
      %368 = vmatprep.subr.mxu0 0.0
      %369 = vmatpush1.msra.mxu0 %v260
      %370 = vmatprep.subr.mxu0 0.0
      %371 = vmatpush1.msra.mxu0 %v261
      %372 = vmatprep.subr.mxu0 0.0
      %373 = vmatpush1.msra.mxu0 %v262
      %374 = vmatprep.subr.mxu0 0.0
      %375 = vmatpush1.msra.mxu0 %v263
      %376 = vmatprep.subr.mxu0 0.0
      %377 = vmatpush1.msra.mxu0 0.0
      %378 = vmatprep.subr.mxu0 0.0
      %379 = vmatpush1.msra.mxu0 0.0
      %380 = vmatprep.subr.mxu0 0.0
      %381 = vmatpush1.msra.mxu0 0.0
      %382 = vmatprep.subr.mxu0 0.0
      %383 = vmatpush1.msra.mxu0 0.0
      %384 = vmatprep.subr.mxu0 0.0
      %385 = vmatpush1.msra.mxu0 0.0
      %386 = vmatprep.subr.mxu0 0.0
      %387 = vmatpush1.msra.mxu0 0.0
      %388 = vmatprep.subr.mxu0 0.0
      %389 = vmatpush1.msra.mxu0 0.0
      %390 = vmatprep.subr.mxu0 0.0
      %391 = vmatpush1.msra.mxu0 0.0
      %392 = vmatprep.subr.mxu0 0.0
      %393 = vmatpush1.msra.mxu0 0.0
      %394 = vmatprep.subr.mxu0 0.0
      %395 = vmatpush1.msra.mxu0 0.0
      %396 = vmatprep.subr.mxu0 0.0
      %397 = vmatpush1.msra.mxu0 0.0
      %398 = vmatprep.subr.mxu0 0.0
      %399 = vmatpush1.msra.mxu0 0.0
      %400 = vmatprep.subr.mxu0 0.0
      %401 = vmatpush1.msra.mxu0 0.0
      %402 = vmatprep.subr.mxu0 0.0
      %403 = vmatpush1.msra.mxu0 0.0
      %404 = vmatprep.subr.mxu0 0.0
      %405 = vmatpush1.msra.mxu0 0.0
      %406 = vmatprep.subr.mxu0 0.0
      %407 = vmatpush1.msra.mxu0 0.0
      %408 = vmatprep.subr.mxu0 0.0
      %409 = vmatpush1.msra.mxu0 0.0
      %410 = vmatprep.subr.mxu0 0.0
      %411 = vmatpush1.msra.mxu0 0.0
      %412 = vmatprep.subr.mxu0 0.0
      %413 = vmatpush1.msra.mxu0 0.0
      %414 = vmatprep.subr.mxu0 0.0
      %415 = vmatpush1.msra.mxu0 0.0
      %416 = vmatprep.subr.mxu0 0.0
      %417 = vmatpush1.msra.mxu0 0.0
      %418 = vmatprep.subr.mxu0 0.0
      %419 = vmatpush1.msra.mxu0 0.0
      %420 = vmatprep.subr.mxu0 0.0
      %421 = vmatpush1.msra.mxu0 0.0
      %422 = vmatprep.subr.mxu0 0.0
      %423 = vmatpush1.msra.mxu0 0.0
      %424 = vmatprep.subr.mxu0 0.0
      %425 = vmatpush1.msra.mxu0 0.0
      %426 = vmatprep.subr.mxu0 0.0
      %427 = vmatpush1.msra.mxu0 0.0
      %428 = vmatprep.subr.mxu0 0.0
      %429 = vmatpush1.msra.mxu0 0.0
      %430 = vmatprep.subr.mxu0 0.0
      %431 = vmatpush1.msra.mxu0 0.0
      %432 = vmatprep.mubr.f32.mxu0 0.0
      %433 = vmatmul.mubr.f32.gmra.mrb[0].mxu0 %v273
      %v434 = vpop.f32.mrb[0].mxu0
      %v435 = vadd.f32 %v269, %v434
      %v436 = vpop.f32.mrb[0].mxu0
      %437 = vmatprep.mubr.f32.mxu0 0.0
      %438 = vmatmul.mubr.f32.gmra.mrb[0].mxu0 %v276
      %v439 = vpop.f32.mrb[0].mxu0
      %v440 = vadd.f32 %v269, %v439
      %v441 = vpop.f32.mrb[0].mxu0
      %442 = vmatprep.mubr.f32.mxu0 0.0
      %443 = vmatmul.mubr.f32.gmra.mrb[0].mxu0 %v279
      %v444 = vpop.f32.mrb[0].mxu0
      %v445 = vadd.f32 %v269, %v444
      %v446 = vpop.f32.mrb[0].mxu0
      %447 = vmatprep.mubr.f32.mxu0 0.0
      %448 = vmatmul.mubr.f32.gmra.mrb[0].mxu0 %v282
      %v449 = vpop.f32.mrb[0].mxu0
      %v450 = vadd.f32 %v269, %v449
      %v451 = vpop.f32.mrb[0].mxu0
      %452 = vmatprep.mubr.f32.mxu0 0.0
      %453 = vmatmul.mubr.f32.gmra.mrb[0].mxu0 %v285
      %v454 = vpop.f32.mrb[0].mxu0
      %v455 = vadd.f32 %v269, %v454
      %v456 = vpop.f32.mrb[0].mxu0
      %457 = vmatprep.mubr.f32.mxu0 0.0
      %458 = vmatmul.mubr.f32.gmra.mrb[0].mxu0 %v288
      %v459 = vpop.f32.mrb[0].mxu0
      %v460 = vadd.f32 %v269, %v459
      %v461 = vpop.f32.mrb[0].mxu0
      %462 = vmatprep.mubr.f32.mxu0 0.0
      %463 = vmatmul.mubr.f32.gmra.mrb[0].mxu0 %v291
      %v464 = vpop.f32.mrb[0].mxu0
      %v465 = vadd.f32 %v269, %v464
      %v466 = vpop.f32.mrb[0].mxu0
      %467 = vmatprep.mubr.f32.mxu0 0.0
      %468 = vmatmul.mubr.f32.gmra.mrb[0].mxu0 %v294
      %v469 = vpop.f32.mrb[0].mxu0
      %v470 = vadd.f32 %v269, %v469
      %v471 = vpop.f32.mrb[0].mxu0
      %472 = vmatprep.mubr.f32.mxu0 0.0
      %473 = vmatmul.mubr.f32.gmra.mrb[0].mxu0 %v297
      %v474 = vpop.f32.mrb[0].mxu0
      %v475 = vadd.f32 %v269, %v474
      %v476 = vpop.f32.mrb[0].mxu0
      %477 = vmatprep.mubr.f32.mxu0 0.0
      %478 = vmatmul.mubr.f32.gmra.mrb[0].mxu0 %v300
      %v479 = vpop.f32.mrb[0].mxu0
      %v480 = vadd.f32 %v269, %v479
      %v481 = vpop.f32.mrb[0].mxu0
      %482 = vmatprep.mubr.f32.mxu0 0.0
      %483 = vmatmul.mubr.f32.gmra.mrb[0].mxu0 %v303
      %v484 = vpop.f32.mrb[0].mxu0
      %v485 = vadd.f32 %v269, %v484
      %v486 = vpop.f32.mrb[0].mxu0
      %487 = vmatprep.mubr.f32.mxu0 0.0
      %488 = vmatmul.mubr.f32.gmra.mrb[0].mxu0 %v306
      %v489 = vpop.f32.mrb[0].mxu0
      %v490 = vadd.f32 %v269, %v489
      %v491 = vpop.f32.mrb[0].mxu0
      %492 = vmatprep.mubr.f32.mxu0 0.0
      %493 = vmatmul.mubr.f32.gmra.mrb[0].mxu0 %v309
      %v494 = vpop.f32.mrb[0].mxu0
      %v495 = vadd.f32 %v269, %v494
      %v496 = vpop.f32.mrb[0].mxu0
      %497 = vmatprep.mubr.f32.mxu0 0.0
      %498 = vmatmul.mubr.f32.gmra.mrb[0].mxu0 %v312
      %v499 = vpop.f32.mrb[0].mxu0
      %v500 = vadd.f32 %v269, %v499
      %v501 = vpop.f32.mrb[0].mxu0
      %502 = vmatprep.mubr.f32.mxu0 0.0
      %503 = vmatmul.mubr.f32.gmra.mrb[0].mxu0 %v315
      %v504 = vpop.f32.mrb[0].mxu0
      %v505 = vadd.f32 %v269, %v504
      %v506 = vpop.f32.mrb[0].mxu0
      %507 = vmatprep.mubr.f32.mxu0 0.0
      %508 = vmatmul.mubr.f32.gmra.mrb[0].mxu0 %v318
      %v509 = vpop.f32.mrb[0].mxu0
      %v510 = vadd.f32 %v269, %v509
      %v511 = vpop.f32.mrb[0].mxu0
      %512 = vmatprep.mubr.f32.mxu0 0.0
      %513 = vmatmul.mubr.f32.gmra.mrb[0].mxu0 %v321
      %v514 = vpop.f32.mrb[0].mxu0
      %v515 = vadd.f32 %v269, %v514
      %v516 = vpop.f32.mrb[0].mxu0
      %517 = vmatprep.mubr.f32.mxu0 0.0
      %518 = vmatmul.mubr.f32.gmra.mrb[0].mxu0 %v324
      %v519 = vpop.f32.mrb[0].mxu0
      %v520 = vadd.f32 %v269, %v519
      %v521 = vpop.f32.mrb[0].mxu0
      %522 = vmatprep.mubr.f32.mxu0 0.0
      %523 = vmatmul.mubr.f32.gmra.mrb[0].mxu0 %v327
      %v524 = vpop.f32.mrb[0].mxu0
      %v525 = vadd.f32 %v269, %v524
      %v526 = vpop.f32.mrb[0].mxu0
      %527 = vmatprep.mubr.f32.mxu0 0.0
      %528 = vmatmul.mubr.f32.gmra.mrb[0].mxu0 %v330
      %v529 = vpop.f32.mrb[0].mxu0
      %v530 = vadd.f32 %v269, %v529
      %v531 = vpop.f32.mrb[0].mxu0
      %532 = vmatprep.mubr.f32.mxu0 0.0
      %533 = vmatmul.mubr.f32.gmra.mrb[0].mxu0 %v333
      %v534 = vpop.f32.mrb[0].mxu0
      %v535 = vadd.f32 %v269, %v534
      %v536 = vpop.f32.mrb[0].mxu0
      %537 = vmatprep.mubr.f32.mxu0 0.0
      %538 = vmatmul.mubr.f32.gmra.mrb[0].mxu0 %v336
      %v539 = vpop.f32.mrb[0].mxu0
      %v540 = vadd.f32 %v269, %v539
      %v541 = vpop.f32.mrb[0].mxu0
      %542 = vmatprep.mubr.f32.mxu0 0.0
      %543 = vmatmul.mubr.f32.gmra.mrb[0].mxu0 %v339
      %v544 = vpop.f32.mrb[0].mxu0
      %v545 = vadd.f32 %v269, %v544
      %v546 = vpop.f32.mrb[0].mxu0
      %547 = vmatprep.mubr.f32.mxu0 0.0
      %548 = vmatmul.mubr.f32.gmra.mrb[0].mxu0 %v342
      %v549 = vpop.f32.mrb[0].mxu0
      %v550 = vadd.f32 %v269, %v549
      %v551 = vpop.f32.mrb[0].mxu0
      %552 = vmatprep.mubr.f32.mxu0 0.0
      %553 = vmatmul.mubr.f32.gmra.mrb[0].mxu0 %v345
      %v554 = vpop.f32.mrb[0].mxu0
      %v555 = vadd.f32 %v269, %v554
      %v556 = vpop.f32.mrb[0].mxu0
      %557 = vmatprep.mubr.f32.mxu0 0.0
      %558 = vmatmul.mubr.f32.gmra.mrb[0].mxu0 %v348
      %v559 = vpop.f32.mrb[0].mxu0
      %v560 = vadd.f32 %v269, %v559
      %v561 = vpop.f32.mrb[0].mxu0
      %562 = vmatprep.mubr.f32.mxu0 0.0
      %563 = vmatmul.mubr.f32.gmra.mrb[0].mxu0 %v351
      %v564 = vpop.f32.mrb[0].mxu0
      %v565 = vadd.f32 %v269, %v564
      %v566 = vpop.f32.mrb[0].mxu0
      %567 = vmatprep.mubr.f32.mxu0 0.0
      %568 = vmatmul.mubr.f32.gmra.mrb[0].mxu0 %v354
      %v569 = vpop.f32.mrb[0].mxu0
      %v570 = vadd.f32 %v269, %v569
      %v571 = vpop.f32.mrb[0].mxu0
      %572 = vmatprep.mubr.f32.mxu0 0.0
      %573 = vmatmul.mubr.f32.gmra.mrb[0].mxu0 %v357
      %v574 = vpop.f32.mrb[0].mxu0
      %v575 = vadd.f32 %v269, %v574
      %v576 = vpop.f32.mrb[0].mxu0
      %577 = vmatprep.mubr.f32.mxu0 0.0
      %578 = vmatmul.mubr.f32.gmra.mrb[0].mxu0 %v360
      %v579 = vpop.f32.mrb[0].mxu0
      %v580 = vadd.f32 %v269, %v579
      %v581 = vpop.f32.mrb[0].mxu0
      %582 = vmatprep.mubr.f32.mxu0 0.0
      %583 = vmatmul.mubr.f32.gmra.mrb[0].mxu0 %v363
      %v584 = vpop.f32.mrb[0].mxu0
      %v585 = vadd.f32 %v269, %v584
      %v586 = vpop.f32.mrb[0].mxu0
      %587 = vmatprep.mubr.f32.mxu0 0.0
      %588 = vmatmul.mubr.f32.gmra.mrb[0].mxu0 %v366
      %v589 = vpop.f32.mrb[0].mxu0
      %v590 = vadd.f32 %v269, %v589
      %v591 = vpop.f32.mrb[0].mxu0
      %592 = vdwg.mxu0
      %v593 = vmax.f32 %v435, 0.0
      %v594 = vmax.f32 %v440, 0.0
      %v595 = vmax.f32 %v445, 0.0
      %v596 = vmax.f32 %v450, 0.0
      %v597 = vmax.f32 %v455, 0.0
      %v598 = vmax.f32 %v460, 0.0
      %v599 = vmax.f32 %v465, 0.0
      %v600 = vmax.f32 %v470, 0.0
      %v601 = vmax.f32 %v475, 0.0
      %v602 = vmax.f32 %v480, 0.0
      %v603 = vmax.f32 %v485, 0.0
      %v604 = vmax.f32 %v490, 0.0
      %v605 = vmax.f32 %v495, 0.0
      %v606 = vmax.f32 %v500, 0.0
      %v607 = vmax.f32 %v505, 0.0
      %v608 = vmax.f32 %v510, 0.0
      %v609 = vmax.f32 %v515, 0.0
      %v610 = vmax.f32 %v520, 0.0
      %v611 = vmax.f32 %v525, 0.0
      %v612 = vmax.f32 %v530, 0.0
      %v613 = vmax.f32 %v535, 0.0
      %v614 = vmax.f32 %v540, 0.0
      %v615 = vmax.f32 %v545, 0.0
      %v616 = vmax.f32 %v550, 0.0
      %v617 = vmax.f32 %v555, 0.0
      %v618 = vmax.f32 %v560, 0.0
      %v619 = vmax.f32 %v565, 0.0
      %v620 = vmax.f32 %v570, 0.0
      %v621 = vmax.f32 %v575, 0.0
      %v622 = vmax.f32 %v580, 0.0
      %v623 = vmax.f32 %v585, 0.0
      %v624 = vmax.f32 %v590, 0.0
      %v625 = vld [vmem:[%s3] sm:$0x1]
      %v627 = vlaneseq
      %v628 = vshrl.u32 %v627, 7
      %v629 = vsub.s32 0, %v628
      %v630 = vrot.slane %v625, %v629
      %v632 = vmul.f32 %v593, %v630
      %v633 = vmul.f32 %v594, %v630
      %v634 = vmul.f32 %v595, %v630
      %v635 = vmul.f32 %v596, %v630
      %v636 = vmul.f32 %v597, %v630
      %v637 = vmul.f32 %v598, %v630
      %v638 = vmul.f32 %v599, %v630
      %v639 = vmul.f32 %v600, %v630
      %v640 = vmul.f32 %v601, %v630
      %v641 = vmul.f32 %v602, %v630
      %v642 = vmul.f32 %v603, %v630
      %v643 = vmul.f32 %v604, %v630
      %v644 = vmul.f32 %v605, %v630
      %v645 = vmul.f32 %v606, %v630
      %v646 = vmul.f32 %v607, %v630
      %v647 = vmul.f32 %v608, %v630
      %v648 = vmul.f32 %v609, %v630
      %v649 = vmul.f32 %v610, %v630
      %v650 = vmul.f32 %v611, %v630
      %v651 = vmul.f32 %v612, %v630
      %v652 = vmul.f32 %v613, %v630
      %v653 = vmul.f32 %v614, %v630
      %v654 = vmul.f32 %v615, %v630
      %v655 = vmul.f32 %v616, %v630
      %v656 = vmul.f32 %v617, %v630
      %v657 = vmul.f32 %v618, %v630
      %v658 = vmul.f32 %v619, %v630
      %v659 = vmul.f32 %v620, %v630
      %v660 = vmul.f32 %v621, %v630
      %v661 = vmul.f32 %v622, %v630
      %v662 = vmul.f32 %v623, %v630
      %v663 = vmul.f32 %v624, %v630
      %v664 = vld [vmem:[%s4] sm:$0x1]
      %v666 = vlaneseq
      %v667 = vshrl.u32 %v666, 7
      %v668 = vsub.s32 0, %v667
      %v669 = vrot.slane %v664, %v668
      %v671 = vadd.f32 %v632, %v669
      %v672 = vadd.f32 %v633, %v669
      %v673 = vadd.f32 %v634, %v669
      %v674 = vadd.f32 %v635, %v669
      %v675 = vadd.f32 %v636, %v669
      %v676 = vadd.f32 %v637, %v669
      %v677 = vadd.f32 %v638, %v669
      %v678 = vadd.f32 %v639, %v669
      %v679 = vadd.f32 %v640, %v669
      %v680 = vadd.f32 %v641, %v669
      %v681 = vadd.f32 %v642, %v669
      %v682 = vadd.f32 %v643, %v669
      %v683 = vadd.f32 %v644, %v669
      %v684 = vadd.f32 %v645, %v669
      %v685 = vadd.f32 %v646, %v669
      %v686 = vadd.f32 %v647, %v669
      %v687 = vadd.f32 %v648, %v669
      %v688 = vadd.f32 %v649, %v669
      %v689 = vadd.f32 %v650, %v669
      %v690 = vadd.f32 %v651, %v669
      %v691 = vadd.f32 %v652, %v669
      %v692 = vadd.f32 %v653, %v669
      %v693 = vadd.f32 %v654, %v669
      %v694 = vadd.f32 %v655, %v669
      %v695 = vadd.f32 %v656, %v669
      %v696 = vadd.f32 %v657, %v669
      %v697 = vadd.f32 %v658, %v669
      %v698 = vadd.f32 %v659, %v669
      %v699 = vadd.f32 %v660, %v669
      %v700 = vadd.f32 %v661, %v669
      %v701 = vadd.f32 %v662, %v669
      %v702 = vadd.f32 %v663, %v669
      %703 = vst [vmem:[%s226] sm:$0xff] %v671
      %704 = vst [vmem:[%s226 + $0x8] sm:$0xff] %v672
      %705 = vst [vmem:[%s226 + $0x10] sm:$0xff] %v673
      %706 = vst [vmem:[%s226 + $0x18] sm:$0xff] %v674
      %707 = vst [vmem:[%s226 + $0x20] sm:$0xff] %v675
      %708 = vst [vmem:[%s226 + $0x28] sm:$0xff] %v676
      %709 = vst [vmem:[%s226 + $0x30] sm:$0xff] %v677
      %710 = vst [vmem:[%s226 + $0x38] sm:$0xff] %v678
      %711 = vst [vmem:[%s226 + $0x40] sm:$0xff] %v679
      %712 = vst [vmem:[%s226 + $0x48] sm:$0xff] %v680
      %713 = vst [vmem:[%s226 + $0x50] sm:$0xff] %v681
      %714 = vst [vmem:[%s226 + $0x58] sm:$0xff] %v682
      %715 = vst [vmem:[%s226 + $0x60] sm:$0xff] %v683
      %716 = vst [vmem:[%s226 + $0x68] sm:$0xff] %v684
      %717 = vst [vmem:[%s226 + $0x70] sm:$0xff] %v685
      %718 = vst [vmem:[%s226 + $0x78] sm:$0xff] %v686
      %719 = vst [vmem:[%s226 + $0x80] sm:$0xff] %v687
      %720 = vst [vmem:[%s226 + $0x88] sm:$0xff] %v688
      %721 = vst [vmem:[%s226 + $0x90] sm:$0xff] %v689
      %722 = vst [vmem:[%s226 + $0x98] sm:$0xff] %v690
      %723 = vst [vmem:[%s226 + $0xa0] sm:$0xff] %v691
      %724 = vst [vmem:[%s226 + $0xa8] sm:$0xff] %v692
      %725 = vst [vmem:[%s226 + $0xb0] sm:$0xff] %v693
      %726 = vst [vmem:[%s226 + $0xb8] sm:$0xff] %v694
      %727 = vst [vmem:[%s226 + $0xc0] sm:$0xff] %v695
      %728 = vst [vmem:[%s226 + $0xc8] sm:$0xff] %v696
      %729 = vst [vmem:[%s226 + $0xd0] sm:$0xff] %v697
      %730 = vst [vmem:[%s226 + $0xd8] sm:$0xff] %v698
      %731 = vst [vmem:[%s226 + $0xe0] sm:$0xff] %v699
      %732 = vst [vmem:[%s226 + $0xe8] sm:$0xff] %v700
      %733 = vst [vmem:[%s226 + $0xf0] sm:$0xff] %v701
      %734 = vst [vmem:[%s226 + $0xf8] sm:$0xff] %v702
      %s735 = smul.u32 32, %s16
      %p736 = scmp.lt.s32.totalorder %s735, 95
      %s737 = scalar_select %p736, %s735, 95
      %s738 = smul.addr %s737, 8
      %s739 = scalar_lea.vmem %s5, %s738
      // Predicated region
      $region41: #{forward.7} parent=39 // pred_check
        %p740 = pneg %p144
      $region42: #{forward.7} parent=39 // pred_check_branch
        %742 = sbr.rel (%p740) target = $region44
      $region43: #{forward.7} parent=39 // pred_region
        %s743 = smul.u32 32, %s16
      $region44: #{forward.7} parent=39 // pred_fallthru
        _
    $region40: #{forward.7} parent=5 // pred_fallthru
      _
    %p744 = scmp.le.s32.totalorder 2, %s11
    // Predicated region
    $region45: #{forward.7} parent=5 // pred_check
      %p745 = pneg %p744
    $region46: #{forward.7} parent=5 // pred_check_branch
      %747 = sbr.rel (%p745) target = $region48
    $region47: #{forward.7} parent=5 // pred_region
      %s748 = ssub.s32 %s11, 2
      // Predicated region
      $region49: #{forward.7} parent=47 // pred_check
        %p749 = pneg %p150
      $region50: #{forward.7} parent=47 // pred_check_branch
        %751 = sbr.rel (%p749) target = $region52
      $region51: #{forward.7} parent=47 // pred_region
        %s752 = smul.u32 32, %s17
        %p753 = scmp.lt.s32.totalorder %s752, 95
        %s754 = scalar_select %p753, %s752, 95
        %s755 = smul.addr %s754, 8
        %s756 = scalar_lea.vmem %s5, %s755
      $region52: #{forward.7} parent=47 // pred_fallthru
        _
    $region48: #{forward.7} parent=5 // pred_fallthru
      _
  $region6: #{forward.7} parent=0 // loop_footer
    %s15 = sadd.s32 1, %s11
  $region7: #{forward.7} parent=0 // loop_footer_branch
    %10 = sbr.rel target = $region3
  $region8: #{forward.7} parent=0 // loop_exit
    _

// kernel: forward.8
$region0: #{forward.8}
  #allocation0 [shape = 'u32[]', space=smem, size = 0x4, offset = 0x4, fixed_abs, tag = 'smem constant byte address 0x4 - core index']
  #allocation1 [shape = 'u32[144,128]{1,0:T(1,128)}', space=vmem, size = 0x12000, scoped, tag = 'internal scratch']
  %s0 = inlined_call_operand.vmem [shape: f32[176,512], index: 0, kind: input, shape index: {}]
  %s1 = inlined_call_operand.vmem [shape: f32[512,128], index: 1, kind: input, shape index: {}]
  %s2 = inlined_call_operand.vmem [shape: f32[1,128], index: 2, kind: input, shape index: {}]
  %s3 = inlined_call_operand.vmem [shape: f32[1,128], index: 3, kind: input, shape index: {}]
  %s4 = inlined_call_operand.vmem [shape: f32[1,128], index: 4, kind: input, shape index: {}]
  %s5 = inlined_call_operand.vmem [shape: f32[176,128], index: 5, kind: output, shape index: {}]
  %s6 = sld [smem:[#allocation0]]
  $region30: #{forward.8} parent=0
    _
  %s8 = ssub.s32 1, %s6
  %s9 = scalar_select 0, %s8, %s6
  // Predicated region
  $region2: #{forward.8} parent=0 // pred_check
    _
  $region3: #{forward.8} parent=0 // pred_check_branch
    %11 = sbr.rel (0) target = $region5
  $region4: #{forward.8} parent=0 // pred_region
    _
  $region5: #{forward.8} parent=0 // pred_fallthru
    _
  // Predicated region
  $region6: #{forward.8} parent=0 // pred_check
    _
  $region7: #{forward.8} parent=0 // pred_check_branch
    %13 = sbr.rel (0) target = $region9
  $region8: #{forward.8} parent=0 // pred_region
    _
  $region9: #{forward.8} parent=0 // pred_fallthru
    _
  // Predicated region
  $region10: #{forward.8} parent=0 // pred_check
    _
  $region11: #{forward.8} parent=0 // pred_check_branch
    %15 = sbr.rel (0) target = $region13
  $region12: #{forward.8} parent=0 // pred_region
    _
  $region13: #{forward.8} parent=0 // pred_fallthru
    _
  // Predicated region
  $region14: #{forward.8} parent=0 // pred_check
    _
  $region15: #{forward.8} parent=0 // pred_check_branch
    %17 = sbr.rel (0) target = $region17
  $region16: #{forward.8} parent=0 // pred_region
    _
  $region17: #{forward.8} parent=0 // pred_fallthru
    _
  // Predicated region
  $region18: #{forward.8} parent=0 // pred_check
    _
  $region19: #{forward.8} parent=0 // pred_check_branch
    %19 = sbr.rel (0) target = $region21
  $region20: #{forward.8} parent=0 // pred_region
    _
  $region21: #{forward.8} parent=0 // pred_fallthru
    _
  %v20 = vld [vmem:[%s0] sm:$0xff]
  %v21 = vld [vmem:[%s0 + $0x8] sm:$0xff]
  %v22 = vld [vmem:[%s0 + $0x10] sm:$0xff]
  %v23 = vld [vmem:[%s0 + $0x18] sm:$0xff]
  %v24 = vld [vmem:[%s0 + $0x20] sm:$0xff]
  %v25 = vld [vmem:[%s0 + $0x28] sm:$0xff]
  %v26 = vld [vmem:[%s0 + $0x30] sm:$0xff]
  %v27 = vld [vmem:[%s0 + $0x38] sm:$0xff]
  %v28 = vld [vmem:[%s0 + $0x40] sm:$0xff]
  %v29 = vld [vmem:[%s0 + $0x48] sm:$0xff]
  %v30 = vld [vmem:[%s0 + $0x50] sm:$0xff]
  %v31 = vld [vmem:[%s0 + $0x58] sm:$0xff]
  %v32 = vld [vmem:[%s0 + $0x60] sm:$0xff]
  %v33 = vld [vmem:[%s0 + $0x68] sm:$0xff]
  %v34 = vld [vmem:[%s0 + $0x70] sm:$0xff]
  %v35 = vld [vmem:[%s0 + $0x78] sm:$0xff]
  %v36 = vld [vmem:[%s0 + $0x80] sm:$0xff]
  %v37 = vld [vmem:[%s0 + $0x88] sm:$0xff]
  %v38 = vld [vmem:[%s0 + $0x90] sm:$0xff]
  %v39 = vld [vmem:[%s0 + $0x98] sm:$0xff]
  %v40 = vld [vmem:[%s0 + $0xa0] sm:$0xff]
  %v41 = vld [vmem:[%s0 + $0xa8] sm:$0xff]
  %v42 = vld [vmem:[%s0 + $0xb0] sm:$0xff]
  %v43 = vld [vmem:[%s0 + $0xb8] sm:$0xff]
  %v44 = vld [vmem:[%s0 + $0xc0] sm:$0xff]
  %v45 = vld [vmem:[%s0 + $0xc8] sm:$0xff]
  %v46 = vld [vmem:[%s0 + $0xd0] sm:$0xff]
  %v47 = vld [vmem:[%s0 + $0xd8] sm:$0xff]
  %v48 = vld [vmem:[%s0 + $0xe0] sm:$0xff]
  %v49 = vld [vmem:[%s0 + $0xe8] sm:$0xff]
  %v50 = vld [vmem:[%s0 + $0xf0] sm:$0xff]
  %v51 = vld [vmem:[%s0 + $0xf8] sm:$0xff]
  %v52 = vld [vmem:[%s0 + $0x100] sm:$0xff]
  %v53 = vld [vmem:[%s0 + $0x108] sm:$0xff]
  %v54 = vld [vmem:[%s0 + $0x110] sm:$0xff]
  %v55 = vld [vmem:[%s0 + $0x118] sm:$0xff]
  %v56 = vld [vmem:[%s0 + $0x120] sm:$0xff]
  %v57 = vld [vmem:[%s0 + $0x128] sm:$0xff]
  %v58 = vld [vmem:[%s0 + $0x130] sm:$0xff]
  %v59 = vld [vmem:[%s0 + $0x138] sm:$0xff]
  %v60 = vld [vmem:[%s0 + $0x140] sm:$0xff]
  %v61 = vld [vmem:[%s0 + $0x148] sm:$0xff]
  %v62 = vld [vmem:[%s0 + $0x150] sm:$0xff]
  %v63 = vld [vmem:[%s0 + $0x158] sm:$0xff]
  %v64 = vld [vmem:[%s0 + $0x160] sm:$0xff]
  %v65 = vld [vmem:[%s0 + $0x168] sm:$0xff]
  %v66 = vld [vmem:[%s0 + $0x170] sm:$0xff]
  %v67 = vld [vmem:[%s0 + $0x178] sm:$0xff]
  %v68 = vld [vmem:[%s0 + $0x180] sm:$0xff]
  %v69 = vld [vmem:[%s0 + $0x188] sm:$0xff]
  %v70 = vld [vmem:[%s0 + $0x190] sm:$0xff]
  %v71 = vld [vmem:[%s0 + $0x198] sm:$0xff]
  %v72 = vld [vmem:[%s0 + $0x1a0] sm:$0xff]
  %v73 = vld [vmem:[%s0 + $0x1a8] sm:$0xff]
  %v74 = vld [vmem:[%s0 + $0x1b0] sm:$0xff]
  %v75 = vld [vmem:[%s0 + $0x1b8] sm:$0xff]
  %v76 = vld [vmem:[%s0 + $0x1c0] sm:$0xff]
  %v77 = vld [vmem:[%s0 + $0x1c8] sm:$0xff]
  %v78 = vld [vmem:[%s0 + $0x1d0] sm:$0xff]
  %v79 = vld [vmem:[%s0 + $0x1d8] sm:$0xff]
  %v80 = vld [vmem:[%s0 + $0x1e0] sm:$0xff]
  %v81 = vld [vmem:[%s0 + $0x1e8] sm:$0xff]
  %v82 = vld [vmem:[%s0 + $0x1f0] sm:$0xff]
  %v83 = vld [vmem:[%s0 + $0x1f8] sm:$0xff]
  %v84 = vld [vmem:[%s0 + $0x200] sm:$0xff]
  %v85 = vld [vmem:[%s0 + $0x208] sm:$0xff]
  %v86 = vld [vmem:[%s0 + $0x210] sm:$0xff]
  %v87 = vld [vmem:[%s0 + $0x218] sm:$0xff]
  %v88 = vld [vmem:[%s0 + $0x220] sm:$0xff]
  %v89 = vld [vmem:[%s0 + $0x228] sm:$0xff]
  %v90 = vld [vmem:[%s0 + $0x230] sm:$0xff]
  %v91 = vld [vmem:[%s0 + $0x238] sm:$0xff]
  %v92 = vld [vmem:[%s0 + $0x240] sm:$0xff]
  %v93 = vld [vmem:[%s0 + $0x248] sm:$0xff]
  %v94 = vld [vmem:[%s0 + $0x250] sm:$0xff]
  %v95 = vld [vmem:[%s0 + $0x258] sm:$0xff]
  %v96 = vld [vmem:[%s0 + $0x260] sm:$0xff]
  %v97 = vld [vmem:[%s0 + $0x268] sm:$0xff]
  %v98 = vld [vmem:[%s0 + $0x270] sm:$0xff]
  %v99 = vld [vmem:[%s0 + $0x278] sm:$0xff]
  %v100 = vld [vmem:[%s0 + $0x280] sm:$0xff]
  %v101 = vld [vmem:[%s0 + $0x288] sm:$0xff]
  %v102 = vld [vmem:[%s0 + $0x290] sm:$0xff]
  %v103 = vld [vmem:[%s0 + $0x298] sm:$0xff]
  %v104 = vld [vmem:[%s0 + $0x2a0] sm:$0xff]
  %v105 = vld [vmem:[%s0 + $0x2a8] sm:$0xff]
  %v106 = vld [vmem:[%s0 + $0x2b0] sm:$0xff]
  %v107 = vld [vmem:[%s0 + $0x2b8] sm:$0xff]
  %v108 = vld [vmem:[%s1] sm:$0xff]
  %v109 = vld [vmem:[%s1 + $0x8] sm:$0xff]
  %v110 = vld [vmem:[%s1 + $0x10] sm:$0xff]
  %v111 = vld [vmem:[%s1 + $0x18] sm:$0xff]
  %v112 = vld [vmem:[%s1 + $0x20] sm:$0xff]
  %v113 = vld [vmem:[%s1 + $0x28] sm:$0xff]
  %v114 = vld [vmem:[%s1 + $0x30] sm:$0xff]
  %v115 = vld [vmem:[%s1 + $0x38] sm:$0xff]
  %v116 = vld [vmem:[%s1 + $0x40] sm:$0xff]
  %v117 = vld [vmem:[%s1 + $0x48] sm:$0xff]
  %v118 = vld [vmem:[%s1 + $0x50] sm:$0xff]
  %v119 = vld [vmem:[%s1 + $0x58] sm:$0xff]
  %v120 = vld [vmem:[%s1 + $0x60] sm:$0xff]
  %v121 = vld [vmem:[%s1 + $0x68] sm:$0xff]
  %v122 = vld [vmem:[%s1 + $0x70] sm:$0xff]
  %v123 = vld [vmem:[%s1 + $0x78] sm:$0xff]
  %v124 = vld [vmem:[%s1 + $0x80] sm:$0xff]
  %v125 = vld [vmem:[%s1 + $0x88] sm:$0xff]
  %v126 = vld [vmem:[%s1 + $0x90] sm:$0xff]
  %v127 = vld [vmem:[%s1 + $0x98] sm:$0xff]
  %v128 = vld [vmem:[%s1 + $0xa0] sm:$0xff]
  %v129 = vld [vmem:[%s1 + $0xa8] sm:$0xff]
  %v130 = vld [vmem:[%s1 + $0xb0] sm:$0xff]
  %v131 = vld [vmem:[%s1 + $0xb8] sm:$0xff]
  %v132 = vld [vmem:[%s1 + $0xc0] sm:$0xff]
  %v133 = vld [vmem:[%s1 + $0xc8] sm:$0xff]
  %v134 = vld [vmem:[%s1 + $0xd0] sm:$0xff]
  %v135 = vld [vmem:[%s1 + $0xd8] sm:$0xff]
  %v136 = vld [vmem:[%s1 + $0xe0] sm:$0xff]
  %v137 = vld [vmem:[%s1 + $0xe8] sm:$0xff]
  %v138 = vld [vmem:[%s1 + $0xf0] sm:$0xff]
  %v139 = vld [vmem:[%s1 + $0xf8] sm:$0xff]
  %v140 = vld [vmem:[%s1 + $0x100] sm:$0xff]
  %v141 = vld [vmem:[%s1 + $0x108] sm:$0xff]
  %v142 = vld [vmem:[%s1 + $0x110] sm:$0xff]
  %v143 = vld [vmem:[%s1 + $0x118] sm:$0xff]
  %v144 = vld [vmem:[%s1 + $0x120] sm:$0xff]
  %v145 = vld [vmem:[%s1 + $0x128] sm:$0xff]
  %v146 = vld [vmem:[%s1 + $0x130] sm:$0xff]
  %v147 = vld [vmem:[%s1 + $0x138] sm:$0xff]
  %v148 = vld [vmem:[%s1 + $0x140] sm:$0xff]
  %v149 = vld [vmem:[%s1 + $0x148] sm:$0xff]
  %v150 = vld [vmem:[%s1 + $0x150] sm:$0xff]
  %v151 = vld [vmem:[%s1 + $0x158] sm:$0xff]
  %v152 = vld [vmem:[%s1 + $0x160] sm:$0xff]
  %v153 = vld [vmem:[%s1 + $0x168] sm:$0xff]
  %v154 = vld [vmem:[%s1 + $0x170] sm:$0xff]
  %v155 = vld [vmem:[%s1 + $0x178] sm:$0xff]
  %v156 = vld [vmem:[%s1 + $0x180] sm:$0xff]
  %v157 = vld [vmem:[%s1 + $0x188] sm:$0xff]
  %v158 = vld [vmem:[%s1 + $0x190] sm:$0xff]
  %v159 = vld [vmem:[%s1 + $0x198] sm:$0xff]
  %v160 = vld [vmem:[%s1 + $0x1a0] sm:$0xff]
  %v161 = vld [vmem:[%s1 + $0x1a8] sm:$0xff]
  %v162 = vld [vmem:[%s1 + $0x1b0] sm:$0xff]
  %v163 = vld [vmem:[%s1 + $0x1b8] sm:$0xff]
  %v164 = vld [vmem:[%s1 + $0x1c0] sm:$0xff]
  %v165 = vld [vmem:[%s1 + $0x1c8] sm:$0xff]
  %v166 = vld [vmem:[%s1 + $0x1d0] sm:$0xff]
  %v167 = vld [vmem:[%s1 + $0x1d8] sm:$0xff]
  %v168 = vld [vmem:[%s1 + $0x1e0] sm:$0xff]
  %v169 = vld [vmem:[%s1 + $0x1e8] sm:$0xff]
  %v170 = vld [vmem:[%s1 + $0x1f0] sm:$0xff]
  %v171 = vld [vmem:[%s1 + $0x1f8] sm:$0xff]
  %v172 = vld [vmem:[%s2] sm:$0x1]
  %v174 = vlaneseq
  %v175 = vshrl.u32 %v174, 7
  %v176 = vsub.s32 0, %v175
  %v177 = vrot.slane %v172, %v176
  %179 = vmatprep.subr.mxu0 0.0
  %180 = vmatpush1.msra.mxu0 %v108
  %181 = vmatprep.subr.mxu0 0.0
  %182 = vmatpush1.msra.mxu0 %v109
  %183 = vmatprep.subr.mxu0 0.0
  %184 = vmatpush1.msra.mxu0 %v110
  %185 = vmatprep.subr.mxu0 0.0
  %186 = vmatpush1.msra.mxu0 %v111
  %187 = vmatprep.subr.mxu0 0.0
  %188 = vmatpush1.msra.mxu0 %v112
  %189 = vmatprep.subr.mxu0 0.0
  %190 = vmatpush1.msra.mxu0 %v113
  %191 = vmatprep.subr.mxu0 0.0
  %192 = vmatpush1.msra.mxu0 %v114
  %193 = vmatprep.subr.mxu0 0.0
  %194 = vmatpush1.msra.mxu0 %v115
  %195 = vmatprep.subr.mxu0 0.0
  %196 = vmatpush1.msra.mxu0 %v116
  %197 = vmatprep.subr.mxu0 0.0
  %198 = vmatpush1.msra.mxu0 %v117
  %199 = vmatprep.subr.mxu0 0.0
  %200 = vmatpush1.msra.mxu0 %v118
  %201 = vmatprep.subr.mxu0 0.0
  %202 = vmatpush1.msra.mxu0 %v119
  %203 = vmatprep.subr.mxu0 0.0
  %204 = vmatpush1.msra.mxu0 %v120
  %205 = vmatprep.subr.mxu0 0.0
  %206 = vmatpush1.msra.mxu0 %v121
  %207 = vmatprep.subr.mxu0 0.0
  %208 = vmatpush1.msra.mxu0 %v122
  %209 = vmatprep.subr.mxu0 0.0
  %210 = vmatpush1.msra.mxu0 %v123
  %211 = vmatprep.subr.mxu0 0.0
  %212 = vmatpush1.msra.mxu0 %v124
  %213 = vmatprep.subr.mxu0 0.0
  %214 = vmatpush1.msra.mxu0 %v125
  %215 = vmatprep.subr.mxu0 0.0
  %216 = vmatpush1.msra.mxu0 %v126
  %217 = vmatprep.subr.mxu0 0.0
  %218 = vmatpush1.msra.mxu0 %v127
  %219 = vmatprep.subr.mxu0 0.0
  %220 = vmatpush1.msra.mxu0 %v128
  %221 = vmatprep.subr.mxu0 0.0
  %222 = vmatpush1.msra.mxu0 %v129
  %223 = vmatprep.subr.mxu0 0.0
  %224 = vmatpush1.msra.mxu0 %v130
  %225 = vmatprep.subr.mxu0 0.0
  %226 = vmatpush1.msra.mxu0 %v131
  %227 = vmatprep.subr.mxu0 0.0
  %228 = vmatpush1.msra.mxu0 %v132
  %229 = vmatprep.subr.mxu0 0.0
  %230 = vmatpush1.msra.mxu0 %v133
  %231 = vmatprep.subr.mxu0 0.0
  %232 = vmatpush1.msra.mxu0 %v134
  %233 = vmatprep.subr.mxu0 0.0
  %234 = vmatpush1.msra.mxu0 %v135
  %235 = vmatprep.subr.mxu0 0.0
  %236 = vmatpush1.msra.mxu0 %v136
  %237 = vmatprep.subr.mxu0 0.0
  %238 = vmatpush1.msra.mxu0 %v137
  %239 = vmatprep.subr.mxu0 0.0
  %240 = vmatpush1.msra.mxu0 %v138
  %241 = vmatprep.subr.mxu0 0.0
  %242 = vmatpush1.msra.mxu0 %v139
  %243 = vmatprep.mubr.f32.mxu0 %v21
  %244 = vmatmul.mubr.f32.gmra.mrb[0].mxu0 %v20
  %v245 = vpop.f32.mrb[0].mxu0
  %v246 = vadd.f32 %v177, %v245
  %v247 = vpop.f32.mrb[0].mxu0
  %248 = vmatprep.mubr.f32.mxu0 %v25
  %249 = vmatmul.mubr.f32.gmra.mrb[0].mxu0 %v24
  %v250 = vpop.f32.mrb[0].mxu0
  %v251 = vadd.f32 %v177, %v250
  %v252 = vpop.f32.mrb[0].mxu0
  %253 = vmatprep.mubr.f32.mxu0 %v29
  %254 = vmatmul.mubr.f32.gmra.mrb[0].mxu0 %v28
  %v255 = vpop.f32.mrb[0].mxu0
  %v256 = vadd.f32 %v177, %v255
  %v257 = vpop.f32.mrb[0].mxu0
  %258 = vmatprep.mubr.f32.mxu0 %v33
  %259 = vmatmul.mubr.f32.gmra.mrb[0].mxu0 %v32
  %v260 = vpop.f32.mrb[0].mxu0
  %v261 = vadd.f32 %v177, %v260
  %v262 = vpop.f32.mrb[0].mxu0
  %263 = vmatprep.mubr.f32.mxu0 %v37
  %264 = vmatmul.mubr.f32.gmra.mrb[0].mxu0 %v36
  %v265 = vpop.f32.mrb[0].mxu0
  %v266 = vadd.f32 %v177, %v265
  %v267 = vpop.f32.mrb[0].mxu0
  %268 = vmatprep.mubr.f32.mxu0 %v41
  %269 = vmatmul.mubr.f32.gmra.mrb[0].mxu0 %v40
  %v270 = vpop.f32.mrb[0].mxu0
  %v271 = vadd.f32 %v177, %v270
  %v272 = vpop.f32.mrb[0].mxu0
  %273 = vmatprep.mubr.f32.mxu0 %v45
  %274 = vmatmul.mubr.f32.gmra.mrb[0].mxu0 %v44
  %v275 = vpop.f32.mrb[0].mxu0
  %v276 = vadd.f32 %v177, %v275
  %v277 = vpop.f32.mrb[0].mxu0
  %278 = vmatprep.mubr.f32.mxu0 %v49
  %279 = vmatmul.mubr.f32.gmra.mrb[0].mxu0 %v48
  %v280 = vpop.f32.mrb[0].mxu0
  %v281 = vadd.f32 %v177, %v280
  %v282 = vpop.f32.mrb[0].mxu0
  %283 = vmatprep.mubr.f32.mxu0 %v53
  %284 = vmatmul.mubr.f32.gmra.mrb[0].mxu0 %v52
  %v285 = vpop.f32.mrb[0].mxu0
  %v286 = vadd.f32 %v177, %v285
  %v287 = vpop.f32.mrb[0].mxu0
  %288 = vmatprep.mubr.f32.mxu0 %v57
  %289 = vmatmul.mubr.f32.gmra.mrb[0].mxu0 %v56
  %v290 = vpop.f32.mrb[0].mxu0
  %v291 = vadd.f32 %v177, %v290
  %v292 = vpop.f32.mrb[0].mxu0
  %293 = vmatprep.mubr.f32.mxu0 %v61
  %294 = vmatmul.mubr.f32.gmra.mrb[0].mxu0 %v60
  %v295 = vpop.f32.mrb[0].mxu0
  %v296 = vadd.f32 %v177, %v295
  %v297 = vpop.f32.mrb[0].mxu0
  %298 = vmatprep.mubr.f32.mxu0 %v65
  %299 = vmatmul.mubr.f32.gmra.mrb[0].mxu0 %v64
  %v300 = vpop.f32.mrb[0].mxu0
  %v301 = vadd.f32 %v177, %v300
  %v302 = vpop.f32.mrb[0].mxu0
  %303 = vmatprep.mubr.f32.mxu0 %v69
  %304 = vmatmul.mubr.f32.gmra.mrb[0].mxu0 %v68
  %v305 = vpop.f32.mrb[0].mxu0
  %v306 = vadd.f32 %v177, %v305
  %v307 = vpop.f32.mrb[0].mxu0
  %308 = vmatprep.mubr.f32.mxu0 %v73
  %309 = vmatmul.mubr.f32.gmra.mrb[0].mxu0 %v72
  %v310 = vpop.f32.mrb[0].mxu0
  %v311 = vadd.f32 %v177, %v310
  %v312 = vpop.f32.mrb[0].mxu0
  %313 = vmatprep.mubr.f32.mxu0 %v77
  %314 = vmatmul.mubr.f32.gmra.mrb[0].mxu0 %v76
  %v315 = vpop.f32.mrb[0].mxu0
  %v316 = vadd.f32 %v177, %v315
  %v317 = vpop.f32.mrb[0].mxu0
  %318 = vmatprep.mubr.f32.mxu0 %v81
  %319 = vmatmul.mubr.f32.gmra.mrb[0].mxu0 %v80
  %v320 = vpop.f32.mrb[0].mxu0
  %v321 = vadd.f32 %v177, %v320
  %v322 = vpop.f32.mrb[0].mxu0
  %323 = vmatprep.mubr.f32.mxu0 %v85
  %324 = vmatmul.mubr.f32.gmra.mrb[0].mxu0 %v84
  %v325 = vpop.f32.mrb[0].mxu0
  %v326 = vadd.f32 %v177, %v325
  %v327 = vpop.f32.mrb[0].mxu0
  %328 = vmatprep.mubr.f32.mxu0 %v89
  %329 = vmatmul.mubr.f32.gmra.mrb[0].mxu0 %v88
  %v330 = vpop.f32.mrb[0].mxu0
  %v331 = vadd.f32 %v177, %v330
  %v332 = vpop.f32.mrb[0].mxu0
  %333 = vmatprep.mubr.f32.mxu0 %v93
  %334 = vmatmul.mubr.f32.gmra.mrb[0].mxu0 %v92
  %v335 = vpop.f32.mrb[0].mxu0
  %v336 = vadd.f32 %v177, %v335
  %v337 = vpop.f32.mrb[0].mxu0
  %338 = vmatprep.mubr.f32.mxu0 %v97
  %339 = vmatmul.mubr.f32.gmra.mrb[0].mxu0 %v96
  %v340 = vpop.f32.mrb[0].mxu0
  %v341 = vadd.f32 %v177, %v340
  %v342 = vpop.f32.mrb[0].mxu0
  %343 = vmatprep.mubr.f32.mxu0 %v101
  %344 = vmatmul.mubr.f32.gmra.mrb[0].mxu0 %v100
  %v345 = vpop.f32.mrb[0].mxu0
  %v346 = vadd.f32 %v177, %v345
  %v347 = vpop.f32.mrb[0].mxu0
  %348 = vmatprep.mubr.f32.mxu0 %v105
  %349 = vmatmul.mubr.f32.gmra.mrb[0].mxu0 %v104
  %v350 = vpop.f32.mrb[0].mxu0
  %v351 = vadd.f32 %v177, %v350
  %v352 = vpop.f32.mrb[0].mxu0
  %353 = vdwg.mxu0
  %354 = vmatprep.subr.mxu0 0.0
  %355 = vmatpush1.msra.mxu0 %v140
  %356 = vmatprep.subr.mxu0 0.0
  %357 = vmatpush1.msra.mxu0 %v141
  %358 = vmatprep.subr.mxu0 0.0
  %359 = vmatpush1.msra.mxu0 %v142
  %360 = vmatprep.subr.mxu0 0.0
  %361 = vmatpush1.msra.mxu0 %v143
  %362 = vmatprep.subr.mxu0 0.0
  %363 = vmatpush1.msra.mxu0 %v144
  %364 = vmatprep.subr.mxu0 0.0
  %365 = vmatpush1.msra.mxu0 %v145
  %366 = vmatprep.subr.mxu0 0.0
  %367 = vmatpush1.msra.mxu0 %v146
  %368 = vmatprep.subr.mxu0 0.0
  %369 = vmatpush1.msra.mxu0 %v147
  %370 = vmatprep.subr.mxu0 0.0
  %371 = vmatpush1.msra.mxu0 %v148
  %372 = vmatprep.subr.mxu0 0.0
  %373 = vmatpush1.msra.mxu0 %v149
  %374 = vmatprep.subr.mxu0 0.0
  %375 = vmatpush1.msra.mxu0 %v150
  %376 = vmatprep.subr.mxu0 0.0
  %377 = vmatpush1.msra.mxu0 %v151
  %378 = vmatprep.subr.mxu0 0.0
  %379 = vmatpush1.msra.mxu0 %v152
  %380 = vmatprep.subr.mxu0 0.0
  %381 = vmatpush1.msra.mxu0 %v153
  %382 = vmatprep.subr.mxu0 0.0
  %383 = vmatpush1.msra.mxu0 %v154
  %384 = vmatprep.subr.mxu0 0.0
  %385 = vmatpush1.msra.mxu0 %v155
  %386 = vmatprep.subr.mxu0 0.0
  %387 = vmatpush1.msra.mxu0 %v156
  %388 = vmatprep.subr.mxu0 0.0
  %389 = vmatpush1.msra.mxu0 %v157
  %390 = vmatprep.subr.mxu0 0.0
  %391 = vmatpush1.msra.mxu0 %v158
  %392 = vmatprep.subr.mxu0 0.0
  %393 = vmatpush1.msra.mxu0 %v159
  %394 = vmatprep.subr.mxu0 0.0
  %395 = vmatpush1.msra.mxu0 %v160
  %396 = vmatprep.subr.mxu0 0.0
  %397 = vmatpush1.msra.mxu0 %v161
  %398 = vmatprep.subr.mxu0 0.0
  %399 = vmatpush1.msra.mxu0 %v162
  %400 = vmatprep.subr.mxu0 0.0
  %401 = vmatpush1.msra.mxu0 %v163
  %402 = vmatprep.subr.mxu0 0.0
  %403 = vmatpush1.msra.mxu0 %v164
  %404 = vmatprep.subr.mxu0 0.0
  %405 = vmatpush1.msra.mxu0 %v165
  %406 = vmatprep.subr.mxu0 0.0
  %407 = vmatpush1.msra.mxu0 %v166
  %408 = vmatprep.subr.mxu0 0.0
  %409 = vmatpush1.msra.mxu0 %v167
  %410 = vmatprep.subr.mxu0 0.0
  %411 = vmatpush1.msra.mxu0 %v168
  %412 = vmatprep.subr.mxu0 0.0
  %413 = vmatpush1.msra.mxu0 %v169
  %414 = vmatprep.subr.mxu0 0.0
  %415 = vmatpush1.msra.mxu0 %v170
  %416 = vmatprep.subr.mxu0 0.0
  %417 = vmatpush1.msra.mxu0 %v171
  %418 = vmatprep.mubr.f32.mxu0 %v23
  %419 = vmatmul.mubr.f32.gmra.mrb[0].mxu0 %v22
  %v420 = vpop.f32.mrb[0].mxu0
  %v421 = vadd.f32 %v246, %v420
  %v422 = vpop.f32.mrb[0].mxu0
  %423 = vmatprep.mubr.f32.mxu0 %v27
  %424 = vmatmul.mubr.f32.gmra.mrb[0].mxu0 %v26
  %v425 = vpop.f32.mrb[0].mxu0
  %v426 = vadd.f32 %v251, %v425
  %v427 = vpop.f32.mrb[0].mxu0
  %428 = vmatprep.mubr.f32.mxu0 %v31
  %429 = vmatmul.mubr.f32.gmra.mrb[0].mxu0 %v30
  %v430 = vpop.f32.mrb[0].mxu0
  %v431 = vadd.f32 %v256, %v430
  %v432 = vpop.f32.mrb[0].mxu0
  %433 = vmatprep.mubr.f32.mxu0 %v35
  %434 = vmatmul.mubr.f32.gmra.mrb[0].mxu0 %v34
  %v435 = vpop.f32.mrb[0].mxu0
  %v436 = vadd.f32 %v261, %v435
  %v437 = vpop.f32.mrb[0].mxu0
  %438 = vmatprep.mubr.f32.mxu0 %v39
  %439 = vmatmul.mubr.f32.gmra.mrb[0].mxu0 %v38
  %v440 = vpop.f32.mrb[0].mxu0
  %v441 = vadd.f32 %v266, %v440
  %v442 = vpop.f32.mrb[0].mxu0
  %443 = vmatprep.mubr.f32.mxu0 %v43
  %444 = vmatmul.mubr.f32.gmra.mrb[0].mxu0 %v42
  %v445 = vpop.f32.mrb[0].mxu0
  %v446 = vadd.f32 %v271, %v445
  %v447 = vpop.f32.mrb[0].mxu0
  %448 = vmatprep.mubr.f32.mxu0 %v47
  %449 = vmatmul.mubr.f32.gmra.mrb[0].mxu0 %v46
  %v450 = vpop.f32.mrb[0].mxu0
  %v451 = vadd.f32 %v276, %v450
  %v452 = vpop.f32.mrb[0].mxu0
  %453 = vmatprep.mubr.f32.mxu0 %v51
  %454 = vmatmul.mubr.f32.gmra.mrb[0].mxu0 %v50
  %v455 = vpop.f32.mrb[0].mxu0
  %v456 = vadd.f32 %v281, %v455
  %v457 = vpop.f32.mrb[0].mxu0
  %458 = vmatprep.mubr.f32.mxu0 %v55
  %459 = vmatmul.mubr.f32.gmra.mrb[0].mxu0 %v54
  %v460 = vpop.f32.mrb[0].mxu0
  %v461 = vadd.f32 %v286, %v460
  %v462 = vpop.f32.mrb[0].mxu0
  %463 = vmatprep.mubr.f32.mxu0 %v59
  %464 = vmatmul.mubr.f32.gmra.mrb[0].mxu0 %v58
  %v465 = vpop.f32.mrb[0].mxu0
  %v466 = vadd.f32 %v291, %v465
  %v467 = vpop.f32.mrb[0].mxu0
  %468 = vmatprep.mubr.f32.mxu0 %v63
  %469 = vmatmul.mubr.f32.gmra.mrb[0].mxu0 %v62
  %v470 = vpop.f32.mrb[0].mxu0
  %v471 = vadd.f32 %v296, %v470
  %v472 = vpop.f32.mrb[0].mxu0
  %473 = vmatprep.mubr.f32.mxu0 %v67
  %474 = vmatmul.mubr.f32.gmra.mrb[0].mxu0 %v66
  %v475 = vpop.f32.mrb[0].mxu0
  %v476 = vadd.f32 %v301, %v475
  %v477 = vpop.f32.mrb[0].mxu0
  %478 = vmatprep.mubr.f32.mxu0 %v71
  %479 = vmatmul.mubr.f32.gmra.mrb[0].mxu0 %v70
  %v480 = vpop.f32.mrb[0].mxu0
  %v481 = vadd.f32 %v306, %v480
  %v482 = vpop.f32.mrb[0].mxu0
  %483 = vmatprep.mubr.f32.mxu0 %v75
  %484 = vmatmul.mubr.f32.gmra.mrb[0].mxu0 %v74
  %v485 = vpop.f32.mrb[0].mxu0
  %v486 = vadd.f32 %v311, %v485
  %v487 = vpop.f32.mrb[0].mxu0
  %488 = vmatprep.mubr.f32.mxu0 %v79
  %489 = vmatmul.mubr.f32.gmra.mrb[0].mxu0 %v78
  %v490 = vpop.f32.mrb[0].mxu0
  %v491 = vadd.f32 %v316, %v490
  %v492 = vpop.f32.mrb[0].mxu0
  %493 = vmatprep.mubr.f32.mxu0 %v83
  %494 = vmatmul.mubr.f32.gmra.mrb[0].mxu0 %v82
  %v495 = vpop.f32.mrb[0].mxu0
  %v496 = vadd.f32 %v321, %v495
  %v497 = vpop.f32.mrb[0].mxu0
  %498 = vmatprep.mubr.f32.mxu0 %v87
  %499 = vmatmul.mubr.f32.gmra.mrb[0].mxu0 %v86
  %v500 = vpop.f32.mrb[0].mxu0
  %v501 = vadd.f32 %v326, %v500
  %v502 = vpop.f32.mrb[0].mxu0
  %503 = vmatprep.mubr.f32.mxu0 %v91
  %504 = vmatmul.mubr.f32.gmra.mrb[0].mxu0 %v90
  %v505 = vpop.f32.mrb[0].mxu0
  %v506 = vadd.f32 %v331, %v505
  %v507 = vpop.f32.mrb[0].mxu0
  %508 = vmatprep.mubr.f32.mxu0 %v95
  %509 = vmatmul.mubr.f32.gmra.mrb[0].mxu0 %v94
  %v510 = vpop.f32.mrb[0].mxu0
  %v511 = vadd.f32 %v336, %v510
  %v512 = vpop.f32.mrb[0].mxu0
  %513 = vmatprep.mubr.f32.mxu0 %v99
  %514 = vmatmul.mubr.f32.gmra.mrb[0].mxu0 %v98
  %v515 = vpop.f32.mrb[0].mxu0
  %v516 = vadd.f32 %v341, %v515
  %v517 = vpop.f32.mrb[0].mxu0
  %518 = vmatprep.mubr.f32.mxu0 %v103
  %519 = vmatmul.mubr.f32.gmra.mrb[0].mxu0 %v102
  %v520 = vpop.f32.mrb[0].mxu0
  %v521 = vadd.f32 %v346, %v520
  %v522 = vpop.f32.mrb[0].mxu0
  %523 = vmatprep.mubr.f32.mxu0 %v107
  %524 = vmatmul.mubr.f32.gmra.mrb[0].mxu0 %v106
  %v525 = vpop.f32.mrb[0].mxu0
  %v526 = vadd.f32 %v351, %v525
  %v527 = vpop.f32.mrb[0].mxu0
  %528 = vdwg.mxu0
  %v529 = vmax.f32 %v421, 0.0
  %v530 = vmax.f32 %v426, 0.0
  %v531 = vmax.f32 %v431, 0.0
  %v532 = vmax.f32 %v436, 0.0
  %v533 = vmax.f32 %v441, 0.0
  %v534 = vmax.f32 %v446, 0.0
  %v535 = vmax.f32 %v451, 0.0
  %v536 = vmax.f32 %v456, 0.0
  %v537 = vmax.f32 %v461, 0.0
  %v538 = vmax.f32 %v466, 0.0
  %v539 = vmax.f32 %v471, 0.0
  %v540 = vmax.f32 %v476, 0.0
  %v541 = vmax.f32 %v481, 0.0
  %v542 = vmax.f32 %v486, 0.0
  %v543 = vmax.f32 %v491, 0.0
  %v544 = vmax.f32 %v496, 0.0
  %v545 = vmax.f32 %v501, 0.0
  %v546 = vmax.f32 %v506, 0.0
  %v547 = vmax.f32 %v511, 0.0
  %v548 = vmax.f32 %v516, 0.0
  %v549 = vmax.f32 %v521, 0.0
  %v550 = vmax.f32 %v526, 0.0
  %v551 = vld [vmem:[%s3] sm:$0x1]
  %v553 = vlaneseq
  %v554 = vshrl.u32 %v553, 7
  %v555 = vsub.s32 0, %v554
  %v556 = vrot.slane %v551, %v555
  %v558 = vmul.f32 %v529, %v556
  %v559 = vmul.f32 %v530, %v556
  %v560 = vmul.f32 %v531, %v556
  %v561 = vmul.f32 %v532, %v556
  %v562 = vmul.f32 %v533, %v556
  %v563 = vmul.f32 %v534, %v556
  %v564 = vmul.f32 %v535, %v556
  %v565 = vmul.f32 %v536, %v556
  %v566 = vmul.f32 %v537, %v556
  %v567 = vmul.f32 %v538, %v556
  %v568 = vmul.f32 %v539, %v556
  %v569 = vmul.f32 %v540, %v556
  %v570 = vmul.f32 %v541, %v556
  %v571 = vmul.f32 %v542, %v556
  %v572 = vmul.f32 %v543, %v556
  %v573 = vmul.f32 %v544, %v556
  %v574 = vmul.f32 %v545, %v556
  %v575 = vmul.f32 %v546, %v556
  %v576 = vmul.f32 %v547, %v556
  %v577 = vmul.f32 %v548, %v556
  %v578 = vmul.f32 %v549, %v556
  %v579 = vmul.f32 %v550, %v556
  %v580 = vld [vmem:[%s4] sm:$0x1]
  %v582 = vlaneseq
  %v583 = vshrl.u32 %v582, 7
  %v584 = vsub.s32 0, %v583
  %v585 = vrot.slane %v580, %v584
  %v587 = vadd.f32 %v558, %v585
  %v588 = vadd.f32 %v559, %v585
  %v589 = vadd.f32 %v560, %v585
  %v590 = vadd.f32 %v561, %v585
  %v591 = vadd.f32 %v562, %v585
  %v592 = vadd.f32 %v563, %v585
  %v593 = vadd.f32 %v564, %v585
  %v594 = vadd.f32 %v565, %v585
  %v595 = vadd.f32 %v566, %v585
  %v596 = vadd.f32 %v567, %v585
  %v597 = vadd.f32 %v568, %v585
  %v598 = vadd.f32 %v569, %v585
  %v599 = vadd.f32 %v570, %v585
  %v600 = vadd.f32 %v571, %v585
  %v601 = vadd.f32 %v572, %v585
  %v602 = vadd.f32 %v573, %v585
  %v603 = vadd.f32 %v574, %v585
  %v604 = vadd.f32 %v575, %v585
  %v605 = vadd.f32 %v576, %v585
  %v606 = vadd.f32 %v577, %v585
  %v607 = vadd.f32 %v578, %v585
  %v608 = vadd.f32 %v579, %v585
  %609 = vst [vmem:[%s5] sm:$0xff] %v587
  %610 = vst [vmem:[%s5 + $0x8] sm:$0xff] %v588
  %611 = vst [vmem:[%s5 + $0x10] sm:$0xff] %v589
  %612 = vst [vmem:[%s5 + $0x18] sm:$0xff] %v590
  %613 = vst [vmem:[%s5 + $0x20] sm:$0xff] %v591
  %614 = vst [vmem:[%s5 + $0x28] sm:$0xff] %v592
  %615 = vst [vmem:[%s5 + $0x30] sm:$0xff] %v593
  %616 = vst [vmem:[%s5 + $0x38] sm:$0xff] %v594
  %617 = vst [vmem:[%s5 + $0x40] sm:$0xff] %v595
  %618 = vst [vmem:[%s5 + $0x48] sm:$0xff] %v596
  %619 = vst [vmem:[%s5 + $0x50] sm:$0xff] %v597
  %620 = vst [vmem:[%s5 + $0x58] sm:$0xff] %v598
  %621 = vst [vmem:[%s5 + $0x60] sm:$0xff] %v599
  %622 = vst [vmem:[%s5 + $0x68] sm:$0xff] %v600
  %623 = vst [vmem:[%s5 + $0x70] sm:$0xff] %v601
  %624 = vst [vmem:[%s5 + $0x78] sm:$0xff] %v602
  %625 = vst [vmem:[%s5 + $0x80] sm:$0xff] %v603
  %626 = vst [vmem:[%s5 + $0x88] sm:$0xff] %v604
  %627 = vst [vmem:[%s5 + $0x90] sm:$0xff] %v605
  %628 = vst [vmem:[%s5 + $0x98] sm:$0xff] %v606
  %629 = vst [vmem:[%s5 + $0xa0] sm:$0xff] %v607
  %630 = vst [vmem:[%s5 + $0xa8] sm:$0xff] %v608
  // Predicated region
  $region22: #{forward.8} parent=0 // pred_check
    _
  $region23: #{forward.8} parent=0 // pred_check_branch
    %632 = sbr.rel (0) target = $region25
  $region24: #{forward.8} parent=0 // pred_region
    _
  $region25: #{forward.8} parent=0 // pred_fallthru
    _
  // Predicated region
  $region26: #{forward.8} parent=0 // pred_check
    _
  $region27: #{forward.8} parent=0 // pred_check_branch
    %634 = sbr.rel (0) target = $region29
  $region28: #{forward.8} parent=0 // pred_region
    _
  $region29: #{forward.8} parent=0 // pred_fallthru
    _

// kernel: forward.9
$region0: #{forward.9}
  #allocation0 [shape = 'u32[]', space=smem, size = 0x4, offset = 0x4, fixed_abs, tag = 'smem constant byte address 0x4 - core index']
  #allocation1 [shape = 'u32[144,128]{1,0:T(1,128)}', space=vmem, size = 0x12000, scoped, tag = 'internal scratch']
  %s0 = inlined_call_operand.vmem [shape: f32[88,512], index: 0, kind: input, shape index: {}]
  %s1 = inlined_call_operand.vmem [shape: f32[512,128], index: 1, kind: input, shape index: {}]
  %s2 = inlined_call_operand.vmem [shape: f32[1,128], index: 2, kind: input, shape index: {}]
  %s3 = inlined_call_operand.vmem [shape: f32[1,128], index: 3, kind: input, shape index: {}]
  %s4 = inlined_call_operand.vmem [shape: f32[1,128], index: 4, kind: input, shape index: {}]
  %s5 = inlined_call_operand.vmem [shape: f32[88,128], index: 5, kind: output, shape index: {}]
  %s6 = sld [smem:[#allocation0]]
  $region30: #{forward.9} parent=0
    _
  %s8 = ssub.s32 1, %s6
  %s9 = scalar_select 0, %s8, %s6
  // Predicated region
  $region2: #{forward.9} parent=0 // pred_check
    _
  $region3: #{forward.9} parent=0 // pred_check_branch
    %11 = sbr.rel (0) target = $region5
  $region4: #{forward.9} parent=0 // pred_region
    _
  $region5: #{forward.9} parent=0 // pred_fallthru
    _
  // Predicated region
  $region6: #{forward.9} parent=0 // pred_check
    _
  $region7: #{forward.9} parent=0 // pred_check_branch
    %13 = sbr.rel (0) target = $region9
  $region8: #{forward.9} parent=0 // pred_region
    _
  $region9: #{forward.9} parent=0 // pred_fallthru
    _
  // Predicated region
  $region10: #{forward.9} parent=0 // pred_check
    _
  $region11: #{forward.9} parent=0 // pred_check_branch
    %15 = sbr.rel (0) target = $region13
  $region12: #{forward.9} parent=0 // pred_region
    _
  $region13: #{forward.9} parent=0 // pred_fallthru
    _
  // Predicated region
  $region14: #{forward.9} parent=0 // pred_check
    _
  $region15: #{forward.9} parent=0 // pred_check_branch
    %17 = sbr.rel (0) target = $region17
  $region16: #{forward.9} parent=0 // pred_region
    _
  $region17: #{forward.9} parent=0 // pred_fallthru
    _
  // Predicated region
  $region18: #{forward.9} parent=0 // pred_check
    _
  $region19: #{forward.9} parent=0 // pred_check_branch
    %19 = sbr.rel (0) target = $region21
  $region20: #{forward.9} parent=0 // pred_region
    _
  $region21: #{forward.9} parent=0 // pred_fallthru
    _
  %v20 = vld [vmem:[%s0] sm:$0xff]
  %v21 = vld [vmem:[%s0 + $0x8] sm:$0xff]
  %v22 = vld [vmem:[%s0 + $0x10] sm:$0xff]
  %v23 = vld [vmem:[%s0 + $0x18] sm:$0xff]
  %v24 = vld [vmem:[%s0 + $0x20] sm:$0xff]
  %v25 = vld [vmem:[%s0 + $0x28] sm:$0xff]
  %v26 = vld [vmem:[%s0 + $0x30] sm:$0xff]
  %v27 = vld [vmem:[%s0 + $0x38] sm:$0xff]
  %v28 = vld [vmem:[%s0 + $0x40] sm:$0xff]
  %v29 = vld [vmem:[%s0 + $0x48] sm:$0xff]
  %v30 = vld [vmem:[%s0 + $0x50] sm:$0xff]
  %v31 = vld [vmem:[%s0 + $0x58] sm:$0xff]
  %v32 = vld [vmem:[%s0 + $0x60] sm:$0xff]
  %v33 = vld [vmem:[%s0 + $0x68] sm:$0xff]
  %v34 = vld [vmem:[%s0 + $0x70] sm:$0xff]
  %v35 = vld [vmem:[%s0 + $0x78] sm:$0xff]
  %v36 = vld [vmem:[%s0 + $0x80] sm:$0xff]
  %v37 = vld [vmem:[%s0 + $0x88] sm:$0xff]
  %v38 = vld [vmem:[%s0 + $0x90] sm:$0xff]
  %v39 = vld [vmem:[%s0 + $0x98] sm:$0xff]
  %v40 = vld [vmem:[%s0 + $0xa0] sm:$0xff]
  %v41 = vld [vmem:[%s0 + $0xa8] sm:$0xff]
  %v42 = vld [vmem:[%s0 + $0xb0] sm:$0xff]
  %v43 = vld [vmem:[%s0 + $0xb8] sm:$0xff]
  %v44 = vld [vmem:[%s0 + $0xc0] sm:$0xff]
  %v45 = vld [vmem:[%s0 + $0xc8] sm:$0xff]
  %v46 = vld [vmem:[%s0 + $0xd0] sm:$0xff]
  %v47 = vld [vmem:[%s0 + $0xd8] sm:$0xff]
  %v48 = vld [vmem:[%s0 + $0xe0] sm:$0xff]
  %v49 = vld [vmem:[%s0 + $0xe8] sm:$0xff]
  %v50 = vld [vmem:[%s0 + $0xf0] sm:$0xff]
  %v51 = vld [vmem:[%s0 + $0xf8] sm:$0xff]
  %v52 = vld [vmem:[%s0 + $0x100] sm:$0xff]
  %v53 = vld [vmem:[%s0 + $0x108] sm:$0xff]
  %v54 = vld [vmem:[%s0 + $0x110] sm:$0xff]
  %v55 = vld [vmem:[%s0 + $0x118] sm:$0xff]
  %v56 = vld [vmem:[%s0 + $0x120] sm:$0xff]
  %v57 = vld [vmem:[%s0 + $0x128] sm:$0xff]
  %v58 = vld [vmem:[%s0 + $0x130] sm:$0xff]
  %v59 = vld [vmem:[%s0 + $0x138] sm:$0xff]
  %v60 = vld [vmem:[%s0 + $0x140] sm:$0xff]
  %v61 = vld [vmem:[%s0 + $0x148] sm:$0xff]
  %v62 = vld [vmem:[%s0 + $0x150] sm:$0xff]
  %v63 = vld [vmem:[%s0 + $0x158] sm:$0xff]
  %v64 = vld [vmem:[%s1] sm:$0xff]
  %v65 = vld [vmem:[%s1 + $0x8] sm:$0xff]
  %v66 = vld [vmem:[%s1 + $0x10] sm:$0xff]
  %v67 = vld [vmem:[%s1 + $0x18] sm:$0xff]
  %v68 = vld [vmem:[%s1 + $0x20] sm:$0xff]
  %v69 = vld [vmem:[%s1 + $0x28] sm:$0xff]
  %v70 = vld [vmem:[%s1 + $0x30] sm:$0xff]
  %v71 = vld [vmem:[%s1 + $0x38] sm:$0xff]
  %v72 = vld [vmem:[%s1 + $0x40] sm:$0xff]
  %v73 = vld [vmem:[%s1 + $0x48] sm:$0xff]
  %v74 = vld [vmem:[%s1 + $0x50] sm:$0xff]
  %v75 = vld [vmem:[%s1 + $0x58] sm:$0xff]
  %v76 = vld [vmem:[%s1 + $0x60] sm:$0xff]
  %v77 = vld [vmem:[%s1 + $0x68] sm:$0xff]
  %v78 = vld [vmem:[%s1 + $0x70] sm:$0xff]
  %v79 = vld [vmem:[%s1 + $0x78] sm:$0xff]
  %v80 = vld [vmem:[%s1 + $0x80] sm:$0xff]
  %v81 = vld [vmem:[%s1 + $0x88] sm:$0xff]
  %v82 = vld [vmem:[%s1 + $0x90] sm:$0xff]
  %v83 = vld [vmem:[%s1 + $0x98] sm:$0xff]
  %v84 = vld [vmem:[%s1 + $0xa0] sm:$0xff]
  %v85 = vld [vmem:[%s1 + $0xa8] sm:$0xff]
  %v86 = vld [vmem:[%s1 + $0xb0] sm:$0xff]
  %v87 = vld [vmem:[%s1 + $0xb8] sm:$0xff]
  %v88 = vld [vmem:[%s1 + $0xc0] sm:$0xff]
  %v89 = vld [vmem:[%s1 + $0xc8] sm:$0xff]
  %v90 = vld [vmem:[%s1 + $0xd0] sm:$0xff]
  %v91 = vld [vmem:[%s1 + $0xd8] sm:$0xff]
  %v92 = vld [vmem:[%s1 + $0xe0] sm:$0xff]
  %v93 = vld [vmem:[%s1 + $0xe8] sm:$0xff]
  %v94 = vld [vmem:[%s1 + $0xf0] sm:$0xff]
  %v95 = vld [vmem:[%s1 + $0xf8] sm:$0xff]
  %v96 = vld [vmem:[%s1 + $0x100] sm:$0xff]
  %v97 = vld [vmem:[%s1 + $0x108] sm:$0xff]
  %v98 = vld [vmem:[%s1 + $0x110] sm:$0xff]
  %v99 = vld [vmem:[%s1 + $0x118] sm:$0xff]
  %v100 = vld [vmem:[%s1 + $0x120] sm:$0xff]
  %v101 = vld [vmem:[%s1 + $0x128] sm:$0xff]
  %v102 = vld [vmem:[%s1 + $0x130] sm:$0xff]
  %v103 = vld [vmem:[%s1 + $0x138] sm:$0xff]
  %v104 = vld [vmem:[%s1 + $0x140] sm:$0xff]
  %v105 = vld [vmem:[%s1 + $0x148] sm:$0xff]
  %v106 = vld [vmem:[%s1 + $0x150] sm:$0xff]
  %v107 = vld [vmem:[%s1 + $0x158] sm:$0xff]
  %v108 = vld [vmem:[%s1 + $0x160] sm:$0xff]
  %v109 = vld [vmem:[%s1 + $0x168] sm:$0xff]
  %v110 = vld [vmem:[%s1 + $0x170] sm:$0xff]
  %v111 = vld [vmem:[%s1 + $0x178] sm:$0xff]
  %v112 = vld [vmem:[%s1 + $0x180] sm:$0xff]
  %v113 = vld [vmem:[%s1 + $0x188] sm:$0xff]
  %v114 = vld [vmem:[%s1 + $0x190] sm:$0xff]
  %v115 = vld [vmem:[%s1 + $0x198] sm:$0xff]
  %v116 = vld [vmem:[%s1 + $0x1a0] sm:$0xff]
  %v117 = vld [vmem:[%s1 + $0x1a8] sm:$0xff]
  %v118 = vld [vmem:[%s1 + $0x1b0] sm:$0xff]
  %v119 = vld [vmem:[%s1 + $0x1b8] sm:$0xff]
  %v120 = vld [vmem:[%s1 + $0x1c0] sm:$0xff]
  %v121 = vld [vmem:[%s1 + $0x1c8] sm:$0xff]
  %v122 = vld [vmem:[%s1 + $0x1d0] sm:$0xff]
  %v123 = vld [vmem:[%s1 + $0x1d8] sm:$0xff]
  %v124 = vld [vmem:[%s1 + $0x1e0] sm:$0xff]
  %v125 = vld [vmem:[%s1 + $0x1e8] sm:$0xff]
  %v126 = vld [vmem:[%s1 + $0x1f0] sm:$0xff]
  %v127 = vld [vmem:[%s1 + $0x1f8] sm:$0xff]
  %v128 = vld [vmem:[%s2] sm:$0x1]
  %v130 = vlaneseq
  %v131 = vshrl.u32 %v130, 7
  %v132 = vsub.s32 0, %v131
  %v133 = vrot.slane %v128, %v132
  %135 = vmatprep.subr.mxu0 0.0
  %136 = vmatpush1.msra.mxu0 %v64
  %137 = vmatprep.subr.mxu0 0.0
  %138 = vmatpush1.msra.mxu0 %v65
  %139 = vmatprep.subr.mxu0 0.0
  %140 = vmatpush1.msra.mxu0 %v66
  %141 = vmatprep.subr.mxu0 0.0
  %142 = vmatpush1.msra.mxu0 %v67
  %143 = vmatprep.subr.mxu0 0.0
  %144 = vmatpush1.msra.mxu0 %v68
  %145 = vmatprep.subr.mxu0 0.0
  %146 = vmatpush1.msra.mxu0 %v69
  %147 = vmatprep.subr.mxu0 0.0
  %148 = vmatpush1.msra.mxu0 %v70
  %149 = vmatprep.subr.mxu0 0.0
  %150 = vmatpush1.msra.mxu0 %v71
  %151 = vmatprep.subr.mxu0 0.0
  %152 = vmatpush1.msra.mxu0 %v72
  %153 = vmatprep.subr.mxu0 0.0
  %154 = vmatpush1.msra.mxu0 %v73
  %155 = vmatprep.subr.mxu0 0.0
  %156 = vmatpush1.msra.mxu0 %v74
  %157 = vmatprep.subr.mxu0 0.0
  %158 = vmatpush1.msra.mxu0 %v75
  %159 = vmatprep.subr.mxu0 0.0
  %160 = vmatpush1.msra.mxu0 %v76
  %161 = vmatprep.subr.mxu0 0.0
  %162 = vmatpush1.msra.mxu0 %v77
  %163 = vmatprep.subr.mxu0 0.0
  %164 = vmatpush1.msra.mxu0 %v78
  %165 = vmatprep.subr.mxu0 0.0
  %166 = vmatpush1.msra.mxu0 %v79
  %167 = vmatprep.subr.mxu0 0.0
  %168 = vmatpush1.msra.mxu0 %v80
  %169 = vmatprep.subr.mxu0 0.0
  %170 = vmatpush1.msra.mxu0 %v81
  %171 = vmatprep.subr.mxu0 0.0
  %172 = vmatpush1.msra.mxu0 %v82
  %173 = vmatprep.subr.mxu0 0.0
  %174 = vmatpush1.msra.mxu0 %v83
  %175 = vmatprep.subr.mxu0 0.0
  %176 = vmatpush1.msra.mxu0 %v84
  %177 = vmatprep.subr.mxu0 0.0
  %178 = vmatpush1.msra.mxu0 %v85
  %179 = vmatprep.subr.mxu0 0.0
  %180 = vmatpush1.msra.mxu0 %v86
  %181 = vmatprep.subr.mxu0 0.0
  %182 = vmatpush1.msra.mxu0 %v87
  %183 = vmatprep.subr.mxu0 0.0
  %184 = vmatpush1.msra.mxu0 %v88
  %185 = vmatprep.subr.mxu0 0.0
  %186 = vmatpush1.msra.mxu0 %v89
  %187 = vmatprep.subr.mxu0 0.0
  %188 = vmatpush1.msra.mxu0 %v90
  %189 = vmatprep.subr.mxu0 0.0
  %190 = vmatpush1.msra.mxu0 %v91
  %191 = vmatprep.subr.mxu0 0.0
  %192 = vmatpush1.msra.mxu0 %v92
  %193 = vmatprep.subr.mxu0 0.0
  %194 = vmatpush1.msra.mxu0 %v93
  %195 = vmatprep.subr.mxu0 0.0
  %196 = vmatpush1.msra.mxu0 %v94
  %197 = vmatprep.subr.mxu0 0.0
  %198 = vmatpush1.msra.mxu0 %v95
  %199 = vmatprep.mubr.f32.mxu0 %v21
  %200 = vmatmul.mubr.f32.gmra.mrb[0].mxu0 %v20
  %v201 = vpop.f32.mrb[0].mxu0
  %v202 = vadd.f32 %v133, %v201
  %v203 = vpop.f32.mrb[0].mxu0
  %204 = vmatprep.mubr.f32.mxu0 %v25
  %205 = vmatmul.mubr.f32.gmra.mrb[0].mxu0 %v24
  %v206 = vpop.f32.mrb[0].mxu0
  %v207 = vadd.f32 %v133, %v206
  %v208 = vpop.f32.mrb[0].mxu0
  %209 = vmatprep.mubr.f32.mxu0 %v29
  %210 = vmatmul.mubr.f32.gmra.mrb[0].mxu0 %v28
  %v211 = vpop.f32.mrb[0].mxu0
  %v212 = vadd.f32 %v133, %v211
  %v213 = vpop.f32.mrb[0].mxu0
  %214 = vmatprep.mubr.f32.mxu0 %v33
  %215 = vmatmul.mubr.f32.gmra.mrb[0].mxu0 %v32
  %v216 = vpop.f32.mrb[0].mxu0
  %v217 = vadd.f32 %v133, %v216
  %v218 = vpop.f32.mrb[0].mxu0
  %219 = vmatprep.mubr.f32.mxu0 %v37
  %220 = vmatmul.mubr.f32.gmra.mrb[0].mxu0 %v36
  %v221 = vpop.f32.mrb[0].mxu0
  %v222 = vadd.f32 %v133, %v221
  %v223 = vpop.f32.mrb[0].mxu0
  %224 = vmatprep.mubr.f32.mxu0 %v41
  %225 = vmatmul.mubr.f32.gmra.mrb[0].mxu0 %v40
  %v226 = vpop.f32.mrb[0].mxu0
  %v227 = vadd.f32 %v133, %v226
  %v228 = vpop.f32.mrb[0].mxu0
  %229 = vmatprep.mubr.f32.mxu0 %v45
  %230 = vmatmul.mubr.f32.gmra.mrb[0].mxu0 %v44
  %v231 = vpop.f32.mrb[0].mxu0
  %v232 = vadd.f32 %v133, %v231
  %v233 = vpop.f32.mrb[0].mxu0
  %234 = vmatprep.mubr.f32.mxu0 %v49
  %235 = vmatmul.mubr.f32.gmra.mrb[0].mxu0 %v48
  %v236 = vpop.f32.mrb[0].mxu0
  %v237 = vadd.f32 %v133, %v236
  %v238 = vpop.f32.mrb[0].mxu0
  %239 = vmatprep.mubr.f32.mxu0 %v53
  %240 = vmatmul.mubr.f32.gmra.mrb[0].mxu0 %v52
  %v241 = vpop.f32.mrb[0].mxu0
  %v242 = vadd.f32 %v133, %v241
  %v243 = vpop.f32.mrb[0].mxu0
  %244 = vmatprep.mubr.f32.mxu0 %v57
  %245 = vmatmul.mubr.f32.gmra.mrb[0].mxu0 %v56
  %v246 = vpop.f32.mrb[0].mxu0
  %v247 = vadd.f32 %v133, %v246
  %v248 = vpop.f32.mrb[0].mxu0
  %249 = vmatprep.mubr.f32.mxu0 %v61
  %250 = vmatmul.mubr.f32.gmra.mrb[0].mxu0 %v60
  %v251 = vpop.f32.mrb[0].mxu0
  %v252 = vadd.f32 %v133, %v251
  %v253 = vpop.f32.mrb[0].mxu0
  %254 = vdwg.mxu0
  %255 = vmatprep.subr.mxu0 0.0
  %256 = vmatpush1.msra.mxu0 %v96
  %257 = vmatprep.subr.mxu0 0.0
  %258 = vmatpush1.msra.mxu0 %v97
  %259 = vmatprep.subr.mxu0 0.0
  %260 = vmatpush1.msra.mxu0 %v98
  %261 = vmatprep.subr.mxu0 0.0
  %262 = vmatpush1.msra.mxu0 %v99
  %263 = vmatprep.subr.mxu0 0.0
  %264 = vmatpush1.msra.mxu0 %v100
  %265 = vmatprep.subr.mxu0 0.0
  %266 = vmatpush1.msra.mxu0 %v101
  %267 = vmatprep.subr.mxu0 0.0
  %268 = vmatpush1.msra.mxu0 %v102
  %269 = vmatprep.subr.mxu0 0.0
  %270 = vmatpush1.msra.mxu0 %v103
  %271 = vmatprep.subr.mxu0 0.0
  %272 = vmatpush1.msra.mxu0 %v104
  %273 = vmatprep.subr.mxu0 0.0
  %274 = vmatpush1.msra.mxu0 %v105
  %275 = vmatprep.subr.mxu0 0.0
  %276 = vmatpush1.msra.mxu0 %v106
  %277 = vmatprep.subr.mxu0 0.0
  %278 = vmatpush1.msra.mxu0 %v107
  %279 = vmatprep.subr.mxu0 0.0
  %280 = vmatpush1.msra.mxu0 %v108
  %281 = vmatprep.subr.mxu0 0.0
  %282 = vmatpush1.msra.mxu0 %v109
  %283 = vmatprep.subr.mxu0 0.0
  %284 = vmatpush1.msra.mxu0 %v110
  %285 = vmatprep.subr.mxu0 0.0
  %286 = vmatpush1.msra.mxu0 %v111
  %287 = vmatprep.subr.mxu0 0.0
  %288 = vmatpush1.msra.mxu0 %v112
  %289 = vmatprep.subr.mxu0 0.0
  %290 = vmatpush1.msra.mxu0 %v113
  %291 = vmatprep.subr.mxu0 0.0
  %292 = vmatpush1.msra.mxu0 %v114
  %293 = vmatprep.subr.mxu0 0.0
  %294 = vmatpush1.msra.mxu0 %v115
  %295 = vmatprep.subr.mxu0 0.0
  %296 = vmatpush1.msra.mxu0 %v116
  %297 = vmatprep.subr.mxu0 0.0
  %298 = vmatpush1.msra.mxu0 %v117
  %299 = vmatprep.subr.mxu0 0.0
  %300 = vmatpush1.msra.mxu0 %v118
  %301 = vmatprep.subr.mxu0 0.0
  %302 = vmatpush1.msra.mxu0 %v119
  %303 = vmatprep.subr.mxu0 0.0
  %304 = vmatpush1.msra.mxu0 %v120
  %305 = vmatprep.subr.mxu0 0.0
  %306 = vmatpush1.msra.mxu0 %v121
  %307 = vmatprep.subr.mxu0 0.0
  %308 = vmatpush1.msra.mxu0 %v122
  %309 = vmatprep.subr.mxu0 0.0
  %310 = vmatpush1.msra.mxu0 %v123
  %311 = vmatprep.subr.mxu0 0.0
  %312 = vmatpush1.msra.mxu0 %v124
  %313 = vmatprep.subr.mxu0 0.0
  %314 = vmatpush1.msra.mxu0 %v125
  %315 = vmatprep.subr.mxu0 0.0
  %316 = vmatpush1.msra.mxu0 %v126
  %317 = vmatprep.subr.mxu0 0.0
  %318 = vmatpush1.msra.mxu0 %v127
  %319 = vmatprep.mubr.f32.mxu0 %v23
  %320 = vmatmul.mubr.f32.gmra.mrb[0].mxu0 %v22
  %v321 = vpop.f32.mrb[0].mxu0
  %v322 = vadd.f32 %v202, %v321
  %v323 = vpop.f32.mrb[0].mxu0
  %324 = vmatprep.mubr.f32.mxu0 %v27
  %325 = vmatmul.mubr.f32.gmra.mrb[0].mxu0 %v26
  %v326 = vpop.f32.mrb[0].mxu0
  %v327 = vadd.f32 %v207, %v326
  %v328 = vpop.f32.mrb[0].mxu0
  %329 = vmatprep.mubr.f32.mxu0 %v31
  %330 = vmatmul.mubr.f32.gmra.mrb[0].mxu0 %v30
  %v331 = vpop.f32.mrb[0].mxu0
  %v332 = vadd.f32 %v212, %v331
  %v333 = vpop.f32.mrb[0].mxu0
  %334 = vmatprep.mubr.f32.mxu0 %v35
  %335 = vmatmul.mubr.f32.gmra.mrb[0].mxu0 %v34
  %v336 = vpop.f32.mrb[0].mxu0
  %v337 = vadd.f32 %v217, %v336
  %v338 = vpop.f32.mrb[0].mxu0
  %339 = vmatprep.mubr.f32.mxu0 %v39
  %340 = vmatmul.mubr.f32.gmra.mrb[0].mxu0 %v38
  %v341 = vpop.f32.mrb[0].mxu0
  %v342 = vadd.f32 %v222, %v341
  %v343 = vpop.f32.mrb[0].mxu0
  %344 = vmatprep.mubr.f32.mxu0 %v43
  %345 = vmatmul.mubr.f32.gmra.mrb[0].mxu0 %v42
  %v346 = vpop.f32.mrb[0].mxu0
  %v347 = vadd.f32 %v227, %v346
  %v348 = vpop.f32.mrb[0].mxu0
  %349 = vmatprep.mubr.f32.mxu0 %v47
  %350 = vmatmul.mubr.f32.gmra.mrb[0].mxu0 %v46
  %v351 = vpop.f32.mrb[0].mxu0
  %v352 = vadd.f32 %v232, %v351
  %v353 = vpop.f32.mrb[0].mxu0
  %354 = vmatprep.mubr.f32.mxu0 %v51
  %355 = vmatmul.mubr.f32.gmra.mrb[0].mxu0 %v50
  %v356 = vpop.f32.mrb[0].mxu0
  %v357 = vadd.f32 %v237, %v356
  %v358 = vpop.f32.mrb[0].mxu0
  %359 = vmatprep.mubr.f32.mxu0 %v55
  %360 = vmatmul.mubr.f32.gmra.mrb[0].mxu0 %v54
  %v361 = vpop.f32.mrb[0].mxu0
  %v362 = vadd.f32 %v242, %v361
  %v363 = vpop.f32.mrb[0].mxu0
  %364 = vmatprep.mubr.f32.mxu0 %v59
  %365 = vmatmul.mubr.f32.gmra.mrb[0].mxu0 %v58
  %v366 = vpop.f32.mrb[0].mxu0
  %v367 = vadd.f32 %v247, %v366
  %v368 = vpop.f32.mrb[0].mxu0
  %369 = vmatprep.mubr.f32.mxu0 %v63
  %370 = vmatmul.mubr.f32.gmra.mrb[0].mxu0 %v62
  %v371 = vpop.f32.mrb[0].mxu0
  %v372 = vadd.f32 %v252, %v371
  %v373 = vpop.f32.mrb[0].mxu0
  %374 = vdwg.mxu0
  %v375 = vmax.f32 %v322, 0.0
  %v376 = vmax.f32 %v327, 0.0
  %v377 = vmax.f32 %v332, 0.0
  %v378 = vmax.f32 %v337, 0.0
  %v379 = vmax.f32 %v342, 0.0
  %v380 = vmax.f32 %v347, 0.0
  %v381 = vmax.f32 %v352, 0.0
  %v382 = vmax.f32 %v357, 0.0
  %v383 = vmax.f32 %v362, 0.0
  %v384 = vmax.f32 %v367, 0.0
  %v385 = vmax.f32 %v372, 0.0
  %v386 = vld [vmem:[%s3] sm:$0x1]
  %v388 = vlaneseq
  %v389 = vshrl.u32 %v388, 7
  %v390 = vsub.s32 0, %v389
  %v391 = vrot.slane %v386, %v390
  %v393 = vmul.f32 %v375, %v391
  %v394 = vmul.f32 %v376, %v391
  %v395 = vmul.f32 %v377, %v391
  %v396 = vmul.f32 %v378, %v391
  %v397 = vmul.f32 %v379, %v391
  %v398 = vmul.f32 %v380, %v391
  %v399 = vmul.f32 %v381, %v391
  %v400 = vmul.f32 %v382, %v391
  %v401 = vmul.f32 %v383, %v391
  %v402 = vmul.f32 %v384, %v391
  %v403 = vmul.f32 %v385, %v391
  %v404 = vld [vmem:[%s4] sm:$0x1]
  %v406 = vlaneseq
  %v407 = vshrl.u32 %v406, 7
  %v408 = vsub.s32 0, %v407
  %v409 = vrot.slane %v404, %v408
  %v411 = vadd.f32 %v393, %v409
  %v412 = vadd.f32 %v394, %v409
  %v413 = vadd.f32 %v395, %v409
  %v414 = vadd.f32 %v396, %v409
  %v415 = vadd.f32 %v397, %v409
  %v416 = vadd.f32 %v398, %v409
  %v417 = vadd.f32 %v399, %v409
  %v418 = vadd.f32 %v400, %v409
  %v419 = vadd.f32 %v401, %v409
  %v420 = vadd.f32 %v402, %v409
  %v421 = vadd.f32 %v403, %v409
  %422 = vst [vmem:[%s5] sm:$0xff] %v411
  %423 = vst [vmem:[%s5 + $0x8] sm:$0xff] %v412
  %424 = vst [vmem:[%s5 + $0x10] sm:$0xff] %v413
  %425 = vst [vmem:[%s5 + $0x18] sm:$0xff] %v414
  %426 = vst [vmem:[%s5 + $0x20] sm:$0xff] %v415
  %427 = vst [vmem:[%s5 + $0x28] sm:$0xff] %v416
  %428 = vst [vmem:[%s5 + $0x30] sm:$0xff] %v417
  %429 = vst [vmem:[%s5 + $0x38] sm:$0xff] %v418
  %430 = vst [vmem:[%s5 + $0x40] sm:$0xff] %v419
  %431 = vst [vmem:[%s5 + $0x48] sm:$0xff] %v420
  %432 = vst [vmem:[%s5 + $0x50] sm:$0xff] %v421
  // Predicated region
  $region22: #{forward.9} parent=0 // pred_check
    _
  $region23: #{forward.9} parent=0 // pred_check_branch
    %434 = sbr.rel (0) target = $region25
  $region24: #{forward.9} parent=0 // pred_region
    _
  $region25: #{forward.9} parent=0 // pred_fallthru
    _
  // Predicated region
  $region26: #{forward.9} parent=0 // pred_check
    _
  $region27: #{forward.9} parent=0 // pred_check_branch
    %436 = sbr.rel (0) target = $region29
  $region28: #{forward.9} parent=0 // pred_region
    _
  $region29: #{forward.9} parent=0 // pred_fallthru
    _

// kernel: forward.10
$region0: #{forward.10}
  #allocation0 [shape = 'u32[]', space=smem, size = 0x4, offset = 0x4, fixed_abs, tag = 'smem constant byte address 0x4 - core index']
  #allocation1 [shape = 'u32[144,128]{1,0:T(1,128)}', space=vmem, size = 0x12000, scoped, tag = 'internal scratch']
  %s0 = inlined_call_operand.vmem [shape: f32[48,512], index: 0, kind: input, shape index: {}]
  %s1 = inlined_call_operand.vmem [shape: f32[512,128], index: 1, kind: input, shape index: {}]
  %s2 = inlined_call_operand.vmem [shape: f32[1,128], index: 2, kind: input, shape index: {}]
  %s3 = inlined_call_operand.vmem [shape: f32[1,128], index: 3, kind: input, shape index: {}]
  %s4 = inlined_call_operand.vmem [shape: f32[1,128], index: 4, kind: input, shape index: {}]
  %s5 = inlined_call_operand.vmem [shape: f32[48,128], index: 5, kind: output, shape index: {}]
  %s6 = sld [smem:[#allocation0]]
  $region30: #{forward.10} parent=0
    _
  %s8 = ssub.s32 1, %s6
  %s9 = scalar_select 0, %s8, %s6
  // Predicated region
  $region2: #{forward.10} parent=0 // pred_check
    _
  $region3: #{forward.10} parent=0 // pred_check_branch
    %11 = sbr.rel (0) target = $region5
  $region4: #{forward.10} parent=0 // pred_region
    _
  $region5: #{forward.10} parent=0 // pred_fallthru
    _
  // Predicated region
  $region6: #{forward.10} parent=0 // pred_check
    _
  $region7: #{forward.10} parent=0 // pred_check_branch
    %13 = sbr.rel (0) target = $region9
  $region8: #{forward.10} parent=0 // pred_region
    _
  $region9: #{forward.10} parent=0 // pred_fallthru
    _
  // Predicated region
  $region10: #{forward.10} parent=0 // pred_check
    _
  $region11: #{forward.10} parent=0 // pred_check_branch
    %15 = sbr.rel (0) target = $region13
  $region12: #{forward.10} parent=0 // pred_region
    _
  $region13: #{forward.10} parent=0 // pred_fallthru
    _
  // Predicated region
  $region14: #{forward.10} parent=0 // pred_check
    _
  $region15: #{forward.10} parent=0 // pred_check_branch
    %17 = sbr.rel (0) target = $region17
  $region16: #{forward.10} parent=0 // pred_region
    _
  $region17: #{forward.10} parent=0 // pred_fallthru
    _
  // Predicated region
  $region18: #{forward.10} parent=0 // pred_check
    _
  $region19: #{forward.10} parent=0 // pred_check_branch
    %19 = sbr.rel (0) target = $region21
  $region20: #{forward.10} parent=0 // pred_region
    _
  $region21: #{forward.10} parent=0 // pred_fallthru
    _
  %v20 = vld [vmem:[%s0] sm:$0xff]
  %v21 = vld [vmem:[%s0 + $0x8] sm:$0xff]
  %v22 = vld [vmem:[%s0 + $0x10] sm:$0xff]
  %v23 = vld [vmem:[%s0 + $0x18] sm:$0xff]
  %v24 = vld [vmem:[%s0 + $0x20] sm:$0xff]
  %v25 = vld [vmem:[%s0 + $0x28] sm:$0xff]
  %v26 = vld [vmem:[%s0 + $0x30] sm:$0xff]
  %v27 = vld [vmem:[%s0 + $0x38] sm:$0xff]
  %v28 = vld [vmem:[%s0 + $0x40] sm:$0xff]
  %v29 = vld [vmem:[%s0 + $0x48] sm:$0xff]
  %v30 = vld [vmem:[%s0 + $0x50] sm:$0xff]
  %v31 = vld [vmem:[%s0 + $0x58] sm:$0xff]
  %v32 = vld [vmem:[%s0 + $0x60] sm:$0xff]
  %v33 = vld [vmem:[%s0 + $0x68] sm:$0xff]
  %v34 = vld [vmem:[%s0 + $0x70] sm:$0xff]
  %v35 = vld [vmem:[%s0 + $0x78] sm:$0xff]
  %v36 = vld [vmem:[%s0 + $0x80] sm:$0xff]
  %v37 = vld [vmem:[%s0 + $0x88] sm:$0xff]
  %v38 = vld [vmem:[%s0 + $0x90] sm:$0xff]
  %v39 = vld [vmem:[%s0 + $0x98] sm:$0xff]
  %v40 = vld [vmem:[%s0 + $0xa0] sm:$0xff]
  %v41 = vld [vmem:[%s0 + $0xa8] sm:$0xff]
  %v42 = vld [vmem:[%s0 + $0xb0] sm:$0xff]
  %v43 = vld [vmem:[%s0 + $0xb8] sm:$0xff]
  %v44 = vld [vmem:[%s1] sm:$0xff]
  %v45 = vld [vmem:[%s1 + $0x8] sm:$0xff]
  %v46 = vld [vmem:[%s1 + $0x10] sm:$0xff]
  %v47 = vld [vmem:[%s1 + $0x18] sm:$0xff]
  %v48 = vld [vmem:[%s1 + $0x20] sm:$0xff]
  %v49 = vld [vmem:[%s1 + $0x28] sm:$0xff]
  %v50 = vld [vmem:[%s1 + $0x30] sm:$0xff]
  %v51 = vld [vmem:[%s1 + $0x38] sm:$0xff]
  %v52 = vld [vmem:[%s1 + $0x40] sm:$0xff]
  %v53 = vld [vmem:[%s1 + $0x48] sm:$0xff]
  %v54 = vld [vmem:[%s1 + $0x50] sm:$0xff]
  %v55 = vld [vmem:[%s1 + $0x58] sm:$0xff]
  %v56 = vld [vmem:[%s1 + $0x60] sm:$0xff]
  %v57 = vld [vmem:[%s1 + $0x68] sm:$0xff]
  %v58 = vld [vmem:[%s1 + $0x70] sm:$0xff]
  %v59 = vld [vmem:[%s1 + $0x78] sm:$0xff]
  %v60 = vld [vmem:[%s1 + $0x80] sm:$0xff]
  %v61 = vld [vmem:[%s1 + $0x88] sm:$0xff]
  %v62 = vld [vmem:[%s1 + $0x90] sm:$0xff]
  %v63 = vld [vmem:[%s1 + $0x98] sm:$0xff]
  %v64 = vld [vmem:[%s1 + $0xa0] sm:$0xff]
  %v65 = vld [vmem:[%s1 + $0xa8] sm:$0xff]
  %v66 = vld [vmem:[%s1 + $0xb0] sm:$0xff]
  %v67 = vld [vmem:[%s1 + $0xb8] sm:$0xff]
  %v68 = vld [vmem:[%s1 + $0xc0] sm:$0xff]
  %v69 = vld [vmem:[%s1 + $0xc8] sm:$0xff]
  %v70 = vld [vmem:[%s1 + $0xd0] sm:$0xff]
  %v71 = vld [vmem:[%s1 + $0xd8] sm:$0xff]
  %v72 = vld [vmem:[%s1 + $0xe0] sm:$0xff]
  %v73 = vld [vmem:[%s1 + $0xe8] sm:$0xff]
  %v74 = vld [vmem:[%s1 + $0xf0] sm:$0xff]
  %v75 = vld [vmem:[%s1 + $0xf8] sm:$0xff]
  %v76 = vld [vmem:[%s1 + $0x100] sm:$0xff]
  %v77 = vld [vmem:[%s1 + $0x108] sm:$0xff]
  %v78 = vld [vmem:[%s1 + $0x110] sm:$0xff]
  %v79 = vld [vmem:[%s1 + $0x118] sm:$0xff]
  %v80 = vld [vmem:[%s1 + $0x120] sm:$0xff]
  %v81 = vld [vmem:[%s1 + $0x128] sm:$0xff]
  %v82 = vld [vmem:[%s1 + $0x130] sm:$0xff]
  %v83 = vld [vmem:[%s1 + $0x138] sm:$0xff]
  %v84 = vld [vmem:[%s1 + $0x140] sm:$0xff]
  %v85 = vld [vmem:[%s1 + $0x148] sm:$0xff]
  %v86 = vld [vmem:[%s1 + $0x150] sm:$0xff]
  %v87 = vld [vmem:[%s1 + $0x158] sm:$0xff]
  %v88 = vld [vmem:[%s1 + $0x160] sm:$0xff]
  %v89 = vld [vmem:[%s1 + $0x168] sm:$0xff]
  %v90 = vld [vmem:[%s1 + $0x170] sm:$0xff]
  %v91 = vld [vmem:[%s1 + $0x178] sm:$0xff]
  %v92 = vld [vmem:[%s1 + $0x180] sm:$0xff]
  %v93 = vld [vmem:[%s1 + $0x188] sm:$0xff]
  %v94 = vld [vmem:[%s1 + $0x190] sm:$0xff]
  %v95 = vld [vmem:[%s1 + $0x198] sm:$0xff]
  %v96 = vld [vmem:[%s1 + $0x1a0] sm:$0xff]
  %v97 = vld [vmem:[%s1 + $0x1a8] sm:$0xff]
  %v98 = vld [vmem:[%s1 + $0x1b0] sm:$0xff]
  %v99 = vld [vmem:[%s1 + $0x1b8] sm:$0xff]
  %v100 = vld [vmem:[%s1 + $0x1c0] sm:$0xff]
  %v101 = vld [vmem:[%s1 + $0x1c8] sm:$0xff]
  %v102 = vld [vmem:[%s1 + $0x1d0] sm:$0xff]
  %v103 = vld [vmem:[%s1 + $0x1d8] sm:$0xff]
  %v104 = vld [vmem:[%s1 + $0x1e0] sm:$0xff]
  %v105 = vld [vmem:[%s1 + $0x1e8] sm:$0xff]
  %v106 = vld [vmem:[%s1 + $0x1f0] sm:$0xff]
  %v107 = vld [vmem:[%s1 + $0x1f8] sm:$0xff]
  %v108 = vld [vmem:[%s2] sm:$0x1]
  %v110 = vlaneseq
  %v111 = vshrl.u32 %v110, 7
  %v112 = vsub.s32 0, %v111
  %v113 = vrot.slane %v108, %v112
  %115 = vmatprep.subr.mxu0 0.0
  %116 = vmatpush1.msra.mxu0 %v44
  %117 = vmatprep.subr.mxu0 0.0
  %118 = vmatpush1.msra.mxu0 %v45
  %119 = vmatprep.subr.mxu0 0.0
  %120 = vmatpush1.msra.mxu0 %v46
  %121 = vmatprep.subr.mxu0 0.0
  %122 = vmatpush1.msra.mxu0 %v47
  %123 = vmatprep.subr.mxu0 0.0
  %124 = vmatpush1.msra.mxu0 %v48
  %125 = vmatprep.subr.mxu0 0.0
  %126 = vmatpush1.msra.mxu0 %v49
  %127 = vmatprep.subr.mxu0 0.0
  %128 = vmatpush1.msra.mxu0 %v50
  %129 = vmatprep.subr.mxu0 0.0
  %130 = vmatpush1.msra.mxu0 %v51
  %131 = vmatprep.subr.mxu0 0.0
  %132 = vmatpush1.msra.mxu0 %v52
  %133 = vmatprep.subr.mxu0 0.0
  %134 = vmatpush1.msra.mxu0 %v53
  %135 = vmatprep.subr.mxu0 0.0
  %136 = vmatpush1.msra.mxu0 %v54
  %137 = vmatprep.subr.mxu0 0.0
  %138 = vmatpush1.msra.mxu0 %v55
  %139 = vmatprep.subr.mxu0 0.0
  %140 = vmatpush1.msra.mxu0 %v56
  %141 = vmatprep.subr.mxu0 0.0
  %142 = vmatpush1.msra.mxu0 %v57
  %143 = vmatprep.subr.mxu0 0.0
  %144 = vmatpush1.msra.mxu0 %v58
  %145 = vmatprep.subr.mxu0 0.0
  %146 = vmatpush1.msra.mxu0 %v59
  %147 = vmatprep.subr.mxu0 0.0
  %148 = vmatpush1.msra.mxu0 %v60
  %149 = vmatprep.subr.mxu0 0.0
  %150 = vmatpush1.msra.mxu0 %v61
  %151 = vmatprep.subr.mxu0 0.0
  %152 = vmatpush1.msra.mxu0 %v62
  %153 = vmatprep.subr.mxu0 0.0
  %154 = vmatpush1.msra.mxu0 %v63
  %155 = vmatprep.subr.mxu0 0.0
  %156 = vmatpush1.msra.mxu0 %v64
  %157 = vmatprep.subr.mxu0 0.0
  %158 = vmatpush1.msra.mxu0 %v65
  %159 = vmatprep.subr.mxu0 0.0
  %160 = vmatpush1.msra.mxu0 %v66
  %161 = vmatprep.subr.mxu0 0.0
  %162 = vmatpush1.msra.mxu0 %v67
  %163 = vmatprep.subr.mxu0 0.0
  %164 = vmatpush1.msra.mxu0 %v68
  %165 = vmatprep.subr.mxu0 0.0
  %166 = vmatpush1.msra.mxu0 %v69
  %167 = vmatprep.subr.mxu0 0.0
  %168 = vmatpush1.msra.mxu0 %v70
  %169 = vmatprep.subr.mxu0 0.0
  %170 = vmatpush1.msra.mxu0 %v71
  %171 = vmatprep.subr.mxu0 0.0
  %172 = vmatpush1.msra.mxu0 %v72
  %173 = vmatprep.subr.mxu0 0.0
  %174 = vmatpush1.msra.mxu0 %v73
  %175 = vmatprep.subr.mxu0 0.0
  %176 = vmatpush1.msra.mxu0 %v74
  %177 = vmatprep.subr.mxu0 0.0
  %178 = vmatpush1.msra.mxu0 %v75
  %179 = vmatprep.mubr.f32.mxu0 %v21
  %180 = vmatmul.mubr.f32.gmra.mrb[0].mxu0 %v20
  %v181 = vpop.f32.mrb[0].mxu0
  %v182 = vadd.f32 %v113, %v181
  %v183 = vpop.f32.mrb[0].mxu0
  %184 = vmatprep.mubr.f32.mxu0 %v25
  %185 = vmatmul.mubr.f32.gmra.mrb[0].mxu0 %v24
  %v186 = vpop.f32.mrb[0].mxu0
  %v187 = vadd.f32 %v113, %v186
  %v188 = vpop.f32.mrb[0].mxu0
  %189 = vmatprep.mubr.f32.mxu0 %v29
  %190 = vmatmul.mubr.f32.gmra.mrb[0].mxu0 %v28
  %v191 = vpop.f32.mrb[0].mxu0
  %v192 = vadd.f32 %v113, %v191
  %v193 = vpop.f32.mrb[0].mxu0
  %194 = vmatprep.mubr.f32.mxu0 %v33
  %195 = vmatmul.mubr.f32.gmra.mrb[0].mxu0 %v32
  %v196 = vpop.f32.mrb[0].mxu0
  %v197 = vadd.f32 %v113, %v196
  %v198 = vpop.f32.mrb[0].mxu0
  %199 = vmatprep.mubr.f32.mxu0 %v37
  %200 = vmatmul.mubr.f32.gmra.mrb[0].mxu0 %v36
  %v201 = vpop.f32.mrb[0].mxu0
  %v202 = vadd.f32 %v113, %v201
  %v203 = vpop.f32.mrb[0].mxu0
  %204 = vmatprep.mubr.f32.mxu0 %v41
  %205 = vmatmul.mubr.f32.gmra.mrb[0].mxu0 %v40
  %v206 = vpop.f32.mrb[0].mxu0
  %v207 = vadd.f32 %v113, %v206
  %v208 = vpop.f32.mrb[0].mxu0
  %209 = vdwg.mxu0
  %210 = vmatprep.subr.mxu0 0.0
  %211 = vmatpush1.msra.mxu0 %v76
  %212 = vmatprep.subr.mxu0 0.0
  %213 = vmatpush1.msra.mxu0 %v77
  %214 = vmatprep.subr.mxu0 0.0
  %215 = vmatpush1.msra.mxu0 %v78
  %216 = vmatprep.subr.mxu0 0.0
  %217 = vmatpush1.msra.mxu0 %v79
  %218 = vmatprep.subr.mxu0 0.0
  %219 = vmatpush1.msra.mxu0 %v80
  %220 = vmatprep.subr.mxu0 0.0
  %221 = vmatpush1.msra.mxu0 %v81
  %222 = vmatprep.subr.mxu0 0.0
  %223 = vmatpush1.msra.mxu0 %v82
  %224 = vmatprep.subr.mxu0 0.0
  %225 = vmatpush1.msra.mxu0 %v83
  %226 = vmatprep.subr.mxu0 0.0
  %227 = vmatpush1.msra.mxu0 %v84
  %228 = vmatprep.subr.mxu0 0.0
  %229 = vmatpush1.msra.mxu0 %v85
  %230 = vmatprep.subr.mxu0 0.0
  %231 = vmatpush1.msra.mxu0 %v86
  %232 = vmatprep.subr.mxu0 0.0
  %233 = vmatpush1.msra.mxu0 %v87
  %234 = vmatprep.subr.mxu0 0.0
  %235 = vmatpush1.msra.mxu0 %v88
  %236 = vmatprep.subr.mxu0 0.0
  %237 = vmatpush1.msra.mxu0 %v89
  %238 = vmatprep.subr.mxu0 0.0
  %239 = vmatpush1.msra.mxu0 %v90
  %240 = vmatprep.subr.mxu0 0.0
  %241 = vmatpush1.msra.mxu0 %v91
  %242 = vmatprep.subr.mxu0 0.0
  %243 = vmatpush1.msra.mxu0 %v92
  %244 = vmatprep.subr.mxu0 0.0
  %245 = vmatpush1.msra.mxu0 %v93
  %246 = vmatprep.subr.mxu0 0.0
  %247 = vmatpush1.msra.mxu0 %v94
  %248 = vmatprep.subr.mxu0 0.0
  %249 = vmatpush1.msra.mxu0 %v95
  %250 = vmatprep.subr.mxu0 0.0
  %251 = vmatpush1.msra.mxu0 %v96
  %252 = vmatprep.subr.mxu0 0.0
  %253 = vmatpush1.msra.mxu0 %v97
  %254 = vmatprep.subr.mxu0 0.0
  %255 = vmatpush1.msra.mxu0 %v98
  %256 = vmatprep.subr.mxu0 0.0
  %257 = vmatpush1.msra.mxu0 %v99
  %258 = vmatprep.subr.mxu0 0.0
  %259 = vmatpush1.msra.mxu0 %v100
  %260 = vmatprep.subr.mxu0 0.0
  %261 = vmatpush1.msra.mxu0 %v101
  %262 = vmatprep.subr.mxu0 0.0
  %263 = vmatpush1.msra.mxu0 %v102
  %264 = vmatprep.subr.mxu0 0.0
  %265 = vmatpush1.msra.mxu0 %v103
  %266 = vmatprep.subr.mxu0 0.0
  %267 = vmatpush1.msra.mxu0 %v104
  %268 = vmatprep.subr.mxu0 0.0
  %269 = vmatpush1.msra.mxu0 %v105
  %270 = vmatprep.subr.mxu0 0.0
  %271 = vmatpush1.msra.mxu0 %v106
  %272 = vmatprep.subr.mxu0 0.0
  %273 = vmatpush1.msra.mxu0 %v107
  %274 = vmatprep.mubr.f32.mxu0 %v23
  %275 = vmatmul.mubr.f32.gmra.mrb[0].mxu0 %v22
  %v276 = vpop.f32.mrb[0].mxu0
  %v277 = vadd.f32 %v182, %v276
  %v278 = vpop.f32.mrb[0].mxu0
  %279 = vmatprep.mubr.f32.mxu0 %v27
  %280 = vmatmul.mubr.f32.gmra.mrb[0].mxu0 %v26
  %v281 = vpop.f32.mrb[0].mxu0
  %v282 = vadd.f32 %v187, %v281
  %v283 = vpop.f32.mrb[0].mxu0
  %284 = vmatprep.mubr.f32.mxu0 %v31
  %285 = vmatmul.mubr.f32.gmra.mrb[0].mxu0 %v30
  %v286 = vpop.f32.mrb[0].mxu0
  %v287 = vadd.f32 %v192, %v286
  %v288 = vpop.f32.mrb[0].mxu0
  %289 = vmatprep.mubr.f32.mxu0 %v35
  %290 = vmatmul.mubr.f32.gmra.mrb[0].mxu0 %v34
  %v291 = vpop.f32.mrb[0].mxu0
  %v292 = vadd.f32 %v197, %v291
  %v293 = vpop.f32.mrb[0].mxu0
  %294 = vmatprep.mubr.f32.mxu0 %v39
  %295 = vmatmul.mubr.f32.gmra.mrb[0].mxu0 %v38
  %v296 = vpop.f32.mrb[0].mxu0
  %v297 = vadd.f32 %v202, %v296
  %v298 = vpop.f32.mrb[0].mxu0
  %299 = vmatprep.mubr.f32.mxu0 %v43
  %300 = vmatmul.mubr.f32.gmra.mrb[0].mxu0 %v42
  %v301 = vpop.f32.mrb[0].mxu0
  %v302 = vadd.f32 %v207, %v301
  %v303 = vpop.f32.mrb[0].mxu0
  %304 = vdwg.mxu0
  %v305 = vmax.f32 %v277, 0.0
  %v306 = vmax.f32 %v282, 0.0
  %v307 = vmax.f32 %v287, 0.0
  %v308 = vmax.f32 %v292, 0.0
  %v309 = vmax.f32 %v297, 0.0
  %v310 = vmax.f32 %v302, 0.0
  %v311 = vld [vmem:[%s3] sm:$0x1]
  %v313 = vlaneseq
  %v314 = vshrl.u32 %v313, 7
  %v315 = vsub.s32 0, %v314
  %v316 = vrot.slane %v311, %v315
  %v318 = vmul.f32 %v305, %v316
  %v319 = vmul.f32 %v306, %v316
  %v320 = vmul.f32 %v307, %v316
  %v321 = vmul.f32 %v308, %v316
  %v322 = vmul.f32 %v309, %v316
  %v323 = vmul.f32 %v310, %v316
  %v324 = vld [vmem:[%s4] sm:$0x1]
  %v326 = vlaneseq
  %v327 = vshrl.u32 %v326, 7
  %v328 = vsub.s32 0, %v327
  %v329 = vrot.slane %v324, %v328
  %v331 = vadd.f32 %v318, %v329
  %v332 = vadd.f32 %v319, %v329
  %v333 = vadd.f32 %v320, %v329
  %v334 = vadd.f32 %v321, %v329
  %v335 = vadd.f32 %v322, %v329
  %v336 = vadd.f32 %v323, %v329
  %337 = vst [vmem:[%s5] sm:$0xff] %v331
  %338 = vst [vmem:[%s5 + $0x8] sm:$0xff] %v332
  %339 = vst [vmem:[%s5 + $0x10] sm:$0xff] %v333
  %340 = vst [vmem:[%s5 + $0x18] sm:$0xff] %v334
  %341 = vst [vmem:[%s5 + $0x20] sm:$0xff] %v335
  %342 = vst [vmem:[%s5 + $0x28] sm:$0xff] %v336
  // Predicated region
  $region22: #{forward.10} parent=0 // pred_check
    _
  $region23: #{forward.10} parent=0 // pred_check_branch
    %344 = sbr.rel (0) target = $region25
  $region24: #{forward.10} parent=0 // pred_region
    _
  $region25: #{forward.10} parent=0 // pred_fallthru
    _
  // Predicated region
  $region26: #{forward.10} parent=0 // pred_check
    _
  $region27: #{forward.10} parent=0 // pred_check_branch
    %346 = sbr.rel (0) target = $region29
  $region28: #{forward.10} parent=0 // pred_region
    _
  $region29: #{forward.10} parent=0 // pred_fallthru
    _

// kernel: forward.11
$region0: #{forward.11}
  #allocation0 [shape = 'u32[]', space=smem, size = 0x4, offset = 0x4, fixed_abs, tag = 'smem constant byte address 0x4 - core index']
  #allocation1 [shape = 'u32[144,128]{1,0:T(1,128)}', space=vmem, size = 0x12000, scoped, tag = 'internal scratch']
  %s0 = inlined_call_operand.vmem [shape: f32[24,512], index: 0, kind: input, shape index: {}]
  %s1 = inlined_call_operand.vmem [shape: f32[512,128], index: 1, kind: input, shape index: {}]
  %s2 = inlined_call_operand.vmem [shape: f32[1,128], index: 2, kind: input, shape index: {}]
  %s3 = inlined_call_operand.vmem [shape: f32[1,128], index: 3, kind: input, shape index: {}]
  %s4 = inlined_call_operand.vmem [shape: f32[1,128], index: 4, kind: input, shape index: {}]
  %s5 = inlined_call_operand.vmem [shape: f32[24,128], index: 5, kind: output, shape index: {}]
  %s6 = sld [smem:[#allocation0]]
  $region30: #{forward.11} parent=0
    _
  %s8 = ssub.s32 1, %s6
  %s9 = scalar_select 0, %s8, %s6
  // Predicated region
  $region2: #{forward.11} parent=0 // pred_check
    _
  $region3: #{forward.11} parent=0 // pred_check_branch
    %11 = sbr.rel (0) target = $region5
  $region4: #{forward.11} parent=0 // pred_region
    _
  $region5: #{forward.11} parent=0 // pred_fallthru
    _
  // Predicated region
  $region6: #{forward.11} parent=0 // pred_check
    _
  $region7: #{forward.11} parent=0 // pred_check_branch
    %13 = sbr.rel (0) target = $region9
  $region8: #{forward.11} parent=0 // pred_region
    _
  $region9: #{forward.11} parent=0 // pred_fallthru
    _
  // Predicated region
  $region10: #{forward.11} parent=0 // pred_check
    _
  $region11: #{forward.11} parent=0 // pred_check_branch
    %15 = sbr.rel (0) target = $region13
  $region12: #{forward.11} parent=0 // pred_region
    _
  $region13: #{forward.11} parent=0 // pred_fallthru
    _
  // Predicated region
  $region14: #{forward.11} parent=0 // pred_check
    _
  $region15: #{forward.11} parent=0 // pred_check_branch
    %17 = sbr.rel (0) target = $region17
  $region16: #{forward.11} parent=0 // pred_region
    _
  $region17: #{forward.11} parent=0 // pred_fallthru
    _
  // Predicated region
  $region18: #{forward.11} parent=0 // pred_check
    _
  $region19: #{forward.11} parent=0 // pred_check_branch
    %19 = sbr.rel (0) target = $region21
  $region20: #{forward.11} parent=0 // pred_region
    _
  $region21: #{forward.11} parent=0 // pred_fallthru
    _
  %v20 = vld [vmem:[%s0] sm:$0xff]
  %v21 = vld [vmem:[%s0 + $0x8] sm:$0xff]
  %v22 = vld [vmem:[%s0 + $0x10] sm:$0xff]
  %v23 = vld [vmem:[%s0 + $0x18] sm:$0xff]
  %v24 = vld [vmem:[%s0 + $0x20] sm:$0xff]
  %v25 = vld [vmem:[%s0 + $0x28] sm:$0xff]
  %v26 = vld [vmem:[%s0 + $0x30] sm:$0xff]
  %v27 = vld [vmem:[%s0 + $0x38] sm:$0xff]
  %v28 = vld [vmem:[%s0 + $0x40] sm:$0xff]
  %v29 = vld [vmem:[%s0 + $0x48] sm:$0xff]
  %v30 = vld [vmem:[%s0 + $0x50] sm:$0xff]
  %v31 = vld [vmem:[%s0 + $0x58] sm:$0xff]
  %v32 = vld [vmem:[%s1] sm:$0xff]
  %v33 = vld [vmem:[%s1 + $0x8] sm:$0xff]
  %v34 = vld [vmem:[%s1 + $0x10] sm:$0xff]
  %v35 = vld [vmem:[%s1 + $0x18] sm:$0xff]
  %v36 = vld [vmem:[%s1 + $0x20] sm:$0xff]
  %v37 = vld [vmem:[%s1 + $0x28] sm:$0xff]
  %v38 = vld [vmem:[%s1 + $0x30] sm:$0xff]
  %v39 = vld [vmem:[%s1 + $0x38] sm:$0xff]
  %v40 = vld [vmem:[%s1 + $0x40] sm:$0xff]
  %v41 = vld [vmem:[%s1 + $0x48] sm:$0xff]
  %v42 = vld [vmem:[%s1 + $0x50] sm:$0xff]
  %v43 = vld [vmem:[%s1 + $0x58] sm:$0xff]
  %v44 = vld [vmem:[%s1 + $0x60] sm:$0xff]
  %v45 = vld [vmem:[%s1 + $0x68] sm:$0xff]
  %v46 = vld [vmem:[%s1 + $0x70] sm:$0xff]
  %v47 = vld [vmem:[%s1 + $0x78] sm:$0xff]
  %v48 = vld [vmem:[%s1 + $0x80] sm:$0xff]
  %v49 = vld [vmem:[%s1 + $0x88] sm:$0xff]
  %v50 = vld [vmem:[%s1 + $0x90] sm:$0xff]
  %v51 = vld [vmem:[%s1 + $0x98] sm:$0xff]
  %v52 = vld [vmem:[%s1 + $0xa0] sm:$0xff]
  %v53 = vld [vmem:[%s1 + $0xa8] sm:$0xff]
  %v54 = vld [vmem:[%s1 + $0xb0] sm:$0xff]
  %v55 = vld [vmem:[%s1 + $0xb8] sm:$0xff]
  %v56 = vld [vmem:[%s1 + $0xc0] sm:$0xff]
  %v57 = vld [vmem:[%s1 + $0xc8] sm:$0xff]
  %v58 = vld [vmem:[%s1 + $0xd0] sm:$0xff]
  %v59 = vld [vmem:[%s1 + $0xd8] sm:$0xff]
  %v60 = vld [vmem:[%s1 + $0xe0] sm:$0xff]
  %v61 = vld [vmem:[%s1 + $0xe8] sm:$0xff]
  %v62 = vld [vmem:[%s1 + $0xf0] sm:$0xff]
  %v63 = vld [vmem:[%s1 + $0xf8] sm:$0xff]
  %v64 = vld [vmem:[%s1 + $0x100] sm:$0xff]
  %v65 = vld [vmem:[%s1 + $0x108] sm:$0xff]
  %v66 = vld [vmem:[%s1 + $0x110] sm:$0xff]
  %v67 = vld [vmem:[%s1 + $0x118] sm:$0xff]
  %v68 = vld [vmem:[%s1 + $0x120] sm:$0xff]
  %v69 = vld [vmem:[%s1 + $0x128] sm:$0xff]
  %v70 = vld [vmem:[%s1 + $0x130] sm:$0xff]
  %v71 = vld [vmem:[%s1 + $0x138] sm:$0xff]
  %v72 = vld [vmem:[%s1 + $0x140] sm:$0xff]
  %v73 = vld [vmem:[%s1 + $0x148] sm:$0xff]
  %v74 = vld [vmem:[%s1 + $0x150] sm:$0xff]
  %v75 = vld [vmem:[%s1 + $0x158] sm:$0xff]
  %v76 = vld [vmem:[%s1 + $0x160] sm:$0xff]
  %v77 = vld [vmem:[%s1 + $0x168] sm:$0xff]
  %v78 = vld [vmem:[%s1 + $0x170] sm:$0xff]
  %v79 = vld [vmem:[%s1 + $0x178] sm:$0xff]
  %v80 = vld [vmem:[%s1 + $0x180] sm:$0xff]
  %v81 = vld [vmem:[%s1 + $0x188] sm:$0xff]
  %v82 = vld [vmem:[%s1 + $0x190] sm:$0xff]
  %v83 = vld [vmem:[%s1 + $0x198] sm:$0xff]
  %v84 = vld [vmem:[%s1 + $0x1a0] sm:$0xff]
  %v85 = vld [vmem:[%s1 + $0x1a8] sm:$0xff]
  %v86 = vld [vmem:[%s1 + $0x1b0] sm:$0xff]
  %v87 = vld [vmem:[%s1 + $0x1b8] sm:$0xff]
  %v88 = vld [vmem:[%s1 + $0x1c0] sm:$0xff]
  %v89 = vld [vmem:[%s1 + $0x1c8] sm:$0xff]
  %v90 = vld [vmem:[%s1 + $0x1d0] sm:$0xff]
  %v91 = vld [vmem:[%s1 + $0x1d8] sm:$0xff]
  %v92 = vld [vmem:[%s1 + $0x1e0] sm:$0xff]
  %v93 = vld [vmem:[%s1 + $0x1e8] sm:$0xff]
  %v94 = vld [vmem:[%s1 + $0x1f0] sm:$0xff]
  %v95 = vld [vmem:[%s1 + $0x1f8] sm:$0xff]
  %v96 = vld [vmem:[%s2] sm:$0x1]
  %v98 = vlaneseq
  %v99 = vshrl.u32 %v98, 7
  %v100 = vsub.s32 0, %v99
  %v101 = vrot.slane %v96, %v100
  %103 = vmatprep.subr.mxu0 0.0
  %104 = vmatpush1.msra.mxu0 %v32
  %105 = vmatprep.subr.mxu0 0.0
  %106 = vmatpush1.msra.mxu0 %v33
  %107 = vmatprep.subr.mxu0 0.0
  %108 = vmatpush1.msra.mxu0 %v34
  %109 = vmatprep.subr.mxu0 0.0
  %110 = vmatpush1.msra.mxu0 %v35
  %111 = vmatprep.subr.mxu0 0.0
  %112 = vmatpush1.msra.mxu0 %v36
  %113 = vmatprep.subr.mxu0 0.0
  %114 = vmatpush1.msra.mxu0 %v37
  %115 = vmatprep.subr.mxu0 0.0
  %116 = vmatpush1.msra.mxu0 %v38
  %117 = vmatprep.subr.mxu0 0.0
  %118 = vmatpush1.msra.mxu0 %v39
  %119 = vmatprep.subr.mxu0 0.0
  %120 = vmatpush1.msra.mxu0 %v40
  %121 = vmatprep.subr.mxu0 0.0
  %122 = vmatpush1.msra.mxu0 %v41
  %123 = vmatprep.subr.mxu0 0.0
  %124 = vmatpush1.msra.mxu0 %v42
  %125 = vmatprep.subr.mxu0 0.0
  %126 = vmatpush1.msra.mxu0 %v43
  %127 = vmatprep.subr.mxu0 0.0
  %128 = vmatpush1.msra.mxu0 %v44
  %129 = vmatprep.subr.mxu0 0.0
  %130 = vmatpush1.msra.mxu0 %v45
  %131 = vmatprep.subr.mxu0 0.0
  %132 = vmatpush1.msra.mxu0 %v46
  %133 = vmatprep.subr.mxu0 0.0
  %134 = vmatpush1.msra.mxu0 %v47
  %135 = vmatprep.subr.mxu0 0.0
  %136 = vmatpush1.msra.mxu0 %v48
  %137 = vmatprep.subr.mxu0 0.0
  %138 = vmatpush1.msra.mxu0 %v49
  %139 = vmatprep.subr.mxu0 0.0
  %140 = vmatpush1.msra.mxu0 %v50
  %141 = vmatprep.subr.mxu0 0.0
  %142 = vmatpush1.msra.mxu0 %v51
  %143 = vmatprep.subr.mxu0 0.0
  %144 = vmatpush1.msra.mxu0 %v52
  %145 = vmatprep.subr.mxu0 0.0
  %146 = vmatpush1.msra.mxu0 %v53
  %147 = vmatprep.subr.mxu0 0.0
  %148 = vmatpush1.msra.mxu0 %v54
  %149 = vmatprep.subr.mxu0 0.0
  %150 = vmatpush1.msra.mxu0 %v55
  %151 = vmatprep.subr.mxu0 0.0
  %152 = vmatpush1.msra.mxu0 %v56
  %153 = vmatprep.subr.mxu0 0.0
  %154 = vmatpush1.msra.mxu0 %v57
  %155 = vmatprep.subr.mxu0 0.0
  %156 = vmatpush1.msra.mxu0 %v58
  %157 = vmatprep.subr.mxu0 0.0
  %158 = vmatpush1.msra.mxu0 %v59
  %159 = vmatprep.subr.mxu0 0.0
  %160 = vmatpush1.msra.mxu0 %v60
  %161 = vmatprep.subr.mxu0 0.0
  %162 = vmatpush1.msra.mxu0 %v61
  %163 = vmatprep.subr.mxu0 0.0
  %164 = vmatpush1.msra.mxu0 %v62
  %165 = vmatprep.subr.mxu0 0.0
  %166 = vmatpush1.msra.mxu0 %v63
  %167 = vmatprep.mubr.f32.mxu0 %v21
  %168 = vmatmul.mubr.f32.gmra.mrb[0].mxu0 %v20
  %v169 = vpop.f32.mrb[0].mxu0
  %v170 = vadd.f32 %v101, %v169
  %v171 = vpop.f32.mrb[0].mxu0
  %172 = vmatprep.mubr.f32.mxu0 %v25
  %173 = vmatmul.mubr.f32.gmra.mrb[0].mxu0 %v24
  %v174 = vpop.f32.mrb[0].mxu0
  %v175 = vadd.f32 %v101, %v174
  %v176 = vpop.f32.mrb[0].mxu0
  %177 = vmatprep.mubr.f32.mxu0 %v29
  %178 = vmatmul.mubr.f32.gmra.mrb[0].mxu0 %v28
  %v179 = vpop.f32.mrb[0].mxu0
  %v180 = vadd.f32 %v101, %v179
  %v181 = vpop.f32.mrb[0].mxu0
  %182 = vdwg.mxu0
  %183 = vmatprep.subr.mxu0 0.0
  %184 = vmatpush1.msra.mxu0 %v64
  %185 = vmatprep.subr.mxu0 0.0
  %186 = vmatpush1.msra.mxu0 %v65
  %187 = vmatprep.subr.mxu0 0.0
  %188 = vmatpush1.msra.mxu0 %v66
  %189 = vmatprep.subr.mxu0 0.0
  %190 = vmatpush1.msra.mxu0 %v67
  %191 = vmatprep.subr.mxu0 0.0
  %192 = vmatpush1.msra.mxu0 %v68
  %193 = vmatprep.subr.mxu0 0.0
  %194 = vmatpush1.msra.mxu0 %v69
  %195 = vmatprep.subr.mxu0 0.0
  %196 = vmatpush1.msra.mxu0 %v70
  %197 = vmatprep.subr.mxu0 0.0
  %198 = vmatpush1.msra.mxu0 %v71
  %199 = vmatprep.subr.mxu0 0.0
  %200 = vmatpush1.msra.mxu0 %v72
  %201 = vmatprep.subr.mxu0 0.0
  %202 = vmatpush1.msra.mxu0 %v73
  %203 = vmatprep.subr.mxu0 0.0
  %204 = vmatpush1.msra.mxu0 %v74
  %205 = vmatprep.subr.mxu0 0.0
  %206 = vmatpush1.msra.mxu0 %v75
  %207 = vmatprep.subr.mxu0 0.0
  %208 = vmatpush1.msra.mxu0 %v76
  %209 = vmatprep.subr.mxu0 0.0
  %210 = vmatpush1.msra.mxu0 %v77
  %211 = vmatprep.subr.mxu0 0.0
  %212 = vmatpush1.msra.mxu0 %v78
  %213 = vmatprep.subr.mxu0 0.0
  %214 = vmatpush1.msra.mxu0 %v79
  %215 = vmatprep.subr.mxu0 0.0
  %216 = vmatpush1.msra.mxu0 %v80
  %217 = vmatprep.subr.mxu0 0.0
  %218 = vmatpush1.msra.mxu0 %v81
  %219 = vmatprep.subr.mxu0 0.0
  %220 = vmatpush1.msra.mxu0 %v82
  %221 = vmatprep.subr.mxu0 0.0
  %222 = vmatpush1.msra.mxu0 %v83
  %223 = vmatprep.subr.mxu0 0.0
  %224 = vmatpush1.msra.mxu0 %v84
  %225 = vmatprep.subr.mxu0 0.0
  %226 = vmatpush1.msra.mxu0 %v85
  %227 = vmatprep.subr.mxu0 0.0
  %228 = vmatpush1.msra.mxu0 %v86
  %229 = vmatprep.subr.mxu0 0.0
  %230 = vmatpush1.msra.mxu0 %v87
  %231 = vmatprep.subr.mxu0 0.0
  %232 = vmatpush1.msra.mxu0 %v88
  %233 = vmatprep.subr.mxu0 0.0
  %234 = vmatpush1.msra.mxu0 %v89
  %235 = vmatprep.subr.mxu0 0.0
  %236 = vmatpush1.msra.mxu0 %v90
  %237 = vmatprep.subr.mxu0 0.0
  %238 = vmatpush1.msra.mxu0 %v91
  %239 = vmatprep.subr.mxu0 0.0
  %240 = vmatpush1.msra.mxu0 %v92
  %241 = vmatprep.subr.mxu0 0.0
  %242 = vmatpush1.msra.mxu0 %v93
  %243 = vmatprep.subr.mxu0 0.0
  %244 = vmatpush1.msra.mxu0 %v94
  %245 = vmatprep.subr.mxu0 0.0
  %246 = vmatpush1.msra.mxu0 %v95
  %247 = vmatprep.mubr.f32.mxu0 %v23
  %248 = vmatmul.mubr.f32.gmra.mrb[0].mxu0 %v22
  %v249 = vpop.f32.mrb[0].mxu0
  %v250 = vadd.f32 %v170, %v249
  %v251 = vpop.f32.mrb[0].mxu0
  %252 = vmatprep.mubr.f32.mxu0 %v27
  %253 = vmatmul.mubr.f32.gmra.mrb[0].mxu0 %v26
  %v254 = vpop.f32.mrb[0].mxu0
  %v255 = vadd.f32 %v175, %v254
  %v256 = vpop.f32.mrb[0].mxu0
  %257 = vmatprep.mubr.f32.mxu0 %v31
  %258 = vmatmul.mubr.f32.gmra.mrb[0].mxu0 %v30
  %v259 = vpop.f32.mrb[0].mxu0
  %v260 = vadd.f32 %v180, %v259
  %v261 = vpop.f32.mrb[0].mxu0
  %262 = vdwg.mxu0
  %v263 = vmax.f32 %v250, 0.0
  %v264 = vmax.f32 %v255, 0.0
  %v265 = vmax.f32 %v260, 0.0
  %v266 = vld [vmem:[%s3] sm:$0x1]
  %v268 = vlaneseq
  %v269 = vshrl.u32 %v268, 7
  %v270 = vsub.s32 0, %v269
  %v271 = vrot.slane %v266, %v270
  %v273 = vmul.f32 %v263, %v271
  %v274 = vmul.f32 %v264, %v271
  %v275 = vmul.f32 %v265, %v271
  %v276 = vld [vmem:[%s4] sm:$0x1]
  %v278 = vlaneseq
  %v279 = vshrl.u32 %v278, 7
  %v280 = vsub.s32 0, %v279
  %v281 = vrot.slane %v276, %v280
  %v283 = vadd.f32 %v273, %v281
  %v284 = vadd.f32 %v274, %v281
  %v285 = vadd.f32 %v275, %v281
  %286 = vst [vmem:[%s5] sm:$0xff] %v283
  %287 = vst [vmem:[%s5 + $0x8] sm:$0xff] %v284
  %288 = vst [vmem:[%s5 + $0x10] sm:$0xff] %v285
  // Predicated region
  $region22: #{forward.11} parent=0 // pred_check
    _
  $region23: #{forward.11} parent=0 // pred_check_branch
    %290 = sbr.rel (0) target = $region25
  $region24: #{forward.11} parent=0 // pred_region
    _
  $region25: #{forward.11} parent=0 // pred_fallthru
    _
  // Predicated region
  $region26: #{forward.11} parent=0 // pred_check
    _
  $region27: #{forward.11} parent=0 // pred_check_branch
    %292 = sbr.rel (0) target = $region29
  $region28: #{forward.11} parent=0 // pred_region
    _
  $region29: #{forward.11} parent=0 // pred_fallthru
    _

// kernel: forward.12
$region0: #{forward.12}
  #allocation0 [shape = 'u32[]', space=smem, size = 0x4, offset = 0x4, fixed_abs, tag = 'smem constant byte address 0x4 - core index']
  #allocation1 [shape = 'u32[144,128]{1,0:T(1,128)}', space=vmem, size = 0x12000, scoped, tag = 'internal scratch']
  %s0 = inlined_call_operand.vmem [shape: f32[8,512], index: 0, kind: input, shape index: {}]
  %s1 = inlined_call_operand.vmem [shape: f32[512,256], index: 1, kind: input, shape index: {}]
  %s2 = inlined_call_operand.vmem [shape: f32[1,256], index: 2, kind: input, shape index: {}]
  %s3 = inlined_call_operand.vmem [shape: f32[1,256], index: 3, kind: input, shape index: {}]
  %s4 = inlined_call_operand.vmem [shape: f32[1,256], index: 4, kind: input, shape index: {}]
  %s5 = inlined_call_operand.vmem [shape: f32[8,256], index: 5, kind: output, shape index: {}]
  %s6 = sld [smem:[#allocation0]]
  $region30: #{forward.12} parent=0
    _
  %s8 = ssub.s32 1, %s6
  %s9 = scalar_select 0, %s8, %s6
  // Predicated region
  $region2: #{forward.12} parent=0 // pred_check
    _
  $region3: #{forward.12} parent=0 // pred_check_branch
    %11 = sbr.rel (0) target = $region5
  $region4: #{forward.12} parent=0 // pred_region
    _
  $region5: #{forward.12} parent=0 // pred_fallthru
    _
  // Predicated region
  $region6: #{forward.12} parent=0 // pred_check
    _
  $region7: #{forward.12} parent=0 // pred_check_branch
    %13 = sbr.rel (0) target = $region9
  $region8: #{forward.12} parent=0 // pred_region
    _
  $region9: #{forward.12} parent=0 // pred_fallthru
    _
  // Predicated region
  $region10: #{forward.12} parent=0 // pred_check
    _
  $region11: #{forward.12} parent=0 // pred_check_branch
    %15 = sbr.rel (0) target = $region13
  $region12: #{forward.12} parent=0 // pred_region
    _
  $region13: #{forward.12} parent=0 // pred_fallthru
    _
  // Predicated region
  $region14: #{forward.12} parent=0 // pred_check
    _
  $region15: #{forward.12} parent=0 // pred_check_branch
    %17 = sbr.rel (0) target = $region17
  $region16: #{forward.12} parent=0 // pred_region
    _
  $region17: #{forward.12} parent=0 // pred_fallthru
    _
  // Predicated region
  $region18: #{forward.12} parent=0 // pred_check
    _
  $region19: #{forward.12} parent=0 // pred_check_branch
    %19 = sbr.rel (0) target = $region21
  $region20: #{forward.12} parent=0 // pred_region
    _
  $region21: #{forward.12} parent=0 // pred_fallthru
    _
  %v20 = vld [vmem:[%s0] sm:$0xff]
  %v21 = vld [vmem:[%s0 + $0x8] sm:$0xff]
  %v22 = vld [vmem:[%s0 + $0x10] sm:$0xff]
  %v23 = vld [vmem:[%s0 + $0x18] sm:$0xff]
  %v24 = vld [vmem:[%s1] sm:$0xff]
  %v25 = vld [vmem:[%s1 + $0x8] sm:$0xff]
  %v26 = vld [vmem:[%s1 + $0x10] sm:$0xff]
  %v27 = vld [vmem:[%s1 + $0x18] sm:$0xff]
  %v28 = vld [vmem:[%s1 + $0x20] sm:$0xff]
  %v29 = vld [vmem:[%s1 + $0x28] sm:$0xff]
  %v30 = vld [vmem:[%s1 + $0x30] sm:$0xff]
  %v31 = vld [vmem:[%s1 + $0x38] sm:$0xff]
  %v32 = vld [vmem:[%s1 + $0x40] sm:$0xff]
  %v33 = vld [vmem:[%s1 + $0x48] sm:$0xff]
  %v34 = vld [vmem:[%s1 + $0x50] sm:$0xff]
  %v35 = vld [vmem:[%s1 + $0x58] sm:$0xff]
  %v36 = vld [vmem:[%s1 + $0x60] sm:$0xff]
  %v37 = vld [vmem:[%s1 + $0x68] sm:$0xff]
  %v38 = vld [vmem:[%s1 + $0x70] sm:$0xff]
  %v39 = vld [vmem:[%s1 + $0x78] sm:$0xff]
  %v40 = vld [vmem:[%s1 + $0x80] sm:$0xff]
  %v41 = vld [vmem:[%s1 + $0x88] sm:$0xff]
  %v42 = vld [vmem:[%s1 + $0x90] sm:$0xff]
  %v43 = vld [vmem:[%s1 + $0x98] sm:$0xff]
  %v44 = vld [vmem:[%s1 + $0xa0] sm:$0xff]
  %v45 = vld [vmem:[%s1 + $0xa8] sm:$0xff]
  %v46 = vld [vmem:[%s1 + $0xb0] sm:$0xff]
  %v47 = vld [vmem:[%s1 + $0xb8] sm:$0xff]
  %v48 = vld [vmem:[%s1 + $0xc0] sm:$0xff]
  %v49 = vld [vmem:[%s1 + $0xc8] sm:$0xff]
  %v50 = vld [vmem:[%s1 + $0xd0] sm:$0xff]
  %v51 = vld [vmem:[%s1 + $0xd8] sm:$0xff]
  %v52 = vld [vmem:[%s1 + $0xe0] sm:$0xff]
  %v53 = vld [vmem:[%s1 + $0xe8] sm:$0xff]
  %v54 = vld [vmem:[%s1 + $0xf0] sm:$0xff]
  %v55 = vld [vmem:[%s1 + $0xf8] sm:$0xff]
  %v56 = vld [vmem:[%s1 + $0x100] sm:$0xff]
  %v57 = vld [vmem:[%s1 + $0x108] sm:$0xff]
  %v58 = vld [vmem:[%s1 + $0x110] sm:$0xff]
  %v59 = vld [vmem:[%s1 + $0x118] sm:$0xff]
  %v60 = vld [vmem:[%s1 + $0x120] sm:$0xff]
  %v61 = vld [vmem:[%s1 + $0x128] sm:$0xff]
  %v62 = vld [vmem:[%s1 + $0x130] sm:$0xff]
  %v63 = vld [vmem:[%s1 + $0x138] sm:$0xff]
  %v64 = vld [vmem:[%s1 + $0x140] sm:$0xff]
  %v65 = vld [vmem:[%s1 + $0x148] sm:$0xff]
  %v66 = vld [vmem:[%s1 + $0x150] sm:$0xff]
  %v67 = vld [vmem:[%s1 + $0x158] sm:$0xff]
  %v68 = vld [vmem:[%s1 + $0x160] sm:$0xff]
  %v69 = vld [vmem:[%s1 + $0x168] sm:$0xff]
  %v70 = vld [vmem:[%s1 + $0x170] sm:$0xff]
  %v71 = vld [vmem:[%s1 + $0x178] sm:$0xff]
  %v72 = vld [vmem:[%s1 + $0x180] sm:$0xff]
  %v73 = vld [vmem:[%s1 + $0x188] sm:$0xff]
  %v74 = vld [vmem:[%s1 + $0x190] sm:$0xff]
  %v75 = vld [vmem:[%s1 + $0x198] sm:$0xff]
  %v76 = vld [vmem:[%s1 + $0x1a0] sm:$0xff]
  %v77 = vld [vmem:[%s1 + $0x1a8] sm:$0xff]
  %v78 = vld [vmem:[%s1 + $0x1b0] sm:$0xff]
  %v79 = vld [vmem:[%s1 + $0x1b8] sm:$0xff]
  %v80 = vld [vmem:[%s1 + $0x1c0] sm:$0xff]
  %v81 = vld [vmem:[%s1 + $0x1c8] sm:$0xff]
  %v82 = vld [vmem:[%s1 + $0x1d0] sm:$0xff]
  %v83 = vld [vmem:[%s1 + $0x1d8] sm:$0xff]
  %v84 = vld [vmem:[%s1 + $0x1e0] sm:$0xff]
  %v85 = vld [vmem:[%s1 + $0x1e8] sm:$0xff]
  %v86 = vld [vmem:[%s1 + $0x1f0] sm:$0xff]
  %v87 = vld [vmem:[%s1 + $0x1f8] sm:$0xff]
  %v88 = vld [vmem:[%s1 + $0x200] sm:$0xff]
  %v89 = vld [vmem:[%s1 + $0x208] sm:$0xff]
  %v90 = vld [vmem:[%s1 + $0x210] sm:$0xff]
  %v91 = vld [vmem:[%s1 + $0x218] sm:$0xff]
  %v92 = vld [vmem:[%s1 + $0x220] sm:$0xff]
  %v93 = vld [vmem:[%s1 + $0x228] sm:$0xff]
  %v94 = vld [vmem:[%s1 + $0x230] sm:$0xff]
  %v95 = vld [vmem:[%s1 + $0x238] sm:$0xff]
  %v96 = vld [vmem:[%s1 + $0x240] sm:$0xff]
  %v97 = vld [vmem:[%s1 + $0x248] sm:$0xff]
  %v98 = vld [vmem:[%s1 + $0x250] sm:$0xff]
  %v99 = vld [vmem:[%s1 + $0x258] sm:$0xff]
  %v100 = vld [vmem:[%s1 + $0x260] sm:$0xff]
  %v101 = vld [vmem:[%s1 + $0x268] sm:$0xff]
  %v102 = vld [vmem:[%s1 + $0x270] sm:$0xff]
  %v103 = vld [vmem:[%s1 + $0x278] sm:$0xff]
  %v104 = vld [vmem:[%s1 + $0x280] sm:$0xff]
  %v105 = vld [vmem:[%s1 + $0x288] sm:$0xff]
  %v106 = vld [vmem:[%s1 + $0x290] sm:$0xff]
  %v107 = vld [vmem:[%s1 + $0x298] sm:$0xff]
  %v108 = vld [vmem:[%s1 + $0x2a0] sm:$0xff]
  %v109 = vld [vmem:[%s1 + $0x2a8] sm:$0xff]
  %v110 = vld [vmem:[%s1 + $0x2b0] sm:$0xff]
  %v111 = vld [vmem:[%s1 + $0x2b8] sm:$0xff]
  %v112 = vld [vmem:[%s1 + $0x2c0] sm:$0xff]
  %v113 = vld [vmem:[%s1 + $0x2c8] sm:$0xff]
  %v114 = vld [vmem:[%s1 + $0x2d0] sm:$0xff]
  %v115 = vld [vmem:[%s1 + $0x2d8] sm:$0xff]
  %v116 = vld [vmem:[%s1 + $0x2e0] sm:$0xff]
  %v117 = vld [vmem:[%s1 + $0x2e8] sm:$0xff]
  %v118 = vld [vmem:[%s1 + $0x2f0] sm:$0xff]
  %v119 = vld [vmem:[%s1 + $0x2f8] sm:$0xff]
  %v120 = vld [vmem:[%s1 + $0x300] sm:$0xff]
  %v121 = vld [vmem:[%s1 + $0x308] sm:$0xff]
  %v122 = vld [vmem:[%s1 + $0x310] sm:$0xff]
  %v123 = vld [vmem:[%s1 + $0x318] sm:$0xff]
  %v124 = vld [vmem:[%s1 + $0x320] sm:$0xff]
  %v125 = vld [vmem:[%s1 + $0x328] sm:$0xff]
  %v126 = vld [vmem:[%s1 + $0x330] sm:$0xff]
  %v127 = vld [vmem:[%s1 + $0x338] sm:$0xff]
  %v128 = vld [vmem:[%s1 + $0x340] sm:$0xff]
  %v129 = vld [vmem:[%s1 + $0x348] sm:$0xff]
  %v130 = vld [vmem:[%s1 + $0x350] sm:$0xff]
  %v131 = vld [vmem:[%s1 + $0x358] sm:$0xff]
  %v132 = vld [vmem:[%s1 + $0x360] sm:$0xff]
  %v133 = vld [vmem:[%s1 + $0x368] sm:$0xff]
  %v134 = vld [vmem:[%s1 + $0x370] sm:$0xff]
  %v135 = vld [vmem:[%s1 + $0x378] sm:$0xff]
  %v136 = vld [vmem:[%s1 + $0x380] sm:$0xff]
  %v137 = vld [vmem:[%s1 + $0x388] sm:$0xff]
  %v138 = vld [vmem:[%s1 + $0x390] sm:$0xff]
  %v139 = vld [vmem:[%s1 + $0x398] sm:$0xff]
  %v140 = vld [vmem:[%s1 + $0x3a0] sm:$0xff]
  %v141 = vld [vmem:[%s1 + $0x3a8] sm:$0xff]
  %v142 = vld [vmem:[%s1 + $0x3b0] sm:$0xff]
  %v143 = vld [vmem:[%s1 + $0x3b8] sm:$0xff]
  %v144 = vld [vmem:[%s1 + $0x3c0] sm:$0xff]
  %v145 = vld [vmem:[%s1 + $0x3c8] sm:$0xff]
  %v146 = vld [vmem:[%s1 + $0x3d0] sm:$0xff]
  %v147 = vld [vmem:[%s1 + $0x3d8] sm:$0xff]
  %v148 = vld [vmem:[%s1 + $0x3e0] sm:$0xff]
  %v149 = vld [vmem:[%s1 + $0x3e8] sm:$0xff]
  %v150 = vld [vmem:[%s1 + $0x3f0] sm:$0xff]
  %v151 = vld [vmem:[%s1 + $0x3f8] sm:$0xff]
  %v152 = vld [vmem:[%s2] sm:$0x3]
  %v154 = vlaneseq
  %v155 = vshrl.u32 %v154, 7
  %v156 = vsub.s32 0, %v155
  %v157 = vrot.slane %v152, %v156
  %v158 = vlaneseq
  %v159 = vshrl.u32 %v158, 7
  %v160 = vsub.s32 1, %v159
  %v161 = vrot.slane %v152, %v160
  %164 = vmatprep.subr.mxu0 %v25
  %165 = vmatpush1.msra.mxu0 %v24
  %166 = vmatprep.subr.mxu0 %v27
  %167 = vmatpush1.msra.mxu0 %v26
  %168 = vmatprep.subr.mxu0 %v29
  %169 = vmatpush1.msra.mxu0 %v28
  %170 = vmatprep.subr.mxu0 %v31
  %171 = vmatpush1.msra.mxu0 %v30
  %172 = vmatprep.subr.mxu0 %v33
  %173 = vmatpush1.msra.mxu0 %v32
  %174 = vmatprep.subr.mxu0 %v35
  %175 = vmatpush1.msra.mxu0 %v34
  %176 = vmatprep.subr.mxu0 %v37
  %177 = vmatpush1.msra.mxu0 %v36
  %178 = vmatprep.subr.mxu0 %v39
  %179 = vmatpush1.msra.mxu0 %v38
  %180 = vmatprep.subr.mxu0 %v41
  %181 = vmatpush1.msra.mxu0 %v40
  %182 = vmatprep.subr.mxu0 %v43
  %183 = vmatpush1.msra.mxu0 %v42
  %184 = vmatprep.subr.mxu0 %v45
  %185 = vmatpush1.msra.mxu0 %v44
  %186 = vmatprep.subr.mxu0 %v47
  %187 = vmatpush1.msra.mxu0 %v46
  %188 = vmatprep.subr.mxu0 %v49
  %189 = vmatpush1.msra.mxu0 %v48
  %190 = vmatprep.subr.mxu0 %v51
  %191 = vmatpush1.msra.mxu0 %v50
  %192 = vmatprep.subr.mxu0 %v53
  %193 = vmatpush1.msra.mxu0 %v52
  %194 = vmatprep.subr.mxu0 %v55
  %195 = vmatpush1.msra.mxu0 %v54
  %196 = vmatprep.subr.mxu0 %v57
  %197 = vmatpush1.msra.mxu0 %v56
  %198 = vmatprep.subr.mxu0 %v59
  %199 = vmatpush1.msra.mxu0 %v58
  %200 = vmatprep.subr.mxu0 %v61
  %201 = vmatpush1.msra.mxu0 %v60
  %202 = vmatprep.subr.mxu0 %v63
  %203 = vmatpush1.msra.mxu0 %v62
  %204 = vmatprep.subr.mxu0 %v65
  %205 = vmatpush1.msra.mxu0 %v64
  %206 = vmatprep.subr.mxu0 %v67
  %207 = vmatpush1.msra.mxu0 %v66
  %208 = vmatprep.subr.mxu0 %v69
  %209 = vmatpush1.msra.mxu0 %v68
  %210 = vmatprep.subr.mxu0 %v71
  %211 = vmatpush1.msra.mxu0 %v70
  %212 = vmatprep.subr.mxu0 %v73
  %213 = vmatpush1.msra.mxu0 %v72
  %214 = vmatprep.subr.mxu0 %v75
  %215 = vmatpush1.msra.mxu0 %v74
  %216 = vmatprep.subr.mxu0 %v77
  %217 = vmatpush1.msra.mxu0 %v76
  %218 = vmatprep.subr.mxu0 %v79
  %219 = vmatpush1.msra.mxu0 %v78
  %220 = vmatprep.subr.mxu0 %v81
  %221 = vmatpush1.msra.mxu0 %v80
  %222 = vmatprep.subr.mxu0 %v83
  %223 = vmatpush1.msra.mxu0 %v82
  %224 = vmatprep.subr.mxu0 %v85
  %225 = vmatpush1.msra.mxu0 %v84
  %226 = vmatprep.subr.mxu0 %v87
  %227 = vmatpush1.msra.mxu0 %v86
  %228 = vmatprep.mubr.f32.mxu0 %v21
  %229 = vmatmul.mubr.f32.gmra.mrb[0].mxu0 %v20
  %v230 = vpop.f32.mrb[0].mxu0
  %v231 = vadd.f32 %v157, %v230
  %v232 = vpop.f32.mrb[0].mxu0
  %v233 = vadd.f32 %v161, %v232
  %234 = vdwg.mxu0
  %235 = vmatprep.subr.mxu0 %v89
  %236 = vmatpush1.msra.mxu0 %v88
  %237 = vmatprep.subr.mxu0 %v91
  %238 = vmatpush1.msra.mxu0 %v90
  %239 = vmatprep.subr.mxu0 %v93
  %240 = vmatpush1.msra.mxu0 %v92
  %241 = vmatprep.subr.mxu0 %v95
  %242 = vmatpush1.msra.mxu0 %v94
  %243 = vmatprep.subr.mxu0 %v97
  %244 = vmatpush1.msra.mxu0 %v96
  %245 = vmatprep.subr.mxu0 %v99
  %246 = vmatpush1.msra.mxu0 %v98
  %247 = vmatprep.subr.mxu0 %v101
  %248 = vmatpush1.msra.mxu0 %v100
  %249 = vmatprep.subr.mxu0 %v103
  %250 = vmatpush1.msra.mxu0 %v102
  %251 = vmatprep.subr.mxu0 %v105
  %252 = vmatpush1.msra.mxu0 %v104
  %253 = vmatprep.subr.mxu0 %v107
  %254 = vmatpush1.msra.mxu0 %v106
  %255 = vmatprep.subr.mxu0 %v109
  %256 = vmatpush1.msra.mxu0 %v108
  %257 = vmatprep.subr.mxu0 %v111
  %258 = vmatpush1.msra.mxu0 %v110
  %259 = vmatprep.subr.mxu0 %v113
  %260 = vmatpush1.msra.mxu0 %v112
  %261 = vmatprep.subr.mxu0 %v115
  %262 = vmatpush1.msra.mxu0 %v114
  %263 = vmatprep.subr.mxu0 %v117
  %264 = vmatpush1.msra.mxu0 %v116
  %265 = vmatprep.subr.mxu0 %v119
  %266 = vmatpush1.msra.mxu0 %v118
  %267 = vmatprep.subr.mxu0 %v121
  %268 = vmatpush1.msra.mxu0 %v120
  %269 = vmatprep.subr.mxu0 %v123
  %270 = vmatpush1.msra.mxu0 %v122
  %271 = vmatprep.subr.mxu0 %v125
  %272 = vmatpush1.msra.mxu0 %v124
  %273 = vmatprep.subr.mxu0 %v127
  %274 = vmatpush1.msra.mxu0 %v126
  %275 = vmatprep.subr.mxu0 %v129
  %276 = vmatpush1.msra.mxu0 %v128
  %277 = vmatprep.subr.mxu0 %v131
  %278 = vmatpush1.msra.mxu0 %v130
  %279 = vmatprep.subr.mxu0 %v133
  %280 = vmatpush1.msra.mxu0 %v132
  %281 = vmatprep.subr.mxu0 %v135
  %282 = vmatpush1.msra.mxu0 %v134
  %283 = vmatprep.subr.mxu0 %v137
  %284 = vmatpush1.msra.mxu0 %v136
  %285 = vmatprep.subr.mxu0 %v139
  %286 = vmatpush1.msra.mxu0 %v138
  %287 = vmatprep.subr.mxu0 %v141
  %288 = vmatpush1.msra.mxu0 %v140
  %289 = vmatprep.subr.mxu0 %v143
  %290 = vmatpush1.msra.mxu0 %v142
  %291 = vmatprep.subr.mxu0 %v145
  %292 = vmatpush1.msra.mxu0 %v144
  %293 = vmatprep.subr.mxu0 %v147
  %294 = vmatpush1.msra.mxu0 %v146
  %295 = vmatprep.subr.mxu0 %v149
  %296 = vmatpush1.msra.mxu0 %v148
  %297 = vmatprep.subr.mxu0 %v151
  %298 = vmatpush1.msra.mxu0 %v150
  %299 = vmatprep.mubr.f32.mxu0 %v23
  %300 = vmatmul.mubr.f32.gmra.mrb[0].mxu0 %v22
  %v301 = vpop.f32.mrb[0].mxu0
  %v302 = vadd.f32 %v231, %v301
  %v303 = vpop.f32.mrb[0].mxu0
  %v304 = vadd.f32 %v233, %v303
  %305 = vdwg.mxu0
  %v306 = vmax.f32 %v302, 0.0
  %v307 = vmax.f32 %v304, 0.0
  %v308 = vld [vmem:[%s3] sm:$0x3]
  %v310 = vlaneseq
  %v311 = vshrl.u32 %v310, 7
  %v312 = vsub.s32 0, %v311
  %v313 = vrot.slane %v308, %v312
  %v314 = vlaneseq
  %v315 = vshrl.u32 %v314, 7
  %v316 = vsub.s32 1, %v315
  %v317 = vrot.slane %v308, %v316
  %v320 = vmul.f32 %v306, %v313
  %v321 = vmul.f32 %v307, %v317
  %v322 = vld [vmem:[%s4] sm:$0x3]
  %v324 = vlaneseq
  %v325 = vshrl.u32 %v324, 7
  %v326 = vsub.s32 0, %v325
  %v327 = vrot.slane %v322, %v326
  %v328 = vlaneseq
  %v329 = vshrl.u32 %v328, 7
  %v330 = vsub.s32 1, %v329
  %v331 = vrot.slane %v322, %v330
  %v334 = vadd.f32 %v320, %v327
  %v335 = vadd.f32 %v321, %v331
  %336 = vst [vmem:[%s5] sm:$0xff] %v334
  %337 = vst [vmem:[%s5 + $0x8] sm:$0xff] %v335
  // Predicated region
  $region22: #{forward.12} parent=0 // pred_check
    _
  $region23: #{forward.12} parent=0 // pred_check_branch
    %339 = sbr.rel (0) target = $region25
  $region24: #{forward.12} parent=0 // pred_region
    _
  $region25: #{forward.12} parent=0 // pred_fallthru
    _
  // Predicated region
  $region26: #{forward.12} parent=0 // pred_check
    _
  $region27: #{forward.12} parent=0 // pred_check_branch
    %341 = sbr.rel (0) target = $region29
  $region28: #{forward.12} parent=0 // pred_region
    _
  $region29: #{forward.12} parent=0 // pred_fallthru
    _

// kernel: forward.13
$region0: #{forward.13}
  #allocation0 [shape = 'u32[]', space=smem, size = 0x4, offset = 0x4, fixed_abs, tag = 'smem constant byte address 0x4 - core index']
  #allocation1 [shape = 'u32[144,128]{1,0:T(1,128)}', space=vmem, size = 0x12000, scoped, tag = 'internal scratch']
  #allocation2 [shape = 'f32[8,512]{1,0:T(8,128)}', space=vmem, size = 0x4000, scoped, tag = 'scratch operand']
  #allocation3 [shape = 'f32[8,512]{1,0:T(8,128)}', space=vmem, size = 0x4000, scoped, tag = 'scratch operand']
  #allocation4 [shape = 'f32[8,128]{1,0:T(8,128)}', space=vmem, size = 0x1000, scoped, tag = 'scratch operand']
  #allocation5 [shape = 'f32[8,512]{1,0:T(8,128)}', space=vmem, size = 0x4000, scoped, tag = 'scratch operand']
  #allocation6 [shape = 'f32[8,512]{1,0:T(8,128)}', space=vmem, size = 0x4000, scoped, tag = 'scratch operand']
  %s0 = inlined_call_operand.vmem [shape: f32[8,256], index: 0, kind: input, shape index: {}]
  %s1 = inlined_call_operand.vmem [shape: f32[256,512], index: 1, kind: input, shape index: {}]
  %s2 = inlined_call_operand.vmem [shape: f32[256,512], index: 2, kind: input, shape index: {}]
  %s3 = inlined_call_operand.vmem [shape: f32[128,512], index: 3, kind: input, shape index: {}]
  %s4 = inlined_call_operand.vmem [shape: f32[1,512], index: 4, kind: input, shape index: {}]
  %s5 = inlined_call_operand.vmem [shape: f32[128,512], index: 5, kind: input, shape index: {}]
  %s6 = inlined_call_operand.vmem [shape: f32[128,512], index: 6, kind: input, shape index: {}]
  %s7 = inlined_call_operand.vmem [shape: f32[128,512], index: 7, kind: input, shape index: {}]
  %s8 = inlined_call_operand.vmem [shape: f32[1,512], index: 8, kind: input, shape index: {}]
  %s9 = inlined_call_operand.vmem [shape: f32[128,2], index: 9, kind: input, shape index: {}]
  %s10 = inlined_call_operand.vmem [shape: f32[1,2], index: 10, kind: input, shape index: {}]
  %s11 = inlined_call_operand.hbm [shape: f32[2,2], index: 11, kind: output, shape index: {}]
  %s12 = sld [smem:[#allocation0]]
  $region54: #{forward.13} parent=0
    _
  %s14 = ssub.s32 1, %s12
  %s15 = scalar_select 0, %s14, %s12
  $region1: #{forward.13} parent=0
    #allocation7 [shape = 'u8[1024]{0}', space=vmem, size = 0x400, scoped, tag = 'output window, operand 0, single buffered']
    #allocation8 [shape = 's32[1]{0}', space=sflag, size = 0x4, scoped, tag = 'scoped memory for forward.13']
    %16 = vsyncpa [#allocation8], 0
    // Predicated region
    $region2: #{forward.13} parent=1 // pred_check
      _
    $region3: #{forward.13} parent=1 // pred_check_branch
      %18 = sbr.rel (0) target = $region5
    $region4: #{forward.13} parent=1 // pred_region
      _
    $region5: #{forward.13} parent=1 // pred_fallthru
      _
    // Predicated region
    $region6: #{forward.13} parent=1 // pred_check
      _
    $region7: #{forward.13} parent=1 // pred_check_branch
      %20 = sbr.rel (0) target = $region9
    $region8: #{forward.13} parent=1 // pred_region
      _
    $region9: #{forward.13} parent=1 // pred_fallthru
      _
    // Predicated region
    $region10: #{forward.13} parent=1 // pred_check
      _
    $region11: #{forward.13} parent=1 // pred_check_branch
      %22 = sbr.rel (0) target = $region13
    $region12: #{forward.13} parent=1 // pred_region
      _
    $region13: #{forward.13} parent=1 // pred_fallthru
      _
    // Predicated region
    $region14: #{forward.13} parent=1 // pred_check
      _
    $region15: #{forward.13} parent=1 // pred_check_branch
      %24 = sbr.rel (0) target = $region17
    $region16: #{forward.13} parent=1 // pred_region
      _
    $region17: #{forward.13} parent=1 // pred_fallthru
      _
    // Predicated region
    $region18: #{forward.13} parent=1 // pred_check
      _
    $region19: #{forward.13} parent=1 // pred_check_branch
      %26 = sbr.rel (0) target = $region21
    $region20: #{forward.13} parent=1 // pred_region
      _
    $region21: #{forward.13} parent=1 // pred_fallthru
      _
    // Predicated region
    $region22: #{forward.13} parent=1 // pred_check
      _
    $region23: #{forward.13} parent=1 // pred_check_branch
      %28 = sbr.rel (0) target = $region25
    $region24: #{forward.13} parent=1 // pred_region
      _
    $region25: #{forward.13} parent=1 // pred_fallthru
      _
    // Predicated region
    $region26: #{forward.13} parent=1 // pred_check
      _
    $region27: #{forward.13} parent=1 // pred_check_branch
      %30 = sbr.rel (0) target = $region29
    $region28: #{forward.13} parent=1 // pred_region
      _
    $region29: #{forward.13} parent=1 // pred_fallthru
      _
    // Predicated region
    $region30: #{forward.13} parent=1 // pred_check
      _
    $region31: #{forward.13} parent=1 // pred_check_branch
      %32 = sbr.rel (0) target = $region33
    $region32: #{forward.13} parent=1 // pred_region
      _
    $region33: #{forward.13} parent=1 // pred_fallthru
      _
    // Predicated region
    $region34: #{forward.13} parent=1 // pred_check
      _
    $region35: #{forward.13} parent=1 // pred_check_branch
      %34 = sbr.rel (0) target = $region37
    $region36: #{forward.13} parent=1 // pred_region
      _
    $region37: #{forward.13} parent=1 // pred_fallthru
      _
    // Predicated region
    $region38: #{forward.13} parent=1 // pred_check
      _
    $region39: #{forward.13} parent=1 // pred_check_branch
      %36 = sbr.rel (0) target = $region41
    $region40: #{forward.13} parent=1 // pred_region
      _
    $region41: #{forward.13} parent=1 // pred_fallthru
      _
    // Predicated region
    $region42: #{forward.13} parent=1 // pred_check
      _
    $region43: #{forward.13} parent=1 // pred_check_branch
      %38 = sbr.rel (0) target = $region45
    $region44: #{forward.13} parent=1 // pred_region
      _
    $region45: #{forward.13} parent=1 // pred_fallthru
      _
    %v39 = vld [vmem:[%s0] sm:$0xff]
    %v40 = vld [vmem:[%s0 + $0x8] sm:$0xff]
    %v41 = vld [vmem:[%s1] sm:$0xff]
    %v42 = vld [vmem:[%s1 + $0x8] sm:$0xff]
    %v43 = vld [vmem:[%s1 + $0x10] sm:$0xff]
    %v44 = vld [vmem:[%s1 + $0x18] sm:$0xff]
    %v45 = vld [vmem:[%s1 + $0x20] sm:$0xff]
    %v46 = vld [vmem:[%s1 + $0x28] sm:$0xff]
    %v47 = vld [vmem:[%s1 + $0x30] sm:$0xff]
    %v48 = vld [vmem:[%s1 + $0x38] sm:$0xff]
    %v49 = vld [vmem:[%s1 + $0x40] sm:$0xff]
    %v50 = vld [vmem:[%s1 + $0x48] sm:$0xff]
    %v51 = vld [vmem:[%s1 + $0x50] sm:$0xff]
    %v52 = vld [vmem:[%s1 + $0x58] sm:$0xff]
    %v53 = vld [vmem:[%s1 + $0x60] sm:$0xff]
    %v54 = vld [vmem:[%s1 + $0x68] sm:$0xff]
    %v55 = vld [vmem:[%s1 + $0x70] sm:$0xff]
    %v56 = vld [vmem:[%s1 + $0x78] sm:$0xff]
    %v57 = vld [vmem:[%s1 + $0x80] sm:$0xff]
    %v58 = vld [vmem:[%s1 + $0x88] sm:$0xff]
    %v59 = vld [vmem:[%s1 + $0x90] sm:$0xff]
    %v60 = vld [vmem:[%s1 + $0x98] sm:$0xff]
    %v61 = vld [vmem:[%s1 + $0xa0] sm:$0xff]
    %v62 = vld [vmem:[%s1 + $0xa8] sm:$0xff]
    %v63 = vld [vmem:[%s1 + $0xb0] sm:$0xff]
    %v64 = vld [vmem:[%s1 + $0xb8] sm:$0xff]
    %v65 = vld [vmem:[%s1 + $0xc0] sm:$0xff]
    %v66 = vld [vmem:[%s1 + $0xc8] sm:$0xff]
    %v67 = vld [vmem:[%s1 + $0xd0] sm:$0xff]
    %v68 = vld [vmem:[%s1 + $0xd8] sm:$0xff]
    %v69 = vld [vmem:[%s1 + $0xe0] sm:$0xff]
    %v70 = vld [vmem:[%s1 + $0xe8] sm:$0xff]
    %v71 = vld [vmem:[%s1 + $0xf0] sm:$0xff]
    %v72 = vld [vmem:[%s1 + $0xf8] sm:$0xff]
    %v73 = vld [vmem:[%s1 + $0x100] sm:$0xff]
    %v74 = vld [vmem:[%s1 + $0x108] sm:$0xff]
    %v75 = vld [vmem:[%s1 + $0x110] sm:$0xff]
    %v76 = vld [vmem:[%s1 + $0x118] sm:$0xff]
    %v77 = vld [vmem:[%s1 + $0x120] sm:$0xff]
    %v78 = vld [vmem:[%s1 + $0x128] sm:$0xff]
    %v79 = vld [vmem:[%s1 + $0x130] sm:$0xff]
    %v80 = vld [vmem:[%s1 + $0x138] sm:$0xff]
    %v81 = vld [vmem:[%s1 + $0x140] sm:$0xff]
    %v82 = vld [vmem:[%s1 + $0x148] sm:$0xff]
    %v83 = vld [vmem:[%s1 + $0x150] sm:$0xff]
    %v84 = vld [vmem:[%s1 + $0x158] sm:$0xff]
    %v85 = vld [vmem:[%s1 + $0x160] sm:$0xff]
    %v86 = vld [vmem:[%s1 + $0x168] sm:$0xff]
    %v87 = vld [vmem:[%s1 + $0x170] sm:$0xff]
    %v88 = vld [vmem:[%s1 + $0x178] sm:$0xff]
    %v89 = vld [vmem:[%s1 + $0x180] sm:$0xff]
    %v90 = vld [vmem:[%s1 + $0x188] sm:$0xff]
    %v91 = vld [vmem:[%s1 + $0x190] sm:$0xff]
    %v92 = vld [vmem:[%s1 + $0x198] sm:$0xff]
    %v93 = vld [vmem:[%s1 + $0x1a0] sm:$0xff]
    %v94 = vld [vmem:[%s1 + $0x1a8] sm:$0xff]
    %v95 = vld [vmem:[%s1 + $0x1b0] sm:$0xff]
    %v96 = vld [vmem:[%s1 + $0x1b8] sm:$0xff]
    %v97 = vld [vmem:[%s1 + $0x1c0] sm:$0xff]
    %v98 = vld [vmem:[%s1 + $0x1c8] sm:$0xff]
    %v99 = vld [vmem:[%s1 + $0x1d0] sm:$0xff]
    %v100 = vld [vmem:[%s1 + $0x1d8] sm:$0xff]
    %v101 = vld [vmem:[%s1 + $0x1e0] sm:$0xff]
    %v102 = vld [vmem:[%s1 + $0x1e8] sm:$0xff]
    %v103 = vld [vmem:[%s1 + $0x1f0] sm:$0xff]
    %v104 = vld [vmem:[%s1 + $0x1f8] sm:$0xff]
    %v105 = vld [vmem:[%s1 + $0x200] sm:$0xff]
    %v106 = vld [vmem:[%s1 + $0x208] sm:$0xff]
    %v107 = vld [vmem:[%s1 + $0x210] sm:$0xff]
    %v108 = vld [vmem:[%s1 + $0x218] sm:$0xff]
    %v109 = vld [vmem:[%s1 + $0x220] sm:$0xff]
    %v110 = vld [vmem:[%s1 + $0x228] sm:$0xff]
    %v111 = vld [vmem:[%s1 + $0x230] sm:$0xff]
    %v112 = vld [vmem:[%s1 + $0x238] sm:$0xff]
    %v113 = vld [vmem:[%s1 + $0x240] sm:$0xff]
    %v114 = vld [vmem:[%s1 + $0x248] sm:$0xff]
    %v115 = vld [vmem:[%s1 + $0x250] sm:$0xff]
    %v116 = vld [vmem:[%s1 + $0x258] sm:$0xff]
    %v117 = vld [vmem:[%s1 + $0x260] sm:$0xff]
    %v118 = vld [vmem:[%s1 + $0x268] sm:$0xff]
    %v119 = vld [vmem:[%s1 + $0x270] sm:$0xff]
    %v120 = vld [vmem:[%s1 + $0x278] sm:$0xff]
    %v121 = vld [vmem:[%s1 + $0x280] sm:$0xff]
    %v122 = vld [vmem:[%s1 + $0x288] sm:$0xff]
    %v123 = vld [vmem:[%s1 + $0x290] sm:$0xff]
    %v124 = vld [vmem:[%s1 + $0x298] sm:$0xff]
    %v125 = vld [vmem:[%s1 + $0x2a0] sm:$0xff]
    %v126 = vld [vmem:[%s1 + $0x2a8] sm:$0xff]
    %v127 = vld [vmem:[%s1 + $0x2b0] sm:$0xff]
    %v128 = vld [vmem:[%s1 + $0x2b8] sm:$0xff]
    %v129 = vld [vmem:[%s1 + $0x2c0] sm:$0xff]
    %v130 = vld [vmem:[%s1 + $0x2c8] sm:$0xff]
    %v131 = vld [vmem:[%s1 + $0x2d0] sm:$0xff]
    %v132 = vld [vmem:[%s1 + $0x2d8] sm:$0xff]
    %v133 = vld [vmem:[%s1 + $0x2e0] sm:$0xff]
    %v134 = vld [vmem:[%s1 + $0x2e8] sm:$0xff]
    %v135 = vld [vmem:[%s1 + $0x2f0] sm:$0xff]
    %v136 = vld [vmem:[%s1 + $0x2f8] sm:$0xff]
    %v137 = vld [vmem:[%s1 + $0x300] sm:$0xff]
    %v138 = vld [vmem:[%s1 + $0x308] sm:$0xff]
    %v139 = vld [vmem:[%s1 + $0x310] sm:$0xff]
    %v140 = vld [vmem:[%s1 + $0x318] sm:$0xff]
    %v141 = vld [vmem:[%s1 + $0x320] sm:$0xff]
    %v142 = vld [vmem:[%s1 + $0x328] sm:$0xff]
    %v143 = vld [vmem:[%s1 + $0x330] sm:$0xff]
    %v144 = vld [vmem:[%s1 + $0x338] sm:$0xff]
    %v145 = vld [vmem:[%s1 + $0x340] sm:$0xff]
    %v146 = vld [vmem:[%s1 + $0x348] sm:$0xff]
    %v147 = vld [vmem:[%s1 + $0x350] sm:$0xff]
    %v148 = vld [vmem:[%s1 + $0x358] sm:$0xff]
    %v149 = vld [vmem:[%s1 + $0x360] sm:$0xff]
    %v150 = vld [vmem:[%s1 + $0x368] sm:$0xff]
    %v151 = vld [vmem:[%s1 + $0x370] sm:$0xff]
    %v152 = vld [vmem:[%s1 + $0x378] sm:$0xff]
    %v153 = vld [vmem:[%s1 + $0x380] sm:$0xff]
    %v154 = vld [vmem:[%s1 + $0x388] sm:$0xff]
    %v155 = vld [vmem:[%s1 + $0x390] sm:$0xff]
    %v156 = vld [vmem:[%s1 + $0x398] sm:$0xff]
    %v157 = vld [vmem:[%s1 + $0x3a0] sm:$0xff]
    %v158 = vld [vmem:[%s1 + $0x3a8] sm:$0xff]
    %v159 = vld [vmem:[%s1 + $0x3b0] sm:$0xff]
    %v160 = vld [vmem:[%s1 + $0x3b8] sm:$0xff]
    %v161 = vld [vmem:[%s1 + $0x3c0] sm:$0xff]
    %v162 = vld [vmem:[%s1 + $0x3c8] sm:$0xff]
    %v163 = vld [vmem:[%s1 + $0x3d0] sm:$0xff]
    %v164 = vld [vmem:[%s1 + $0x3d8] sm:$0xff]
    %v165 = vld [vmem:[%s1 + $0x3e0] sm:$0xff]
    %v166 = vld [vmem:[%s1 + $0x3e8] sm:$0xff]
    %v167 = vld [vmem:[%s1 + $0x3f0] sm:$0xff]
    %v168 = vld [vmem:[%s1 + $0x3f8] sm:$0xff]
    %169 = vmatprep.subr.mxu0 %v42
    %170 = vmatpush1.msra.mxu0 %v41
    %171 = vmatprep.subr.mxu0 %v46
    %172 = vmatpush1.msra.mxu0 %v45
    %173 = vmatprep.subr.mxu0 %v50
    %174 = vmatpush1.msra.mxu0 %v49
    %175 = vmatprep.subr.mxu0 %v54
    %176 = vmatpush1.msra.mxu0 %v53
    %177 = vmatprep.subr.mxu0 %v58
    %178 = vmatpush1.msra.mxu0 %v57
    %179 = vmatprep.subr.mxu0 %v62
    %180 = vmatpush1.msra.mxu0 %v61
    %181 = vmatprep.subr.mxu0 %v66
    %182 = vmatpush1.msra.mxu0 %v65
    %183 = vmatprep.subr.mxu0 %v70
    %184 = vmatpush1.msra.mxu0 %v69
    %185 = vmatprep.subr.mxu0 %v74
    %186 = vmatpush1.msra.mxu0 %v73
    %187 = vmatprep.subr.mxu0 %v78
    %188 = vmatpush1.msra.mxu0 %v77
    %189 = vmatprep.subr.mxu0 %v82
    %190 = vmatpush1.msra.mxu0 %v81
    %191 = vmatprep.subr.mxu0 %v86
    %192 = vmatpush1.msra.mxu0 %v85
    %193 = vmatprep.subr.mxu0 %v90
    %194 = vmatpush1.msra.mxu0 %v89
    %195 = vmatprep.subr.mxu0 %v94
    %196 = vmatpush1.msra.mxu0 %v93
    %197 = vmatprep.subr.mxu0 %v98
    %198 = vmatpush1.msra.mxu0 %v97
    %199 = vmatprep.subr.mxu0 %v102
    %200 = vmatpush1.msra.mxu0 %v101
    %201 = vmatprep.subr.mxu0 %v106
    %202 = vmatpush1.msra.mxu0 %v105
    %203 = vmatprep.subr.mxu0 %v110
    %204 = vmatpush1.msra.mxu0 %v109
    %205 = vmatprep.subr.mxu0 %v114
    %206 = vmatpush1.msra.mxu0 %v113
    %207 = vmatprep.subr.mxu0 %v118
    %208 = vmatpush1.msra.mxu0 %v117
    %209 = vmatprep.subr.mxu0 %v122
    %210 = vmatpush1.msra.mxu0 %v121
    %211 = vmatprep.subr.mxu0 %v126
    %212 = vmatpush1.msra.mxu0 %v125
    %213 = vmatprep.subr.mxu0 %v130
    %214 = vmatpush1.msra.mxu0 %v129
    %215 = vmatprep.subr.mxu0 %v134
    %216 = vmatpush1.msra.mxu0 %v133
    %217 = vmatprep.subr.mxu0 %v138
    %218 = vmatpush1.msra.mxu0 %v137
    %219 = vmatprep.subr.mxu0 %v142
    %220 = vmatpush1.msra.mxu0 %v141
    %221 = vmatprep.subr.mxu0 %v146
    %222 = vmatpush1.msra.mxu0 %v145
    %223 = vmatprep.subr.mxu0 %v150
    %224 = vmatpush1.msra.mxu0 %v149
    %225 = vmatprep.subr.mxu0 %v154
    %226 = vmatpush1.msra.mxu0 %v153
    %227 = vmatprep.subr.mxu0 %v158
    %228 = vmatpush1.msra.mxu0 %v157
    %229 = vmatprep.subr.mxu0 %v162
    %230 = vmatpush1.msra.mxu0 %v161
    %231 = vmatprep.subr.mxu0 %v166
    %232 = vmatpush1.msra.mxu0 %v165
    %233 = vmatprep.mubr.f32.mxu0 %v40
    %234 = vmatmul.mubr.f32.gmra.mrb[0].mxu0 %v39
    %v235 = vpop.f32.mrb[0].mxu0
    %v236 = vadd.f32 0.0, %v235
    %v237 = vpop.f32.mrb[0].mxu0
    %v238 = vadd.f32 0.0, %v237
    %239 = vdwg.mxu0
    %240 = vmatprep.subr.mxu0 %v44
    %241 = vmatpush1.msra.mxu0 %v43
    %242 = vmatprep.subr.mxu0 %v48
    %243 = vmatpush1.msra.mxu0 %v47
    %244 = vmatprep.subr.mxu0 %v52
    %245 = vmatpush1.msra.mxu0 %v51
    %246 = vmatprep.subr.mxu0 %v56
    %247 = vmatpush1.msra.mxu0 %v55
    %248 = vmatprep.subr.mxu0 %v60
    %249 = vmatpush1.msra.mxu0 %v59
    %250 = vmatprep.subr.mxu0 %v64
    %251 = vmatpush1.msra.mxu0 %v63
    %252 = vmatprep.subr.mxu0 %v68
    %253 = vmatpush1.msra.mxu0 %v67
    %254 = vmatprep.subr.mxu0 %v72
    %255 = vmatpush1.msra.mxu0 %v71
    %256 = vmatprep.subr.mxu0 %v76
    %257 = vmatpush1.msra.mxu0 %v75
    %258 = vmatprep.subr.mxu0 %v80
    %259 = vmatpush1.msra.mxu0 %v79
    %260 = vmatprep.subr.mxu0 %v84
    %261 = vmatpush1.msra.mxu0 %v83
    %262 = vmatprep.subr.mxu0 %v88
    %263 = vmatpush1.msra.mxu0 %v87
    %264 = vmatprep.subr.mxu0 %v92
    %265 = vmatpush1.msra.mxu0 %v91
    %266 = vmatprep.subr.mxu0 %v96
    %267 = vmatpush1.msra.mxu0 %v95
    %268 = vmatprep.subr.mxu0 %v100
    %269 = vmatpush1.msra.mxu0 %v99
    %270 = vmatprep.subr.mxu0 %v104
    %271 = vmatpush1.msra.mxu0 %v103
    %272 = vmatprep.subr.mxu0 %v108
    %273 = vmatpush1.msra.mxu0 %v107
    %274 = vmatprep.subr.mxu0 %v112
    %275 = vmatpush1.msra.mxu0 %v111
    %276 = vmatprep.subr.mxu0 %v116
    %277 = vmatpush1.msra.mxu0 %v115
    %278 = vmatprep.subr.mxu0 %v120
    %279 = vmatpush1.msra.mxu0 %v119
    %280 = vmatprep.subr.mxu0 %v124
    %281 = vmatpush1.msra.mxu0 %v123
    %282 = vmatprep.subr.mxu0 %v128
    %283 = vmatpush1.msra.mxu0 %v127
    %284 = vmatprep.subr.mxu0 %v132
    %285 = vmatpush1.msra.mxu0 %v131
    %286 = vmatprep.subr.mxu0 %v136
    %287 = vmatpush1.msra.mxu0 %v135
    %288 = vmatprep.subr.mxu0 %v140
    %289 = vmatpush1.msra.mxu0 %v139
    %290 = vmatprep.subr.mxu0 %v144
    %291 = vmatpush1.msra.mxu0 %v143
    %292 = vmatprep.subr.mxu0 %v148
    %293 = vmatpush1.msra.mxu0 %v147
    %294 = vmatprep.subr.mxu0 %v152
    %295 = vmatpush1.msra.mxu0 %v151
    %296 = vmatprep.subr.mxu0 %v156
    %297 = vmatpush1.msra.mxu0 %v155
    %298 = vmatprep.subr.mxu0 %v160
    %299 = vmatpush1.msra.mxu0 %v159
    %300 = vmatprep.subr.mxu0 %v164
    %301 = vmatpush1.msra.mxu0 %v163
    %302 = vmatprep.subr.mxu0 %v168
    %303 = vmatpush1.msra.mxu0 %v167
    %304 = vmatprep.mubr.f32.mxu0 %v40
    %305 = vmatmul.mubr.f32.gmra.mrb[0].mxu0 %v39
    %v306 = vpop.f32.mrb[0].mxu0
    %v307 = vadd.f32 0.0, %v306
    %v308 = vpop.f32.mrb[0].mxu0
    %v309 = vadd.f32 0.0, %v308
    %310 = vdwg.mxu0
    %311 = vst [vmem:[#allocation2] sm:$0xff] %v236
    %312 = vst [vmem:[#allocation2 + $0x8] sm:$0xff] %v238
    %313 = vst [vmem:[#allocation2 + $0x10] sm:$0xff] %v307
    %314 = vst [vmem:[#allocation2 + $0x18] sm:$0xff] %v309
    %v315 = vld [vmem:[%s2] sm:$0xff]
    %v316 = vld [vmem:[%s2 + $0x8] sm:$0xff]
    %v317 = vld [vmem:[%s2 + $0x10] sm:$0xff]
    %v318 = vld [vmem:[%s2 + $0x18] sm:$0xff]
    %v319 = vld [vmem:[%s2 + $0x20] sm:$0xff]
    %v320 = vld [vmem:[%s2 + $0x28] sm:$0xff]
    %v321 = vld [vmem:[%s2 + $0x30] sm:$0xff]
    %v322 = vld [vmem:[%s2 + $0x38] sm:$0xff]
    %v323 = vld [vmem:[%s2 + $0x40] sm:$0xff]
    %v324 = vld [vmem:[%s2 + $0x48] sm:$0xff]
    %v325 = vld [vmem:[%s2 + $0x50] sm:$0xff]
    %v326 = vld [vmem:[%s2 + $0x58] sm:$0xff]
    %v327 = vld [vmem:[%s2 + $0x60] sm:$0xff]
    %v328 = vld [vmem:[%s2 + $0x68] sm:$0xff]
    %v329 = vld [vmem:[%s2 + $0x70] sm:$0xff]
    %v330 = vld [vmem:[%s2 + $0x78] sm:$0xff]
    %v331 = vld [vmem:[%s2 + $0x80] sm:$0xff]
    %v332 = vld [vmem:[%s2 + $0x88] sm:$0xff]
    %v333 = vld [vmem:[%s2 + $0x90] sm:$0xff]
    %v334 = vld [vmem:[%s2 + $0x98] sm:$0xff]
    %v335 = vld [vmem:[%s2 + $0xa0] sm:$0xff]
    %v336 = vld [vmem:[%s2 + $0xa8] sm:$0xff]
    %v337 = vld [vmem:[%s2 + $0xb0] sm:$0xff]
    %v338 = vld [vmem:[%s2 + $0xb8] sm:$0xff]
    %v339 = vld [vmem:[%s2 + $0xc0] sm:$0xff]
    %v340 = vld [vmem:[%s2 + $0xc8] sm:$0xff]
    %v341 = vld [vmem:[%s2 + $0xd0] sm:$0xff]
    %v342 = vld [vmem:[%s2 + $0xd8] sm:$0xff]
    %v343 = vld [vmem:[%s2 + $0xe0] sm:$0xff]
    %v344 = vld [vmem:[%s2 + $0xe8] sm:$0xff]
    %v345 = vld [vmem:[%s2 + $0xf0] sm:$0xff]
    %v346 = vld [vmem:[%s2 + $0xf8] sm:$0xff]
    %v347 = vld [vmem:[%s2 + $0x100] sm:$0xff]
    %v348 = vld [vmem:[%s2 + $0x108] sm:$0xff]
    %v349 = vld [vmem:[%s2 + $0x110] sm:$0xff]
    %v350 = vld [vmem:[%s2 + $0x118] sm:$0xff]
    %v351 = vld [vmem:[%s2 + $0x120] sm:$0xff]
    %v352 = vld [vmem:[%s2 + $0x128] sm:$0xff]
    %v353 = vld [vmem:[%s2 + $0x130] sm:$0xff]
    %v354 = vld [vmem:[%s2 + $0x138] sm:$0xff]
    %v355 = vld [vmem:[%s2 + $0x140] sm:$0xff]
    %v356 = vld [vmem:[%s2 + $0x148] sm:$0xff]
    %v357 = vld [vmem:[%s2 + $0x150] sm:$0xff]
    %v358 = vld [vmem:[%s2 + $0x158] sm:$0xff]
    %v359 = vld [vmem:[%s2 + $0x160] sm:$0xff]
    %v360 = vld [vmem:[%s2 + $0x168] sm:$0xff]
    %v361 = vld [vmem:[%s2 + $0x170] sm:$0xff]
    %v362 = vld [vmem:[%s2 + $0x178] sm:$0xff]
    %v363 = vld [vmem:[%s2 + $0x180] sm:$0xff]
    %v364 = vld [vmem:[%s2 + $0x188] sm:$0xff]
    %v365 = vld [vmem:[%s2 + $0x190] sm:$0xff]
    %v366 = vld [vmem:[%s2 + $0x198] sm:$0xff]
    %v367 = vld [vmem:[%s2 + $0x1a0] sm:$0xff]
    %v368 = vld [vmem:[%s2 + $0x1a8] sm:$0xff]
    %v369 = vld [vmem:[%s2 + $0x1b0] sm:$0xff]
    %v370 = vld [vmem:[%s2 + $0x1b8] sm:$0xff]
    %v371 = vld [vmem:[%s2 + $0x1c0] sm:$0xff]
    %v372 = vld [vmem:[%s2 + $0x1c8] sm:$0xff]
    %v373 = vld [vmem:[%s2 + $0x1d0] sm:$0xff]
    %v374 = vld [vmem:[%s2 + $0x1d8] sm:$0xff]
    %v375 = vld [vmem:[%s2 + $0x1e0] sm:$0xff]
    %v376 = vld [vmem:[%s2 + $0x1e8] sm:$0xff]
    %v377 = vld [vmem:[%s2 + $0x1f0] sm:$0xff]
    %v378 = vld [vmem:[%s2 + $0x1f8] sm:$0xff]
    %v379 = vld [vmem:[%s2 + $0x200] sm:$0xff]
    %v380 = vld [vmem:[%s2 + $0x208] sm:$0xff]
    %v381 = vld [vmem:[%s2 + $0x210] sm:$0xff]
    %v382 = vld [vmem:[%s2 + $0x218] sm:$0xff]
    %v383 = vld [vmem:[%s2 + $0x220] sm:$0xff]
    %v384 = vld [vmem:[%s2 + $0x228] sm:$0xff]
    %v385 = vld [vmem:[%s2 + $0x230] sm:$0xff]
    %v386 = vld [vmem:[%s2 + $0x238] sm:$0xff]
    %v387 = vld [vmem:[%s2 + $0x240] sm:$0xff]
    %v388 = vld [vmem:[%s2 + $0x248] sm:$0xff]
    %v389 = vld [vmem:[%s2 + $0x250] sm:$0xff]
    %v390 = vld [vmem:[%s2 + $0x258] sm:$0xff]
    %v391 = vld [vmem:[%s2 + $0x260] sm:$0xff]
    %v392 = vld [vmem:[%s2 + $0x268] sm:$0xff]
    %v393 = vld [vmem:[%s2 + $0x270] sm:$0xff]
    %v394 = vld [vmem:[%s2 + $0x278] sm:$0xff]
    %v395 = vld [vmem:[%s2 + $0x280] sm:$0xff]
    %v396 = vld [vmem:[%s2 + $0x288] sm:$0xff]
    %v397 = vld [vmem:[%s2 + $0x290] sm:$0xff]
    %v398 = vld [vmem:[%s2 + $0x298] sm:$0xff]
    %v399 = vld [vmem:[%s2 + $0x2a0] sm:$0xff]
    %v400 = vld [vmem:[%s2 + $0x2a8] sm:$0xff]
    %v401 = vld [vmem:[%s2 + $0x2b0] sm:$0xff]
    %v402 = vld [vmem:[%s2 + $0x2b8] sm:$0xff]
    %v403 = vld [vmem:[%s2 + $0x2c0] sm:$0xff]
    %v404 = vld [vmem:[%s2 + $0x2c8] sm:$0xff]
    %v405 = vld [vmem:[%s2 + $0x2d0] sm:$0xff]
    %v406 = vld [vmem:[%s2 + $0x2d8] sm:$0xff]
    %v407 = vld [vmem:[%s2 + $0x2e0] sm:$0xff]
    %v408 = vld [vmem:[%s2 + $0x2e8] sm:$0xff]
    %v409 = vld [vmem:[%s2 + $0x2f0] sm:$0xff]
    %v410 = vld [vmem:[%s2 + $0x2f8] sm:$0xff]
    %v411 = vld [vmem:[%s2 + $0x300] sm:$0xff]
    %v412 = vld [vmem:[%s2 + $0x308] sm:$0xff]
    %v413 = vld [vmem:[%s2 + $0x310] sm:$0xff]
    %v414 = vld [vmem:[%s2 + $0x318] sm:$0xff]
    %v415 = vld [vmem:[%s2 + $0x320] sm:$0xff]
    %v416 = vld [vmem:[%s2 + $0x328] sm:$0xff]
    %v417 = vld [vmem:[%s2 + $0x330] sm:$0xff]
    %v418 = vld [vmem:[%s2 + $0x338] sm:$0xff]
    %v419 = vld [vmem:[%s2 + $0x340] sm:$0xff]
    %v420 = vld [vmem:[%s2 + $0x348] sm:$0xff]
    %v421 = vld [vmem:[%s2 + $0x350] sm:$0xff]
    %v422 = vld [vmem:[%s2 + $0x358] sm:$0xff]
    %v423 = vld [vmem:[%s2 + $0x360] sm:$0xff]
    %v424 = vld [vmem:[%s2 + $0x368] sm:$0xff]
    %v425 = vld [vmem:[%s2 + $0x370] sm:$0xff]
    %v426 = vld [vmem:[%s2 + $0x378] sm:$0xff]
    %v427 = vld [vmem:[%s2 + $0x380] sm:$0xff]
    %v428 = vld [vmem:[%s2 + $0x388] sm:$0xff]
    %v429 = vld [vmem:[%s2 + $0x390] sm:$0xff]
    %v430 = vld [vmem:[%s2 + $0x398] sm:$0xff]
    %v431 = vld [vmem:[%s2 + $0x3a0] sm:$0xff]
    %v432 = vld [vmem:[%s2 + $0x3a8] sm:$0xff]
    %v433 = vld [vmem:[%s2 + $0x3b0] sm:$0xff]
    %v434 = vld [vmem:[%s2 + $0x3b8] sm:$0xff]
    %v435 = vld [vmem:[%s2 + $0x3c0] sm:$0xff]
    %v436 = vld [vmem:[%s2 + $0x3c8] sm:$0xff]
    %v437 = vld [vmem:[%s2 + $0x3d0] sm:$0xff]
    %v438 = vld [vmem:[%s2 + $0x3d8] sm:$0xff]
    %v439 = vld [vmem:[%s2 + $0x3e0] sm:$0xff]
    %v440 = vld [vmem:[%s2 + $0x3e8] sm:$0xff]
    %v441 = vld [vmem:[%s2 + $0x3f0] sm:$0xff]
    %v442 = vld [vmem:[%s2 + $0x3f8] sm:$0xff]
    %443 = vmatprep.subr.mxu0 %v316
    %444 = vmatpush1.msra.mxu0 %v315
    %445 = vmatprep.subr.mxu0 %v320
    %446 = vmatpush1.msra.mxu0 %v319
    %447 = vmatprep.subr.mxu0 %v324
    %448 = vmatpush1.msra.mxu0 %v323
    %449 = vmatprep.subr.mxu0 %v328
    %450 = vmatpush1.msra.mxu0 %v327
    %451 = vmatprep.subr.mxu0 %v332
    %452 = vmatpush1.msra.mxu0 %v331
    %453 = vmatprep.subr.mxu0 %v336
    %454 = vmatpush1.msra.mxu0 %v335
    %455 = vmatprep.subr.mxu0 %v340
    %456 = vmatpush1.msra.mxu0 %v339
    %457 = vmatprep.subr.mxu0 %v344
    %458 = vmatpush1.msra.mxu0 %v343
    %459 = vmatprep.subr.mxu0 %v348
    %460 = vmatpush1.msra.mxu0 %v347
    %461 = vmatprep.subr.mxu0 %v352
    %462 = vmatpush1.msra.mxu0 %v351
    %463 = vmatprep.subr.mxu0 %v356
    %464 = vmatpush1.msra.mxu0 %v355
    %465 = vmatprep.subr.mxu0 %v360
    %466 = vmatpush1.msra.mxu0 %v359
    %467 = vmatprep.subr.mxu0 %v364
    %468 = vmatpush1.msra.mxu0 %v363
    %469 = vmatprep.subr.mxu0 %v368
    %470 = vmatpush1.msra.mxu0 %v367
    %471 = vmatprep.subr.mxu0 %v372
    %472 = vmatpush1.msra.mxu0 %v371
    %473 = vmatprep.subr.mxu0 %v376
    %474 = vmatpush1.msra.mxu0 %v375
    %475 = vmatprep.subr.mxu0 %v380
    %476 = vmatpush1.msra.mxu0 %v379
    %477 = vmatprep.subr.mxu0 %v384
    %478 = vmatpush1.msra.mxu0 %v383
    %479 = vmatprep.subr.mxu0 %v388
    %480 = vmatpush1.msra.mxu0 %v387
    %481 = vmatprep.subr.mxu0 %v392
    %482 = vmatpush1.msra.mxu0 %v391
    %483 = vmatprep.subr.mxu0 %v396
    %484 = vmatpush1.msra.mxu0 %v395
    %485 = vmatprep.subr.mxu0 %v400
    %486 = vmatpush1.msra.mxu0 %v399
    %487 = vmatprep.subr.mxu0 %v404
    %488 = vmatpush1.msra.mxu0 %v403
    %489 = vmatprep.subr.mxu0 %v408
    %490 = vmatpush1.msra.mxu0 %v407
    %491 = vmatprep.subr.mxu0 %v412
    %492 = vmatpush1.msra.mxu0 %v411
    %493 = vmatprep.subr.mxu0 %v416
    %494 = vmatpush1.msra.mxu0 %v415
    %495 = vmatprep.subr.mxu0 %v420
    %496 = vmatpush1.msra.mxu0 %v419
    %497 = vmatprep.subr.mxu0 %v424
    %498 = vmatpush1.msra.mxu0 %v423
    %499 = vmatprep.subr.mxu0 %v428
    %500 = vmatpush1.msra.mxu0 %v427
    %501 = vmatprep.subr.mxu0 %v432
    %502 = vmatpush1.msra.mxu0 %v431
    %503 = vmatprep.subr.mxu0 %v436
    %504 = vmatpush1.msra.mxu0 %v435
    %505 = vmatprep.subr.mxu0 %v440
    %506 = vmatpush1.msra.mxu0 %v439
    %507 = vmatprep.mubr.f32.mxu0 %v40
    %508 = vmatmul.mubr.f32.gmra.mrb[0].mxu0 %v39
    %v509 = vpop.f32.mrb[0].mxu0
    %v510 = vadd.f32 0.0, %v509
    %v511 = vpop.f32.mrb[0].mxu0
    %v512 = vadd.f32 0.0, %v511
    %513 = vdwg.mxu0
    %514 = vmatprep.subr.mxu0 %v318
    %515 = vmatpush1.msra.mxu0 %v317
    %516 = vmatprep.subr.mxu0 %v322
    %517 = vmatpush1.msra.mxu0 %v321
    %518 = vmatprep.subr.mxu0 %v326
    %519 = vmatpush1.msra.mxu0 %v325
    %520 = vmatprep.subr.mxu0 %v330
    %521 = vmatpush1.msra.mxu0 %v329
    %522 = vmatprep.subr.mxu0 %v334
    %523 = vmatpush1.msra.mxu0 %v333
    %524 = vmatprep.subr.mxu0 %v338
    %525 = vmatpush1.msra.mxu0 %v337
    %526 = vmatprep.subr.mxu0 %v342
    %527 = vmatpush1.msra.mxu0 %v341
    %528 = vmatprep.subr.mxu0 %v346
    %529 = vmatpush1.msra.mxu0 %v345
    %530 = vmatprep.subr.mxu0 %v350
    %531 = vmatpush1.msra.mxu0 %v349
    %532 = vmatprep.subr.mxu0 %v354
    %533 = vmatpush1.msra.mxu0 %v353
    %534 = vmatprep.subr.mxu0 %v358
    %535 = vmatpush1.msra.mxu0 %v357
    %536 = vmatprep.subr.mxu0 %v362
    %537 = vmatpush1.msra.mxu0 %v361
    %538 = vmatprep.subr.mxu0 %v366
    %539 = vmatpush1.msra.mxu0 %v365
    %540 = vmatprep.subr.mxu0 %v370
    %541 = vmatpush1.msra.mxu0 %v369
    %542 = vmatprep.subr.mxu0 %v374
    %543 = vmatpush1.msra.mxu0 %v373
    %544 = vmatprep.subr.mxu0 %v378
    %545 = vmatpush1.msra.mxu0 %v377
    %546 = vmatprep.subr.mxu0 %v382
    %547 = vmatpush1.msra.mxu0 %v381
    %548 = vmatprep.subr.mxu0 %v386
    %549 = vmatpush1.msra.mxu0 %v385
    %550 = vmatprep.subr.mxu0 %v390
    %551 = vmatpush1.msra.mxu0 %v389
    %552 = vmatprep.subr.mxu0 %v394
    %553 = vmatpush1.msra.mxu0 %v393
    %554 = vmatprep.subr.mxu0 %v398
    %555 = vmatpush1.msra.mxu0 %v397
    %556 = vmatprep.subr.mxu0 %v402
    %557 = vmatpush1.msra.mxu0 %v401
    %558 = vmatprep.subr.mxu0 %v406
    %559 = vmatpush1.msra.mxu0 %v405
    %560 = vmatprep.subr.mxu0 %v410
    %561 = vmatpush1.msra.mxu0 %v409
    %562 = vmatprep.subr.mxu0 %v414
    %563 = vmatpush1.msra.mxu0 %v413
    %564 = vmatprep.subr.mxu0 %v418
    %565 = vmatpush1.msra.mxu0 %v417
    %566 = vmatprep.subr.mxu0 %v422
    %567 = vmatpush1.msra.mxu0 %v421
    %568 = vmatprep.subr.mxu0 %v426
    %569 = vmatpush1.msra.mxu0 %v425
    %570 = vmatprep.subr.mxu0 %v430
    %571 = vmatpush1.msra.mxu0 %v429
    %572 = vmatprep.subr.mxu0 %v434
    %573 = vmatpush1.msra.mxu0 %v433
    %574 = vmatprep.subr.mxu0 %v438
    %575 = vmatpush1.msra.mxu0 %v437
    %576 = vmatprep.subr.mxu0 %v442
    %577 = vmatpush1.msra.mxu0 %v441
    %578 = vmatprep.mubr.f32.mxu0 %v40
    %579 = vmatmul.mubr.f32.gmra.mrb[0].mxu0 %v39
    %v580 = vpop.f32.mrb[0].mxu0
    %v581 = vadd.f32 0.0, %v580
    %v582 = vpop.f32.mrb[0].mxu0
    %v583 = vadd.f32 0.0, %v582
    %584 = vdwg.mxu0
    %585 = vst [vmem:[#allocation3] sm:$0xff] %v510
    %586 = vst [vmem:[#allocation3 + $0x8] sm:$0xff] %v512
    %587 = vst [vmem:[#allocation3 + $0x10] sm:$0xff] %v581
    %588 = vst [vmem:[#allocation3 + $0x18] sm:$0xff] %v583
    %v589 = vld [vmem:[#allocation2] sm:$0x3]
    %v590 = vld [vmem:[#allocation2 + $0x8] sm:$0x3]
    %v591 = vld [vmem:[#allocation2 + $0x10] sm:$0x3]
    %v592 = vld [vmem:[#allocation2 + $0x18] sm:$0x3]
    %v593 = vld [vmem:[#allocation3] sm:$0xc0]
    %v594 = vld [vmem:[#allocation3 + $0x8] sm:$0xc0]
    %v595 = vld [vmem:[#allocation3 + $0x10] sm:$0xc0]
    %v596 = vld [vmem:[#allocation3 + $0x18] sm:$0xc0]
    %v601 = vrot.slane %v593, 6
    %v602 = vrot.slane %v594, 6
    %v603 = vrot.slane %v595, 6
    %v604 = vrot.slane %v596, 6
    %v609 = vadd.f32 %v589, %v601
    %v610 = vadd.f32 %v590, %v602
    %v611 = vadd.f32 %v591, %v603
    %v612 = vadd.f32 %v592, %v604
    %v613 = vld [vmem:[%s3] sm:$0xff]
    %v614 = vld [vmem:[%s3 + $0x8] sm:$0xff]
    %v615 = vld [vmem:[%s3 + $0x10] sm:$0xff]
    %v616 = vld [vmem:[%s3 + $0x18] sm:$0xff]
    %v617 = vld [vmem:[%s3 + $0x20] sm:$0xff]
    %v618 = vld [vmem:[%s3 + $0x28] sm:$0xff]
    %v619 = vld [vmem:[%s3 + $0x30] sm:$0xff]
    %v620 = vld [vmem:[%s3 + $0x38] sm:$0xff]
    %v621 = vld [vmem:[%s3 + $0x40] sm:$0xff]
    %v622 = vld [vmem:[%s3 + $0x48] sm:$0xff]
    %v623 = vld [vmem:[%s3 + $0x50] sm:$0xff]
    %v624 = vld [vmem:[%s3 + $0x58] sm:$0xff]
    %v625 = vld [vmem:[%s3 + $0x60] sm:$0xff]
    %v626 = vld [vmem:[%s3 + $0x68] sm:$0xff]
    %v627 = vld [vmem:[%s3 + $0x70] sm:$0xff]
    %v628 = vld [vmem:[%s3 + $0x78] sm:$0xff]
    %v629 = vld [vmem:[%s3 + $0x80] sm:$0xff]
    %v630 = vld [vmem:[%s3 + $0x88] sm:$0xff]
    %v631 = vld [vmem:[%s3 + $0x90] sm:$0xff]
    %v632 = vld [vmem:[%s3 + $0x98] sm:$0xff]
    %v633 = vld [vmem:[%s3 + $0xa0] sm:$0xff]
    %v634 = vld [vmem:[%s3 + $0xa8] sm:$0xff]
    %v635 = vld [vmem:[%s3 + $0xb0] sm:$0xff]
    %v636 = vld [vmem:[%s3 + $0xb8] sm:$0xff]
    %v637 = vld [vmem:[%s3 + $0xc0] sm:$0xff]
    %v638 = vld [vmem:[%s3 + $0xc8] sm:$0xff]
    %v639 = vld [vmem:[%s3 + $0xd0] sm:$0xff]
    %v640 = vld [vmem:[%s3 + $0xd8] sm:$0xff]
    %v641 = vld [vmem:[%s3 + $0xe0] sm:$0xff]
    %v642 = vld [vmem:[%s3 + $0xe8] sm:$0xff]
    %v643 = vld [vmem:[%s3 + $0xf0] sm:$0xff]
    %v644 = vld [vmem:[%s3 + $0xf8] sm:$0xff]
    %v645 = vld [vmem:[%s3 + $0x100] sm:$0xff]
    %v646 = vld [vmem:[%s3 + $0x108] sm:$0xff]
    %v647 = vld [vmem:[%s3 + $0x110] sm:$0xff]
    %v648 = vld [vmem:[%s3 + $0x118] sm:$0xff]
    %v649 = vld [vmem:[%s3 + $0x120] sm:$0xff]
    %v650 = vld [vmem:[%s3 + $0x128] sm:$0xff]
    %v651 = vld [vmem:[%s3 + $0x130] sm:$0xff]
    %v652 = vld [vmem:[%s3 + $0x138] sm:$0xff]
    %v653 = vld [vmem:[%s3 + $0x140] sm:$0xff]
    %v654 = vld [vmem:[%s3 + $0x148] sm:$0xff]
    %v655 = vld [vmem:[%s3 + $0x150] sm:$0xff]
    %v656 = vld [vmem:[%s3 + $0x158] sm:$0xff]
    %v657 = vld [vmem:[%s3 + $0x160] sm:$0xff]
    %v658 = vld [vmem:[%s3 + $0x168] sm:$0xff]
    %v659 = vld [vmem:[%s3 + $0x170] sm:$0xff]
    %v660 = vld [vmem:[%s3 + $0x178] sm:$0xff]
    %v661 = vld [vmem:[%s3 + $0x180] sm:$0xff]
    %v662 = vld [vmem:[%s3 + $0x188] sm:$0xff]
    %v663 = vld [vmem:[%s3 + $0x190] sm:$0xff]
    %v664 = vld [vmem:[%s3 + $0x198] sm:$0xff]
    %v665 = vld [vmem:[%s3 + $0x1a0] sm:$0xff]
    %v666 = vld [vmem:[%s3 + $0x1a8] sm:$0xff]
    %v667 = vld [vmem:[%s3 + $0x1b0] sm:$0xff]
    %v668 = vld [vmem:[%s3 + $0x1b8] sm:$0xff]
    %v669 = vld [vmem:[%s3 + $0x1c0] sm:$0xff]
    %v670 = vld [vmem:[%s3 + $0x1c8] sm:$0xff]
    %v671 = vld [vmem:[%s3 + $0x1d0] sm:$0xff]
    %v672 = vld [vmem:[%s3 + $0x1d8] sm:$0xff]
    %v673 = vld [vmem:[%s3 + $0x1e0] sm:$0xff]
    %v674 = vld [vmem:[%s3 + $0x1e8] sm:$0xff]
    %v675 = vld [vmem:[%s3 + $0x1f0] sm:$0xff]
    %v676 = vld [vmem:[%s3 + $0x1f8] sm:$0xff]
    %677 = vmatprep.subr.mxu0 %v614
    %678 = vmatpush1.msra.mxu0 %v613
    %679 = vmatprep.subr.mxu0 %v618
    %680 = vmatpush1.msra.mxu0 %v617
    %681 = vmatprep.subr.mxu0 %v622
    %682 = vmatpush1.msra.mxu0 %v621
    %683 = vmatprep.subr.mxu0 %v626
    %684 = vmatpush1.msra.mxu0 %v625
    %685 = vmatprep.subr.mxu0 %v630
    %686 = vmatpush1.msra.mxu0 %v629
    %687 = vmatprep.subr.mxu0 %v634
    %688 = vmatpush1.msra.mxu0 %v633
    %689 = vmatprep.subr.mxu0 %v638
    %690 = vmatpush1.msra.mxu0 %v637
    %691 = vmatprep.subr.mxu0 %v642
    %692 = vmatpush1.msra.mxu0 %v641
    %693 = vmatprep.subr.mxu0 %v646
    %694 = vmatpush1.msra.mxu0 %v645
    %695 = vmatprep.subr.mxu0 %v650
    %696 = vmatpush1.msra.mxu0 %v649
    %697 = vmatprep.subr.mxu0 %v654
    %698 = vmatpush1.msra.mxu0 %v653
    %699 = vmatprep.subr.mxu0 %v658
    %700 = vmatpush1.msra.mxu0 %v657
    %701 = vmatprep.subr.mxu0 %v662
    %702 = vmatpush1.msra.mxu0 %v661
    %703 = vmatprep.subr.mxu0 %v666
    %704 = vmatpush1.msra.mxu0 %v665
    %705 = vmatprep.subr.mxu0 %v670
    %706 = vmatpush1.msra.mxu0 %v669
    %707 = vmatprep.subr.mxu0 %v674
    %708 = vmatpush1.msra.mxu0 %v673
    %709 = vmatprep.subr.mxu0 0.0
    %710 = vmatpush1.msra.mxu0 0.0
    %711 = vmatprep.subr.mxu0 0.0
    %712 = vmatpush1.msra.mxu0 0.0
    %713 = vmatprep.subr.mxu0 0.0
    %714 = vmatpush1.msra.mxu0 0.0
    %715 = vmatprep.subr.mxu0 0.0
    %716 = vmatpush1.msra.mxu0 0.0
    %717 = vmatprep.subr.mxu0 0.0
    %718 = vmatpush1.msra.mxu0 0.0
    %719 = vmatprep.subr.mxu0 0.0
    %720 = vmatpush1.msra.mxu0 0.0
    %721 = vmatprep.subr.mxu0 0.0
    %722 = vmatpush1.msra.mxu0 0.0
    %723 = vmatprep.subr.mxu0 0.0
    %724 = vmatpush1.msra.mxu0 0.0
    %725 = vmatprep.subr.mxu0 0.0
    %726 = vmatpush1.msra.mxu0 0.0
    %727 = vmatprep.subr.mxu0 0.0
    %728 = vmatpush1.msra.mxu0 0.0
    %729 = vmatprep.subr.mxu0 0.0
    %730 = vmatpush1.msra.mxu0 0.0
    %731 = vmatprep.subr.mxu0 0.0
    %732 = vmatpush1.msra.mxu0 0.0
    %733 = vmatprep.subr.mxu0 0.0
    %734 = vmatpush1.msra.mxu0 0.0
    %735 = vmatprep.subr.mxu0 0.0
    %736 = vmatpush1.msra.mxu0 0.0
    %737 = vmatprep.subr.mxu0 0.0
    %738 = vmatpush1.msra.mxu0 0.0
    %739 = vmatprep.subr.mxu0 0.0
    %740 = vmatpush1.msra.mxu0 0.0
    %741 = vmatprep.mubr.f32.mxu0 0.0
    %742 = vmatmul.mubr.f32.gmra.mrb[0].mxu0 0.0
    %v743 = vpop.f32.mrb[0].mxu0
    %v744 = vadd.f32 0.0, %v743
    %v745 = vpop.f32.mrb[0].mxu0
    %v746 = vadd.f32 0.0, %v745
    %747 = vdwg.mxu0
    %748 = vmatprep.subr.mxu0 %v616
    %749 = vmatpush1.msra.mxu0 %v615
    %750 = vmatprep.subr.mxu0 %v620
    %751 = vmatpush1.msra.mxu0 %v619
    %752 = vmatprep.subr.mxu0 %v624
    %753 = vmatpush1.msra.mxu0 %v623
    %754 = vmatprep.subr.mxu0 %v628
    %755 = vmatpush1.msra.mxu0 %v627
    %756 = vmatprep.subr.mxu0 %v632
    %757 = vmatpush1.msra.mxu0 %v631
    %758 = vmatprep.subr.mxu0 %v636
    %759 = vmatpush1.msra.mxu0 %v635
    %760 = vmatprep.subr.mxu0 %v640
    %761 = vmatpush1.msra.mxu0 %v639
    %762 = vmatprep.subr.mxu0 %v644
    %763 = vmatpush1.msra.mxu0 %v643
    %764 = vmatprep.subr.mxu0 %v648
    %765 = vmatpush1.msra.mxu0 %v647
    %766 = vmatprep.subr.mxu0 %v652
    %767 = vmatpush1.msra.mxu0 %v651
    %768 = vmatprep.subr.mxu0 %v656
    %769 = vmatpush1.msra.mxu0 %v655
    %770 = vmatprep.subr.mxu0 %v660
    %771 = vmatpush1.msra.mxu0 %v659
    %772 = vmatprep.subr.mxu0 %v664
    %773 = vmatpush1.msra.mxu0 %v663
    %774 = vmatprep.subr.mxu0 %v668
    %775 = vmatpush1.msra.mxu0 %v667
    %776 = vmatprep.subr.mxu0 %v672
    %777 = vmatpush1.msra.mxu0 %v671
    %778 = vmatprep.subr.mxu0 %v676
    %779 = vmatpush1.msra.mxu0 %v675
    %780 = vmatprep.subr.mxu0 0.0
    %781 = vmatpush1.msra.mxu0 0.0
    %782 = vmatprep.subr.mxu0 0.0
    %783 = vmatpush1.msra.mxu0 0.0
    %784 = vmatprep.subr.mxu0 0.0
    %785 = vmatpush1.msra.mxu0 0.0
    %786 = vmatprep.subr.mxu0 0.0
    %787 = vmatpush1.msra.mxu0 0.0
    %788 = vmatprep.subr.mxu0 0.0
    %789 = vmatpush1.msra.mxu0 0.0
    %790 = vmatprep.subr.mxu0 0.0
    %791 = vmatpush1.msra.mxu0 0.0
    %792 = vmatprep.subr.mxu0 0.0
    %793 = vmatpush1.msra.mxu0 0.0
    %794 = vmatprep.subr.mxu0 0.0
    %795 = vmatpush1.msra.mxu0 0.0
    %796 = vmatprep.subr.mxu0 0.0
    %797 = vmatpush1.msra.mxu0 0.0
    %798 = vmatprep.subr.mxu0 0.0
    %799 = vmatpush1.msra.mxu0 0.0
    %800 = vmatprep.subr.mxu0 0.0
    %801 = vmatpush1.msra.mxu0 0.0
    %802 = vmatprep.subr.mxu0 0.0
    %803 = vmatpush1.msra.mxu0 0.0
    %804 = vmatprep.subr.mxu0 0.0
    %805 = vmatpush1.msra.mxu0 0.0
    %806 = vmatprep.subr.mxu0 0.0
    %807 = vmatpush1.msra.mxu0 0.0
    %808 = vmatprep.subr.mxu0 0.0
    %809 = vmatpush1.msra.mxu0 0.0
    %810 = vmatprep.subr.mxu0 0.0
    %811 = vmatpush1.msra.mxu0 0.0
    %812 = vmatprep.mubr.f32.mxu0 0.0
    %813 = vmatmul.mubr.f32.gmra.mrb[0].mxu0 0.0
    %v814 = vpop.f32.mrb[0].mxu0
    %v815 = vadd.f32 0.0, %v814
    %v816 = vpop.f32.mrb[0].mxu0
    %v817 = vadd.f32 0.0, %v816
    %818 = vdwg.mxu0
    %v819 = vadd.f32 %v609, %v744
    %v820 = vadd.f32 %v610, %v746
    %v821 = vadd.f32 %v611, %v815
    %v822 = vadd.f32 %v612, %v817
    %v823 = vld [vmem:[%s4] sm:$0xf]
    %v825 = vlaneseq
    %v826 = vshrl.u32 %v825, 7
    %v827 = vsub.s32 0, %v826
    %v828 = vrot.slane %v823, %v827
    %v829 = vlaneseq
    %v830 = vshrl.u32 %v829, 7
    %v831 = vsub.s32 1, %v830
    %v832 = vrot.slane %v823, %v831
    %v833 = vlaneseq
    %v834 = vshrl.u32 %v833, 7
    %v835 = vsub.s32 2, %v834
    %v836 = vrot.slane %v823, %v835
    %v837 = vlaneseq
    %v838 = vshrl.u32 %v837, 7
    %v839 = vsub.s32 3, %v838
    %v840 = vrot.slane %v823, %v839
    %v845 = vadd.f32 %v819, %v828
    %v846 = vadd.f32 %v820, %v832
    %v847 = vadd.f32 %v821, %v836
    %v848 = vadd.f32 %v822, %v840
    %v849 = vxor.u32 %v845, 2147483648
    %v850 = vxor.u32 %v846, 2147483648
    %v851 = vxor.u32 %v847, 2147483648
    %v852 = vmul.f32 %v849, 1.442695
    %v853 = vpow.pop %v852
    %v854 = vmul.f32 %v850, 1.442695
    %v855 = vpow.pop %v854
    %v856 = vmul.f32 %v851, 1.442695
    %v857 = vpow.pop %v856
    %v858 = vadd.f32 %v853, 1.0
    %v859 = vadd.f32 %v855, 1.0
    %v860 = vadd.f32 %v857, 1.0
    %v861 = vrcp.pop %v858
    %v862 = vmul.f32 1.0, %v861
    %v863 = vrcp.pop %v859
    %v864 = vmul.f32 1.0, %v863
    %v865 = vrcp.pop %v860
    %v866 = vmul.f32 1.0, %v865
    %v867 = vtanh.pop %v848
    %v868 = vmul.f32 %v864, 0.0
    %v869 = vmul.f32 %v862, %v867
    %v870 = vadd.f32 %v868, %v869
    %v871 = vtanh.pop %v870
    %v872 = vmul.f32 %v866, %v871
    %873 = vst [vmem:[#allocation4] sm:$0x3] %v872
    %v874 = vld [vmem:[#allocation2] sm:$0xc]
    %v875 = vld [vmem:[#allocation2 + $0x8] sm:$0xc]
    %v876 = vld [vmem:[#allocation2 + $0x10] sm:$0xc]
    %v877 = vld [vmem:[#allocation2 + $0x18] sm:$0xc]
    %v878 = vld [vmem:[#allocation3] sm:$0x30]
    %v879 = vld [vmem:[#allocation3 + $0x8] sm:$0x30]
    %v880 = vld [vmem:[#allocation3 + $0x10] sm:$0x30]
    %v881 = vld [vmem:[#allocation3 + $0x18] sm:$0x30]
    %v886 = vrot.slane %v878, 2
    %v887 = vrot.slane %v879, 2
    %v888 = vrot.slane %v880, 2
    %v889 = vrot.slane %v881, 2
    %v894 = vadd.f32 %v874, %v886
    %v895 = vadd.f32 %v875, %v887
    %v896 = vadd.f32 %v876, %v888
    %v897 = vadd.f32 %v877, %v889
    %v898 = vld [vmem:[%s3] sm:$0xff]
    %v899 = vld [vmem:[%s3 + $0x8] sm:$0xff]
    %v900 = vld [vmem:[%s3 + $0x10] sm:$0xff]
    %v901 = vld [vmem:[%s3 + $0x18] sm:$0xff]
    %v902 = vld [vmem:[%s3 + $0x20] sm:$0xff]
    %v903 = vld [vmem:[%s3 + $0x28] sm:$0xff]
    %v904 = vld [vmem:[%s3 + $0x30] sm:$0xff]
    %v905 = vld [vmem:[%s3 + $0x38] sm:$0xff]
    %v906 = vld [vmem:[%s3 + $0x40] sm:$0xff]
    %v907 = vld [vmem:[%s3 + $0x48] sm:$0xff]
    %v908 = vld [vmem:[%s3 + $0x50] sm:$0xff]
    %v909 = vld [vmem:[%s3 + $0x58] sm:$0xff]
    %v910 = vld [vmem:[%s3 + $0x60] sm:$0xff]
    %v911 = vld [vmem:[%s3 + $0x68] sm:$0xff]
    %v912 = vld [vmem:[%s3 + $0x70] sm:$0xff]
    %v913 = vld [vmem:[%s3 + $0x78] sm:$0xff]
    %v914 = vld [vmem:[%s3 + $0x80] sm:$0xff]
    %v915 = vld [vmem:[%s3 + $0x88] sm:$0xff]
    %v916 = vld [vmem:[%s3 + $0x90] sm:$0xff]
    %v917 = vld [vmem:[%s3 + $0x98] sm:$0xff]
    %v918 = vld [vmem:[%s3 + $0xa0] sm:$0xff]
    %v919 = vld [vmem:[%s3 + $0xa8] sm:$0xff]
    %v920 = vld [vmem:[%s3 + $0xb0] sm:$0xff]
    %v921 = vld [vmem:[%s3 + $0xb8] sm:$0xff]
    %v922 = vld [vmem:[%s3 + $0xc0] sm:$0xff]
    %v923 = vld [vmem:[%s3 + $0xc8] sm:$0xff]
    %v924 = vld [vmem:[%s3 + $0xd0] sm:$0xff]
    %v925 = vld [vmem:[%s3 + $0xd8] sm:$0xff]
    %v926 = vld [vmem:[%s3 + $0xe0] sm:$0xff]
    %v927 = vld [vmem:[%s3 + $0xe8] sm:$0xff]
    %v928 = vld [vmem:[%s3 + $0xf0] sm:$0xff]
    %v929 = vld [vmem:[%s3 + $0xf8] sm:$0xff]
    %v930 = vld [vmem:[%s3 + $0x100] sm:$0xff]
    %v931 = vld [vmem:[%s3 + $0x108] sm:$0xff]
    %v932 = vld [vmem:[%s3 + $0x110] sm:$0xff]
    %v933 = vld [vmem:[%s3 + $0x118] sm:$0xff]
    %v934 = vld [vmem:[%s3 + $0x120] sm:$0xff]
    %v935 = vld [vmem:[%s3 + $0x128] sm:$0xff]
    %v936 = vld [vmem:[%s3 + $0x130] sm:$0xff]
    %v937 = vld [vmem:[%s3 + $0x138] sm:$0xff]
    %v938 = vld [vmem:[%s3 + $0x140] sm:$0xff]
    %v939 = vld [vmem:[%s3 + $0x148] sm:$0xff]
    %v940 = vld [vmem:[%s3 + $0x150] sm:$0xff]
    %v941 = vld [vmem:[%s3 + $0x158] sm:$0xff]
    %v942 = vld [vmem:[%s3 + $0x160] sm:$0xff]
    %v943 = vld [vmem:[%s3 + $0x168] sm:$0xff]
    %v944 = vld [vmem:[%s3 + $0x170] sm:$0xff]
    %v945 = vld [vmem:[%s3 + $0x178] sm:$0xff]
    %v946 = vld [vmem:[%s3 + $0x180] sm:$0xff]
    %v947 = vld [vmem:[%s3 + $0x188] sm:$0xff]
    %v948 = vld [vmem:[%s3 + $0x190] sm:$0xff]
    %v949 = vld [vmem:[%s3 + $0x198] sm:$0xff]
    %v950 = vld [vmem:[%s3 + $0x1a0] sm:$0xff]
    %v951 = vld [vmem:[%s3 + $0x1a8] sm:$0xff]
    %v952 = vld [vmem:[%s3 + $0x1b0] sm:$0xff]
    %v953 = vld [vmem:[%s3 + $0x1b8] sm:$0xff]
    %v954 = vld [vmem:[%s3 + $0x1c0] sm:$0xff]
    %v955 = vld [vmem:[%s3 + $0x1c8] sm:$0xff]
    %v956 = vld [vmem:[%s3 + $0x1d0] sm:$0xff]
    %v957 = vld [vmem:[%s3 + $0x1d8] sm:$0xff]
    %v958 = vld [vmem:[%s3 + $0x1e0] sm:$0xff]
    %v959 = vld [vmem:[%s3 + $0x1e8] sm:$0xff]
    %v960 = vld [vmem:[%s3 + $0x1f0] sm:$0xff]
    %v961 = vld [vmem:[%s3 + $0x1f8] sm:$0xff]
    %962 = vmatprep.subr.mxu0 %v899
    %963 = vmatpush1.msra.mxu0 %v898
    %964 = vmatprep.subr.mxu0 %v903
    %965 = vmatpush1.msra.mxu0 %v902
    %966 = vmatprep.subr.mxu0 %v907
    %967 = vmatpush1.msra.mxu0 %v906
    %968 = vmatprep.subr.mxu0 %v911
    %969 = vmatpush1.msra.mxu0 %v910
    %970 = vmatprep.subr.mxu0 %v915
    %971 = vmatpush1.msra.mxu0 %v914
    %972 = vmatprep.subr.mxu0 %v919
    %973 = vmatpush1.msra.mxu0 %v918
    %974 = vmatprep.subr.mxu0 %v923
    %975 = vmatpush1.msra.mxu0 %v922
    %976 = vmatprep.subr.mxu0 %v927
    %977 = vmatpush1.msra.mxu0 %v926
    %978 = vmatprep.subr.mxu0 %v931
    %979 = vmatpush1.msra.mxu0 %v930
    %980 = vmatprep.subr.mxu0 %v935
    %981 = vmatpush1.msra.mxu0 %v934
    %982 = vmatprep.subr.mxu0 %v939
    %983 = vmatpush1.msra.mxu0 %v938
    %984 = vmatprep.subr.mxu0 %v943
    %985 = vmatpush1.msra.mxu0 %v942
    %986 = vmatprep.subr.mxu0 %v947
    %987 = vmatpush1.msra.mxu0 %v946
    %988 = vmatprep.subr.mxu0 %v951
    %989 = vmatpush1.msra.mxu0 %v950
    %990 = vmatprep.subr.mxu0 %v955
    %991 = vmatpush1.msra.mxu0 %v954
    %992 = vmatprep.subr.mxu0 %v959
    %993 = vmatpush1.msra.mxu0 %v958
    %994 = vmatprep.subr.mxu0 0.0
    %995 = vmatpush1.msra.mxu0 0.0
    %996 = vmatprep.subr.mxu0 0.0
    %997 = vmatpush1.msra.mxu0 0.0
    %998 = vmatprep.subr.mxu0 0.0
    %999 = vmatpush1.msra.mxu0 0.0
    %1000 = vmatprep.subr.mxu0 0.0
    %1001 = vmatpush1.msra.mxu0 0.0
    %1002 = vmatprep.subr.mxu0 0.0
    %1003 = vmatpush1.msra.mxu0 0.0
    %1004 = vmatprep.subr.mxu0 0.0
    %1005 = vmatpush1.msra.mxu0 0.0
    %1006 = vmatprep.subr.mxu0 0.0
    %1007 = vmatpush1.msra.mxu0 0.0
    %1008 = vmatprep.subr.mxu0 0.0
    %1009 = vmatpush1.msra.mxu0 0.0
    %1010 = vmatprep.subr.mxu0 0.0
    %1011 = vmatpush1.msra.mxu0 0.0
    %1012 = vmatprep.subr.mxu0 0.0
    %1013 = vmatpush1.msra.mxu0 0.0
    %1014 = vmatprep.subr.mxu0 0.0
    %1015 = vmatpush1.msra.mxu0 0.0
    %1016 = vmatprep.subr.mxu0 0.0
    %1017 = vmatpush1.msra.mxu0 0.0
    %1018 = vmatprep.subr.mxu0 0.0
    %1019 = vmatpush1.msra.mxu0 0.0
    %1020 = vmatprep.subr.mxu0 0.0
    %1021 = vmatpush1.msra.mxu0 0.0
    %1022 = vmatprep.subr.mxu0 0.0
    %1023 = vmatpush1.msra.mxu0 0.0
    %1024 = vmatprep.subr.mxu0 0.0
    %1025 = vmatpush1.msra.mxu0 0.0
    %1026 = vmatprep.mubr.f32.mxu0 0.0
    %1027 = vmatmul.mubr.f32.gmra.mrb[0].mxu0 %v872
    %v1028 = vpop.f32.mrb[0].mxu0
    %v1029 = vadd.f32 0.0, %v1028
    %v1030 = vpop.f32.mrb[0].mxu0
    %v1031 = vadd.f32 0.0, %v1030
    %1032 = vdwg.mxu0
    %1033 = vmatprep.subr.mxu0 %v901
    %1034 = vmatpush1.msra.mxu0 %v900
    %1035 = vmatprep.subr.mxu0 %v905
    %1036 = vmatpush1.msra.mxu0 %v904
    %1037 = vmatprep.subr.mxu0 %v909
    %1038 = vmatpush1.msra.mxu0 %v908
    %1039 = vmatprep.subr.mxu0 %v913
    %1040 = vmatpush1.msra.mxu0 %v912
    %1041 = vmatprep.subr.mxu0 %v917
    %1042 = vmatpush1.msra.mxu0 %v916
    %1043 = vmatprep.subr.mxu0 %v921
    %1044 = vmatpush1.msra.mxu0 %v920
    %1045 = vmatprep.subr.mxu0 %v925
    %1046 = vmatpush1.msra.mxu0 %v924
    %1047 = vmatprep.subr.mxu0 %v929
    %1048 = vmatpush1.msra.mxu0 %v928
    %1049 = vmatprep.subr.mxu0 %v933
    %1050 = vmatpush1.msra.mxu0 %v932
    %1051 = vmatprep.subr.mxu0 %v937
    %1052 = vmatpush1.msra.mxu0 %v936
    %1053 = vmatprep.subr.mxu0 %v941
    %1054 = vmatpush1.msra.mxu0 %v940
    %1055 = vmatprep.subr.mxu0 %v945
    %1056 = vmatpush1.msra.mxu0 %v944
    %1057 = vmatprep.subr.mxu0 %v949
    %1058 = vmatpush1.msra.mxu0 %v948
    %1059 = vmatprep.subr.mxu0 %v953
    %1060 = vmatpush1.msra.mxu0 %v952
    %1061 = vmatprep.subr.mxu0 %v957
    %1062 = vmatpush1.msra.mxu0 %v956
    %1063 = vmatprep.subr.mxu0 %v961
    %1064 = vmatpush1.msra.mxu0 %v960
    %1065 = vmatprep.subr.mxu0 0.0
    %1066 = vmatpush1.msra.mxu0 0.0
    %1067 = vmatprep.subr.mxu0 0.0
    %1068 = vmatpush1.msra.mxu0 0.0
    %1069 = vmatprep.subr.mxu0 0.0
    %1070 = vmatpush1.msra.mxu0 0.0
    %1071 = vmatprep.subr.mxu0 0.0
    %1072 = vmatpush1.msra.mxu0 0.0
    %1073 = vmatprep.subr.mxu0 0.0
    %1074 = vmatpush1.msra.mxu0 0.0
    %1075 = vmatprep.subr.mxu0 0.0
    %1076 = vmatpush1.msra.mxu0 0.0
    %1077 = vmatprep.subr.mxu0 0.0
    %1078 = vmatpush1.msra.mxu0 0.0
    %1079 = vmatprep.subr.mxu0 0.0
    %1080 = vmatpush1.msra.mxu0 0.0
    %1081 = vmatprep.subr.mxu0 0.0
    %1082 = vmatpush1.msra.mxu0 0.0
    %1083 = vmatprep.subr.mxu0 0.0
    %1084 = vmatpush1.msra.mxu0 0.0
    %1085 = vmatprep.subr.mxu0 0.0
    %1086 = vmatpush1.msra.mxu0 0.0
    %1087 = vmatprep.subr.mxu0 0.0
    %1088 = vmatpush1.msra.mxu0 0.0
    %1089 = vmatprep.subr.mxu0 0.0
    %1090 = vmatpush1.msra.mxu0 0.0
    %1091 = vmatprep.subr.mxu0 0.0
    %1092 = vmatpush1.msra.mxu0 0.0
    %1093 = vmatprep.subr.mxu0 0.0
    %1094 = vmatpush1.msra.mxu0 0.0
    %1095 = vmatprep.subr.mxu0 0.0
    %1096 = vmatpush1.msra.mxu0 0.0
    %1097 = vmatprep.mubr.f32.mxu0 0.0
    %1098 = vmatmul.mubr.f32.gmra.mrb[0].mxu0 %v872
    %v1099 = vpop.f32.mrb[0].mxu0
    %v1100 = vadd.f32 0.0, %v1099
    %v1101 = vpop.f32.mrb[0].mxu0
    %v1102 = vadd.f32 0.0, %v1101
    %1103 = vdwg.mxu0
    %v1108 = vrot.slane %v1029, 6
    %v1109 = vrot.slane %v1031, 6
    %v1110 = vrot.slane %v1100, 6
    %v1111 = vrot.slane %v1102, 6
    %v1116 = vadd.f32 %v894, %v1108
    %v1117 = vadd.f32 %v895, %v1109
    %v1118 = vadd.f32 %v896, %v1110
    %v1119 = vadd.f32 %v897, %v1111
    %v1120 = vld [vmem:[%s4] sm:$0xf]
    %v1122 = vlaneseq
    %v1123 = vshrl.u32 %v1122, 7
    %v1124 = vsub.s32 0, %v1123
    %v1125 = vrot.slane %v1120, %v1124
    %v1126 = vlaneseq
    %v1127 = vshrl.u32 %v1126, 7
    %v1128 = vsub.s32 1, %v1127
    %v1129 = vrot.slane %v1120, %v1128
    %v1130 = vlaneseq
    %v1131 = vshrl.u32 %v1130, 7
    %v1132 = vsub.s32 2, %v1131
    %v1133 = vrot.slane %v1120, %v1132
    %v1134 = vlaneseq
    %v1135 = vshrl.u32 %v1134, 7
    %v1136 = vsub.s32 3, %v1135
    %v1137 = vrot.slane %v1120, %v1136
    %v1142 = vadd.f32 %v1116, %v1125
    %v1143 = vadd.f32 %v1117, %v1129
    %v1144 = vadd.f32 %v1118, %v1133
    %v1145 = vadd.f32 %v1119, %v1137
    %v1146 = vxor.u32 %v1142, 2147483648
    %v1147 = vxor.u32 %v1143, 2147483648
    %v1148 = vxor.u32 %v1144, 2147483648
    %v1149 = vmul.f32 %v1146, 1.442695
    %v1150 = vpow.pop %v1149
    %v1151 = vmul.f32 %v1147, 1.442695
    %v1152 = vpow.pop %v1151
    %v1153 = vmul.f32 %v1148, 1.442695
    %v1154 = vpow.pop %v1153
    %v1155 = vadd.f32 %v1150, 1.0
    %v1156 = vadd.f32 %v1152, 1.0
    %v1157 = vadd.f32 %v1154, 1.0
    %v1158 = vrcp.pop %v1155
    %v1159 = vmul.f32 1.0, %v1158
    %v1160 = vrcp.pop %v1156
    %v1161 = vmul.f32 1.0, %v1160
    %v1162 = vrcp.pop %v1157
    %v1163 = vmul.f32 1.0, %v1162
    %v1164 = vtanh.pop %v1145
    %v1166 = vrot.slane %v870, 6
    %v1168 = vmul.f32 %v1161, %v1166
    %v1169 = vmul.f32 %v1159, %v1164
    %v1170 = vadd.f32 %v1168, %v1169
    %v1171 = vtanh.pop %v1170
    %v1172 = vmul.f32 %v1163, %v1171
    %1173 = vst [vmem:[#allocation4] sm:$0xc] %v1172
    %v1174 = vld [vmem:[#allocation2] sm:$0x30]
    %v1175 = vld [vmem:[#allocation2 + $0x8] sm:$0x30]
    %v1176 = vld [vmem:[#allocation2 + $0x10] sm:$0x30]
    %v1177 = vld [vmem:[#allocation2 + $0x18] sm:$0x30]
    %v1178 = vld [vmem:[#allocation3] sm:$0xc]
    %v1179 = vld [vmem:[#allocation3 + $0x8] sm:$0xc]
    %v1180 = vld [vmem:[#allocation3 + $0x10] sm:$0xc]
    %v1181 = vld [vmem:[#allocation3 + $0x18] sm:$0xc]
    %v1186 = vrot.slane %v1178, 6
    %v1187 = vrot.slane %v1179, 6
    %v1188 = vrot.slane %v1180, 6
    %v1189 = vrot.slane %v1181, 6
    %v1194 = vadd.f32 %v1174, %v1186
    %v1195 = vadd.f32 %v1175, %v1187
    %v1196 = vadd.f32 %v1176, %v1188
    %v1197 = vadd.f32 %v1177, %v1189
    %v1198 = vld [vmem:[%s3] sm:$0xff]
    %v1199 = vld [vmem:[%s3 + $0x8] sm:$0xff]
    %v1200 = vld [vmem:[%s3 + $0x10] sm:$0xff]
    %v1201 = vld [vmem:[%s3 + $0x18] sm:$0xff]
    %v1202 = vld [vmem:[%s3 + $0x20] sm:$0xff]
    %v1203 = vld [vmem:[%s3 + $0x28] sm:$0xff]
    %v1204 = vld [vmem:[%s3 + $0x30] sm:$0xff]
    %v1205 = vld [vmem:[%s3 + $0x38] sm:$0xff]
    %v1206 = vld [vmem:[%s3 + $0x40] sm:$0xff]
    %v1207 = vld [vmem:[%s3 + $0x48] sm:$0xff]
    %v1208 = vld [vmem:[%s3 + $0x50] sm:$0xff]
    %v1209 = vld [vmem:[%s3 + $0x58] sm:$0xff]
    %v1210 = vld [vmem:[%s3 + $0x60] sm:$0xff]
    %v1211 = vld [vmem:[%s3 + $0x68] sm:$0xff]
    %v1212 = vld [vmem:[%s3 + $0x70] sm:$0xff]
    %v1213 = vld [vmem:[%s3 + $0x78] sm:$0xff]
    %v1214 = vld [vmem:[%s3 + $0x80] sm:$0xff]
    %v1215 = vld [vmem:[%s3 + $0x88] sm:$0xff]
    %v1216 = vld [vmem:[%s3 + $0x90] sm:$0xff]
    %v1217 = vld [vmem:[%s3 + $0x98] sm:$0xff]
    %v1218 = vld [vmem:[%s3 + $0xa0] sm:$0xff]
    %v1219 = vld [vmem:[%s3 + $0xa8] sm:$0xff]
    %v1220 = vld [vmem:[%s3 + $0xb0] sm:$0xff]
    %v1221 = vld [vmem:[%s3 + $0xb8] sm:$0xff]
    %v1222 = vld [vmem:[%s3 + $0xc0] sm:$0xff]
    %v1223 = vld [vmem:[%s3 + $0xc8] sm:$0xff]
    %v1224 = vld [vmem:[%s3 + $0xd0] sm:$0xff]
    %v1225 = vld [vmem:[%s3 + $0xd8] sm:$0xff]
    %v1226 = vld [vmem:[%s3 + $0xe0] sm:$0xff]
    %v1227 = vld [vmem:[%s3 + $0xe8] sm:$0xff]
    %v1228 = vld [vmem:[%s3 + $0xf0] sm:$0xff]
    %v1229 = vld [vmem:[%s3 + $0xf8] sm:$0xff]
    %v1230 = vld [vmem:[%s3 + $0x100] sm:$0xff]
    %v1231 = vld [vmem:[%s3 + $0x108] sm:$0xff]
    %v1232 = vld [vmem:[%s3 + $0x110] sm:$0xff]
    %v1233 = vld [vmem:[%s3 + $0x118] sm:$0xff]
    %v1234 = vld [vmem:[%s3 + $0x120] sm:$0xff]
    %v1235 = vld [vmem:[%s3 + $0x128] sm:$0xff]
    %v1236 = vld [vmem:[%s3 + $0x130] sm:$0xff]
    %v1237 = vld [vmem:[%s3 + $0x138] sm:$0xff]
    %v1238 = vld [vmem:[%s3 + $0x140] sm:$0xff]
    %v1239 = vld [vmem:[%s3 + $0x148] sm:$0xff]
    %v1240 = vld [vmem:[%s3 + $0x150] sm:$0xff]
    %v1241 = vld [vmem:[%s3 + $0x158] sm:$0xff]
    %v1242 = vld [vmem:[%s3 + $0x160] sm:$0xff]
    %v1243 = vld [vmem:[%s3 + $0x168] sm:$0xff]
    %v1244 = vld [vmem:[%s3 + $0x170] sm:$0xff]
    %v1245 = vld [vmem:[%s3 + $0x178] sm:$0xff]
    %v1246 = vld [vmem:[%s3 + $0x180] sm:$0xff]
    %v1247 = vld [vmem:[%s3 + $0x188] sm:$0xff]
    %v1248 = vld [vmem:[%s3 + $0x190] sm:$0xff]
    %v1249 = vld [vmem:[%s3 + $0x198] sm:$0xff]
    %v1250 = vld [vmem:[%s3 + $0x1a0] sm:$0xff]
    %v1251 = vld [vmem:[%s3 + $0x1a8] sm:$0xff]
    %v1252 = vld [vmem:[%s3 + $0x1b0] sm:$0xff]
    %v1253 = vld [vmem:[%s3 + $0x1b8] sm:$0xff]
    %v1254 = vld [vmem:[%s3 + $0x1c0] sm:$0xff]
    %v1255 = vld [vmem:[%s3 + $0x1c8] sm:$0xff]
    %v1256 = vld [vmem:[%s3 + $0x1d0] sm:$0xff]
    %v1257 = vld [vmem:[%s3 + $0x1d8] sm:$0xff]
    %v1258 = vld [vmem:[%s3 + $0x1e0] sm:$0xff]
    %v1259 = vld [vmem:[%s3 + $0x1e8] sm:$0xff]
    %v1260 = vld [vmem:[%s3 + $0x1f0] sm:$0xff]
    %v1261 = vld [vmem:[%s3 + $0x1f8] sm:$0xff]
    %v1263 = vrot.slane %v1172, 2
    %1265 = vmatprep.subr.mxu0 %v1199
    %1266 = vmatpush1.msra.mxu0 %v1198
    %1267 = vmatprep.subr.mxu0 %v1203
    %1268 = vmatpush1.msra.mxu0 %v1202
    %1269 = vmatprep.subr.mxu0 %v1207
    %1270 = vmatpush1.msra.mxu0 %v1206
    %1271 = vmatprep.subr.mxu0 %v1211
    %1272 = vmatpush1.msra.mxu0 %v1210
    %1273 = vmatprep.subr.mxu0 %v1215
    %1274 = vmatpush1.msra.mxu0 %v1214
    %1275 = vmatprep.subr.mxu0 %v1219
    %1276 = vmatpush1.msra.mxu0 %v1218
    %1277 = vmatprep.subr.mxu0 %v1223
    %1278 = vmatpush1.msra.mxu0 %v1222
    %1279 = vmatprep.subr.mxu0 %v1227
    %1280 = vmatpush1.msra.mxu0 %v1226
    %1281 = vmatprep.subr.mxu0 %v1231
    %1282 = vmatpush1.msra.mxu0 %v1230
    %1283 = vmatprep.subr.mxu0 %v1235
    %1284 = vmatpush1.msra.mxu0 %v1234
    %1285 = vmatprep.subr.mxu0 %v1239
    %1286 = vmatpush1.msra.mxu0 %v1238
    %1287 = vmatprep.subr.mxu0 %v1243
    %1288 = vmatpush1.msra.mxu0 %v1242
    %1289 = vmatprep.subr.mxu0 %v1247
    %1290 = vmatpush1.msra.mxu0 %v1246
    %1291 = vmatprep.subr.mxu0 %v1251
    %1292 = vmatpush1.msra.mxu0 %v1250
    %1293 = vmatprep.subr.mxu0 %v1255
    %1294 = vmatpush1.msra.mxu0 %v1254
    %1295 = vmatprep.subr.mxu0 %v1259
    %1296 = vmatpush1.msra.mxu0 %v1258
    %1297 = vmatprep.subr.mxu0 0.0
    %1298 = vmatpush1.msra.mxu0 0.0
    %1299 = vmatprep.subr.mxu0 0.0
    %1300 = vmatpush1.msra.mxu0 0.0
    %1301 = vmatprep.subr.mxu0 0.0
    %1302 = vmatpush1.msra.mxu0 0.0
    %1303 = vmatprep.subr.mxu0 0.0
    %1304 = vmatpush1.msra.mxu0 0.0
    %1305 = vmatprep.subr.mxu0 0.0
    %1306 = vmatpush1.msra.mxu0 0.0
    %1307 = vmatprep.subr.mxu0 0.0
    %1308 = vmatpush1.msra.mxu0 0.0
    %1309 = vmatprep.subr.mxu0 0.0
    %1310 = vmatpush1.msra.mxu0 0.0
    %1311 = vmatprep.subr.mxu0 0.0
    %1312 = vmatpush1.msra.mxu0 0.0
    %1313 = vmatprep.subr.mxu0 0.0
    %1314 = vmatpush1.msra.mxu0 0.0
    %1315 = vmatprep.subr.mxu0 0.0
    %1316 = vmatpush1.msra.mxu0 0.0
    %1317 = vmatprep.subr.mxu0 0.0
    %1318 = vmatpush1.msra.mxu0 0.0
    %1319 = vmatprep.subr.mxu0 0.0
    %1320 = vmatpush1.msra.mxu0 0.0
    %1321 = vmatprep.subr.mxu0 0.0
    %1322 = vmatpush1.msra.mxu0 0.0
    %1323 = vmatprep.subr.mxu0 0.0
    %1324 = vmatpush1.msra.mxu0 0.0
    %1325 = vmatprep.subr.mxu0 0.0
    %1326 = vmatpush1.msra.mxu0 0.0
    %1327 = vmatprep.subr.mxu0 0.0
    %1328 = vmatpush1.msra.mxu0 0.0
    %1329 = vmatprep.mubr.f32.mxu0 0.0
    %1330 = vmatmul.mubr.f32.gmra.mrb[0].mxu0 %v1263
    %v1331 = vpop.f32.mrb[0].mxu0
    %v1332 = vadd.f32 0.0, %v1331
    %v1333 = vpop.f32.mrb[0].mxu0
    %v1334 = vadd.f32 0.0, %v1333
    %1335 = vdwg.mxu0
    %1336 = vmatprep.subr.mxu0 %v1201
    %1337 = vmatpush1.msra.mxu0 %v1200
    %1338 = vmatprep.subr.mxu0 %v1205
    %1339 = vmatpush1.msra.mxu0 %v1204
    %1340 = vmatprep.subr.mxu0 %v1209
    %1341 = vmatpush1.msra.mxu0 %v1208
    %1342 = vmatprep.subr.mxu0 %v1213
    %1343 = vmatpush1.msra.mxu0 %v1212
    %1344 = vmatprep.subr.mxu0 %v1217
    %1345 = vmatpush1.msra.mxu0 %v1216
    %1346 = vmatprep.subr.mxu0 %v1221
    %1347 = vmatpush1.msra.mxu0 %v1220
    %1348 = vmatprep.subr.mxu0 %v1225
    %1349 = vmatpush1.msra.mxu0 %v1224
    %1350 = vmatprep.subr.mxu0 %v1229
    %1351 = vmatpush1.msra.mxu0 %v1228
    %1352 = vmatprep.subr.mxu0 %v1233
    %1353 = vmatpush1.msra.mxu0 %v1232
    %1354 = vmatprep.subr.mxu0 %v1237
    %1355 = vmatpush1.msra.mxu0 %v1236
    %1356 = vmatprep.subr.mxu0 %v1241
    %1357 = vmatpush1.msra.mxu0 %v1240
    %1358 = vmatprep.subr.mxu0 %v1245
    %1359 = vmatpush1.msra.mxu0 %v1244
    %1360 = vmatprep.subr.mxu0 %v1249
    %1361 = vmatpush1.msra.mxu0 %v1248
    %1362 = vmatprep.subr.mxu0 %v1253
    %1363 = vmatpush1.msra.mxu0 %v1252
    %1364 = vmatprep.subr.mxu0 %v1257
    %1365 = vmatpush1.msra.mxu0 %v1256
    %1366 = vmatprep.subr.mxu0 %v1261
    %1367 = vmatpush1.msra.mxu0 %v1260
    %1368 = vmatprep.subr.mxu0 0.0
    %1369 = vmatpush1.msra.mxu0 0.0
    %1370 = vmatprep.subr.mxu0 0.0
    %1371 = vmatpush1.msra.mxu0 0.0
    %1372 = vmatprep.subr.mxu0 0.0
    %1373 = vmatpush1.msra.mxu0 0.0
    %1374 = vmatprep.subr.mxu0 0.0
    %1375 = vmatpush1.msra.mxu0 0.0
    %1376 = vmatprep.subr.mxu0 0.0
    %1377 = vmatpush1.msra.mxu0 0.0
    %1378 = vmatprep.subr.mxu0 0.0
    %1379 = vmatpush1.msra.mxu0 0.0
    %1380 = vmatprep.subr.mxu0 0.0
    %1381 = vmatpush1.msra.mxu0 0.0
    %1382 = vmatprep.subr.mxu0 0.0
    %1383 = vmatpush1.msra.mxu0 0.0
    %1384 = vmatprep.subr.mxu0 0.0
    %1385 = vmatpush1.msra.mxu0 0.0
    %1386 = vmatprep.subr.mxu0 0.0
    %1387 = vmatpush1.msra.mxu0 0.0
    %1388 = vmatprep.subr.mxu0 0.0
    %1389 = vmatpush1.msra.mxu0 0.0
    %1390 = vmatprep.subr.mxu0 0.0
    %1391 = vmatpush1.msra.mxu0 0.0
    %1392 = vmatprep.subr.mxu0 0.0
    %1393 = vmatpush1.msra.mxu0 0.0
    %1394 = vmatprep.subr.mxu0 0.0
    %1395 = vmatpush1.msra.mxu0 0.0
    %1396 = vmatprep.subr.mxu0 0.0
    %1397 = vmatpush1.msra.mxu0 0.0
    %1398 = vmatprep.subr.mxu0 0.0
    %1399 = vmatpush1.msra.mxu0 0.0
    %1400 = vmatprep.mubr.f32.mxu0 0.0
    %1401 = vmatmul.mubr.f32.gmra.mrb[0].mxu0 %v1263
    %v1402 = vpop.f32.mrb[0].mxu0
    %v1403 = vadd.f32 0.0, %v1402
    %v1404 = vpop.f32.mrb[0].mxu0
    %v1405 = vadd.f32 0.0, %v1404
    %1406 = vdwg.mxu0
    %v1411 = vrot.slane %v1332, 4
    %v1412 = vrot.slane %v1334, 4
    %v1413 = vrot.slane %v1403, 4
    %v1414 = vrot.slane %v1405, 4
    %v1419 = vadd.f32 %v1194, %v1411
    %v1420 = vadd.f32 %v1195, %v1412
    %v1421 = vadd.f32 %v1196, %v1413
    %v1422 = vadd.f32 %v1197, %v1414
    %v1423 = vld [vmem:[%s4] sm:$0xf]
    %v1425 = vlaneseq
    %v1426 = vshrl.u32 %v1425, 7
    %v1427 = vsub.s32 0, %v1426
    %v1428 = vrot.slane %v1423, %v1427
    %v1429 = vlaneseq
    %v1430 = vshrl.u32 %v1429, 7
    %v1431 = vsub.s32 1, %v1430
    %v1432 = vrot.slane %v1423, %v1431
    %v1433 = vlaneseq
    %v1434 = vshrl.u32 %v1433, 7
    %v1435 = vsub.s32 2, %v1434
    %v1436 = vrot.slane %v1423, %v1435
    %v1437 = vlaneseq
    %v1438 = vshrl.u32 %v1437, 7
    %v1439 = vsub.s32 3, %v1438
    %v1440 = vrot.slane %v1423, %v1439
    %v1445 = vadd.f32 %v1419, %v1428
    %v1446 = vadd.f32 %v1420, %v1432
    %v1447 = vadd.f32 %v1421, %v1436
    %v1448 = vadd.f32 %v1422, %v1440
    %v1449 = vxor.u32 %v1445, 2147483648
    %v1450 = vxor.u32 %v1446, 2147483648
    %v1451 = vxor.u32 %v1447, 2147483648
    %v1452 = vmul.f32 %v1449, 1.442695
    %v1453 = vpow.pop %v1452
    %v1454 = vmul.f32 %v1450, 1.442695
    %v1455 = vpow.pop %v1454
    %v1456 = vmul.f32 %v1451, 1.442695
    %v1457 = vpow.pop %v1456
    %v1458 = vadd.f32 %v1453, 1.0
    %v1459 = vadd.f32 %v1455, 1.0
    %v1460 = vadd.f32 %v1457, 1.0
    %v1461 = vrcp.pop %v1458
    %v1462 = vmul.f32 1.0, %v1461
    %v1463 = vrcp.pop %v1459
    %v1464 = vmul.f32 1.0, %v1463
    %v1465 = vrcp.pop %v1460
    %v1466 = vmul.f32 1.0, %v1465
    %v1467 = vtanh.pop %v1448
    %v1469 = vrot.slane %v1170, 6
    %v1471 = vmul.f32 %v1464, %v1469
    %v1472 = vmul.f32 %v1462, %v1467
    %v1473 = vadd.f32 %v1471, %v1472
    %v1474 = vtanh.pop %v1473
    %v1475 = vmul.f32 %v1466, %v1474
    %1476 = vst [vmem:[#allocation4] sm:$0x30] %v1475
    %v1477 = vld [vmem:[#allocation2] sm:$0xc0]
    %v1478 = vld [vmem:[#allocation2 + $0x8] sm:$0xc0]
    %v1479 = vld [vmem:[#allocation2 + $0x10] sm:$0xc0]
    %v1480 = vld [vmem:[#allocation2 + $0x18] sm:$0xc0]
    %v1481 = vld [vmem:[#allocation3] sm:$0x3]
    %v1482 = vld [vmem:[#allocation3 + $0x8] sm:$0x3]
    %v1483 = vld [vmem:[#allocation3 + $0x10] sm:$0x3]
    %v1484 = vld [vmem:[#allocation3 + $0x18] sm:$0x3]
    %v1489 = vrot.slane %v1481, 2
    %v1490 = vrot.slane %v1482, 2
    %v1491 = vrot.slane %v1483, 2
    %v1492 = vrot.slane %v1484, 2
    %v1497 = vadd.f32 %v1477, %v1489
    %v1498 = vadd.f32 %v1478, %v1490
    %v1499 = vadd.f32 %v1479, %v1491
    %v1500 = vadd.f32 %v1480, %v1492
    %v1501 = vld [vmem:[%s3] sm:$0xff]
    %v1502 = vld [vmem:[%s3 + $0x8] sm:$0xff]
    %v1503 = vld [vmem:[%s3 + $0x10] sm:$0xff]
    %v1504 = vld [vmem:[%s3 + $0x18] sm:$0xff]
    %v1505 = vld [vmem:[%s3 + $0x20] sm:$0xff]
    %v1506 = vld [vmem:[%s3 + $0x28] sm:$0xff]
    %v1507 = vld [vmem:[%s3 + $0x30] sm:$0xff]
    %v1508 = vld [vmem:[%s3 + $0x38] sm:$0xff]
    %v1509 = vld [vmem:[%s3 + $0x40] sm:$0xff]
    %v1510 = vld [vmem:[%s3 + $0x48] sm:$0xff]
    %v1511 = vld [vmem:[%s3 + $0x50] sm:$0xff]
    %v1512 = vld [vmem:[%s3 + $0x58] sm:$0xff]
    %v1513 = vld [vmem:[%s3 + $0x60] sm:$0xff]
    %v1514 = vld [vmem:[%s3 + $0x68] sm:$0xff]
    %v1515 = vld [vmem:[%s3 + $0x70] sm:$0xff]
    %v1516 = vld [vmem:[%s3 + $0x78] sm:$0xff]
    %v1517 = vld [vmem:[%s3 + $0x80] sm:$0xff]
    %v1518 = vld [vmem:[%s3 + $0x88] sm:$0xff]
    %v1519 = vld [vmem:[%s3 + $0x90] sm:$0xff]
    %v1520 = vld [vmem:[%s3 + $0x98] sm:$0xff]
    %v1521 = vld [vmem:[%s3 + $0xa0] sm:$0xff]
    %v1522 = vld [vmem:[%s3 + $0xa8] sm:$0xff]
    %v1523 = vld [vmem:[%s3 + $0xb0] sm:$0xff]
    %v1524 = vld [vmem:[%s3 + $0xb8] sm:$0xff]
    %v1525 = vld [vmem:[%s3 + $0xc0] sm:$0xff]
    %v1526 = vld [vmem:[%s3 + $0xc8] sm:$0xff]
    %v1527 = vld [vmem:[%s3 + $0xd0] sm:$0xff]
    %v1528 = vld [vmem:[%s3 + $0xd8] sm:$0xff]
    %v1529 = vld [vmem:[%s3 + $0xe0] sm:$0xff]
    %v1530 = vld [vmem:[%s3 + $0xe8] sm:$0xff]
    %v1531 = vld [vmem:[%s3 + $0xf0] sm:$0xff]
    %v1532 = vld [vmem:[%s3 + $0xf8] sm:$0xff]
    %v1533 = vld [vmem:[%s3 + $0x100] sm:$0xff]
    %v1534 = vld [vmem:[%s3 + $0x108] sm:$0xff]
    %v1535 = vld [vmem:[%s3 + $0x110] sm:$0xff]
    %v1536 = vld [vmem:[%s3 + $0x118] sm:$0xff]
    %v1537 = vld [vmem:[%s3 + $0x120] sm:$0xff]
    %v1538 = vld [vmem:[%s3 + $0x128] sm:$0xff]
    %v1539 = vld [vmem:[%s3 + $0x130] sm:$0xff]
    %v1540 = vld [vmem:[%s3 + $0x138] sm:$0xff]
    %v1541 = vld [vmem:[%s3 + $0x140] sm:$0xff]
    %v1542 = vld [vmem:[%s3 + $0x148] sm:$0xff]
    %v1543 = vld [vmem:[%s3 + $0x150] sm:$0xff]
    %v1544 = vld [vmem:[%s3 + $0x158] sm:$0xff]
    %v1545 = vld [vmem:[%s3 + $0x160] sm:$0xff]
    %v1546 = vld [vmem:[%s3 + $0x168] sm:$0xff]
    %v1547 = vld [vmem:[%s3 + $0x170] sm:$0xff]
    %v1548 = vld [vmem:[%s3 + $0x178] sm:$0xff]
    %v1549 = vld [vmem:[%s3 + $0x180] sm:$0xff]
    %v1550 = vld [vmem:[%s3 + $0x188] sm:$0xff]
    %v1551 = vld [vmem:[%s3 + $0x190] sm:$0xff]
    %v1552 = vld [vmem:[%s3 + $0x198] sm:$0xff]
    %v1553 = vld [vmem:[%s3 + $0x1a0] sm:$0xff]
    %v1554 = vld [vmem:[%s3 + $0x1a8] sm:$0xff]
    %v1555 = vld [vmem:[%s3 + $0x1b0] sm:$0xff]
    %v1556 = vld [vmem:[%s3 + $0x1b8] sm:$0xff]
    %v1557 = vld [vmem:[%s3 + $0x1c0] sm:$0xff]
    %v1558 = vld [vmem:[%s3 + $0x1c8] sm:$0xff]
    %v1559 = vld [vmem:[%s3 + $0x1d0] sm:$0xff]
    %v1560 = vld [vmem:[%s3 + $0x1d8] sm:$0xff]
    %v1561 = vld [vmem:[%s3 + $0x1e0] sm:$0xff]
    %v1562 = vld [vmem:[%s3 + $0x1e8] sm:$0xff]
    %v1563 = vld [vmem:[%s3 + $0x1f0] sm:$0xff]
    %v1564 = vld [vmem:[%s3 + $0x1f8] sm:$0xff]
    %v1566 = vrot.slane %v1475, 4
    %1568 = vmatprep.subr.mxu0 %v1502
    %1569 = vmatpush1.msra.mxu0 %v1501
    %1570 = vmatprep.subr.mxu0 %v1506
    %1571 = vmatpush1.msra.mxu0 %v1505
    %1572 = vmatprep.subr.mxu0 %v1510
    %1573 = vmatpush1.msra.mxu0 %v1509
    %1574 = vmatprep.subr.mxu0 %v1514
    %1575 = vmatpush1.msra.mxu0 %v1513
    %1576 = vmatprep.subr.mxu0 %v1518
    %1577 = vmatpush1.msra.mxu0 %v1517
    %1578 = vmatprep.subr.mxu0 %v1522
    %1579 = vmatpush1.msra.mxu0 %v1521
    %1580 = vmatprep.subr.mxu0 %v1526
    %1581 = vmatpush1.msra.mxu0 %v1525
    %1582 = vmatprep.subr.mxu0 %v1530
    %1583 = vmatpush1.msra.mxu0 %v1529
    %1584 = vmatprep.subr.mxu0 %v1534
    %1585 = vmatpush1.msra.mxu0 %v1533
    %1586 = vmatprep.subr.mxu0 %v1538
    %1587 = vmatpush1.msra.mxu0 %v1537
    %1588 = vmatprep.subr.mxu0 %v1542
    %1589 = vmatpush1.msra.mxu0 %v1541
    %1590 = vmatprep.subr.mxu0 %v1546
    %1591 = vmatpush1.msra.mxu0 %v1545
    %1592 = vmatprep.subr.mxu0 %v1550
    %1593 = vmatpush1.msra.mxu0 %v1549
    %1594 = vmatprep.subr.mxu0 %v1554
    %1595 = vmatpush1.msra.mxu0 %v1553
    %1596 = vmatprep.subr.mxu0 %v1558
    %1597 = vmatpush1.msra.mxu0 %v1557
    %1598 = vmatprep.subr.mxu0 %v1562
    %1599 = vmatpush1.msra.mxu0 %v1561
    %1600 = vmatprep.subr.mxu0 0.0
    %1601 = vmatpush1.msra.mxu0 0.0
    %1602 = vmatprep.subr.mxu0 0.0
    %1603 = vmatpush1.msra.mxu0 0.0
    %1604 = vmatprep.subr.mxu0 0.0
    %1605 = vmatpush1.msra.mxu0 0.0
    %1606 = vmatprep.subr.mxu0 0.0
    %1607 = vmatpush1.msra.mxu0 0.0
    %1608 = vmatprep.subr.mxu0 0.0
    %1609 = vmatpush1.msra.mxu0 0.0
    %1610 = vmatprep.subr.mxu0 0.0
    %1611 = vmatpush1.msra.mxu0 0.0
    %1612 = vmatprep.subr.mxu0 0.0
    %1613 = vmatpush1.msra.mxu0 0.0
    %1614 = vmatprep.subr.mxu0 0.0
    %1615 = vmatpush1.msra.mxu0 0.0
    %1616 = vmatprep.subr.mxu0 0.0
    %1617 = vmatpush1.msra.mxu0 0.0
    %1618 = vmatprep.subr.mxu0 0.0
    %1619 = vmatpush1.msra.mxu0 0.0
    %1620 = vmatprep.subr.mxu0 0.0
    %1621 = vmatpush1.msra.mxu0 0.0
    %1622 = vmatprep.subr.mxu0 0.0
    %1623 = vmatpush1.msra.mxu0 0.0
    %1624 = vmatprep.subr.mxu0 0.0
    %1625 = vmatpush1.msra.mxu0 0.0
    %1626 = vmatprep.subr.mxu0 0.0
    %1627 = vmatpush1.msra.mxu0 0.0
    %1628 = vmatprep.subr.mxu0 0.0
    %1629 = vmatpush1.msra.mxu0 0.0
    %1630 = vmatprep.subr.mxu0 0.0
    %1631 = vmatpush1.msra.mxu0 0.0
    %1632 = vmatprep.mubr.f32.mxu0 0.0
    %1633 = vmatmul.mubr.f32.gmra.mrb[0].mxu0 %v1566
    %v1634 = vpop.f32.mrb[0].mxu0
    %v1635 = vadd.f32 0.0, %v1634
    %v1636 = vpop.f32.mrb[0].mxu0
    %v1637 = vadd.f32 0.0, %v1636
    %1638 = vdwg.mxu0
    %1639 = vmatprep.subr.mxu0 %v1504
    %1640 = vmatpush1.msra.mxu0 %v1503
    %1641 = vmatprep.subr.mxu0 %v1508
    %1642 = vmatpush1.msra.mxu0 %v1507
    %1643 = vmatprep.subr.mxu0 %v1512
    %1644 = vmatpush1.msra.mxu0 %v1511
    %1645 = vmatprep.subr.mxu0 %v1516
    %1646 = vmatpush1.msra.mxu0 %v1515
    %1647 = vmatprep.subr.mxu0 %v1520
    %1648 = vmatpush1.msra.mxu0 %v1519
    %1649 = vmatprep.subr.mxu0 %v1524
    %1650 = vmatpush1.msra.mxu0 %v1523
    %1651 = vmatprep.subr.mxu0 %v1528
    %1652 = vmatpush1.msra.mxu0 %v1527
    %1653 = vmatprep.subr.mxu0 %v1532
    %1654 = vmatpush1.msra.mxu0 %v1531
    %1655 = vmatprep.subr.mxu0 %v1536
    %1656 = vmatpush1.msra.mxu0 %v1535
    %1657 = vmatprep.subr.mxu0 %v1540
    %1658 = vmatpush1.msra.mxu0 %v1539
    %1659 = vmatprep.subr.mxu0 %v1544
    %1660 = vmatpush1.msra.mxu0 %v1543
    %1661 = vmatprep.subr.mxu0 %v1548
    %1662 = vmatpush1.msra.mxu0 %v1547
    %1663 = vmatprep.subr.mxu0 %v1552
    %1664 = vmatpush1.msra.mxu0 %v1551
    %1665 = vmatprep.subr.mxu0 %v1556
    %1666 = vmatpush1.msra.mxu0 %v1555
    %1667 = vmatprep.subr.mxu0 %v1560
    %1668 = vmatpush1.msra.mxu0 %v1559
    %1669 = vmatprep.subr.mxu0 %v1564
    %1670 = vmatpush1.msra.mxu0 %v1563
    %1671 = vmatprep.subr.mxu0 0.0
    %1672 = vmatpush1.msra.mxu0 0.0
    %1673 = vmatprep.subr.mxu0 0.0
    %1674 = vmatpush1.msra.mxu0 0.0
    %1675 = vmatprep.subr.mxu0 0.0
    %1676 = vmatpush1.msra.mxu0 0.0
    %1677 = vmatprep.subr.mxu0 0.0
    %1678 = vmatpush1.msra.mxu0 0.0
    %1679 = vmatprep.subr.mxu0 0.0
    %1680 = vmatpush1.msra.mxu0 0.0
    %1681 = vmatprep.subr.mxu0 0.0
    %1682 = vmatpush1.msra.mxu0 0.0
    %1683 = vmatprep.subr.mxu0 0.0
    %1684 = vmatpush1.msra.mxu0 0.0
    %1685 = vmatprep.subr.mxu0 0.0
    %1686 = vmatpush1.msra.mxu0 0.0
    %1687 = vmatprep.subr.mxu0 0.0
    %1688 = vmatpush1.msra.mxu0 0.0
    %1689 = vmatprep.subr.mxu0 0.0
    %1690 = vmatpush1.msra.mxu0 0.0
    %1691 = vmatprep.subr.mxu0 0.0
    %1692 = vmatpush1.msra.mxu0 0.0
    %1693 = vmatprep.subr.mxu0 0.0
    %1694 = vmatpush1.msra.mxu0 0.0
    %1695 = vmatprep.subr.mxu0 0.0
    %1696 = vmatpush1.msra.mxu0 0.0
    %1697 = vmatprep.subr.mxu0 0.0
    %1698 = vmatpush1.msra.mxu0 0.0
    %1699 = vmatprep.subr.mxu0 0.0
    %1700 = vmatpush1.msra.mxu0 0.0
    %1701 = vmatprep.subr.mxu0 0.0
    %1702 = vmatpush1.msra.mxu0 0.0
    %1703 = vmatprep.mubr.f32.mxu0 0.0
    %1704 = vmatmul.mubr.f32.gmra.mrb[0].mxu0 %v1566
    %v1705 = vpop.f32.mrb[0].mxu0
    %v1706 = vadd.f32 0.0, %v1705
    %v1707 = vpop.f32.mrb[0].mxu0
    %v1708 = vadd.f32 0.0, %v1707
    %1709 = vdwg.mxu0
    %v1714 = vrot.slane %v1635, 2
    %v1715 = vrot.slane %v1637, 2
    %v1716 = vrot.slane %v1706, 2
    %v1717 = vrot.slane %v1708, 2
    %v1722 = vadd.f32 %v1497, %v1714
    %v1723 = vadd.f32 %v1498, %v1715
    %v1724 = vadd.f32 %v1499, %v1716
    %v1725 = vadd.f32 %v1500, %v1717
    %v1726 = vld [vmem:[%s4] sm:$0xf]
    %v1728 = vlaneseq
    %v1729 = vshrl.u32 %v1728, 7
    %v1730 = vsub.s32 0, %v1729
    %v1731 = vrot.slane %v1726, %v1730
    %v1732 = vlaneseq
    %v1733 = vshrl.u32 %v1732, 7
    %v1734 = vsub.s32 1, %v1733
    %v1735 = vrot.slane %v1726, %v1734
    %v1736 = vlaneseq
    %v1737 = vshrl.u32 %v1736, 7
    %v1738 = vsub.s32 2, %v1737
    %v1739 = vrot.slane %v1726, %v1738
    %v1740 = vlaneseq
    %v1741 = vshrl.u32 %v1740, 7
    %v1742 = vsub.s32 3, %v1741
    %v1743 = vrot.slane %v1726, %v1742
    %v1748 = vadd.f32 %v1722, %v1731
    %v1749 = vadd.f32 %v1723, %v1735
    %v1750 = vadd.f32 %v1724, %v1739
    %v1751 = vadd.f32 %v1725, %v1743
    %v1752 = vxor.u32 %v1748, 2147483648
    %v1753 = vxor.u32 %v1749, 2147483648
    %v1754 = vxor.u32 %v1750, 2147483648
    %v1755 = vmul.f32 %v1752, 1.442695
    %v1756 = vpow.pop %v1755
    %v1757 = vmul.f32 %v1753, 1.442695
    %v1758 = vpow.pop %v1757
    %v1759 = vmul.f32 %v1754, 1.442695
    %v1760 = vpow.pop %v1759
    %v1761 = vadd.f32 %v1756, 1.0
    %v1762 = vadd.f32 %v1758, 1.0
    %v1763 = vadd.f32 %v1760, 1.0
    %v1764 = vrcp.pop %v1761
    %v1765 = vmul.f32 1.0, %v1764
    %v1766 = vrcp.pop %v1762
    %v1767 = vmul.f32 1.0, %v1766
    %v1768 = vrcp.pop %v1763
    %v1769 = vmul.f32 1.0, %v1768
    %v1770 = vtanh.pop %v1751
    %v1772 = vrot.slane %v1473, 6
    %v1774 = vmul.f32 %v1767, %v1772
    %v1775 = vmul.f32 %v1765, %v1770
    %v1776 = vadd.f32 %v1774, %v1775
    %v1777 = vtanh.pop %v1776
    %v1778 = vmul.f32 %v1769, %v1777
    %1779 = vst [vmem:[#allocation4] sm:$0xc0] %v1778
    %v1780 = vld [vmem:[#allocation4] sm:$0xff]
    %v1781 = vld [vmem:[%s5] sm:$0xff]
    %v1782 = vld [vmem:[%s5 + $0x8] sm:$0xff]
    %v1783 = vld [vmem:[%s5 + $0x10] sm:$0xff]
    %v1784 = vld [vmem:[%s5 + $0x18] sm:$0xff]
    %v1785 = vld [vmem:[%s5 + $0x20] sm:$0xff]
    %v1786 = vld [vmem:[%s5 + $0x28] sm:$0xff]
    %v1787 = vld [vmem:[%s5 + $0x30] sm:$0xff]
    %v1788 = vld [vmem:[%s5 + $0x38] sm:$0xff]
    %v1789 = vld [vmem:[%s5 + $0x40] sm:$0xff]
    %v1790 = vld [vmem:[%s5 + $0x48] sm:$0xff]
    %v1791 = vld [vmem:[%s5 + $0x50] sm:$0xff]
    %v1792 = vld [vmem:[%s5 + $0x58] sm:$0xff]
    %v1793 = vld [vmem:[%s5 + $0x60] sm:$0xff]
    %v1794 = vld [vmem:[%s5 + $0x68] sm:$0xff]
    %v1795 = vld [vmem:[%s5 + $0x70] sm:$0xff]
    %v1796 = vld [vmem:[%s5 + $0x78] sm:$0xff]
    %v1797 = vld [vmem:[%s5 + $0x80] sm:$0xff]
    %v1798 = vld [vmem:[%s5 + $0x88] sm:$0xff]
    %v1799 = vld [vmem:[%s5 + $0x90] sm:$0xff]
    %v1800 = vld [vmem:[%s5 + $0x98] sm:$0xff]
    %v1801 = vld [vmem:[%s5 + $0xa0] sm:$0xff]
    %v1802 = vld [vmem:[%s5 + $0xa8] sm:$0xff]
    %v1803 = vld [vmem:[%s5 + $0xb0] sm:$0xff]
    %v1804 = vld [vmem:[%s5 + $0xb8] sm:$0xff]
    %v1805 = vld [vmem:[%s5 + $0xc0] sm:$0xff]
    %v1806 = vld [vmem:[%s5 + $0xc8] sm:$0xff]
    %v1807 = vld [vmem:[%s5 + $0xd0] sm:$0xff]
    %v1808 = vld [vmem:[%s5 + $0xd8] sm:$0xff]
    %v1809 = vld [vmem:[%s5 + $0xe0] sm:$0xff]
    %v1810 = vld [vmem:[%s5 + $0xe8] sm:$0xff]
    %v1811 = vld [vmem:[%s5 + $0xf0] sm:$0xff]
    %v1812 = vld [vmem:[%s5 + $0xf8] sm:$0xff]
    %v1813 = vld [vmem:[%s5 + $0x100] sm:$0xff]
    %v1814 = vld [vmem:[%s5 + $0x108] sm:$0xff]
    %v1815 = vld [vmem:[%s5 + $0x110] sm:$0xff]
    %v1816 = vld [vmem:[%s5 + $0x118] sm:$0xff]
    %v1817 = vld [vmem:[%s5 + $0x120] sm:$0xff]
    %v1818 = vld [vmem:[%s5 + $0x128] sm:$0xff]
    %v1819 = vld [vmem:[%s5 + $0x130] sm:$0xff]
    %v1820 = vld [vmem:[%s5 + $0x138] sm:$0xff]
    %v1821 = vld [vmem:[%s5 + $0x140] sm:$0xff]
    %v1822 = vld [vmem:[%s5 + $0x148] sm:$0xff]
    %v1823 = vld [vmem:[%s5 + $0x150] sm:$0xff]
    %v1824 = vld [vmem:[%s5 + $0x158] sm:$0xff]
    %v1825 = vld [vmem:[%s5 + $0x160] sm:$0xff]
    %v1826 = vld [vmem:[%s5 + $0x168] sm:$0xff]
    %v1827 = vld [vmem:[%s5 + $0x170] sm:$0xff]
    %v1828 = vld [vmem:[%s5 + $0x178] sm:$0xff]
    %v1829 = vld [vmem:[%s5 + $0x180] sm:$0xff]
    %v1830 = vld [vmem:[%s5 + $0x188] sm:$0xff]
    %v1831 = vld [vmem:[%s5 + $0x190] sm:$0xff]
    %v1832 = vld [vmem:[%s5 + $0x198] sm:$0xff]
    %v1833 = vld [vmem:[%s5 + $0x1a0] sm:$0xff]
    %v1834 = vld [vmem:[%s5 + $0x1a8] sm:$0xff]
    %v1835 = vld [vmem:[%s5 + $0x1b0] sm:$0xff]
    %v1836 = vld [vmem:[%s5 + $0x1b8] sm:$0xff]
    %v1837 = vld [vmem:[%s5 + $0x1c0] sm:$0xff]
    %v1838 = vld [vmem:[%s5 + $0x1c8] sm:$0xff]
    %v1839 = vld [vmem:[%s5 + $0x1d0] sm:$0xff]
    %v1840 = vld [vmem:[%s5 + $0x1d8] sm:$0xff]
    %v1841 = vld [vmem:[%s5 + $0x1e0] sm:$0xff]
    %v1842 = vld [vmem:[%s5 + $0x1e8] sm:$0xff]
    %v1843 = vld [vmem:[%s5 + $0x1f0] sm:$0xff]
    %v1844 = vld [vmem:[%s5 + $0x1f8] sm:$0xff]
    %1845 = vmatprep.subr.mxu0 %v1782
    %1846 = vmatpush1.msra.mxu0 %v1781
    %1847 = vmatprep.subr.mxu0 %v1786
    %1848 = vmatpush1.msra.mxu0 %v1785
    %1849 = vmatprep.subr.mxu0 %v1790
    %1850 = vmatpush1.msra.mxu0 %v1789
    %1851 = vmatprep.subr.mxu0 %v1794
    %1852 = vmatpush1.msra.mxu0 %v1793
    %1853 = vmatprep.subr.mxu0 %v1798
    %1854 = vmatpush1.msra.mxu0 %v1797
    %1855 = vmatprep.subr.mxu0 %v1802
    %1856 = vmatpush1.msra.mxu0 %v1801
    %1857 = vmatprep.subr.mxu0 %v1806
    %1858 = vmatpush1.msra.mxu0 %v1805
    %1859 = vmatprep.subr.mxu0 %v1810
    %1860 = vmatpush1.msra.mxu0 %v1809
    %1861 = vmatprep.subr.mxu0 %v1814
    %1862 = vmatpush1.msra.mxu0 %v1813
    %1863 = vmatprep.subr.mxu0 %v1818
    %1864 = vmatpush1.msra.mxu0 %v1817
    %1865 = vmatprep.subr.mxu0 %v1822
    %1866 = vmatpush1.msra.mxu0 %v1821
    %1867 = vmatprep.subr.mxu0 %v1826
    %1868 = vmatpush1.msra.mxu0 %v1825
    %1869 = vmatprep.subr.mxu0 %v1830
    %1870 = vmatpush1.msra.mxu0 %v1829
    %1871 = vmatprep.subr.mxu0 %v1834
    %1872 = vmatpush1.msra.mxu0 %v1833
    %1873 = vmatprep.subr.mxu0 %v1838
    %1874 = vmatpush1.msra.mxu0 %v1837
    %1875 = vmatprep.subr.mxu0 %v1842
    %1876 = vmatpush1.msra.mxu0 %v1841
    %1877 = vmatprep.subr.mxu0 0.0
    %1878 = vmatpush1.msra.mxu0 0.0
    %1879 = vmatprep.subr.mxu0 0.0
    %1880 = vmatpush1.msra.mxu0 0.0
    %1881 = vmatprep.subr.mxu0 0.0
    %1882 = vmatpush1.msra.mxu0 0.0
    %1883 = vmatprep.subr.mxu0 0.0
    %1884 = vmatpush1.msra.mxu0 0.0
    %1885 = vmatprep.subr.mxu0 0.0
    %1886 = vmatpush1.msra.mxu0 0.0
    %1887 = vmatprep.subr.mxu0 0.0
    %1888 = vmatpush1.msra.mxu0 0.0
    %1889 = vmatprep.subr.mxu0 0.0
    %1890 = vmatpush1.msra.mxu0 0.0
    %1891 = vmatprep.subr.mxu0 0.0
    %1892 = vmatpush1.msra.mxu0 0.0
    %1893 = vmatprep.subr.mxu0 0.0
    %1894 = vmatpush1.msra.mxu0 0.0
    %1895 = vmatprep.subr.mxu0 0.0
    %1896 = vmatpush1.msra.mxu0 0.0
    %1897 = vmatprep.subr.mxu0 0.0
    %1898 = vmatpush1.msra.mxu0 0.0
    %1899 = vmatprep.subr.mxu0 0.0
    %1900 = vmatpush1.msra.mxu0 0.0
    %1901 = vmatprep.subr.mxu0 0.0
    %1902 = vmatpush1.msra.mxu0 0.0
    %1903 = vmatprep.subr.mxu0 0.0
    %1904 = vmatpush1.msra.mxu0 0.0
    %1905 = vmatprep.subr.mxu0 0.0
    %1906 = vmatpush1.msra.mxu0 0.0
    %1907 = vmatprep.subr.mxu0 0.0
    %1908 = vmatpush1.msra.mxu0 0.0
    %1909 = vmatprep.mubr.f32.mxu0 0.0
    %1910 = vmatmul.mubr.f32.gmra.mrb[0].mxu0 %v1780
    %v1911 = vpop.f32.mrb[0].mxu0
    %v1912 = vadd.f32 0.0, %v1911
    %v1913 = vpop.f32.mrb[0].mxu0
    %v1914 = vadd.f32 0.0, %v1913
    %1915 = vdwg.mxu0
    %1916 = vmatprep.subr.mxu0 %v1784
    %1917 = vmatpush1.msra.mxu0 %v1783
    %1918 = vmatprep.subr.mxu0 %v1788
    %1919 = vmatpush1.msra.mxu0 %v1787
    %1920 = vmatprep.subr.mxu0 %v1792
    %1921 = vmatpush1.msra.mxu0 %v1791
    %1922 = vmatprep.subr.mxu0 %v1796
    %1923 = vmatpush1.msra.mxu0 %v1795
    %1924 = vmatprep.subr.mxu0 %v1800
    %1925 = vmatpush1.msra.mxu0 %v1799
    %1926 = vmatprep.subr.mxu0 %v1804
    %1927 = vmatpush1.msra.mxu0 %v1803
    %1928 = vmatprep.subr.mxu0 %v1808
    %1929 = vmatpush1.msra.mxu0 %v1807
    %1930 = vmatprep.subr.mxu0 %v1812
    %1931 = vmatpush1.msra.mxu0 %v1811
    %1932 = vmatprep.subr.mxu0 %v1816
    %1933 = vmatpush1.msra.mxu0 %v1815
    %1934 = vmatprep.subr.mxu0 %v1820
    %1935 = vmatpush1.msra.mxu0 %v1819
    %1936 = vmatprep.subr.mxu0 %v1824
    %1937 = vmatpush1.msra.mxu0 %v1823
    %1938 = vmatprep.subr.mxu0 %v1828
    %1939 = vmatpush1.msra.mxu0 %v1827
    %1940 = vmatprep.subr.mxu0 %v1832
    %1941 = vmatpush1.msra.mxu0 %v1831
    %1942 = vmatprep.subr.mxu0 %v1836
    %1943 = vmatpush1.msra.mxu0 %v1835
    %1944 = vmatprep.subr.mxu0 %v1840
    %1945 = vmatpush1.msra.mxu0 %v1839
    %1946 = vmatprep.subr.mxu0 %v1844
    %1947 = vmatpush1.msra.mxu0 %v1843
    %1948 = vmatprep.subr.mxu0 0.0
    %1949 = vmatpush1.msra.mxu0 0.0
    %1950 = vmatprep.subr.mxu0 0.0
    %1951 = vmatpush1.msra.mxu0 0.0
    %1952 = vmatprep.subr.mxu0 0.0
    %1953 = vmatpush1.msra.mxu0 0.0
    %1954 = vmatprep.subr.mxu0 0.0
    %1955 = vmatpush1.msra.mxu0 0.0
    %1956 = vmatprep.subr.mxu0 0.0
    %1957 = vmatpush1.msra.mxu0 0.0
    %1958 = vmatprep.subr.mxu0 0.0
    %1959 = vmatpush1.msra.mxu0 0.0
    %1960 = vmatprep.subr.mxu0 0.0
    %1961 = vmatpush1.msra.mxu0 0.0
    %1962 = vmatprep.subr.mxu0 0.0
    %1963 = vmatpush1.msra.mxu0 0.0
    %1964 = vmatprep.subr.mxu0 0.0
    %1965 = vmatpush1.msra.mxu0 0.0
    %1966 = vmatprep.subr.mxu0 0.0
    %1967 = vmatpush1.msra.mxu0 0.0
    %1968 = vmatprep.subr.mxu0 0.0
    %1969 = vmatpush1.msra.mxu0 0.0
    %1970 = vmatprep.subr.mxu0 0.0
    %1971 = vmatpush1.msra.mxu0 0.0
    %1972 = vmatprep.subr.mxu0 0.0
    %1973 = vmatpush1.msra.mxu0 0.0
    %1974 = vmatprep.subr.mxu0 0.0
    %1975 = vmatpush1.msra.mxu0 0.0
    %1976 = vmatprep.subr.mxu0 0.0
    %1977 = vmatpush1.msra.mxu0 0.0
    %1978 = vmatprep.subr.mxu0 0.0
    %1979 = vmatpush1.msra.mxu0 0.0
    %1980 = vmatprep.mubr.f32.mxu0 0.0
    %1981 = vmatmul.mubr.f32.gmra.mrb[0].mxu0 %v1780
    %v1982 = vpop.f32.mrb[0].mxu0
    %v1983 = vadd.f32 0.0, %v1982
    %v1984 = vpop.f32.mrb[0].mxu0
    %v1985 = vadd.f32 0.0, %v1984
    %1986 = vdwg.mxu0
    %1987 = vst [vmem:[#allocation5] sm:$0xff] %v1912
    %1988 = vst [vmem:[#allocation5 + $0x8] sm:$0xff] %v1914
    %1989 = vst [vmem:[#allocation5 + $0x10] sm:$0xff] %v1983
    %1990 = vst [vmem:[#allocation5 + $0x18] sm:$0xff] %v1985
    %v1991 = vld [vmem:[%s6] sm:$0xff]
    %v1992 = vld [vmem:[%s6 + $0x8] sm:$0xff]
    %v1993 = vld [vmem:[%s6 + $0x10] sm:$0xff]
    %v1994 = vld [vmem:[%s6 + $0x18] sm:$0xff]
    %v1995 = vld [vmem:[%s6 + $0x20] sm:$0xff]
    %v1996 = vld [vmem:[%s6 + $0x28] sm:$0xff]
    %v1997 = vld [vmem:[%s6 + $0x30] sm:$0xff]
    %v1998 = vld [vmem:[%s6 + $0x38] sm:$0xff]
    %v1999 = vld [vmem:[%s6 + $0x40] sm:$0xff]
    %v2000 = vld [vmem:[%s6 + $0x48] sm:$0xff]
    %v2001 = vld [vmem:[%s6 + $0x50] sm:$0xff]
    %v2002 = vld [vmem:[%s6 + $0x58] sm:$0xff]
    %v2003 = vld [vmem:[%s6 + $0x60] sm:$0xff]
    %v2004 = vld [vmem:[%s6 + $0x68] sm:$0xff]
    %v2005 = vld [vmem:[%s6 + $0x70] sm:$0xff]
    %v2006 = vld [vmem:[%s6 + $0x78] sm:$0xff]
    %v2007 = vld [vmem:[%s6 + $0x80] sm:$0xff]
    %v2008 = vld [vmem:[%s6 + $0x88] sm:$0xff]
    %v2009 = vld [vmem:[%s6 + $0x90] sm:$0xff]
    %v2010 = vld [vmem:[%s6 + $0x98] sm:$0xff]
    %v2011 = vld [vmem:[%s6 + $0xa0] sm:$0xff]
    %v2012 = vld [vmem:[%s6 + $0xa8] sm:$0xff]
    %v2013 = vld [vmem:[%s6 + $0xb0] sm:$0xff]
    %v2014 = vld [vmem:[%s6 + $0xb8] sm:$0xff]
    %v2015 = vld [vmem:[%s6 + $0xc0] sm:$0xff]
    %v2016 = vld [vmem:[%s6 + $0xc8] sm:$0xff]
    %v2017 = vld [vmem:[%s6 + $0xd0] sm:$0xff]
    %v2018 = vld [vmem:[%s6 + $0xd8] sm:$0xff]
    %v2019 = vld [vmem:[%s6 + $0xe0] sm:$0xff]
    %v2020 = vld [vmem:[%s6 + $0xe8] sm:$0xff]
    %v2021 = vld [vmem:[%s6 + $0xf0] sm:$0xff]
    %v2022 = vld [vmem:[%s6 + $0xf8] sm:$0xff]
    %v2023 = vld [vmem:[%s6 + $0x100] sm:$0xff]
    %v2024 = vld [vmem:[%s6 + $0x108] sm:$0xff]
    %v2025 = vld [vmem:[%s6 + $0x110] sm:$0xff]
    %v2026 = vld [vmem:[%s6 + $0x118] sm:$0xff]
    %v2027 = vld [vmem:[%s6 + $0x120] sm:$0xff]
    %v2028 = vld [vmem:[%s6 + $0x128] sm:$0xff]
    %v2029 = vld [vmem:[%s6 + $0x130] sm:$0xff]
    %v2030 = vld [vmem:[%s6 + $0x138] sm:$0xff]
    %v2031 = vld [vmem:[%s6 + $0x140] sm:$0xff]
    %v2032 = vld [vmem:[%s6 + $0x148] sm:$0xff]
    %v2033 = vld [vmem:[%s6 + $0x150] sm:$0xff]
    %v2034 = vld [vmem:[%s6 + $0x158] sm:$0xff]
    %v2035 = vld [vmem:[%s6 + $0x160] sm:$0xff]
    %v2036 = vld [vmem:[%s6 + $0x168] sm:$0xff]
    %v2037 = vld [vmem:[%s6 + $0x170] sm:$0xff]
    %v2038 = vld [vmem:[%s6 + $0x178] sm:$0xff]
    %v2039 = vld [vmem:[%s6 + $0x180] sm:$0xff]
    %v2040 = vld [vmem:[%s6 + $0x188] sm:$0xff]
    %v2041 = vld [vmem:[%s6 + $0x190] sm:$0xff]
    %v2042 = vld [vmem:[%s6 + $0x198] sm:$0xff]
    %v2043 = vld [vmem:[%s6 + $0x1a0] sm:$0xff]
    %v2044 = vld [vmem:[%s6 + $0x1a8] sm:$0xff]
    %v2045 = vld [vmem:[%s6 + $0x1b0] sm:$0xff]
    %v2046 = vld [vmem:[%s6 + $0x1b8] sm:$0xff]
    %v2047 = vld [vmem:[%s6 + $0x1c0] sm:$0xff]
    %v2048 = vld [vmem:[%s6 + $0x1c8] sm:$0xff]
    %v2049 = vld [vmem:[%s6 + $0x1d0] sm:$0xff]
    %v2050 = vld [vmem:[%s6 + $0x1d8] sm:$0xff]
    %v2051 = vld [vmem:[%s6 + $0x1e0] sm:$0xff]
    %v2052 = vld [vmem:[%s6 + $0x1e8] sm:$0xff]
    %v2053 = vld [vmem:[%s6 + $0x1f0] sm:$0xff]
    %v2054 = vld [vmem:[%s6 + $0x1f8] sm:$0xff]
    %2055 = vmatprep.subr.mxu0 %v1992
    %2056 = vmatpush1.msra.mxu0 %v1991
    %2057 = vmatprep.subr.mxu0 %v1996
    %2058 = vmatpush1.msra.mxu0 %v1995
    %2059 = vmatprep.subr.mxu0 %v2000
    %2060 = vmatpush1.msra.mxu0 %v1999
    %2061 = vmatprep.subr.mxu0 %v2004
    %2062 = vmatpush1.msra.mxu0 %v2003
    %2063 = vmatprep.subr.mxu0 %v2008
    %2064 = vmatpush1.msra.mxu0 %v2007
    %2065 = vmatprep.subr.mxu0 %v2012
    %2066 = vmatpush1.msra.mxu0 %v2011
    %2067 = vmatprep.subr.mxu0 %v2016
    %2068 = vmatpush1.msra.mxu0 %v2015
    %2069 = vmatprep.subr.mxu0 %v2020
    %2070 = vmatpush1.msra.mxu0 %v2019
    %2071 = vmatprep.subr.mxu0 %v2024
    %2072 = vmatpush1.msra.mxu0 %v2023
    %2073 = vmatprep.subr.mxu0 %v2028
    %2074 = vmatpush1.msra.mxu0 %v2027
    %2075 = vmatprep.subr.mxu0 %v2032
    %2076 = vmatpush1.msra.mxu0 %v2031
    %2077 = vmatprep.subr.mxu0 %v2036
    %2078 = vmatpush1.msra.mxu0 %v2035
    %2079 = vmatprep.subr.mxu0 %v2040
    %2080 = vmatpush1.msra.mxu0 %v2039
    %2081 = vmatprep.subr.mxu0 %v2044
    %2082 = vmatpush1.msra.mxu0 %v2043
    %2083 = vmatprep.subr.mxu0 %v2048
    %2084 = vmatpush1.msra.mxu0 %v2047
    %2085 = vmatprep.subr.mxu0 %v2052
    %2086 = vmatpush1.msra.mxu0 %v2051
    %2087 = vmatprep.subr.mxu0 0.0
    %2088 = vmatpush1.msra.mxu0 0.0
    %2089 = vmatprep.subr.mxu0 0.0
    %2090 = vmatpush1.msra.mxu0 0.0
    %2091 = vmatprep.subr.mxu0 0.0
    %2092 = vmatpush1.msra.mxu0 0.0
    %2093 = vmatprep.subr.mxu0 0.0
    %2094 = vmatpush1.msra.mxu0 0.0
    %2095 = vmatprep.subr.mxu0 0.0
    %2096 = vmatpush1.msra.mxu0 0.0
    %2097 = vmatprep.subr.mxu0 0.0
    %2098 = vmatpush1.msra.mxu0 0.0
    %2099 = vmatprep.subr.mxu0 0.0
    %2100 = vmatpush1.msra.mxu0 0.0
    %2101 = vmatprep.subr.mxu0 0.0
    %2102 = vmatpush1.msra.mxu0 0.0
    %2103 = vmatprep.subr.mxu0 0.0
    %2104 = vmatpush1.msra.mxu0 0.0
    %2105 = vmatprep.subr.mxu0 0.0
    %2106 = vmatpush1.msra.mxu0 0.0
    %2107 = vmatprep.subr.mxu0 0.0
    %2108 = vmatpush1.msra.mxu0 0.0
    %2109 = vmatprep.subr.mxu0 0.0
    %2110 = vmatpush1.msra.mxu0 0.0
    %2111 = vmatprep.subr.mxu0 0.0
    %2112 = vmatpush1.msra.mxu0 0.0
    %2113 = vmatprep.subr.mxu0 0.0
    %2114 = vmatpush1.msra.mxu0 0.0
    %2115 = vmatprep.subr.mxu0 0.0
    %2116 = vmatpush1.msra.mxu0 0.0
    %2117 = vmatprep.subr.mxu0 0.0
    %2118 = vmatpush1.msra.mxu0 0.0
    %2119 = vmatprep.mubr.f32.mxu0 0.0
    %2120 = vmatmul.mubr.f32.gmra.mrb[0].mxu0 %v1780
    %v2121 = vpop.f32.mrb[0].mxu0
    %v2122 = vadd.f32 0.0, %v2121
    %v2123 = vpop.f32.mrb[0].mxu0
    %v2124 = vadd.f32 0.0, %v2123
    %2125 = vdwg.mxu0
    %2126 = vmatprep.subr.mxu0 %v1994
    %2127 = vmatpush1.msra.mxu0 %v1993
    %2128 = vmatprep.subr.mxu0 %v1998
    %2129 = vmatpush1.msra.mxu0 %v1997
    %2130 = vmatprep.subr.mxu0 %v2002
    %2131 = vmatpush1.msra.mxu0 %v2001
    %2132 = vmatprep.subr.mxu0 %v2006
    %2133 = vmatpush1.msra.mxu0 %v2005
    %2134 = vmatprep.subr.mxu0 %v2010
    %2135 = vmatpush1.msra.mxu0 %v2009
    %2136 = vmatprep.subr.mxu0 %v2014
    %2137 = vmatpush1.msra.mxu0 %v2013
    %2138 = vmatprep.subr.mxu0 %v2018
    %2139 = vmatpush1.msra.mxu0 %v2017
    %2140 = vmatprep.subr.mxu0 %v2022
    %2141 = vmatpush1.msra.mxu0 %v2021
    %2142 = vmatprep.subr.mxu0 %v2026
    %2143 = vmatpush1.msra.mxu0 %v2025
    %2144 = vmatprep.subr.mxu0 %v2030
    %2145 = vmatpush1.msra.mxu0 %v2029
    %2146 = vmatprep.subr.mxu0 %v2034
    %2147 = vmatpush1.msra.mxu0 %v2033
    %2148 = vmatprep.subr.mxu0 %v2038
    %2149 = vmatpush1.msra.mxu0 %v2037
    %2150 = vmatprep.subr.mxu0 %v2042
    %2151 = vmatpush1.msra.mxu0 %v2041
    %2152 = vmatprep.subr.mxu0 %v2046
    %2153 = vmatpush1.msra.mxu0 %v2045
    %2154 = vmatprep.subr.mxu0 %v2050
    %2155 = vmatpush1.msra.mxu0 %v2049
    %2156 = vmatprep.subr.mxu0 %v2054
    %2157 = vmatpush1.msra.mxu0 %v2053
    %2158 = vmatprep.subr.mxu0 0.0
    %2159 = vmatpush1.msra.mxu0 0.0
    %2160 = vmatprep.subr.mxu0 0.0
    %2161 = vmatpush1.msra.mxu0 0.0
    %2162 = vmatprep.subr.mxu0 0.0
    %2163 = vmatpush1.msra.mxu0 0.0
    %2164 = vmatprep.subr.mxu0 0.0
    %2165 = vmatpush1.msra.mxu0 0.0
    %2166 = vmatprep.subr.mxu0 0.0
    %2167 = vmatpush1.msra.mxu0 0.0
    %2168 = vmatprep.subr.mxu0 0.0
    %2169 = vmatpush1.msra.mxu0 0.0
    %2170 = vmatprep.subr.mxu0 0.0
    %2171 = vmatpush1.msra.mxu0 0.0
    %2172 = vmatprep.subr.mxu0 0.0
    %2173 = vmatpush1.msra.mxu0 0.0
    %2174 = vmatprep.subr.mxu0 0.0
    %2175 = vmatpush1.msra.mxu0 0.0
    %2176 = vmatprep.subr.mxu0 0.0
    %2177 = vmatpush1.msra.mxu0 0.0
    %2178 = vmatprep.subr.mxu0 0.0
    %2179 = vmatpush1.msra.mxu0 0.0
    %2180 = vmatprep.subr.mxu0 0.0
    %2181 = vmatpush1.msra.mxu0 0.0
    %2182 = vmatprep.subr.mxu0 0.0
    %2183 = vmatpush1.msra.mxu0 0.0
    %2184 = vmatprep.subr.mxu0 0.0
    %2185 = vmatpush1.msra.mxu0 0.0
    %2186 = vmatprep.subr.mxu0 0.0
    %2187 = vmatpush1.msra.mxu0 0.0
    %2188 = vmatprep.subr.mxu0 0.0
    %2189 = vmatpush1.msra.mxu0 0.0
    %2190 = vmatprep.mubr.f32.mxu0 0.0
    %2191 = vmatmul.mubr.f32.gmra.mrb[0].mxu0 %v1780
    %v2192 = vpop.f32.mrb[0].mxu0
    %v2193 = vadd.f32 0.0, %v2192
    %v2194 = vpop.f32.mrb[0].mxu0
    %v2195 = vadd.f32 0.0, %v2194
    %2196 = vdwg.mxu0
    %2197 = vst [vmem:[#allocation6] sm:$0xff] %v2122
    %2198 = vst [vmem:[#allocation6 + $0x8] sm:$0xff] %v2124
    %2199 = vst [vmem:[#allocation6 + $0x10] sm:$0xff] %v2193
    %2200 = vst [vmem:[#allocation6 + $0x18] sm:$0xff] %v2195
    %v2201 = vld [vmem:[#allocation5] sm:$0x3]
    %v2202 = vld [vmem:[#allocation5 + $0x8] sm:$0x3]
    %v2203 = vld [vmem:[#allocation5 + $0x10] sm:$0x3]
    %v2204 = vld [vmem:[#allocation5 + $0x18] sm:$0x3]
    %v2205 = vld [vmem:[#allocation6] sm:$0xc0]
    %v2206 = vld [vmem:[#allocation6 + $0x8] sm:$0xc0]
    %v2207 = vld [vmem:[#allocation6 + $0x10] sm:$0xc0]
    %v2208 = vld [vmem:[#allocation6 + $0x18] sm:$0xc0]
    %v2213 = vrot.slane %v2205, 6
    %v2214 = vrot.slane %v2206, 6
    %v2215 = vrot.slane %v2207, 6
    %v2216 = vrot.slane %v2208, 6
    %v2221 = vadd.f32 %v2201, %v2213
    %v2222 = vadd.f32 %v2202, %v2214
    %v2223 = vadd.f32 %v2203, %v2215
    %v2224 = vadd.f32 %v2204, %v2216
    %v2225 = vld [vmem:[%s7] sm:$0xff]
    %v2226 = vld [vmem:[%s7 + $0x8] sm:$0xff]
    %v2227 = vld [vmem:[%s7 + $0x10] sm:$0xff]
    %v2228 = vld [vmem:[%s7 + $0x18] sm:$0xff]
    %v2229 = vld [vmem:[%s7 + $0x20] sm:$0xff]
    %v2230 = vld [vmem:[%s7 + $0x28] sm:$0xff]
    %v2231 = vld [vmem:[%s7 + $0x30] sm:$0xff]
    %v2232 = vld [vmem:[%s7 + $0x38] sm:$0xff]
    %v2233 = vld [vmem:[%s7 + $0x40] sm:$0xff]
    %v2234 = vld [vmem:[%s7 + $0x48] sm:$0xff]
    %v2235 = vld [vmem:[%s7 + $0x50] sm:$0xff]
    %v2236 = vld [vmem:[%s7 + $0x58] sm:$0xff]
    %v2237 = vld [vmem:[%s7 + $0x60] sm:$0xff]
    %v2238 = vld [vmem:[%s7 + $0x68] sm:$0xff]
    %v2239 = vld [vmem:[%s7 + $0x70] sm:$0xff]
    %v2240 = vld [vmem:[%s7 + $0x78] sm:$0xff]
    %v2241 = vld [vmem:[%s7 + $0x80] sm:$0xff]
    %v2242 = vld [vmem:[%s7 + $0x88] sm:$0xff]
    %v2243 = vld [vmem:[%s7 + $0x90] sm:$0xff]
    %v2244 = vld [vmem:[%s7 + $0x98] sm:$0xff]
    %v2245 = vld [vmem:[%s7 + $0xa0] sm:$0xff]
    %v2246 = vld [vmem:[%s7 + $0xa8] sm:$0xff]
    %v2247 = vld [vmem:[%s7 + $0xb0] sm:$0xff]
    %v2248 = vld [vmem:[%s7 + $0xb8] sm:$0xff]
    %v2249 = vld [vmem:[%s7 + $0xc0] sm:$0xff]
    %v2250 = vld [vmem:[%s7 + $0xc8] sm:$0xff]
    %v2251 = vld [vmem:[%s7 + $0xd0] sm:$0xff]
    %v2252 = vld [vmem:[%s7 + $0xd8] sm:$0xff]
    %v2253 = vld [vmem:[%s7 + $0xe0] sm:$0xff]
    %v2254 = vld [vmem:[%s7 + $0xe8] sm:$0xff]
    %v2255 = vld [vmem:[%s7 + $0xf0] sm:$0xff]
    %v2256 = vld [vmem:[%s7 + $0xf8] sm:$0xff]
    %v2257 = vld [vmem:[%s7 + $0x100] sm:$0xff]
    %v2258 = vld [vmem:[%s7 + $0x108] sm:$0xff]
    %v2259 = vld [vmem:[%s7 + $0x110] sm:$0xff]
    %v2260 = vld [vmem:[%s7 + $0x118] sm:$0xff]
    %v2261 = vld [vmem:[%s7 + $0x120] sm:$0xff]
    %v2262 = vld [vmem:[%s7 + $0x128] sm:$0xff]
    %v2263 = vld [vmem:[%s7 + $0x130] sm:$0xff]
    %v2264 = vld [vmem:[%s7 + $0x138] sm:$0xff]
    %v2265 = vld [vmem:[%s7 + $0x140] sm:$0xff]
    %v2266 = vld [vmem:[%s7 + $0x148] sm:$0xff]
    %v2267 = vld [vmem:[%s7 + $0x150] sm:$0xff]
    %v2268 = vld [vmem:[%s7 + $0x158] sm:$0xff]
    %v2269 = vld [vmem:[%s7 + $0x160] sm:$0xff]
    %v2270 = vld [vmem:[%s7 + $0x168] sm:$0xff]
    %v2271 = vld [vmem:[%s7 + $0x170] sm:$0xff]
    %v2272 = vld [vmem:[%s7 + $0x178] sm:$0xff]
    %v2273 = vld [vmem:[%s7 + $0x180] sm:$0xff]
    %v2274 = vld [vmem:[%s7 + $0x188] sm:$0xff]
    %v2275 = vld [vmem:[%s7 + $0x190] sm:$0xff]
    %v2276 = vld [vmem:[%s7 + $0x198] sm:$0xff]
    %v2277 = vld [vmem:[%s7 + $0x1a0] sm:$0xff]
    %v2278 = vld [vmem:[%s7 + $0x1a8] sm:$0xff]
    %v2279 = vld [vmem:[%s7 + $0x1b0] sm:$0xff]
    %v2280 = vld [vmem:[%s7 + $0x1b8] sm:$0xff]
    %v2281 = vld [vmem:[%s7 + $0x1c0] sm:$0xff]
    %v2282 = vld [vmem:[%s7 + $0x1c8] sm:$0xff]
    %v2283 = vld [vmem:[%s7 + $0x1d0] sm:$0xff]
    %v2284 = vld [vmem:[%s7 + $0x1d8] sm:$0xff]
    %v2285 = vld [vmem:[%s7 + $0x1e0] sm:$0xff]
    %v2286 = vld [vmem:[%s7 + $0x1e8] sm:$0xff]
    %v2287 = vld [vmem:[%s7 + $0x1f0] sm:$0xff]
    %v2288 = vld [vmem:[%s7 + $0x1f8] sm:$0xff]
    %2289 = vmatprep.subr.mxu0 %v2226
    %2290 = vmatpush1.msra.mxu0 %v2225
    %2291 = vmatprep.subr.mxu0 %v2230
    %2292 = vmatpush1.msra.mxu0 %v2229
    %2293 = vmatprep.subr.mxu0 %v2234
    %2294 = vmatpush1.msra.mxu0 %v2233
    %2295 = vmatprep.subr.mxu0 %v2238
    %2296 = vmatpush1.msra.mxu0 %v2237
    %2297 = vmatprep.subr.mxu0 %v2242
    %2298 = vmatpush1.msra.mxu0 %v2241
    %2299 = vmatprep.subr.mxu0 %v2246
    %2300 = vmatpush1.msra.mxu0 %v2245
    %2301 = vmatprep.subr.mxu0 %v2250
    %2302 = vmatpush1.msra.mxu0 %v2249
    %2303 = vmatprep.subr.mxu0 %v2254
    %2304 = vmatpush1.msra.mxu0 %v2253
    %2305 = vmatprep.subr.mxu0 %v2258
    %2306 = vmatpush1.msra.mxu0 %v2257
    %2307 = vmatprep.subr.mxu0 %v2262
    %2308 = vmatpush1.msra.mxu0 %v2261
    %2309 = vmatprep.subr.mxu0 %v2266
    %2310 = vmatpush1.msra.mxu0 %v2265
    %2311 = vmatprep.subr.mxu0 %v2270
    %2312 = vmatpush1.msra.mxu0 %v2269
    %2313 = vmatprep.subr.mxu0 %v2274
    %2314 = vmatpush1.msra.mxu0 %v2273
    %2315 = vmatprep.subr.mxu0 %v2278
    %2316 = vmatpush1.msra.mxu0 %v2277
    %2317 = vmatprep.subr.mxu0 %v2282
    %2318 = vmatpush1.msra.mxu0 %v2281
    %2319 = vmatprep.subr.mxu0 %v2286
    %2320 = vmatpush1.msra.mxu0 %v2285
    %2321 = vmatprep.subr.mxu0 0.0
    %2322 = vmatpush1.msra.mxu0 0.0
    %2323 = vmatprep.subr.mxu0 0.0
    %2324 = vmatpush1.msra.mxu0 0.0
    %2325 = vmatprep.subr.mxu0 0.0
    %2326 = vmatpush1.msra.mxu0 0.0
    %2327 = vmatprep.subr.mxu0 0.0
    %2328 = vmatpush1.msra.mxu0 0.0
    %2329 = vmatprep.subr.mxu0 0.0
    %2330 = vmatpush1.msra.mxu0 0.0
    %2331 = vmatprep.subr.mxu0 0.0
    %2332 = vmatpush1.msra.mxu0 0.0
    %2333 = vmatprep.subr.mxu0 0.0
    %2334 = vmatpush1.msra.mxu0 0.0
    %2335 = vmatprep.subr.mxu0 0.0
    %2336 = vmatpush1.msra.mxu0 0.0
    %2337 = vmatprep.subr.mxu0 0.0
    %2338 = vmatpush1.msra.mxu0 0.0
    %2339 = vmatprep.subr.mxu0 0.0
    %2340 = vmatpush1.msra.mxu0 0.0
    %2341 = vmatprep.subr.mxu0 0.0
    %2342 = vmatpush1.msra.mxu0 0.0
    %2343 = vmatprep.subr.mxu0 0.0
    %2344 = vmatpush1.msra.mxu0 0.0
    %2345 = vmatprep.subr.mxu0 0.0
    %2346 = vmatpush1.msra.mxu0 0.0
    %2347 = vmatprep.subr.mxu0 0.0
    %2348 = vmatpush1.msra.mxu0 0.0
    %2349 = vmatprep.subr.mxu0 0.0
    %2350 = vmatpush1.msra.mxu0 0.0
    %2351 = vmatprep.subr.mxu0 0.0
    %2352 = vmatpush1.msra.mxu0 0.0
    %2353 = vmatprep.mubr.f32.mxu0 0.0
    %2354 = vmatmul.mubr.f32.gmra.mrb[0].mxu0 0.0
    %v2355 = vpop.f32.mrb[0].mxu0
    %v2356 = vadd.f32 0.0, %v2355
    %v2357 = vpop.f32.mrb[0].mxu0
    %v2358 = vadd.f32 0.0, %v2357
    %2359 = vdwg.mxu0
    %2360 = vmatprep.subr.mxu0 %v2228
    %2361 = vmatpush1.msra.mxu0 %v2227
    %2362 = vmatprep.subr.mxu0 %v2232
    %2363 = vmatpush1.msra.mxu0 %v2231
    %2364 = vmatprep.subr.mxu0 %v2236
    %2365 = vmatpush1.msra.mxu0 %v2235
    %2366 = vmatprep.subr.mxu0 %v2240
    %2367 = vmatpush1.msra.mxu0 %v2239
    %2368 = vmatprep.subr.mxu0 %v2244
    %2369 = vmatpush1.msra.mxu0 %v2243
    %2370 = vmatprep.subr.mxu0 %v2248
    %2371 = vmatpush1.msra.mxu0 %v2247
    %2372 = vmatprep.subr.mxu0 %v2252
    %2373 = vmatpush1.msra.mxu0 %v2251
    %2374 = vmatprep.subr.mxu0 %v2256
    %2375 = vmatpush1.msra.mxu0 %v2255
    %2376 = vmatprep.subr.mxu0 %v2260
    %2377 = vmatpush1.msra.mxu0 %v2259
    %2378 = vmatprep.subr.mxu0 %v2264
    %2379 = vmatpush1.msra.mxu0 %v2263
    %2380 = vmatprep.subr.mxu0 %v2268
    %2381 = vmatpush1.msra.mxu0 %v2267
    %2382 = vmatprep.subr.mxu0 %v2272
    %2383 = vmatpush1.msra.mxu0 %v2271
    %2384 = vmatprep.subr.mxu0 %v2276
    %2385 = vmatpush1.msra.mxu0 %v2275
    %2386 = vmatprep.subr.mxu0 %v2280
    %2387 = vmatpush1.msra.mxu0 %v2279
    %2388 = vmatprep.subr.mxu0 %v2284
    %2389 = vmatpush1.msra.mxu0 %v2283
    %2390 = vmatprep.subr.mxu0 %v2288
    %2391 = vmatpush1.msra.mxu0 %v2287
    %2392 = vmatprep.subr.mxu0 0.0
    %2393 = vmatpush1.msra.mxu0 0.0
    %2394 = vmatprep.subr.mxu0 0.0
    %2395 = vmatpush1.msra.mxu0 0.0
    %2396 = vmatprep.subr.mxu0 0.0
    %2397 = vmatpush1.msra.mxu0 0.0
    %2398 = vmatprep.subr.mxu0 0.0
    %2399 = vmatpush1.msra.mxu0 0.0
    %2400 = vmatprep.subr.mxu0 0.0
    %2401 = vmatpush1.msra.mxu0 0.0
    %2402 = vmatprep.subr.mxu0 0.0
    %2403 = vmatpush1.msra.mxu0 0.0
    %2404 = vmatprep.subr.mxu0 0.0
    %2405 = vmatpush1.msra.mxu0 0.0
    %2406 = vmatprep.subr.mxu0 0.0
    %2407 = vmatpush1.msra.mxu0 0.0
    %2408 = vmatprep.subr.mxu0 0.0
    %2409 = vmatpush1.msra.mxu0 0.0
    %2410 = vmatprep.subr.mxu0 0.0
    %2411 = vmatpush1.msra.mxu0 0.0
    %2412 = vmatprep.subr.mxu0 0.0
    %2413 = vmatpush1.msra.mxu0 0.0
    %2414 = vmatprep.subr.mxu0 0.0
    %2415 = vmatpush1.msra.mxu0 0.0
    %2416 = vmatprep.subr.mxu0 0.0
    %2417 = vmatpush1.msra.mxu0 0.0
    %2418 = vmatprep.subr.mxu0 0.0
    %2419 = vmatpush1.msra.mxu0 0.0
    %2420 = vmatprep.subr.mxu0 0.0
    %2421 = vmatpush1.msra.mxu0 0.0
    %2422 = vmatprep.subr.mxu0 0.0
    %2423 = vmatpush1.msra.mxu0 0.0
    %2424 = vmatprep.mubr.f32.mxu0 0.0
    %2425 = vmatmul.mubr.f32.gmra.mrb[0].mxu0 0.0
    %v2426 = vpop.f32.mrb[0].mxu0
    %v2427 = vadd.f32 0.0, %v2426
    %v2428 = vpop.f32.mrb[0].mxu0
    %v2429 = vadd.f32 0.0, %v2428
    %2430 = vdwg.mxu0
    %v2431 = vadd.f32 %v2221, %v2356
    %v2432 = vadd.f32 %v2222, %v2358
    %v2433 = vadd.f32 %v2223, %v2427
    %v2434 = vadd.f32 %v2224, %v2429
    %v2435 = vld [vmem:[%s8] sm:$0xf]
    %v2437 = vlaneseq
    %v2438 = vshrl.u32 %v2437, 7
    %v2439 = vsub.s32 0, %v2438
    %v2440 = vrot.slane %v2435, %v2439
    %v2441 = vlaneseq
    %v2442 = vshrl.u32 %v2441, 7
    %v2443 = vsub.s32 1, %v2442
    %v2444 = vrot.slane %v2435, %v2443
    %v2445 = vlaneseq
    %v2446 = vshrl.u32 %v2445, 7
    %v2447 = vsub.s32 2, %v2446
    %v2448 = vrot.slane %v2435, %v2447
    %v2449 = vlaneseq
    %v2450 = vshrl.u32 %v2449, 7
    %v2451 = vsub.s32 3, %v2450
    %v2452 = vrot.slane %v2435, %v2451
    %v2457 = vadd.f32 %v2431, %v2440
    %v2458 = vadd.f32 %v2432, %v2444
    %v2459 = vadd.f32 %v2433, %v2448
    %v2460 = vadd.f32 %v2434, %v2452
    %v2461 = vxor.u32 %v2457, 2147483648
    %v2462 = vxor.u32 %v2458, 2147483648
    %v2463 = vxor.u32 %v2459, 2147483648
    %v2464 = vmul.f32 %v2461, 1.442695
    %v2465 = vpow.pop %v2464
    %v2466 = vmul.f32 %v2462, 1.442695
    %v2467 = vpow.pop %v2466
    %v2468 = vmul.f32 %v2463, 1.442695
    %v2469 = vpow.pop %v2468
    %v2470 = vadd.f32 %v2465, 1.0
    %v2471 = vadd.f32 %v2467, 1.0
    %v2472 = vadd.f32 %v2469, 1.0
    %v2473 = vrcp.pop %v2470
    %v2474 = vmul.f32 1.0, %v2473
    %v2475 = vrcp.pop %v2471
    %v2476 = vmul.f32 1.0, %v2475
    %v2477 = vrcp.pop %v2472
    %v2478 = vmul.f32 1.0, %v2477
    %v2479 = vtanh.pop %v2460
    %v2480 = vmul.f32 %v2476, 0.0
    %v2481 = vmul.f32 %v2474, %v2479
    %v2482 = vadd.f32 %v2480, %v2481
    %v2483 = vtanh.pop %v2482
    %v2484 = vmul.f32 %v2478, %v2483
    %v2485 = vld [vmem:[#allocation5] sm:$0xc]
    %v2486 = vld [vmem:[#allocation5 + $0x8] sm:$0xc]
    %v2487 = vld [vmem:[#allocation5 + $0x10] sm:$0xc]
    %v2488 = vld [vmem:[#allocation5 + $0x18] sm:$0xc]
    %v2489 = vld [vmem:[#allocation6] sm:$0x30]
    %v2490 = vld [vmem:[#allocation6 + $0x8] sm:$0x30]
    %v2491 = vld [vmem:[#allocation6 + $0x10] sm:$0x30]
    %v2492 = vld [vmem:[#allocation6 + $0x18] sm:$0x30]
    %v2497 = vrot.slane %v2489, 2
    %v2498 = vrot.slane %v2490, 2
    %v2499 = vrot.slane %v2491, 2
    %v2500 = vrot.slane %v2492, 2
    %v2505 = vadd.f32 %v2485, %v2497
    %v2506 = vadd.f32 %v2486, %v2498
    %v2507 = vadd.f32 %v2487, %v2499
    %v2508 = vadd.f32 %v2488, %v2500
    %2509 = vmatprep.subr.mxu0 %v2226
    %2510 = vmatpush1.msra.mxu0 %v2225
    %2511 = vmatprep.subr.mxu0 %v2230
    %2512 = vmatpush1.msra.mxu0 %v2229
    %2513 = vmatprep.subr.mxu0 %v2234
    %2514 = vmatpush1.msra.mxu0 %v2233
    %2515 = vmatprep.subr.mxu0 %v2238
    %2516 = vmatpush1.msra.mxu0 %v2237
    %2517 = vmatprep.subr.mxu0 %v2242
    %2518 = vmatpush1.msra.mxu0 %v2241
    %2519 = vmatprep.subr.mxu0 %v2246
    %2520 = vmatpush1.msra.mxu0 %v2245
    %2521 = vmatprep.subr.mxu0 %v2250
    %2522 = vmatpush1.msra.mxu0 %v2249
    %2523 = vmatprep.subr.mxu0 %v2254
    %2524 = vmatpush1.msra.mxu0 %v2253
    %2525 = vmatprep.subr.mxu0 %v2258
    %2526 = vmatpush1.msra.mxu0 %v2257
    %2527 = vmatprep.subr.mxu0 %v2262
    %2528 = vmatpush1.msra.mxu0 %v2261
    %2529 = vmatprep.subr.mxu0 %v2266
    %2530 = vmatpush1.msra.mxu0 %v2265
    %2531 = vmatprep.subr.mxu0 %v2270
    %2532 = vmatpush1.msra.mxu0 %v2269
    %2533 = vmatprep.subr.mxu0 %v2274
    %2534 = vmatpush1.msra.mxu0 %v2273
    %2535 = vmatprep.subr.mxu0 %v2278
    %2536 = vmatpush1.msra.mxu0 %v2277
    %2537 = vmatprep.subr.mxu0 %v2282
    %2538 = vmatpush1.msra.mxu0 %v2281
    %2539 = vmatprep.subr.mxu0 %v2286
    %2540 = vmatpush1.msra.mxu0 %v2285
    %2541 = vmatprep.subr.mxu0 0.0
    %2542 = vmatpush1.msra.mxu0 0.0
    %2543 = vmatprep.subr.mxu0 0.0
    %2544 = vmatpush1.msra.mxu0 0.0
    %2545 = vmatprep.subr.mxu0 0.0
    %2546 = vmatpush1.msra.mxu0 0.0
    %2547 = vmatprep.subr.mxu0 0.0
    %2548 = vmatpush1.msra.mxu0 0.0
    %2549 = vmatprep.subr.mxu0 0.0
    %2550 = vmatpush1.msra.mxu0 0.0
    %2551 = vmatprep.subr.mxu0 0.0
    %2552 = vmatpush1.msra.mxu0 0.0
    %2553 = vmatprep.subr.mxu0 0.0
    %2554 = vmatpush1.msra.mxu0 0.0
    %2555 = vmatprep.subr.mxu0 0.0
    %2556 = vmatpush1.msra.mxu0 0.0
    %2557 = vmatprep.subr.mxu0 0.0
    %2558 = vmatpush1.msra.mxu0 0.0
    %2559 = vmatprep.subr.mxu0 0.0
    %2560 = vmatpush1.msra.mxu0 0.0
    %2561 = vmatprep.subr.mxu0 0.0
    %2562 = vmatpush1.msra.mxu0 0.0
    %2563 = vmatprep.subr.mxu0 0.0
    %2564 = vmatpush1.msra.mxu0 0.0
    %2565 = vmatprep.subr.mxu0 0.0
    %2566 = vmatpush1.msra.mxu0 0.0
    %2567 = vmatprep.subr.mxu0 0.0
    %2568 = vmatpush1.msra.mxu0 0.0
    %2569 = vmatprep.subr.mxu0 0.0
    %2570 = vmatpush1.msra.mxu0 0.0
    %2571 = vmatprep.subr.mxu0 0.0
    %2572 = vmatpush1.msra.mxu0 0.0
    %2573 = vmatprep.mubr.f32.mxu0 0.0
    %2574 = vmatmul.mubr.f32.gmra.mrb[0].mxu0 %v2484
    %v2575 = vpop.f32.mrb[0].mxu0
    %v2576 = vadd.f32 0.0, %v2575
    %v2577 = vpop.f32.mrb[0].mxu0
    %v2578 = vadd.f32 0.0, %v2577
    %2579 = vdwg.mxu0
    %2580 = vmatprep.subr.mxu0 %v2228
    %2581 = vmatpush1.msra.mxu0 %v2227
    %2582 = vmatprep.subr.mxu0 %v2232
    %2583 = vmatpush1.msra.mxu0 %v2231
    %2584 = vmatprep.subr.mxu0 %v2236
    %2585 = vmatpush1.msra.mxu0 %v2235
    %2586 = vmatprep.subr.mxu0 %v2240
    %2587 = vmatpush1.msra.mxu0 %v2239
    %2588 = vmatprep.subr.mxu0 %v2244
    %2589 = vmatpush1.msra.mxu0 %v2243
    %2590 = vmatprep.subr.mxu0 %v2248
    %2591 = vmatpush1.msra.mxu0 %v2247
    %2592 = vmatprep.subr.mxu0 %v2252
    %2593 = vmatpush1.msra.mxu0 %v2251
    %2594 = vmatprep.subr.mxu0 %v2256
    %2595 = vmatpush1.msra.mxu0 %v2255
    %2596 = vmatprep.subr.mxu0 %v2260
    %2597 = vmatpush1.msra.mxu0 %v2259
    %2598 = vmatprep.subr.mxu0 %v2264
    %2599 = vmatpush1.msra.mxu0 %v2263
    %2600 = vmatprep.subr.mxu0 %v2268
    %2601 = vmatpush1.msra.mxu0 %v2267
    %2602 = vmatprep.subr.mxu0 %v2272
    %2603 = vmatpush1.msra.mxu0 %v2271
    %2604 = vmatprep.subr.mxu0 %v2276
    %2605 = vmatpush1.msra.mxu0 %v2275
    %2606 = vmatprep.subr.mxu0 %v2280
    %2607 = vmatpush1.msra.mxu0 %v2279
    %2608 = vmatprep.subr.mxu0 %v2284
    %2609 = vmatpush1.msra.mxu0 %v2283
    %2610 = vmatprep.subr.mxu0 %v2288
    %2611 = vmatpush1.msra.mxu0 %v2287
    %2612 = vmatprep.subr.mxu0 0.0
    %2613 = vmatpush1.msra.mxu0 0.0
    %2614 = vmatprep.subr.mxu0 0.0
    %2615 = vmatpush1.msra.mxu0 0.0
    %2616 = vmatprep.subr.mxu0 0.0
    %2617 = vmatpush1.msra.mxu0 0.0
    %2618 = vmatprep.subr.mxu0 0.0
    %2619 = vmatpush1.msra.mxu0 0.0
    %2620 = vmatprep.subr.mxu0 0.0
    %2621 = vmatpush1.msra.mxu0 0.0
    %2622 = vmatprep.subr.mxu0 0.0
    %2623 = vmatpush1.msra.mxu0 0.0
    %2624 = vmatprep.subr.mxu0 0.0
    %2625 = vmatpush1.msra.mxu0 0.0
    %2626 = vmatprep.subr.mxu0 0.0
    %2627 = vmatpush1.msra.mxu0 0.0
    %2628 = vmatprep.subr.mxu0 0.0
    %2629 = vmatpush1.msra.mxu0 0.0
    %2630 = vmatprep.subr.mxu0 0.0
    %2631 = vmatpush1.msra.mxu0 0.0
    %2632 = vmatprep.subr.mxu0 0.0
    %2633 = vmatpush1.msra.mxu0 0.0
    %2634 = vmatprep.subr.mxu0 0.0
    %2635 = vmatpush1.msra.mxu0 0.0
    %2636 = vmatprep.subr.mxu0 0.0
    %2637 = vmatpush1.msra.mxu0 0.0
    %2638 = vmatprep.subr.mxu0 0.0
    %2639 = vmatpush1.msra.mxu0 0.0
    %2640 = vmatprep.subr.mxu0 0.0
    %2641 = vmatpush1.msra.mxu0 0.0
    %2642 = vmatprep.subr.mxu0 0.0
    %2643 = vmatpush1.msra.mxu0 0.0
    %2644 = vmatprep.mubr.f32.mxu0 0.0
    %2645 = vmatmul.mubr.f32.gmra.mrb[0].mxu0 %v2484
    %v2646 = vpop.f32.mrb[0].mxu0
    %v2647 = vadd.f32 0.0, %v2646
    %v2648 = vpop.f32.mrb[0].mxu0
    %v2649 = vadd.f32 0.0, %v2648
    %2650 = vdwg.mxu0
    %v2655 = vrot.slane %v2576, 6
    %v2656 = vrot.slane %v2578, 6
    %v2657 = vrot.slane %v2647, 6
    %v2658 = vrot.slane %v2649, 6
    %v2663 = vadd.f32 %v2505, %v2655
    %v2664 = vadd.f32 %v2506, %v2656
    %v2665 = vadd.f32 %v2507, %v2657
    %v2666 = vadd.f32 %v2508, %v2658
    %v2667 = vadd.f32 %v2663, %v2440
    %v2668 = vadd.f32 %v2664, %v2444
    %v2669 = vadd.f32 %v2665, %v2448
    %v2670 = vadd.f32 %v2666, %v2452
    %v2671 = vxor.u32 %v2667, 2147483648
    %v2672 = vxor.u32 %v2668, 2147483648
    %v2673 = vxor.u32 %v2669, 2147483648
    %v2674 = vmul.f32 %v2671, 1.442695
    %v2675 = vpow.pop %v2674
    %v2676 = vmul.f32 %v2672, 1.442695
    %v2677 = vpow.pop %v2676
    %v2678 = vmul.f32 %v2673, 1.442695
    %v2679 = vpow.pop %v2678
    %v2680 = vadd.f32 %v2675, 1.0
    %v2681 = vadd.f32 %v2677, 1.0
    %v2682 = vadd.f32 %v2679, 1.0
    %v2683 = vrcp.pop %v2680
    %v2684 = vmul.f32 1.0, %v2683
    %v2685 = vrcp.pop %v2681
    %v2686 = vmul.f32 1.0, %v2685
    %v2687 = vrcp.pop %v2682
    %v2688 = vmul.f32 1.0, %v2687
    %v2689 = vtanh.pop %v2670
    %v2691 = vrot.slane %v2482, 6
    %v2693 = vmul.f32 %v2686, %v2691
    %v2694 = vmul.f32 %v2684, %v2689
    %v2695 = vadd.f32 %v2693, %v2694
    %v2696 = vtanh.pop %v2695
    %v2697 = vmul.f32 %v2688, %v2696
    %v2698 = vld [vmem:[#allocation5] sm:$0x30]
    %v2699 = vld [vmem:[#allocation5 + $0x8] sm:$0x30]
    %v2700 = vld [vmem:[#allocation5 + $0x10] sm:$0x30]
    %v2701 = vld [vmem:[#allocation5 + $0x18] sm:$0x30]
    %v2702 = vld [vmem:[#allocation6] sm:$0xc]
    %v2703 = vld [vmem:[#allocation6 + $0x8] sm:$0xc]
    %v2704 = vld [vmem:[#allocation6 + $0x10] sm:$0xc]
    %v2705 = vld [vmem:[#allocation6 + $0x18] sm:$0xc]
    %v2710 = vrot.slane %v2702, 6
    %v2711 = vrot.slane %v2703, 6
    %v2712 = vrot.slane %v2704, 6
    %v2713 = vrot.slane %v2705, 6
    %v2718 = vadd.f32 %v2698, %v2710
    %v2719 = vadd.f32 %v2699, %v2711
    %v2720 = vadd.f32 %v2700, %v2712
    %v2721 = vadd.f32 %v2701, %v2713
    %v2723 = vrot.slane %v2697, 2
    %2725 = vmatprep.subr.mxu0 %v2226
    %2726 = vmatpush1.msra.mxu0 %v2225
    %2727 = vmatprep.subr.mxu0 %v2230
    %2728 = vmatpush1.msra.mxu0 %v2229
    %2729 = vmatprep.subr.mxu0 %v2234
    %2730 = vmatpush1.msra.mxu0 %v2233
    %2731 = vmatprep.subr.mxu0 %v2238
    %2732 = vmatpush1.msra.mxu0 %v2237
    %2733 = vmatprep.subr.mxu0 %v2242
    %2734 = vmatpush1.msra.mxu0 %v2241
    %2735 = vmatprep.subr.mxu0 %v2246
    %2736 = vmatpush1.msra.mxu0 %v2245
    %2737 = vmatprep.subr.mxu0 %v2250
    %2738 = vmatpush1.msra.mxu0 %v2249
    %2739 = vmatprep.subr.mxu0 %v2254
    %2740 = vmatpush1.msra.mxu0 %v2253
    %2741 = vmatprep.subr.mxu0 %v2258
    %2742 = vmatpush1.msra.mxu0 %v2257
    %2743 = vmatprep.subr.mxu0 %v2262
    %2744 = vmatpush1.msra.mxu0 %v2261
    %2745 = vmatprep.subr.mxu0 %v2266
    %2746 = vmatpush1.msra.mxu0 %v2265
    %2747 = vmatprep.subr.mxu0 %v2270
    %2748 = vmatpush1.msra.mxu0 %v2269
    %2749 = vmatprep.subr.mxu0 %v2274
    %2750 = vmatpush1.msra.mxu0 %v2273
    %2751 = vmatprep.subr.mxu0 %v2278
    %2752 = vmatpush1.msra.mxu0 %v2277
    %2753 = vmatprep.subr.mxu0 %v2282
    %2754 = vmatpush1.msra.mxu0 %v2281
    %2755 = vmatprep.subr.mxu0 %v2286
    %2756 = vmatpush1.msra.mxu0 %v2285
    %2757 = vmatprep.subr.mxu0 0.0
    %2758 = vmatpush1.msra.mxu0 0.0
    %2759 = vmatprep.subr.mxu0 0.0
    %2760 = vmatpush1.msra.mxu0 0.0
    %2761 = vmatprep.subr.mxu0 0.0
    %2762 = vmatpush1.msra.mxu0 0.0
    %2763 = vmatprep.subr.mxu0 0.0
    %2764 = vmatpush1.msra.mxu0 0.0
    %2765 = vmatprep.subr.mxu0 0.0
    %2766 = vmatpush1.msra.mxu0 0.0
    %2767 = vmatprep.subr.mxu0 0.0
    %2768 = vmatpush1.msra.mxu0 0.0
    %2769 = vmatprep.subr.mxu0 0.0
    %2770 = vmatpush1.msra.mxu0 0.0
    %2771 = vmatprep.subr.mxu0 0.0
    %2772 = vmatpush1.msra.mxu0 0.0
    %2773 = vmatprep.subr.mxu0 0.0
    %2774 = vmatpush1.msra.mxu0 0.0
    %2775 = vmatprep.subr.mxu0 0.0
    %2776 = vmatpush1.msra.mxu0 0.0
    %2777 = vmatprep.subr.mxu0 0.0
    %2778 = vmatpush1.msra.mxu0 0.0
    %2779 = vmatprep.subr.mxu0 0.0
    %2780 = vmatpush1.msra.mxu0 0.0
    %2781 = vmatprep.subr.mxu0 0.0
    %2782 = vmatpush1.msra.mxu0 0.0
    %2783 = vmatprep.subr.mxu0 0.0
    %2784 = vmatpush1.msra.mxu0 0.0
    %2785 = vmatprep.subr.mxu0 0.0
    %2786 = vmatpush1.msra.mxu0 0.0
    %2787 = vmatprep.subr.mxu0 0.0
    %2788 = vmatpush1.msra.mxu0 0.0
    %2789 = vmatprep.mubr.f32.mxu0 0.0
    %2790 = vmatmul.mubr.f32.gmra.mrb[0].mxu0 %v2723
    %v2791 = vpop.f32.mrb[0].mxu0
    %v2792 = vadd.f32 0.0, %v2791
    %v2793 = vpop.f32.mrb[0].mxu0
    %v2794 = vadd.f32 0.0, %v2793
    %2795 = vdwg.mxu0
    %2796 = vmatprep.subr.mxu0 %v2228
    %2797 = vmatpush1.msra.mxu0 %v2227
    %2798 = vmatprep.subr.mxu0 %v2232
    %2799 = vmatpush1.msra.mxu0 %v2231
    %2800 = vmatprep.subr.mxu0 %v2236
    %2801 = vmatpush1.msra.mxu0 %v2235
    %2802 = vmatprep.subr.mxu0 %v2240
    %2803 = vmatpush1.msra.mxu0 %v2239
    %2804 = vmatprep.subr.mxu0 %v2244
    %2805 = vmatpush1.msra.mxu0 %v2243
    %2806 = vmatprep.subr.mxu0 %v2248
    %2807 = vmatpush1.msra.mxu0 %v2247
    %2808 = vmatprep.subr.mxu0 %v2252
    %2809 = vmatpush1.msra.mxu0 %v2251
    %2810 = vmatprep.subr.mxu0 %v2256
    %2811 = vmatpush1.msra.mxu0 %v2255
    %2812 = vmatprep.subr.mxu0 %v2260
    %2813 = vmatpush1.msra.mxu0 %v2259
    %2814 = vmatprep.subr.mxu0 %v2264
    %2815 = vmatpush1.msra.mxu0 %v2263
    %2816 = vmatprep.subr.mxu0 %v2268
    %2817 = vmatpush1.msra.mxu0 %v2267
    %2818 = vmatprep.subr.mxu0 %v2272
    %2819 = vmatpush1.msra.mxu0 %v2271
    %2820 = vmatprep.subr.mxu0 %v2276
    %2821 = vmatpush1.msra.mxu0 %v2275
    %2822 = vmatprep.subr.mxu0 %v2280
    %2823 = vmatpush1.msra.mxu0 %v2279
    %2824 = vmatprep.subr.mxu0 %v2284
    %2825 = vmatpush1.msra.mxu0 %v2283
    %2826 = vmatprep.subr.mxu0 %v2288
    %2827 = vmatpush1.msra.mxu0 %v2287
    %2828 = vmatprep.subr.mxu0 0.0
    %2829 = vmatpush1.msra.mxu0 0.0
    %2830 = vmatprep.subr.mxu0 0.0
    %2831 = vmatpush1.msra.mxu0 0.0
    %2832 = vmatprep.subr.mxu0 0.0
    %2833 = vmatpush1.msra.mxu0 0.0
    %2834 = vmatprep.subr.mxu0 0.0
    %2835 = vmatpush1.msra.mxu0 0.0
    %2836 = vmatprep.subr.mxu0 0.0
    %2837 = vmatpush1.msra.mxu0 0.0
    %2838 = vmatprep.subr.mxu0 0.0
    %2839 = vmatpush1.msra.mxu0 0.0
    %2840 = vmatprep.subr.mxu0 0.0
    %2841 = vmatpush1.msra.mxu0 0.0
    %2842 = vmatprep.subr.mxu0 0.0
    %2843 = vmatpush1.msra.mxu0 0.0
    %2844 = vmatprep.subr.mxu0 0.0
    %2845 = vmatpush1.msra.mxu0 0.0
    %2846 = vmatprep.subr.mxu0 0.0
    %2847 = vmatpush1.msra.mxu0 0.0
    %2848 = vmatprep.subr.mxu0 0.0
    %2849 = vmatpush1.msra.mxu0 0.0
    %2850 = vmatprep.subr.mxu0 0.0
    %2851 = vmatpush1.msra.mxu0 0.0
    %2852 = vmatprep.subr.mxu0 0.0
    %2853 = vmatpush1.msra.mxu0 0.0
    %2854 = vmatprep.subr.mxu0 0.0
    %2855 = vmatpush1.msra.mxu0 0.0
    %2856 = vmatprep.subr.mxu0 0.0
    %2857 = vmatpush1.msra.mxu0 0.0
    %2858 = vmatprep.subr.mxu0 0.0
    %2859 = vmatpush1.msra.mxu0 0.0
    %2860 = vmatprep.mubr.f32.mxu0 0.0
    %2861 = vmatmul.mubr.f32.gmra.mrb[0].mxu0 %v2723
    %v2862 = vpop.f32.mrb[0].mxu0
    %v2863 = vadd.f32 0.0, %v2862
    %v2864 = vpop.f32.mrb[0].mxu0
    %v2865 = vadd.f32 0.0, %v2864
    %2866 = vdwg.mxu0
    %v2871 = vrot.slane %v2792, 4
    %v2872 = vrot.slane %v2794, 4
    %v2873 = vrot.slane %v2863, 4
    %v2874 = vrot.slane %v2865, 4
    %v2879 = vadd.f32 %v2718, %v2871
    %v2880 = vadd.f32 %v2719, %v2872
    %v2881 = vadd.f32 %v2720, %v2873
    %v2882 = vadd.f32 %v2721, %v2874
    %v2883 = vadd.f32 %v2879, %v2440
    %v2884 = vadd.f32 %v2880, %v2444
    %v2885 = vadd.f32 %v2881, %v2448
    %v2886 = vadd.f32 %v2882, %v2452
    %v2887 = vxor.u32 %v2883, 2147483648
    %v2888 = vxor.u32 %v2884, 2147483648
    %v2889 = vxor.u32 %v2885, 2147483648
    %v2890 = vmul.f32 %v2887, 1.442695
    %v2891 = vpow.pop %v2890
    %v2892 = vmul.f32 %v2888, 1.442695
    %v2893 = vpow.pop %v2892
    %v2894 = vmul.f32 %v2889, 1.442695
    %v2895 = vpow.pop %v2894
    %v2896 = vadd.f32 %v2891, 1.0
    %v2897 = vadd.f32 %v2893, 1.0
    %v2898 = vadd.f32 %v2895, 1.0
    %v2899 = vrcp.pop %v2896
    %v2900 = vmul.f32 1.0, %v2899
    %v2901 = vrcp.pop %v2897
    %v2902 = vmul.f32 1.0, %v2901
    %v2903 = vrcp.pop %v2898
    %v2904 = vmul.f32 1.0, %v2903
    %v2905 = vtanh.pop %v2886
    %v2907 = vrot.slane %v2695, 6
    %v2909 = vmul.f32 %v2902, %v2907
    %v2910 = vmul.f32 %v2900, %v2905
    %v2911 = vadd.f32 %v2909, %v2910
    %v2912 = vtanh.pop %v2911
    %v2913 = vmul.f32 %v2904, %v2912
    %v2914 = vld [vmem:[#allocation5] sm:$0xc0]
    %v2915 = vld [vmem:[#allocation5 + $0x8] sm:$0xc0]
    %v2916 = vld [vmem:[#allocation5 + $0x10] sm:$0xc0]
    %v2917 = vld [vmem:[#allocation5 + $0x18] sm:$0xc0]
    %v2918 = vld [vmem:[#allocation6] sm:$0x3]
    %v2919 = vld [vmem:[#allocation6 + $0x8] sm:$0x3]
    %v2920 = vld [vmem:[#allocation6 + $0x10] sm:$0x3]
    %v2921 = vld [vmem:[#allocation6 + $0x18] sm:$0x3]
    %v2926 = vrot.slane %v2918, 2
    %v2927 = vrot.slane %v2919, 2
    %v2928 = vrot.slane %v2920, 2
    %v2929 = vrot.slane %v2921, 2
    %v2934 = vadd.f32 %v2914, %v2926
    %v2935 = vadd.f32 %v2915, %v2927
    %v2936 = vadd.f32 %v2916, %v2928
    %v2937 = vadd.f32 %v2917, %v2929
    %v2939 = vrot.slane %v2913, 4
    %2941 = vmatprep.subr.mxu0 %v2226
    %2942 = vmatpush1.msra.mxu0 %v2225
    %2943 = vmatprep.subr.mxu0 %v2230
    %2944 = vmatpush1.msra.mxu0 %v2229
    %2945 = vmatprep.subr.mxu0 %v2234
    %2946 = vmatpush1.msra.mxu0 %v2233
    %2947 = vmatprep.subr.mxu0 %v2238
    %2948 = vmatpush1.msra.mxu0 %v2237
    %2949 = vmatprep.subr.mxu0 %v2242
    %2950 = vmatpush1.msra.mxu0 %v2241
    %2951 = vmatprep.subr.mxu0 %v2246
    %2952 = vmatpush1.msra.mxu0 %v2245
    %2953 = vmatprep.subr.mxu0 %v2250
    %2954 = vmatpush1.msra.mxu0 %v2249
    %2955 = vmatprep.subr.mxu0 %v2254
    %2956 = vmatpush1.msra.mxu0 %v2253
    %2957 = vmatprep.subr.mxu0 %v2258
    %2958 = vmatpush1.msra.mxu0 %v2257
    %2959 = vmatprep.subr.mxu0 %v2262
    %2960 = vmatpush1.msra.mxu0 %v2261
    %2961 = vmatprep.subr.mxu0 %v2266
    %2962 = vmatpush1.msra.mxu0 %v2265
    %2963 = vmatprep.subr.mxu0 %v2270
    %2964 = vmatpush1.msra.mxu0 %v2269
    %2965 = vmatprep.subr.mxu0 %v2274
    %2966 = vmatpush1.msra.mxu0 %v2273
    %2967 = vmatprep.subr.mxu0 %v2278
    %2968 = vmatpush1.msra.mxu0 %v2277
    %2969 = vmatprep.subr.mxu0 %v2282
    %2970 = vmatpush1.msra.mxu0 %v2281
    %2971 = vmatprep.subr.mxu0 %v2286
    %2972 = vmatpush1.msra.mxu0 %v2285
    %2973 = vmatprep.subr.mxu0 0.0
    %2974 = vmatpush1.msra.mxu0 0.0
    %2975 = vmatprep.subr.mxu0 0.0
    %2976 = vmatpush1.msra.mxu0 0.0
    %2977 = vmatprep.subr.mxu0 0.0
    %2978 = vmatpush1.msra.mxu0 0.0
    %2979 = vmatprep.subr.mxu0 0.0
    %2980 = vmatpush1.msra.mxu0 0.0
    %2981 = vmatprep.subr.mxu0 0.0
    %2982 = vmatpush1.msra.mxu0 0.0
    %2983 = vmatprep.subr.mxu0 0.0
    %2984 = vmatpush1.msra.mxu0 0.0
    %2985 = vmatprep.subr.mxu0 0.0
    %2986 = vmatpush1.msra.mxu0 0.0
    %2987 = vmatprep.subr.mxu0 0.0
    %2988 = vmatpush1.msra.mxu0 0.0
    %2989 = vmatprep.subr.mxu0 0.0
    %2990 = vmatpush1.msra.mxu0 0.0
    %2991 = vmatprep.subr.mxu0 0.0
    %2992 = vmatpush1.msra.mxu0 0.0
    %2993 = vmatprep.subr.mxu0 0.0
    %2994 = vmatpush1.msra.mxu0 0.0
    %2995 = vmatprep.subr.mxu0 0.0
    %2996 = vmatpush1.msra.mxu0 0.0
    %2997 = vmatprep.subr.mxu0 0.0
    %2998 = vmatpush1.msra.mxu0 0.0
    %2999 = vmatprep.subr.mxu0 0.0
    %3000 = vmatpush1.msra.mxu0 0.0
    %3001 = vmatprep.subr.mxu0 0.0
    %3002 = vmatpush1.msra.mxu0 0.0
    %3003 = vmatprep.subr.mxu0 0.0
    %3004 = vmatpush1.msra.mxu0 0.0
    %3005 = vmatprep.mubr.f32.mxu0 0.0
    %3006 = vmatmul.mubr.f32.gmra.mrb[0].mxu0 %v2939
    %v3007 = vpop.f32.mrb[0].mxu0
    %v3008 = vadd.f32 0.0, %v3007
    %v3009 = vpop.f32.mrb[0].mxu0
    %v3010 = vadd.f32 0.0, %v3009
    %3011 = vdwg.mxu0
    %3012 = vmatprep.subr.mxu0 %v2228
    %3013 = vmatpush1.msra.mxu0 %v2227
    %3014 = vmatprep.subr.mxu0 %v2232
    %3015 = vmatpush1.msra.mxu0 %v2231
    %3016 = vmatprep.subr.mxu0 %v2236
    %3017 = vmatpush1.msra.mxu0 %v2235
    %3018 = vmatprep.subr.mxu0 %v2240
    %3019 = vmatpush1.msra.mxu0 %v2239
    %3020 = vmatprep.subr.mxu0 %v2244
    %3021 = vmatpush1.msra.mxu0 %v2243
    %3022 = vmatprep.subr.mxu0 %v2248
    %3023 = vmatpush1.msra.mxu0 %v2247
    %3024 = vmatprep.subr.mxu0 %v2252
    %3025 = vmatpush1.msra.mxu0 %v2251
    %3026 = vmatprep.subr.mxu0 %v2256
    %3027 = vmatpush1.msra.mxu0 %v2255
    %3028 = vmatprep.subr.mxu0 %v2260
    %3029 = vmatpush1.msra.mxu0 %v2259
    %3030 = vmatprep.subr.mxu0 %v2264
    %3031 = vmatpush1.msra.mxu0 %v2263
    %3032 = vmatprep.subr.mxu0 %v2268
    %3033 = vmatpush1.msra.mxu0 %v2267
    %3034 = vmatprep.subr.mxu0 %v2272
    %3035 = vmatpush1.msra.mxu0 %v2271
    %3036 = vmatprep.subr.mxu0 %v2276
    %3037 = vmatpush1.msra.mxu0 %v2275
    %3038 = vmatprep.subr.mxu0 %v2280
    %3039 = vmatpush1.msra.mxu0 %v2279
    %3040 = vmatprep.subr.mxu0 %v2284
    %3041 = vmatpush1.msra.mxu0 %v2283
    %3042 = vmatprep.subr.mxu0 %v2288
    %3043 = vmatpush1.msra.mxu0 %v2287
    %3044 = vmatprep.subr.mxu0 0.0
    %3045 = vmatpush1.msra.mxu0 0.0
    %3046 = vmatprep.subr.mxu0 0.0
    %3047 = vmatpush1.msra.mxu0 0.0
    %3048 = vmatprep.subr.mxu0 0.0
    %3049 = vmatpush1.msra.mxu0 0.0
    %3050 = vmatprep.subr.mxu0 0.0
    %3051 = vmatpush1.msra.mxu0 0.0
    %3052 = vmatprep.subr.mxu0 0.0
    %3053 = vmatpush1.msra.mxu0 0.0
    %3054 = vmatprep.subr.mxu0 0.0
    %3055 = vmatpush1.msra.mxu0 0.0
    %3056 = vmatprep.subr.mxu0 0.0
    %3057 = vmatpush1.msra.mxu0 0.0
    %3058 = vmatprep.subr.mxu0 0.0
    %3059 = vmatpush1.msra.mxu0 0.0
    %3060 = vmatprep.subr.mxu0 0.0
    %3061 = vmatpush1.msra.mxu0 0.0
    %3062 = vmatprep.subr.mxu0 0.0
    %3063 = vmatpush1.msra.mxu0 0.0
    %3064 = vmatprep.subr.mxu0 0.0
    %3065 = vmatpush1.msra.mxu0 0.0
    %3066 = vmatprep.subr.mxu0 0.0
    %3067 = vmatpush1.msra.mxu0 0.0
    %3068 = vmatprep.subr.mxu0 0.0
    %3069 = vmatpush1.msra.mxu0 0.0
    %3070 = vmatprep.subr.mxu0 0.0
    %3071 = vmatpush1.msra.mxu0 0.0
    %3072 = vmatprep.subr.mxu0 0.0
    %3073 = vmatpush1.msra.mxu0 0.0
    %3074 = vmatprep.subr.mxu0 0.0
    %3075 = vmatpush1.msra.mxu0 0.0
    %3076 = vmatprep.mubr.f32.mxu0 0.0
    %3077 = vmatmul.mubr.f32.gmra.mrb[0].mxu0 %v2939
    %v3078 = vpop.f32.mrb[0].mxu0
    %v3079 = vadd.f32 0.0, %v3078
    %v3080 = vpop.f32.mrb[0].mxu0
    %v3081 = vadd.f32 0.0, %v3080
    %3082 = vdwg.mxu0
    %v3087 = vrot.slane %v3008, 2
    %v3088 = vrot.slane %v3010, 2
    %v3089 = vrot.slane %v3079, 2
    %v3090 = vrot.slane %v3081, 2
    %v3095 = vadd.f32 %v2934, %v3087
    %v3096 = vadd.f32 %v2935, %v3088
    %v3097 = vadd.f32 %v2936, %v3089
    %v3098 = vadd.f32 %v2937, %v3090
    %v3099 = vadd.f32 %v3095, %v2440
    %v3100 = vadd.f32 %v3096, %v2444
    %v3101 = vadd.f32 %v3097, %v2448
    %v3102 = vadd.f32 %v3098, %v2452
    %v3103 = vxor.u32 %v3099, 2147483648
    %v3104 = vxor.u32 %v3100, 2147483648
    %v3105 = vxor.u32 %v3101, 2147483648
    %v3106 = vmul.f32 %v3103, 1.442695
    %v3107 = vpow.pop %v3106
    %v3108 = vmul.f32 %v3104, 1.442695
    %v3109 = vpow.pop %v3108
    %v3110 = vmul.f32 %v3105, 1.442695
    %v3111 = vpow.pop %v3110
    %v3112 = vadd.f32 %v3107, 1.0
    %v3113 = vadd.f32 %v3109, 1.0
    %v3114 = vadd.f32 %v3111, 1.0
    %v3115 = vrcp.pop %v3112
    %v3116 = vmul.f32 1.0, %v3115
    %v3117 = vrcp.pop %v3113
    %v3118 = vmul.f32 1.0, %v3117
    %v3119 = vrcp.pop %v3114
    %v3120 = vmul.f32 1.0, %v3119
    %v3121 = vtanh.pop %v3102
    %v3123 = vrot.slane %v2911, 6
    %v3125 = vmul.f32 %v3118, %v3123
    %v3126 = vmul.f32 %v3116, %v3121
    %v3127 = vadd.f32 %v3125, %v3126
    %v3128 = vtanh.pop %v3127
    %v3129 = vmul.f32 %v3120, %v3128
    %v3130 = vld [vmem:[%s9] sm:$0xff]
    %v3131 = vld [vmem:[%s9 + $0x8] sm:$0xff]
    %v3132 = vld [vmem:[%s9 + $0x10] sm:$0xff]
    %v3133 = vld [vmem:[%s9 + $0x18] sm:$0xff]
    %v3134 = vld [vmem:[%s9 + $0x20] sm:$0xff]
    %v3135 = vld [vmem:[%s9 + $0x28] sm:$0xff]
    %v3136 = vld [vmem:[%s9 + $0x30] sm:$0xff]
    %v3137 = vld [vmem:[%s9 + $0x38] sm:$0xff]
    %v3138 = vld [vmem:[%s9 + $0x40] sm:$0xff]
    %v3139 = vld [vmem:[%s9 + $0x48] sm:$0xff]
    %v3140 = vld [vmem:[%s9 + $0x50] sm:$0xff]
    %v3141 = vld [vmem:[%s9 + $0x58] sm:$0xff]
    %v3142 = vld [vmem:[%s9 + $0x60] sm:$0xff]
    %v3143 = vld [vmem:[%s9 + $0x68] sm:$0xff]
    %v3144 = vld [vmem:[%s9 + $0x70] sm:$0xff]
    %v3145 = vld [vmem:[%s9 + $0x78] sm:$0xff]
    %v3146 = vld [vmem:[%s10] sm:$0x1]
    %v3148 = vlaneseq
    %v3149 = vshrl.u32 %v3148, 7
    %v3150 = vsub.s32 0, %v3149
    %v3151 = vrot.slane %v3146, %v3150
    %v3154 = vrot.slane %v3129, 6
    %3156 = vmatprep.subr.mxu0 0.0
    %3157 = vmatpush1.msra.mxu0 %v3130
    %3158 = vmatprep.subr.mxu0 0.0
    %3159 = vmatpush1.msra.mxu0 %v3131
    %3160 = vmatprep.subr.mxu0 0.0
    %3161 = vmatpush1.msra.mxu0 %v3132
    %3162 = vmatprep.subr.mxu0 0.0
    %3163 = vmatpush1.msra.mxu0 %v3133
    %3164 = vmatprep.subr.mxu0 0.0
    %3165 = vmatpush1.msra.mxu0 %v3134
    %3166 = vmatprep.subr.mxu0 0.0
    %3167 = vmatpush1.msra.mxu0 %v3135
    %3168 = vmatprep.subr.mxu0 0.0
    %3169 = vmatpush1.msra.mxu0 %v3136
    %3170 = vmatprep.subr.mxu0 0.0
    %3171 = vmatpush1.msra.mxu0 %v3137
    %3172 = vmatprep.subr.mxu0 0.0
    %3173 = vmatpush1.msra.mxu0 %v3138
    %3174 = vmatprep.subr.mxu0 0.0
    %3175 = vmatpush1.msra.mxu0 %v3139
    %3176 = vmatprep.subr.mxu0 0.0
    %3177 = vmatpush1.msra.mxu0 %v3140
    %3178 = vmatprep.subr.mxu0 0.0
    %3179 = vmatpush1.msra.mxu0 %v3141
    %3180 = vmatprep.subr.mxu0 0.0
    %3181 = vmatpush1.msra.mxu0 %v3142
    %3182 = vmatprep.subr.mxu0 0.0
    %3183 = vmatpush1.msra.mxu0 %v3143
    %3184 = vmatprep.subr.mxu0 0.0
    %3185 = vmatpush1.msra.mxu0 %v3144
    %3186 = vmatprep.subr.mxu0 0.0
    %3187 = vmatpush1.msra.mxu0 %v3145
    %3188 = vmatprep.subr.mxu0 0.0
    %3189 = vmatpush1.msra.mxu0 0.0
    %3190 = vmatprep.subr.mxu0 0.0
    %3191 = vmatpush1.msra.mxu0 0.0
    %3192 = vmatprep.subr.mxu0 0.0
    %3193 = vmatpush1.msra.mxu0 0.0
    %3194 = vmatprep.subr.mxu0 0.0
    %3195 = vmatpush1.msra.mxu0 0.0
    %3196 = vmatprep.subr.mxu0 0.0
    %3197 = vmatpush1.msra.mxu0 0.0
    %3198 = vmatprep.subr.mxu0 0.0
    %3199 = vmatpush1.msra.mxu0 0.0
    %3200 = vmatprep.subr.mxu0 0.0
    %3201 = vmatpush1.msra.mxu0 0.0
    %3202 = vmatprep.subr.mxu0 0.0
    %3203 = vmatpush1.msra.mxu0 0.0
    %3204 = vmatprep.subr.mxu0 0.0
    %3205 = vmatpush1.msra.mxu0 0.0
    %3206 = vmatprep.subr.mxu0 0.0
    %3207 = vmatpush1.msra.mxu0 0.0
    %3208 = vmatprep.subr.mxu0 0.0
    %3209 = vmatpush1.msra.mxu0 0.0
    %3210 = vmatprep.subr.mxu0 0.0
    %3211 = vmatpush1.msra.mxu0 0.0
    %3212 = vmatprep.subr.mxu0 0.0
    %3213 = vmatpush1.msra.mxu0 0.0
    %3214 = vmatprep.subr.mxu0 0.0
    %3215 = vmatpush1.msra.mxu0 0.0
    %3216 = vmatprep.subr.mxu0 0.0
    %3217 = vmatpush1.msra.mxu0 0.0
    %3218 = vmatprep.subr.mxu0 0.0
    %3219 = vmatpush1.msra.mxu0 0.0
    %3220 = vmatprep.mubr.f32.mxu0 0.0
    %3221 = vmatmul.mubr.f32.gmra.mrb[0].mxu0 %v3154
    %v3222 = vpop.f32.mrb[0].mxu0
    %v3223 = vadd.f32 %v3151, %v3222
    %v3224 = vpop.f32.mrb[0].mxu0
    %3225 = vdwg.mxu0
    %vm3226 = vcmask 9216
    %3227 = vst.msk [vmem:[#allocation7] sm:$0x3] %vm3226, %v3223
    // Predicated region
    $region46: #{forward.13} parent=1 // pred_check
      _
    $region47: #{forward.13} parent=1 // pred_check_branch
      %3229 = sbr.rel (0) target = $region49
    $region48: #{forward.13} parent=1 // pred_region
      %s3231 = ssub.s32 32, 32
      %3232 = vsyncadd [#allocation8], %s3231
      %s3234 = sshll.u32 [#allocation7], 4
      %s3235 = int_to_ptr.vmem [resolvable:$true] %s3234
      %3237 = dma.vmem_to_hbm [thread:$0]  %s3235, 32, %s11, [#allocation8]
    $region49: #{forward.13} parent=1 // pred_fallthru
      _
    // Predicated region
    $region50: #{forward.13} parent=1 // pred_check
      _
    $region51: #{forward.13} parent=1 // pred_check_branch
      %3239 = sbr.rel (0) target = $region53
    $region52: #{forward.13} parent=1 // pred_region
      %3240 = dma.done [#allocation8], 32
    $region53: #{forward.13} parent=1 // pred_fallthru
      _
    %3241 = vsyncpa [#allocation8], 1

</llo_original>
